<compile_context>
chip_gen: v6e
topology: v6e:2x2x1
jax: 0.10.0
libtpu: 0.0.40
codegen_flags: <defaults>
</compile_context>

<pallas_src>
import math

import jax
import jax.numpy as jnp
from jax.experimental import pallas as pl
from jax.experimental.pallas import tpu as pltpu

# ---------------- module configuration (consistent with the PyTorch module) ----------------
IMAGE_SIZE = 16
PATCH_SIZE = 4
HIDDEN = 32
NUM_HEADS = 16                          # Block(hidden, 16, 4, qkv_bias=True)
HEAD_DIM = HIDDEN // NUM_HEADS          # 2
MLP_HIDDEN = 4 * HIDDEN                 # 128 (mlp_ratio = 4)
N_PATCH = (IMAGE_SIZE // PATCH_SIZE) ** 2   # 16
CHUNK = 1
N_MASK = CHUNK * N_PATCH                # 16 mask tokens appended
DEPTH = 2                               # decoder_depth = 2
PATCH_DIM = PATCH_SIZE ** 2 * 3         # 48
LN_EPS = 1e-5                           # nn.LayerNorm default

B, S, P_LAT = 2, 2, 8                   # batch, seq_len, n_patch_latents
T_TOK = P_LAT + N_MASK                  # 24 tokens per sequence inside the decoder
NHT = NUM_HEADS * T_TOK                 # 384 = 3 * 128 lanes exactly

# ---------------- packed operand layout ----------------
VEC_W = 128
ROW_MASK, ROW_EMB_B, ROW_DN_W, ROW_DN_B, ROW_PRED_B = 0, 1, 2, 3, 4
ROW_BLK = 5
R_LN1W, R_LN1B, R_QKVB, R_PROJB, R_LN2W, R_LN2B, R_FC1B, R_FC2B = range(8)
ROWS_PER_BLK = 8

QKV_COLS = 4 * HIDDEN                        # 128 qkv columns: [K | V | ones | Q*scale]
KV1_COLS = 3 * HIDDEN                        # 96  leading columns: [K | V | ones]
WBLK_COLS = QKV_COLS + MLP_HIDDEN + HIDDEN   # 288 per-block slab: [qkv_ext | fc1 | proj]
PRED_COLS = 128                              # decoder_pred padded to a lane-dense 128 columns
EP_COLS = PRED_COLS + HIDDEN                 # 160 combined slab: [pred_pad | emb]


# ---------------- in-kernel math helpers ----------------
def _ln(y, w, b):
    mu = jnp.mean(y, axis=-1, keepdims=True)
    var = jnp.mean((y - mu) ** 2, axis=-1, keepdims=True)
    return (y - mu) * jax.lax.rsqrt(var + LN_EPS) * w + b


def _erf(x):
    # Abramowitz & Stegun 7.1.26 polynomial (max abs err ~1.5e-7); VPU/EUP friendly ops only.
    a1, a2, a3, a4, a5 = 0.254829592, -0.284496736, 1.421413741, -1.453152027, 1.061405429
    p = 0.3275911
    sgn = jnp.where(x >= 0, 1.0, -1.0)
    ax = jnp.abs(x)
    t = 1.0 / (1.0 + p * ax)
    y = 1.0 - (((((a5 * t + a4) * t) + a3) * t + a2) * t + a1) * t * jnp.exp(-ax * ax)
    return sgn * y


def _gelu(x):
    # exact (erf) GELU, matching torch.nn.GELU() default
    return 0.5 * x * (1.0 + _erf(x * (1.0 / math.sqrt(2.0))))


# ---------------- the Pallas kernel ----------------
def head_kernel(obs_ref, vec_ref, hm3_ref, wblk_ref, fc2_ref, ep_ref, out_ref):
    sps = obs_ref.shape[0]                                   # sequences handled this grid step
    R = sps * T_TOK                                          # token rows this step

    def vec(row, width):                                     # (1, width) bias / scale row (f32)
        return vec_ref[row:row + 1, :width]

    def mm(a, b):                                            # (rows,k)@(k,n): bf16 operands, f32 acc
        return jax.lax.dot_general(
            a.astype(jnp.bfloat16), b.astype(jnp.bfloat16),
            (((1,), (0,)), ((), ())),
            preferred_element_type=jnp.float32)

    hm3 = hm3_ref[...]                                       # (NH*T, 96) block-diag mask [K|V|1]

    # ---- decoder_embed on latent tokens + mask-token concat ----
    obs = obs_ref[...].reshape(sps * P_LAT, HIDDEN)
    emb = mm(obs, ep_ref[:, PRED_COLS:PRED_COLS + HIDDEN]) + vec(ROW_EMB_B, HIDDEN)
    mask_tok = jnp.broadcast_to(vec(ROW_MASK, HIDDEN), (sps, N_MASK, HIDDEN))
    x = jnp.concatenate([emb.reshape(sps, P_LAT, HIDDEN), mask_tok], axis=1)  # (sps, T, H)
    x = x.reshape(R, HIDDEN)                                                  # token rows, H on lanes
    # TODO(synk): use_pos_embed=True (2d sin-cos pos-embed add) not implemented; module default is False.

    for blk in range(DEPTH):
        base = ROW_BLK + blk * ROWS_PER_BLK
        wb = wblk_ref[blk]                                   # (32, 288) = [qkv_ext | fc1 | proj]

        # ---- attention sublayer: x = x + proj(MHSA(LN(x))) ----
        xn = _ln(x, vec(base + R_LN1W, HIDDEN), vec(base + R_LN1B, HIDDEN))
        # qkv_ext = [K | V | ones | Q*scale]: the ones block (w=0, b=1) later yields the softmax
        # denominator for free inside the attention-output matmul.
        qkv = mm(xn, wb[:, :QKV_COLS]) + vec(base + R_QKVB, QKV_COLS)         # (R, 128)
        qkv3 = qkv.reshape(sps, T_TOK, QKV_COLS)
        kv1 = qkv3[:, :, :KV1_COLS]                                           # (sps, T, 96) = [K|V|1]
        q = qkv3[:, :, KV1_COLS:]                                             # (sps, T, 32), pre-scaled

        # replicate [K|V|1] once per head along sublanes (stride-0 broadcast + leading-dim merge),
        # then zero everything outside each head's 2 channels with the precomputed mask.
        kv1x = jnp.broadcast_to(kv1[:, None], (sps, NUM_HEADS, T_TOK, KV1_COLS)
                                ).reshape(sps, NHT, KV1_COLS) * hm3           # (sps, NH*T, 96)

        # per-head scores, lane-dense: s[b, t, h*T + j] = <q_h[t], k_h[j]> * scale
        s = jnp.einsum('btc,bjc->btj',
                       q.astype(jnp.bfloat16), kv1x[:, :, :HIDDEN].astype(jnp.bfloat16),
                       preferred_element_type=jnp.float32)                    # (sps, T, NH*T)
        e = jnp.exp(s - jnp.max(s, axis=-1, keepdims=True))                   # global row max (exact)
        # one MXU push: [unnormalized head outputs | per-head softmax denominators]
        ud = jnp.einsum('btj,bjc->btc',
                        e.astype(jnp.bfloat16), kv1x[:, :, HIDDEN:].astype(jnp.bfloat16),
                        preferred_element_type=jnp.float32)                   # (sps, T, 64)
        u = ud[:, :, :HIDDEN].reshape(R, HIDDEN)
        d = jnp.maximum(ud[:, :, HIDDEN:].reshape(R, HIDDEN), 1e-30)          # underflow/NaN guard
        o = u * pl.reciprocal(d, approx=True)                                 # (R, H), head-major
        x = x + mm(o, wb[:, QKV_COLS + MLP_HIDDEN:]) + vec(base + R_PROJB, HIDDEN)

        # ---- MLP sublayer: x = x + fc2(GELU(fc1(LN(x)))) ----
        xn2 = _ln(x, vec(base + R_LN2W, HIDDEN), vec(base + R_LN2B, HIDDEN))
        hmid = _gelu(mm(xn2, wb[:, QKV_COLS:QKV_COLS + MLP_HIDDEN]) + vec(base + R_FC1B, MLP_HIDDEN))
        x = x + mm(hmid, fc2_ref[blk]) + vec(base + R_FC2B, HIDDEN)

    # ---- decoder_norm + decoder_pred on the mask-token rows only (lane-dense 128-wide store) ----
    xm = x.reshape(sps, T_TOK, HIDDEN)[:, P_LAT:, :].reshape(sps * N_MASK, HIDDEN)
    xm = _ln(xm, vec(ROW_DN_W, HIDDEN), vec(ROW_DN_B, HIDDEN))
    y = mm(xm, ep_ref[:, :PRED_COLS]) + vec(ROW_PRED_B, PRED_COLS)            # (sps*N_MASK, 128)
    out_ref[...] = y.reshape(sps, N_MASK, PRED_COLS)


# ---------------- wrapper ----------------
def _num_tensorcore_steps(batch_seq):
    """2 'parallel' grid steps only where a chip exposes 2 TensorCores to one Pallas grid (v7x);
    on single-TC v5e/v6e a 2-step grid is a sequential loop, so run a single step."""
    try:
        kind = jax.devices()[0].device_kind.lower()
    except Exception:
        kind = ""
    n_tc = 2 if ("v7" in kind or "7x" in kind) else 1
    return n_tc if (n_tc > 1 and batch_seq % n_tc == 0) else 1


def linear_forward_pred_head(obs, kp):
    """obs: (B, S, P_LAT, HIDDEN) float32 -> (B, S, CHUNK, N_PATCH, PATCH_DIM)"""
    Bn, Sn, Pn, Hn = obs.shape
    assert (Pn, Hn) == (P_LAT, HIDDEN)
    BS = Bn * Sn
    nsteps = _num_tensorcore_steps(BS)
    sps = BS // nsteps
    obs_flat = obs.reshape(BS, Pn, Hn)

    def const_spec(a):
        nd = a.ndim
        return pl.BlockSpec(a.shape, lambda i, nd=nd: (0,) * nd)

    out = pl.pallas_call(
        head_kernel,
        out_shape=jax.ShapeDtypeStruct((BS, N_MASK, PRED_COLS), jnp.float32),
        grid=(nsteps,),
        in_specs=[pl.BlockSpec((sps, P_LAT, HIDDEN), lambda i: (i, 0, 0)),
                  const_spec(kp['vec']), const_spec(kp['hmask3']),
                  const_spec(kp['w_blk']), const_spec(kp['fc2_w']),
                  const_spec(kp['ep_w'])],
        out_specs=pl.BlockSpec((sps, N_MASK, PRED_COLS), lambda i: (i, 0, 0)),
        compiler_params=pltpu.CompilerParams(dimension_semantics=("parallel",)),
    )(obs_flat, kp['vec'], kp['hmask3'], kp['w_blk'], kp['fc2_w'], kp['ep_w'])

    # kernel returns only the mask-token rows, lane-padded to 128; drop the padding here.
    out = out[..., :PATCH_DIM]
    return out.reshape(Bn, Sn, CHUNK, N_PATCH, PATCH_DIM)


# ---------------- deterministic parameter init + packing ----------------
def init_params(key):
    ks = iter(jax.random.split(key, 64))

    def nrm(shape, scale=0.02):
        return (scale * jax.random.normal(next(ks), shape)).astype(jnp.float32)

    flat = {
        'embed_w': nrm((HIDDEN, HIDDEN)), 'embed_b': nrm((HIDDEN,)),
        'mask_token': nrm((1, 1, 1, HIDDEN), 0.001),
        'dn_w': (1.0 + nrm((HIDDEN,))), 'dn_b': nrm((HIDDEN,)),
        'pred_w': nrm((HIDDEN, PATCH_DIM)), 'pred_b': nrm((PATCH_DIM,)),
        'blocks': [],
    }
    for _ in range(DEPTH):
        flat['blocks'].append({
            'ln1_w': (1.0 + nrm((HIDDEN,))), 'ln1_b': nrm((HIDDEN,)),
            'qkv_w': nrm((HIDDEN, 3 * HIDDEN)), 'qkv_b': nrm((3 * HIDDEN,)),
            'proj_w': nrm((HIDDEN, HIDDEN)), 'proj_b': nrm((HIDDEN,)),
            'ln2_w': (1.0 + nrm((HIDDEN,))), 'ln2_b': nrm((HIDDEN,)),
            'fc1_w': nrm((HIDDEN, MLP_HIDDEN)), 'fc1_b': nrm((MLP_HIDDEN,)),
            'fc2_w': nrm((MLP_HIDDEN, HIDDEN)), 'fc2_b': nrm((HIDDEN,)),
        })
    return flat


def pack_kernel_params(flat):
    scale = float(HEAD_DIM) ** -0.5

    def vrow(v):
        v = jnp.asarray(v, jnp.float32).reshape(-1)
        return jnp.pad(v, (0, VEC_W - v.shape[0]))

    rows = [vrow(flat['mask_token']), vrow(flat['embed_b']),
            vrow(flat['dn_w']), vrow(flat['dn_b']), vrow(flat['pred_b'])]

    wblks, fc2s = [], []
    for bp in flat['blocks']:
        qw, kw, vw = (bp['qkv_w'][:, :HIDDEN], bp['qkv_w'][:, HIDDEN:2 * HIDDEN],
                      bp['qkv_w'][:, 2 * HIDDEN:])
        qb, kb, vb = (bp['qkv_b'][:HIDDEN], bp['qkv_b'][HIDDEN:2 * HIDDEN],
                      bp['qkv_b'][2 * HIDDEN:])
        # qkv_ext columns = [K | V | ones-producer (w=0, b=1) | Q * head_dim**-0.5]
        qkv_ext_w = jnp.concatenate(
            [kw, vw, jnp.zeros((HIDDEN, HIDDEN), jnp.float32), qw * scale], axis=1)
        qkv_ext_b = jnp.concatenate([kb, vb, jnp.ones((HIDDEN,), jnp.float32), qb * scale])
        wblks.append(jnp.concatenate([qkv_ext_w, bp['fc1_w'], bp['proj_w']], axis=1))  # (32, 288)
        fc2s.append(bp['fc2_w'])
        rows += [vrow(bp['ln1_w']), vrow(bp['ln1_b']), vrow(qkv_ext_b), vrow(bp['proj_b']),
                 vrow(bp['ln2_w']), vrow(bp['ln2_b']), vrow(bp['fc1_b']), vrow(bp['fc2_b'])]
    while len(rows) % 8:
        rows.append(jnp.zeros((VEC_W,), jnp.float32))

    # head-block-diagonal mask, precomputed on host: hmask3[h*T+j, c] = 1 iff channel (c mod 32)
    # belongs to head h; tiled 3x across the [K | V | ones] column groups.
    heads = jnp.arange(NHT) // T_TOK
    chans = jnp.arange(HIDDEN) // HEAD_DIM
    hmask = (heads[:, None] == chans[None, :]).astype(jnp.float32)            # (NH*T, 32)
    hmask3 = jnp.concatenate([hmask, hmask, hmask], axis=1)                   # (NH*T, 96)

    pred_w_pad = jnp.pad(flat['pred_w'], ((0, 0), (0, PRED_COLS - PATCH_DIM)))  # (32, 128)

    return {
        'vec': jnp.stack(rows),                                               # (24, 128) f32 slab
        'hmask3': hmask3,                                                     # (384, 96)  f32
        'w_blk': jnp.stack(wblks).astype(jnp.bfloat16),                       # (DEPTH, 32, 288)
        'fc2_w': jnp.stack(fc2s).astype(jnp.bfloat16),                        # (DEPTH, 128, 32)
        'ep_w': jnp.concatenate([pred_w_pad, flat['embed_w']], axis=1).astype(jnp.bfloat16),  # (32,160)
    }


# ---------------- pure-JAX reference (mirrors the PyTorch forward, f32 HIGHEST) ----------------
def _ref_mm(a, b):
    return jnp.einsum('...ij,jk->...ik', a, b, precision=jax.lax.Precision.HIGHEST)


def ref_forward(obs, flat):
    Bn, Sn, Pn, Hn = obs.shape
    x = obs.reshape(Bn * Sn, Pn, Hn)
    x = _ref_mm(x, flat['embed_w']) + flat['embed_b']
    mask = jnp.broadcast_to(flat['mask_token'].reshape(1, 1, Hn), (Bn * Sn, N_MASK, Hn))
    x = jnp.concatenate([x, mask], axis=1)                          # (BS, T, H)

    def ln(y, w, b):
        mu = y.mean(-1, keepdims=True)
        var = ((y - mu) ** 2).mean(-1, keepdims=True)
        return (y - mu) / jnp.sqrt(var + LN_EPS) * w + b

    for bp in flat['blocks']:
        xn = ln(x, bp['ln1_w'], bp['ln1_b'])
        qkv = _ref_mm(xn, bp['qkv_w']) + bp['qkv_b']
        BS_, T_, _ = qkv.shape
        qkv = qkv.reshape(BS_, T_, 3, NUM_HEADS, HEAD_DIM).transpose(2, 0, 3, 1, 4)
        q, k, v = qkv[0], qkv[1], qkv[2]
        s = jnp.einsum('bhqd,bhkd->bhqk', q, k,
                       precision=jax.lax.Precision.HIGHEST) * (HEAD_DIM ** -0.5)
        a = jax.nn.softmax(s, axis=-1)
        o = jnp.einsum('bhqk,bhkd->bhqd', a, v, precision=jax.lax.Precision.HIGHEST)
        o = o.transpose(0, 2, 1, 3).reshape(BS_, T_, HIDDEN)
        x = x + _ref_mm(o, bp['proj_w']) + bp['proj_b']
        xn2 = ln(x, bp['ln2_w'], bp['ln2_b'])
        hmid = jax.nn.gelu(_ref_mm(xn2, bp['fc1_w']) + bp['fc1_b'], approximate=False)
        x = x + _ref_mm(hmid, bp['fc2_w']) + bp['fc2_b']

    x = ln(x, flat['dn_w'], flat['dn_b'])
    y = _ref_mm(x, flat['pred_w']) + flat['pred_b']
    y = y.reshape(Bn, Sn, T_TOK, PATCH_DIM)[:, :, P_LAT:]
    return y.reshape(Bn, Sn, CHUNK, N_PATCH, PATCH_DIM)


if __name__ == "__main__":
    key = jax.random.PRNGKey(0)
    pkey, xkey = jax.random.split(key)
    flat = init_params(pkey)
    kp = pack_kernel_params(flat)

    obs_pred = jax.random.normal(xkey, (B, S, P_LAT, HIDDEN), dtype=jnp.float32)

    out = jax.block_until_ready(linear_forward_pred_head(obs_pred, kp))
    ref = jax.block_until_ready(ref_forward(obs_pred, flat))

    assert out.shape == (B, S, CHUNK, N_PATCH, PATCH_DIM), out.shape
    err = float(jnp.max(jnp.abs(out - ref)))
    # Kernel matmuls are single-pass bf16 (bf16-stored weights, f32 accumulation) and the softmax
    # uses pl.reciprocal(approx=True); against the f32 HIGHEST reference the expected max-abs error
    # is ~1e-3 (LayerNorms amplify residual-stream rounding noise with this 0.02-scale init), so
    # budget 5e-3.
    assert err < 5e-3, f"max abs err {err}"
    print("KERNEL_OK")
</pallas_src>

<mosaic_0001>
module attributes {stable_mosaic.version = 11 : i64} {
  func.func @head_kernel(%arg0: i32, %arg1: memref<4x8x32xf32, #tpu.memory_space<vmem>>, %arg2: memref<24x128xf32, #tpu.memory_space<vmem>>, %arg3: memref<384x96xf32, #tpu.memory_space<vmem>>, %arg4: memref<2x32x288xbf16, #tpu.memory_space<vmem>>, %arg5: memref<2x128x32xbf16, #tpu.memory_space<vmem>>, %arg6: memref<32x160xbf16, #tpu.memory_space<vmem>>, %arg7: memref<4x16x128xf32, #tpu.memory_space<vmem>>) attributes {dimension_semantics = [#tpu.dimension_semantics<parallel>], iteration_bounds = array<i64: 1>, scalar_prefetch = 0 : i64, scratch_operands = 0 : i64, tpu.core_type = #tpu.core_type<tc>, window_params = [{transform_indices = @transform_0, window_bounds = array<i64: 4, 8, 32>}, {pipeline_mode = #tpu.pipeline_mode<synchronous>, transform_indices = @transform_1, window_bounds = array<i64: 24, 128>}, {pipeline_mode = #tpu.pipeline_mode<synchronous>, transform_indices = @transform_2, window_bounds = array<i64: 384, 96>}, {pipeline_mode = #tpu.pipeline_mode<synchronous>, transform_indices = @transform_3, window_bounds = array<i64: 2, 32, 288>}, {pipeline_mode = #tpu.pipeline_mode<synchronous>, transform_indices = @transform_4, window_bounds = array<i64: 2, 128, 32>}, {pipeline_mode = #tpu.pipeline_mode<synchronous>, transform_indices = @transform_5, window_bounds = array<i64: 32, 160>}, {transform_indices = @transform_6, window_bounds = array<i64: 4, 16, 128>}]} {
    %c0 = arith.constant 0 : index
    %c0_0 = arith.constant 0 : index
    %0 = vector.load %arg3[%c0, %c0_0] : memref<384x96xf32, #tpu.memory_space<vmem>>, vector<384x96xf32>
    %c0_1 = arith.constant 0 : index
    %c0_2 = arith.constant 0 : index
    %c0_3 = arith.constant 0 : index
    %1 = vector.load %arg1[%c0_1, %c0_2, %c0_3] : memref<4x8x32xf32, #tpu.memory_space<vmem>>, vector<4x8x32xf32>
    %2 = vector.shape_cast %1 : vector<4x8x32xf32> to vector<32x32xf32>
    %c0_4 = arith.constant 0 : index
    %c128 = arith.constant 128 : index
    %3 = vector.load %arg6[%c0_4, %c128] : memref<32x160xbf16, #tpu.memory_space<vmem>>, vector<32x32xbf16>
    %4 = arith.truncf %2 : vector<32x32xf32> to vector<32x32xbf16>
    %cst = arith.constant dense<0.000000e+00> : vector<32x32xf32>
    %5 = tpu.matmul %4, %3, %cst {dimension_numbers = #tpu.dot_dimension_numbers<[1], [0], [0], [1], [0, 0, 1, 1], [], []>} : vector<32x32xbf16>, vector<32x32xbf16>, vector<32x32xf32> -> vector<32x32xf32>
    %c1 = arith.constant 1 : index
    %c0_5 = arith.constant 0 : index
    %6 = vector.load %arg2[%c1, %c0_5] : memref<24x128xf32, #tpu.memory_space<vmem>>, vector<1x32xf32>
    %7 = vector.broadcast %6 : vector<1x32xf32> to vector<32x32xf32>
    %8 = arith.addf %5, %7 : vector<32x32xf32>
    %c0_6 = arith.constant 0 : index
    %c0_7 = arith.constant 0 : index
    %9 = vector.load %arg2[%c0_6, %c0_7] : memref<24x128xf32, #tpu.memory_space<vmem>>, vector<1x32xf32>
    %10 = vector.shape_cast %9 : vector<1x32xf32> to vector<1x1x32xf32>
    %11 = vector.broadcast %10 : vector<1x1x32xf32> to vector<4x16x32xf32>
    %12 = vector.shape_cast %8 : vector<32x32xf32> to vector<4x8x32xf32>
    %13 = tpu.concatenate %12, %11 in 1 : vector<4x8x32xf32>, vector<4x16x32xf32> -> vector<4x24x32xf32>
    %14 = vector.shape_cast %13 : vector<4x24x32xf32> to vector<96x32xf32>
    %c0_8 = arith.constant 0 : index
    %c0_9 = arith.constant 0 : index
    %c0_10 = arith.constant 0 : index
    %15 = vector.load %arg4[%c0_8, %c0_9, %c0_10] : memref<2x32x288xbf16, #tpu.memory_space<vmem>>, vector<1x32x288xbf16>
    %16 = vector.shape_cast %15 : vector<1x32x288xbf16> to vector<32x288xbf16>
    %c5 = arith.constant 5 : index
    %c0_11 = arith.constant 0 : index
    %17 = vector.load %arg2[%c5, %c0_11] : memref<24x128xf32, #tpu.memory_space<vmem>>, vector<1x32xf32>
    %c6 = arith.constant 6 : index
    %c0_12 = arith.constant 0 : index
    %18 = vector.load %arg2[%c6, %c0_12] : memref<24x128xf32, #tpu.memory_space<vmem>>, vector<1x32xf32>
    %cst_13 = arith.constant dense<0.000000e+00> : vector<96xf32>
    %19 = vector.multi_reduction <add>, %14, %cst_13 [1] : vector<96x32xf32> to vector<96xf32>
    %20 = vector.shape_cast %19 : vector<96xf32> to vector<96x1xf32>
    %cst_14 = arith.constant 3.200000e+01 : f32
    %21 = vector.broadcast %cst_14 : f32 to vector<96x1xf32>
    %22 = arith.divf %20, %21 : vector<96x1xf32>
    %23 = vector.broadcast %22 : vector<96x1xf32> to vector<96x32xf32>
    %24 = arith.subf %14, %23 : vector<96x32xf32>
    %25 = arith.mulf %24, %24 : vector<96x32xf32>
    %cst_15 = arith.constant dense<0.000000e+00> : vector<96xf32>
    %26 = vector.multi_reduction <add>, %25, %cst_15 [1] : vector<96x32xf32> to vector<96xf32>
    %27 = vector.shape_cast %26 : vector<96xf32> to vector<96x1xf32>
    %cst_16 = arith.constant 3.200000e+01 : f32
    %28 = vector.broadcast %cst_16 : f32 to vector<96x1xf32>
    %29 = arith.divf %27, %28 : vector<96x1xf32>
    %30 = vector.broadcast %22 : vector<96x1xf32> to vector<96x32xf32>
    %31 = arith.subf %14, %30 : vector<96x32xf32>
    %cst_17 = arith.constant 9.99999974E-6 : f32
    %32 = vector.broadcast %cst_17 : f32 to vector<96x1xf32>
    %33 = arith.addf %29, %32 : vector<96x1xf32>
    %34 = math.rsqrt %33 : vector<96x1xf32>
    %35 = vector.broadcast %34 : vector<96x1xf32> to vector<96x32xf32>
    %36 = arith.mulf %31, %35 : vector<96x32xf32>
    %37 = vector.broadcast %17 : vector<1x32xf32> to vector<96x32xf32>
    %38 = arith.mulf %36, %37 : vector<96x32xf32>
    %39 = vector.broadcast %18 : vector<1x32xf32> to vector<96x32xf32>
    %40 = arith.addf %38, %39 : vector<96x32xf32>
    %41 = vector.extract_strided_slice %16 {offsets = [0, 0], sizes = [32, 128], strides = [1, 1]} : vector<32x288xbf16> to vector<32x128xbf16>
    %42 = arith.truncf %40 : vector<96x32xf32> to vector<96x32xbf16>
    %cst_18 = arith.constant dense<0.000000e+00> : vector<96x128xf32>
    %43 = tpu.matmul %42, %41, %cst_18 {dimension_numbers = #tpu.dot_dimension_numbers<[1], [0], [0], [1], [0, 0, 1, 1], [], []>} : vector<96x32xbf16>, vector<32x128xbf16>, vector<96x128xf32> -> vector<96x128xf32>
    %c7 = arith.constant 7 : index
    %c0_19 = arith.constant 0 : index
    %44 = vector.load %arg2[%c7, %c0_19] : memref<24x128xf32, #tpu.memory_space<vmem>>, vector<1x128xf32>
    %45 = vector.broadcast %44 : vector<1x128xf32> to vector<96x128xf32>
    %46 = arith.addf %43, %45 : vector<96x128xf32>
    %47 = vector.shape_cast %46 : vector<96x128xf32> to vector<4x24x128xf32>
    %48 = vector.extract_strided_slice %47 {offsets = [0, 0, 0], sizes = [4, 24, 96], strides = [1, 1, 1]} : vector<4x24x128xf32> to vector<4x24x96xf32>
    %49 = vector.extract_strided_slice %47 {offsets = [0, 0, 96], sizes = [4, 24, 32], strides = [1, 1, 1]} : vector<4x24x128xf32> to vector<4x24x32xf32>
    %50 = vector.shape_cast %48 : vector<4x24x96xf32> to vector<4x1x24x96xf32>
    %51 = vector.shape_cast %50 : vector<4x1x24x96xf32> to vector<4x1x24x96xf32>
    %52 = vector.broadcast %51 : vector<4x1x24x96xf32> to vector<4x16x24x96xf32>
    %53 = vector.shape_cast %52 : vector<4x16x24x96xf32> to vector<4x384x96xf32>
    %54 = vector.shape_cast %0 : vector<384x96xf32> to vector<1x384x96xf32>
    %55 = vector.broadcast %54 : vector<1x384x96xf32> to vector<4x384x96xf32>
    %56 = arith.mulf %53, %55 : vector<4x384x96xf32>
    %57 = arith.truncf %49 : vector<4x24x32xf32> to vector<4x24x32xbf16>
    %58 = vector.extract_strided_slice %56 {offsets = [0, 0, 0], sizes = [4, 384, 32], strides = [1, 1, 1]} : vector<4x384x96xf32> to vector<4x384x32xf32>
    %59 = arith.truncf %58 : vector<4x384x32xf32> to vector<4x384x32xbf16>
    "tpu.trace_start"() <{level = 10 : i32, message = "btc,bjc->btj"}> : () -> ()
    %cst_20 = arith.constant dense<0.000000e+00> : vector<4x24x384xf32>
    %60 = tpu.matmul %57, %59, %cst_20 {dimension_numbers = #tpu.dot_dimension_numbers<[2], [2], [1], [1], [0, 0, 0, 1, 1, 1], [0], [0]>} : vector<4x24x32xbf16>, vector<4x384x32xbf16>, vector<4x24x384xf32> -> vector<4x24x384xf32>
    "tpu.trace_stop"() : () -> ()
    %cst_21 = arith.constant dense<0xFF800000> : vector<4x24xf32>
    %61 = vector.multi_reduction <maximumf>, %60, %cst_21 [2] : vector<4x24x384xf32> to vector<4x24xf32>
    %62 = vector.shape_cast %61 : vector<4x24xf32> to vector<4x24x1xf32>
    %63 = vector.broadcast %62 : vector<4x24x1xf32> to vector<4x24x384xf32>
    %64 = arith.subf %60, %63 : vector<4x24x384xf32>
    %65 = math.exp %64 : vector<4x24x384xf32>
    %66 = arith.truncf %65 : vector<4x24x384xf32> to vector<4x24x384xbf16>
    %67 = vector.extract_strided_slice %56 {offsets = [0, 0, 32], sizes = [4, 384, 64], strides = [1, 1, 1]} : vector<4x384x96xf32> to vector<4x384x64xf32>
    %68 = arith.truncf %67 : vector<4x384x64xf32> to vector<4x384x64xbf16>
    "tpu.trace_start"() <{level = 10 : i32, message = "btj,bjc->btc"}> : () -> ()
    %cst_22 = arith.constant dense<0.000000e+00> : vector<4x24x64xf32>
    %69 = tpu.matmul %66, %68, %cst_22 {dimension_numbers = #tpu.dot_dimension_numbers<[2], [1], [1], [2], [0, 0, 0, 1, 1, 2], [0], [0]>} : vector<4x24x384xbf16>, vector<4x384x64xbf16>, vector<4x24x64xf32> -> vector<4x24x64xf32>
    "tpu.trace_stop"() : () -> ()
    %70 = vector.extract_strided_slice %69 {offsets = [0, 0, 0], sizes = [4, 24, 32], strides = [1, 1, 1]} : vector<4x24x64xf32> to vector<4x24x32xf32>
    %71 = vector.shape_cast %70 : vector<4x24x32xf32> to vector<96x32xf32>
    %72 = vector.extract_strided_slice %69 {offsets = [0, 0, 32], sizes = [4, 24, 32], strides = [1, 1, 1]} : vector<4x24x64xf32> to vector<4x24x32xf32>
    %73 = vector.shape_cast %72 : vector<4x24x32xf32> to vector<96x32xf32>
    %cst_23 = arith.constant 1.000000e-30 : f32
    %74 = vector.broadcast %cst_23 : f32 to vector<96x32xf32>
    %75 = arith.maximumf %73, %74 : vector<96x32xf32>
    %76 = tpu.reciprocal %75 {approx = true} : vector<96x32xf32> -> vector<96x32xf32>
    %77 = arith.mulf %71, %76 : vector<96x32xf32>
    %78 = vector.extract_strided_slice %16 {offsets = [0, 256], sizes = [32, 32], strides = [1, 1]} : vector<32x288xbf16> to vector<32x32xbf16>
    %79 = arith.truncf %77 : vector<96x32xf32> to vector<96x32xbf16>
    %cst_24 = arith.constant dense<0.000000e+00> : vector<96x32xf32>
    %80 = tpu.matmul %79, %78, %cst_24 {dimension_numbers = #tpu.dot_dimension_numbers<[1], [0], [0], [1], [0, 0, 1, 1], [], []>} : vector<96x32xbf16>, vector<32x32xbf16>, vector<96x32xf32> -> vector<96x32xf32>
    %81 = arith.addf %14, %80 : vector<96x32xf32>
    %c8 = arith.constant 8 : index
    %c0_25 = arith.constant 0 : index
    %82 = vector.load %arg2[%c8, %c0_25] : memref<24x128xf32, #tpu.memory_space<vmem>>, vector<1x32xf32>
    %83 = vector.broadcast %82 : vector<1x32xf32> to vector<96x32xf32>
    %84 = arith.addf %81, %83 : vector<96x32xf32>
    %c9 = arith.constant 9 : index
    %c0_26 = arith.constant 0 : index
    %85 = vector.load %arg2[%c9, %c0_26] : memref<24x128xf32, #tpu.memory_space<vmem>>, vector<1x32xf32>
    %c10 = arith.constant 10 : index
    %c0_27 = arith.constant 0 : index
    %86 = vector.load %arg2[%c10, %c0_27] : memref<24x128xf32, #tpu.memory_space<vmem>>, vector<1x32xf32>
    %cst_28 = arith.constant dense<0.000000e+00> : vector<96xf32>
    %87 = vector.multi_reduction <add>, %84, %cst_28 [1] : vector<96x32xf32> to vector<96xf32>
    %88 = vector.shape_cast %87 : vector<96xf32> to vector<96x1xf32>
    %cst_29 = arith.constant 3.200000e+01 : f32
    %89 = vector.broadcast %cst_29 : f32 to vector<96x1xf32>
    %90 = arith.divf %88, %89 : vector<96x1xf32>
    %91 = vector.broadcast %90 : vector<96x1xf32> to vector<96x32xf32>
    %92 = arith.subf %84, %91 : vector<96x32xf32>
    %93 = arith.mulf %92, %92 : vector<96x32xf32>
    %cst_30 = arith.constant dense<0.000000e+00> : vector<96xf32>
    %94 = vector.multi_reduction <add>, %93, %cst_30 [1] : vector<96x32xf32> to vector<96xf32>
    %95 = vector.shape_cast %94 : vector<96xf32> to vector<96x1xf32>
    %cst_31 = arith.constant 3.200000e+01 : f32
    %96 = vector.broadcast %cst_31 : f32 to vector<96x1xf32>
    %97 = arith.divf %95, %96 : vector<96x1xf32>
    %98 = vector.broadcast %90 : vector<96x1xf32> to vector<96x32xf32>
    %99 = arith.subf %84, %98 : vector<96x32xf32>
    %cst_32 = arith.constant 9.99999974E-6 : f32
    %100 = vector.broadcast %cst_32 : f32 to vector<96x1xf32>
    %101 = arith.addf %97, %100 : vector<96x1xf32>
    %102 = math.rsqrt %101 : vector<96x1xf32>
    %103 = vector.broadcast %102 : vector<96x1xf32> to vector<96x32xf32>
    %104 = arith.mulf %99, %103 : vector<96x32xf32>
    %105 = vector.broadcast %85 : vector<1x32xf32> to vector<96x32xf32>
    %106 = arith.mulf %104, %105 : vector<96x32xf32>
    %107 = vector.broadcast %86 : vector<1x32xf32> to vector<96x32xf32>
    %108 = arith.addf %106, %107 : vector<96x32xf32>
    %109 = vector.extract_strided_slice %16 {offsets = [0, 128], sizes = [32, 128], strides = [1, 1]} : vector<32x288xbf16> to vector<32x128xbf16>
    %110 = arith.truncf %108 : vector<96x32xf32> to vector<96x32xbf16>
    %cst_33 = arith.constant dense<0.000000e+00> : vector<96x128xf32>
    %111 = tpu.matmul %110, %109, %cst_33 {dimension_numbers = #tpu.dot_dimension_numbers<[1], [0], [0], [1], [0, 0, 1, 1], [], []>} : vector<96x32xbf16>, vector<32x128xbf16>, vector<96x128xf32> -> vector<96x128xf32>
    %c11 = arith.constant 11 : index
    %c0_34 = arith.constant 0 : index
    %112 = vector.load %arg2[%c11, %c0_34] : memref<24x128xf32, #tpu.memory_space<vmem>>, vector<1x128xf32>
    %113 = vector.broadcast %112 : vector<1x128xf32> to vector<96x128xf32>
    %114 = arith.addf %111, %113 : vector<96x128xf32>
    %cst_35 = arith.constant 5.000000e-01 : f32
    %115 = vector.broadcast %cst_35 : f32 to vector<96x128xf32>
    %116 = arith.mulf %115, %114 : vector<96x128xf32>
    %cst_36 = arith.constant 0.707106769 : f32
    %117 = vector.broadcast %cst_36 : f32 to vector<96x128xf32>
    %118 = arith.mulf %114, %117 : vector<96x128xf32>
    %cst_37 = arith.constant 0.000000e+00 : f32
    %119 = vector.broadcast %cst_37 : f32 to vector<96x128xf32>
    %120 = arith.cmpf oge, %118, %119 : vector<96x128xf32>
    %cst_38 = arith.constant 1.000000e+00 : f32
    %cst_39 = arith.constant -1.000000e+00 : f32
    %121 = vector.broadcast %cst_38 : f32 to vector<96x128xf32>
    %122 = vector.broadcast %cst_39 : f32 to vector<96x128xf32>
    %123 = arith.select %120, %121, %122 : vector<96x128xi1>, vector<96x128xf32>
    %124 = math.absf %118 : vector<96x128xf32>
    %cst_40 = arith.constant 0.327591091 : f32
    %125 = vector.broadcast %cst_40 : f32 to vector<96x128xf32>
    %126 = arith.mulf %125, %124 : vector<96x128xf32>
    %cst_41 = arith.constant 1.000000e+00 : f32
    %127 = vector.broadcast %cst_41 : f32 to vector<96x128xf32>
    %128 = arith.addf %127, %126 : vector<96x128xf32>
    %cst_42 = arith.constant 1.000000e+00 : f32
    %129 = vector.broadcast %cst_42 : f32 to vector<96x128xf32>
    %130 = arith.divf %129, %128 : vector<96x128xf32>
    %cst_43 = arith.constant 1.06140542 : f32
    %131 = vector.broadcast %cst_43 : f32 to vector<96x128xf32>
    %132 = arith.mulf %131, %130 : vector<96x128xf32>
    %cst_44 = arith.constant -1.45315206 : f32
    %133 = vector.broadcast %cst_44 : f32 to vector<96x128xf32>
    %134 = arith.addf %132, %133 : vector<96x128xf32>
    %135 = arith.mulf %134, %130 : vector<96x128xf32>
    %cst_45 = arith.constant 1.42141378 : f32
    %136 = vector.broadcast %cst_45 : f32 to vector<96x128xf32>
    %137 = arith.addf %135, %136 : vector<96x128xf32>
    %138 = arith.mulf %137, %130 : vector<96x128xf32>
    %cst_46 = arith.constant -0.284496725 : f32
    %139 = vector.broadcast %cst_46 : f32 to vector<96x128xf32>
    %140 = arith.addf %138, %139 : vector<96x128xf32>
    %141 = arith.mulf %140, %130 : vector<96x128xf32>
    %cst_47 = arith.constant 0.254829586 : f32
    %142 = vector.broadcast %cst_47 : f32 to vector<96x128xf32>
    %143 = arith.addf %141, %142 : vector<96x128xf32>
    %144 = arith.mulf %143, %130 : vector<96x128xf32>
    %cst_48 = arith.constant 0.000000e+00 : f32
    %145 = vector.broadcast %cst_48 : f32 to vector<96x128xf32>
    %146 = arith.subf %145, %124 : vector<96x128xf32>
    %147 = arith.mulf %146, %124 : vector<96x128xf32>
    %148 = math.exp %147 : vector<96x128xf32>
    %149 = arith.mulf %144, %148 : vector<96x128xf32>
    %cst_49 = arith.constant 1.000000e+00 : f32
    %150 = vector.broadcast %cst_49 : f32 to vector<96x128xf32>
    %151 = arith.subf %150, %149 : vector<96x128xf32>
    %152 = arith.mulf %123, %151 : vector<96x128xf32>
    %cst_50 = arith.constant 1.000000e+00 : f32
    %153 = vector.broadcast %cst_50 : f32 to vector<96x128xf32>
    %154 = arith.addf %153, %152 : vector<96x128xf32>
    %155 = arith.mulf %116, %154 : vector<96x128xf32>
    %c0_51 = arith.constant 0 : index
    %c0_52 = arith.constant 0 : index
    %c0_53 = arith.constant 0 : index
    %156 = vector.load %arg5[%c0_51, %c0_52, %c0_53] : memref<2x128x32xbf16, #tpu.memory_space<vmem>>, vector<1x128x32xbf16>
    %157 = vector.shape_cast %156 : vector<1x128x32xbf16> to vector<128x32xbf16>
    %158 = arith.truncf %155 : vector<96x128xf32> to vector<96x128xbf16>
    %cst_54 = arith.constant dense<0.000000e+00> : vector<96x32xf32>
    %159 = tpu.matmul %158, %157, %cst_54 {dimension_numbers = #tpu.dot_dimension_numbers<[1], [0], [0], [1], [0, 0, 1, 1], [], []>} : vector<96x128xbf16>, vector<128x32xbf16>, vector<96x32xf32> -> vector<96x32xf32>
    %160 = arith.addf %84, %159 : vector<96x32xf32>
    %c12 = arith.constant 12 : index
    %c0_55 = arith.constant 0 : index
    %161 = vector.load %arg2[%c12, %c0_55] : memref<24x128xf32, #tpu.memory_space<vmem>>, vector<1x32xf32>
    %162 = vector.broadcast %161 : vector<1x32xf32> to vector<96x32xf32>
    %163 = arith.addf %160, %162 : vector<96x32xf32>
    %c1_56 = arith.constant 1 : index
    %c0_57 = arith.constant 0 : index
    %c0_58 = arith.constant 0 : index
    %164 = vector.load %arg4[%c1_56, %c0_57, %c0_58] : memref<2x32x288xbf16, #tpu.memory_space<vmem>>, vector<1x32x288xbf16>
    %165 = vector.shape_cast %164 : vector<1x32x288xbf16> to vector<32x288xbf16>
    %c13 = arith.constant 13 : index
    %c0_59 = arith.constant 0 : index
    %166 = vector.load %arg2[%c13, %c0_59] : memref<24x128xf32, #tpu.memory_space<vmem>>, vector<1x32xf32>
    %c14 = arith.constant 14 : index
    %c0_60 = arith.constant 0 : index
    %167 = vector.load %arg2[%c14, %c0_60] : memref<24x128xf32, #tpu.memory_space<vmem>>, vector<1x32xf32>
    %cst_61 = arith.constant dense<0.000000e+00> : vector<96xf32>
    %168 = vector.multi_reduction <add>, %163, %cst_61 [1] : vector<96x32xf32> to vector<96xf32>
    %169 = vector.shape_cast %168 : vector<96xf32> to vector<96x1xf32>
    %cst_62 = arith.constant 3.200000e+01 : f32
    %170 = vector.broadcast %cst_62 : f32 to vector<96x1xf32>
    %171 = arith.divf %169, %170 : vector<96x1xf32>
    %172 = vector.broadcast %171 : vector<96x1xf32> to vector<96x32xf32>
    %173 = arith.subf %163, %172 : vector<96x32xf32>
    %174 = arith.mulf %173, %173 : vector<96x32xf32>
    %cst_63 = arith.constant dense<0.000000e+00> : vector<96xf32>
    %175 = vector.multi_reduction <add>, %174, %cst_63 [1] : vector<96x32xf32> to vector<96xf32>
    %176 = vector.shape_cast %175 : vector<96xf32> to vector<96x1xf32>
    %cst_64 = arith.constant 3.200000e+01 : f32
    %177 = vector.broadcast %cst_64 : f32 to vector<96x1xf32>
    %178 = arith.divf %176, %177 : vector<96x1xf32>
    %179 = vector.broadcast %171 : vector<96x1xf32> to vector<96x32xf32>
    %180 = arith.subf %163, %179 : vector<96x32xf32>
    %cst_65 = arith.constant 9.99999974E-6 : f32
    %181 = vector.broadcast %cst_65 : f32 to vector<96x1xf32>
    %182 = arith.addf %178, %181 : vector<96x1xf32>
    %183 = math.rsqrt %182 : vector<96x1xf32>
    %184 = vector.broadcast %183 : vector<96x1xf32> to vector<96x32xf32>
    %185 = arith.mulf %180, %184 : vector<96x32xf32>
    %186 = vector.broadcast %166 : vector<1x32xf32> to vector<96x32xf32>
    %187 = arith.mulf %185, %186 : vector<96x32xf32>
    %188 = vector.broadcast %167 : vector<1x32xf32> to vector<96x32xf32>
    %189 = arith.addf %187, %188 : vector<96x32xf32>
    %190 = vector.extract_strided_slice %165 {offsets = [0, 0], sizes = [32, 128], strides = [1, 1]} : vector<32x288xbf16> to vector<32x128xbf16>
    %191 = arith.truncf %189 : vector<96x32xf32> to vector<96x32xbf16>
    %cst_66 = arith.constant dense<0.000000e+00> : vector<96x128xf32>
    %192 = tpu.matmul %191, %190, %cst_66 {dimension_numbers = #tpu.dot_dimension_numbers<[1], [0], [0], [1], [0, 0, 1, 1], [], []>} : vector<96x32xbf16>, vector<32x128xbf16>, vector<96x128xf32> -> vector<96x128xf32>
    %c15 = arith.constant 15 : index
    %c0_67 = arith.constant 0 : index
    %193 = vector.load %arg2[%c15, %c0_67] : memref<24x128xf32, #tpu.memory_space<vmem>>, vector<1x128xf32>
    %194 = vector.broadcast %193 : vector<1x128xf32> to vector<96x128xf32>
    %195 = arith.addf %192, %194 : vector<96x128xf32>
    %196 = vector.shape_cast %195 : vector<96x128xf32> to vector<4x24x128xf32>
    %197 = vector.extract_strided_slice %196 {offsets = [0, 0, 0], sizes = [4, 24, 96], strides = [1, 1, 1]} : vector<4x24x128xf32> to vector<4x24x96xf32>
    %198 = vector.extract_strided_slice %196 {offsets = [0, 0, 96], sizes = [4, 24, 32], strides = [1, 1, 1]} : vector<4x24x128xf32> to vector<4x24x32xf32>
    %199 = vector.shape_cast %197 : vector<4x24x96xf32> to vector<4x1x24x96xf32>
    %200 = vector.shape_cast %199 : vector<4x1x24x96xf32> to vector<4x1x24x96xf32>
    %201 = vector.broadcast %200 : vector<4x1x24x96xf32> to vector<4x16x24x96xf32>
    %202 = vector.shape_cast %201 : vector<4x16x24x96xf32> to vector<4x384x96xf32>
    %203 = vector.shape_cast %0 : vector<384x96xf32> to vector<1x384x96xf32>
    %204 = vector.broadcast %203 : vector<1x384x96xf32> to vector<4x384x96xf32>
    %205 = arith.mulf %202, %204 : vector<4x384x96xf32>
    %206 = arith.truncf %198 : vector<4x24x32xf32> to vector<4x24x32xbf16>
    %207 = vector.extract_strided_slice %205 {offsets = [0, 0, 0], sizes = [4, 384, 32], strides = [1, 1, 1]} : vector<4x384x96xf32> to vector<4x384x32xf32>
    %208 = arith.truncf %207 : vector<4x384x32xf32> to vector<4x384x32xbf16>
    "tpu.trace_start"() <{level = 10 : i32, message = "btc,bjc->btj"}> : () -> ()
    %cst_68 = arith.constant dense<0.000000e+00> : vector<4x24x384xf32>
    %209 = tpu.matmul %206, %208, %cst_68 {dimension_numbers = #tpu.dot_dimension_numbers<[2], [2], [1], [1], [0, 0, 0, 1, 1, 1], [0], [0]>} : vector<4x24x32xbf16>, vector<4x384x32xbf16>, vector<4x24x384xf32> -> vector<4x24x384xf32>
    "tpu.trace_stop"() : () -> ()
    %cst_69 = arith.constant dense<0xFF800000> : vector<4x24xf32>
    %210 = vector.multi_reduction <maximumf>, %209, %cst_69 [2] : vector<4x24x384xf32> to vector<4x24xf32>
    %211 = vector.shape_cast %210 : vector<4x24xf32> to vector<4x24x1xf32>
    %212 = vector.broadcast %211 : vector<4x24x1xf32> to vector<4x24x384xf32>
    %213 = arith.subf %209, %212 : vector<4x24x384xf32>
    %214 = math.exp %213 : vector<4x24x384xf32>
    %215 = arith.truncf %214 : vector<4x24x384xf32> to vector<4x24x384xbf16>
    %216 = vector.extract_strided_slice %205 {offsets = [0, 0, 32], sizes = [4, 384, 64], strides = [1, 1, 1]} : vector<4x384x96xf32> to vector<4x384x64xf32>
    %217 = arith.truncf %216 : vector<4x384x64xf32> to vector<4x384x64xbf16>
    "tpu.trace_start"() <{level = 10 : i32, message = "btj,bjc->btc"}> : () -> ()
    %cst_70 = arith.constant dense<0.000000e+00> : vector<4x24x64xf32>
    %218 = tpu.matmul %215, %217, %cst_70 {dimension_numbers = #tpu.dot_dimension_numbers<[2], [1], [1], [2], [0, 0, 0, 1, 1, 2], [0], [0]>} : vector<4x24x384xbf16>, vector<4x384x64xbf16>, vector<4x24x64xf32> -> vector<4x24x64xf32>
    "tpu.trace_stop"() : () -> ()
    %219 = vector.extract_strided_slice %218 {offsets = [0, 0, 0], sizes = [4, 24, 32], strides = [1, 1, 1]} : vector<4x24x64xf32> to vector<4x24x32xf32>
    %220 = vector.shape_cast %219 : vector<4x24x32xf32> to vector<96x32xf32>
    %221 = vector.extract_strided_slice %218 {offsets = [0, 0, 32], sizes = [4, 24, 32], strides = [1, 1, 1]} : vector<4x24x64xf32> to vector<4x24x32xf32>
    %222 = vector.shape_cast %221 : vector<4x24x32xf32> to vector<96x32xf32>
    %cst_71 = arith.constant 1.000000e-30 : f32
    %223 = vector.broadcast %cst_71 : f32 to vector<96x32xf32>
    %224 = arith.maximumf %222, %223 : vector<96x32xf32>
    %225 = tpu.reciprocal %224 {approx = true} : vector<96x32xf32> -> vector<96x32xf32>
    %226 = arith.mulf %220, %225 : vector<96x32xf32>
    %227 = vector.extract_strided_slice %165 {offsets = [0, 256], sizes = [32, 32], strides = [1, 1]} : vector<32x288xbf16> to vector<32x32xbf16>
    %228 = arith.truncf %226 : vector<96x32xf32> to vector<96x32xbf16>
    %cst_72 = arith.constant dense<0.000000e+00> : vector<96x32xf32>
    %229 = tpu.matmul %228, %227, %cst_72 {dimension_numbers = #tpu.dot_dimension_numbers<[1], [0], [0], [1], [0, 0, 1, 1], [], []>} : vector<96x32xbf16>, vector<32x32xbf16>, vector<96x32xf32> -> vector<96x32xf32>
    %230 = arith.addf %163, %229 : vector<96x32xf32>
    %c16 = arith.constant 16 : index
    %c0_73 = arith.constant 0 : index
    %231 = vector.load %arg2[%c16, %c0_73] : memref<24x128xf32, #tpu.memory_space<vmem>>, vector<1x32xf32>
    %232 = vector.broadcast %231 : vector<1x32xf32> to vector<96x32xf32>
    %233 = arith.addf %230, %232 : vector<96x32xf32>
    %c17 = arith.constant 17 : index
    %c0_74 = arith.constant 0 : index
    %234 = vector.load %arg2[%c17, %c0_74] : memref<24x128xf32, #tpu.memory_space<vmem>>, vector<1x32xf32>
    %c18 = arith.constant 18 : index
    %c0_75 = arith.constant 0 : index
    %235 = vector.load %arg2[%c18, %c0_75] : memref<24x128xf32, #tpu.memory_space<vmem>>, vector<1x32xf32>
    %cst_76 = arith.constant dense<0.000000e+00> : vector<96xf32>
    %236 = vector.multi_reduction <add>, %233, %cst_76 [1] : vector<96x32xf32> to vector<96xf32>
    %237 = vector.shape_cast %236 : vector<96xf32> to vector<96x1xf32>
    %cst_77 = arith.constant 3.200000e+01 : f32
    %238 = vector.broadcast %cst_77 : f32 to vector<96x1xf32>
    %239 = arith.divf %237, %238 : vector<96x1xf32>
    %240 = vector.broadcast %239 : vector<96x1xf32> to vector<96x32xf32>
    %241 = arith.subf %233, %240 : vector<96x32xf32>
    %242 = arith.mulf %241, %241 : vector<96x32xf32>
    %cst_78 = arith.constant dense<0.000000e+00> : vector<96xf32>
    %243 = vector.multi_reduction <add>, %242, %cst_78 [1] : vector<96x32xf32> to vector<96xf32>
    %244 = vector.shape_cast %243 : vector<96xf32> to vector<96x1xf32>
    %cst_79 = arith.constant 3.200000e+01 : f32
    %245 = vector.broadcast %cst_79 : f32 to vector<96x1xf32>
    %246 = arith.divf %244, %245 : vector<96x1xf32>
    %247 = vector.broadcast %239 : vector<96x1xf32> to vector<96x32xf32>
    %248 = arith.subf %233, %247 : vector<96x32xf32>
    %cst_80 = arith.constant 9.99999974E-6 : f32
    %249 = vector.broadcast %cst_80 : f32 to vector<96x1xf32>
    %250 = arith.addf %246, %249 : vector<96x1xf32>
    %251 = math.rsqrt %250 : vector<96x1xf32>
    %252 = vector.broadcast %251 : vector<96x1xf32> to vector<96x32xf32>
    %253 = arith.mulf %248, %252 : vector<96x32xf32>
    %254 = vector.broadcast %234 : vector<1x32xf32> to vector<96x32xf32>
    %255 = arith.mulf %253, %254 : vector<96x32xf32>
    %256 = vector.broadcast %235 : vector<1x32xf32> to vector<96x32xf32>
    %257 = arith.addf %255, %256 : vector<96x32xf32>
    %258 = vector.extract_strided_slice %165 {offsets = [0, 128], sizes = [32, 128], strides = [1, 1]} : vector<32x288xbf16> to vector<32x128xbf16>
    %259 = arith.truncf %257 : vector<96x32xf32> to vector<96x32xbf16>
    %cst_81 = arith.constant dense<0.000000e+00> : vector<96x128xf32>
    %260 = tpu.matmul %259, %258, %cst_81 {dimension_numbers = #tpu.dot_dimension_numbers<[1], [0], [0], [1], [0, 0, 1, 1], [], []>} : vector<96x32xbf16>, vector<32x128xbf16>, vector<96x128xf32> -> vector<96x128xf32>
    %c19 = arith.constant 19 : index
    %c0_82 = arith.constant 0 : index
    %261 = vector.load %arg2[%c19, %c0_82] : memref<24x128xf32, #tpu.memory_space<vmem>>, vector<1x128xf32>
    %262 = vector.broadcast %261 : vector<1x128xf32> to vector<96x128xf32>
    %263 = arith.addf %260, %262 : vector<96x128xf32>
    %cst_83 = arith.constant 5.000000e-01 : f32
    %264 = vector.broadcast %cst_83 : f32 to vector<96x128xf32>
    %265 = arith.mulf %264, %263 : vector<96x128xf32>
    %cst_84 = arith.constant 0.707106769 : f32
    %266 = vector.broadcast %cst_84 : f32 to vector<96x128xf32>
    %267 = arith.mulf %263, %266 : vector<96x128xf32>
    %cst_85 = arith.constant 0.000000e+00 : f32
    %268 = vector.broadcast %cst_85 : f32 to vector<96x128xf32>
    %269 = arith.cmpf oge, %267, %268 : vector<96x128xf32>
    %cst_86 = arith.constant 1.000000e+00 : f32
    %cst_87 = arith.constant -1.000000e+00 : f32
    %270 = vector.broadcast %cst_86 : f32 to vector<96x128xf32>
    %271 = vector.broadcast %cst_87 : f32 to vector<96x128xf32>
    %272 = arith.select %269, %270, %271 : vector<96x128xi1>, vector<96x128xf32>
    %273 = math.absf %267 : vector<96x128xf32>
    %cst_88 = arith.constant 0.327591091 : f32
    %274 = vector.broadcast %cst_88 : f32 to vector<96x128xf32>
    %275 = arith.mulf %274, %273 : vector<96x128xf32>
    %cst_89 = arith.constant 1.000000e+00 : f32
    %276 = vector.broadcast %cst_89 : f32 to vector<96x128xf32>
    %277 = arith.addf %276, %275 : vector<96x128xf32>
    %cst_90 = arith.constant 1.000000e+00 : f32
    %278 = vector.broadcast %cst_90 : f32 to vector<96x128xf32>
    %279 = arith.divf %278, %277 : vector<96x128xf32>
    %cst_91 = arith.constant 1.06140542 : f32
    %280 = vector.broadcast %cst_91 : f32 to vector<96x128xf32>
    %281 = arith.mulf %280, %279 : vector<96x128xf32>
    %cst_92 = arith.constant -1.45315206 : f32
    %282 = vector.broadcast %cst_92 : f32 to vector<96x128xf32>
    %283 = arith.addf %281, %282 : vector<96x128xf32>
    %284 = arith.mulf %283, %279 : vector<96x128xf32>
    %cst_93 = arith.constant 1.42141378 : f32
    %285 = vector.broadcast %cst_93 : f32 to vector<96x128xf32>
    %286 = arith.addf %284, %285 : vector<96x128xf32>
    %287 = arith.mulf %286, %279 : vector<96x128xf32>
    %cst_94 = arith.constant -0.284496725 : f32
    %288 = vector.broadcast %cst_94 : f32 to vector<96x128xf32>
    %289 = arith.addf %287, %288 : vector<96x128xf32>
    %290 = arith.mulf %289, %279 : vector<96x128xf32>
    %cst_95 = arith.constant 0.254829586 : f32
    %291 = vector.broadcast %cst_95 : f32 to vector<96x128xf32>
    %292 = arith.addf %290, %291 : vector<96x128xf32>
    %293 = arith.mulf %292, %279 : vector<96x128xf32>
    %cst_96 = arith.constant 0.000000e+00 : f32
    %294 = vector.broadcast %cst_96 : f32 to vector<96x128xf32>
    %295 = arith.subf %294, %273 : vector<96x128xf32>
    %296 = arith.mulf %295, %273 : vector<96x128xf32>
    %297 = math.exp %296 : vector<96x128xf32>
    %298 = arith.mulf %293, %297 : vector<96x128xf32>
    %cst_97 = arith.constant 1.000000e+00 : f32
    %299 = vector.broadcast %cst_97 : f32 to vector<96x128xf32>
    %300 = arith.subf %299, %298 : vector<96x128xf32>
    %301 = arith.mulf %272, %300 : vector<96x128xf32>
    %cst_98 = arith.constant 1.000000e+00 : f32
    %302 = vector.broadcast %cst_98 : f32 to vector<96x128xf32>
    %303 = arith.addf %302, %301 : vector<96x128xf32>
    %304 = arith.mulf %265, %303 : vector<96x128xf32>
    %c1_99 = arith.constant 1 : index
    %c0_100 = arith.constant 0 : index
    %c0_101 = arith.constant 0 : index
    %305 = vector.load %arg5[%c1_99, %c0_100, %c0_101] : memref<2x128x32xbf16, #tpu.memory_space<vmem>>, vector<1x128x32xbf16>
    %306 = vector.shape_cast %305 : vector<1x128x32xbf16> to vector<128x32xbf16>
    %307 = arith.truncf %304 : vector<96x128xf32> to vector<96x128xbf16>
    %cst_102 = arith.constant dense<0.000000e+00> : vector<96x32xf32>
    %308 = tpu.matmul %307, %306, %cst_102 {dimension_numbers = #tpu.dot_dimension_numbers<[1], [0], [0], [1], [0, 0, 1, 1], [], []>} : vector<96x128xbf16>, vector<128x32xbf16>, vector<96x32xf32> -> vector<96x32xf32>
    %309 = arith.addf %233, %308 : vector<96x32xf32>
    %c20 = arith.constant 20 : index
    %c0_103 = arith.constant 0 : index
    %310 = vector.load %arg2[%c20, %c0_103] : memref<24x128xf32, #tpu.memory_space<vmem>>, vector<1x32xf32>
    %311 = vector.broadcast %310 : vector<1x32xf32> to vector<96x32xf32>
    %312 = arith.addf %309, %311 : vector<96x32xf32>
    %313 = vector.shape_cast %312 : vector<96x32xf32> to vector<4x24x32xf32>
    %314 = vector.extract_strided_slice %313 {offsets = [0, 8, 0], sizes = [4, 16, 32], strides = [1, 1, 1]} : vector<4x24x32xf32> to vector<4x16x32xf32>
    %315 = vector.shape_cast %314 : vector<4x16x32xf32> to vector<64x32xf32>
    %c2 = arith.constant 2 : index
    %c0_104 = arith.constant 0 : index
    %316 = vector.load %arg2[%c2, %c0_104] : memref<24x128xf32, #tpu.memory_space<vmem>>, vector<1x32xf32>
    %c3 = arith.constant 3 : index
    %c0_105 = arith.constant 0 : index
    %317 = vector.load %arg2[%c3, %c0_105] : memref<24x128xf32, #tpu.memory_space<vmem>>, vector<1x32xf32>
    %cst_106 = arith.constant dense<0.000000e+00> : vector<64xf32>
    %318 = vector.multi_reduction <add>, %315, %cst_106 [1] : vector<64x32xf32> to vector<64xf32>
    %319 = vector.shape_cast %318 : vector<64xf32> to vector<64x1xf32>
    %cst_107 = arith.constant 3.200000e+01 : f32
    %320 = vector.broadcast %cst_107 : f32 to vector<64x1xf32>
    %321 = arith.divf %319, %320 : vector<64x1xf32>
    %322 = vector.broadcast %321 : vector<64x1xf32> to vector<64x32xf32>
    %323 = arith.subf %315, %322 : vector<64x32xf32>
    %324 = arith.mulf %323, %323 : vector<64x32xf32>
    %cst_108 = arith.constant dense<0.000000e+00> : vector<64xf32>
    %325 = vector.multi_reduction <add>, %324, %cst_108 [1] : vector<64x32xf32> to vector<64xf32>
    %326 = vector.shape_cast %325 : vector<64xf32> to vector<64x1xf32>
    %cst_109 = arith.constant 3.200000e+01 : f32
    %327 = vector.broadcast %cst_109 : f32 to vector<64x1xf32>
    %328 = arith.divf %326, %327 : vector<64x1xf32>
    %329 = vector.broadcast %321 : vector<64x1xf32> to vector<64x32xf32>
    %330 = arith.subf %315, %329 : vector<64x32xf32>
    %cst_110 = arith.constant 9.99999974E-6 : f32
    %331 = vector.broadcast %cst_110 : f32 to vector<64x1xf32>
    %332 = arith.addf %328, %331 : vector<64x1xf32>
    %333 = math.rsqrt %332 : vector<64x1xf32>
    %334 = vector.broadcast %333 : vector<64x1xf32> to vector<64x32xf32>
    %335 = arith.mulf %330, %334 : vector<64x32xf32>
    %336 = vector.broadcast %316 : vector<1x32xf32> to vector<64x32xf32>
    %337 = arith.mulf %335, %336 : vector<64x32xf32>
    %338 = vector.broadcast %317 : vector<1x32xf32> to vector<64x32xf32>
    %339 = arith.addf %337, %338 : vector<64x32xf32>
    %c0_111 = arith.constant 0 : index
    %c0_112 = arith.constant 0 : index
    %340 = vector.load %arg6[%c0_111, %c0_112] : memref<32x160xbf16, #tpu.memory_space<vmem>>, vector<32x128xbf16>
    %341 = arith.truncf %339 : vector<64x32xf32> to vector<64x32xbf16>
    %cst_113 = arith.constant dense<0.000000e+00> : vector<64x128xf32>
    %342 = tpu.matmul %341, %340, %cst_113 {dimension_numbers = #tpu.dot_dimension_numbers<[1], [0], [0], [1], [0, 0, 1, 1], [], []>} : vector<64x32xbf16>, vector<32x128xbf16>, vector<64x128xf32> -> vector<64x128xf32>
    %c4 = arith.constant 4 : index
    %c0_114 = arith.constant 0 : index
    %343 = vector.load %arg2[%c4, %c0_114] : memref<24x128xf32, #tpu.memory_space<vmem>>, vector<1x128xf32>
    %344 = vector.broadcast %343 : vector<1x128xf32> to vector<64x128xf32>
    %345 = arith.addf %342, %344 : vector<64x128xf32>
    %346 = vector.shape_cast %345 : vector<64x128xf32> to vector<4x16x128xf32>
    %c0_115 = arith.constant 0 : index
    %c0_116 = arith.constant 0 : index
    %c0_117 = arith.constant 0 : index
    %347 = vector.load %arg7[%c0_115, %c0_116, %c0_117] : memref<4x16x128xf32, #tpu.memory_space<vmem>>, vector<4x16x128xf32>
    tpu.vector_store %arg7[%c0_115, %c0_116, %c0_117], %346 {strides = array<i32>} : memref<4x16x128xf32, #tpu.memory_space<vmem>>, vector<4x16x128xf32>,
    return
  }
  func.func @transform_0(%arg0: i32) -> (i32, i32, i32) {
    %c0_i32 = arith.constant 0 : i32
    %c0_i32_0 = arith.constant 0 : i32
    %c0_i32_1 = arith.constant 0 : i32
    return %arg0, %c0_i32, %c0_i32_0 : i32, i32, i32
  }
  func.func @transform_1(%arg0: i32) -> (i32, i32) {
    %c0_i32 = arith.constant 0 : i32
    %c0_i32_0 = arith.constant 0 : i32
    %c0_i32_1 = arith.constant 0 : i32
    return %c0_i32, %c0_i32_0 : i32, i32
  }
  func.func @transform_2(%arg0: i32) -> (i32, i32) {
    %c0_i32 = arith.constant 0 : i32
    %c0_i32_0 = arith.constant 0 : i32
    %c0_i32_1 = arith.constant 0 : i32
    return %c0_i32, %c0_i32_0 : i32, i32
  }
  func.func @transform_3(%arg0: i32) -> (i32, i32, i32) {
    %c0_i32 = arith.constant 0 : i32
    %c0_i32_0 = arith.constant 0 : i32
    %c0_i32_1 = arith.constant 0 : i32
    %c0_i32_2 = arith.constant 0 : i32
    return %c0_i32, %c0_i32_0, %c0_i32_1 : i32, i32, i32
  }
  func.func @transform_4(%arg0: i32) -> (i32, i32, i32) {
    %c0_i32 = arith.constant 0 : i32
    %c0_i32_0 = arith.constant 0 : i32
    %c0_i32_1 = arith.constant 0 : i32
    %c0_i32_2 = arith.constant 0 : i32
    return %c0_i32, %c0_i32_0, %c0_i32_1 : i32, i32, i32
  }
  func.func @transform_5(%arg0: i32) -> (i32, i32) {
    %c0_i32 = arith.constant 0 : i32
    %c0_i32_0 = arith.constant 0 : i32
    %c0_i32_1 = arith.constant 0 : i32
    return %c0_i32, %c0_i32_0 : i32, i32
  }
  func.func @transform_6(%arg0: i32) -> (i32, i32, i32) {
    %c0_i32 = arith.constant 0 : i32
    %c0_i32_0 = arith.constant 0 : i32
    %c0_i32_1 = arith.constant 0 : i32
    return %arg0, %c0_i32, %c0_i32_0 : i32, i32, i32
  }
}

</mosaic_0001>

<llo_original>
// kernel: tpu_custom_call.1
$region0: #{tpu_custom_call.1}
  #allocation0 [shape = 'u32[]', space=smem, size = 0x4, offset = 0x4, fixed_abs, tag = 'smem constant byte address 0x4 - core index']
  #allocation1 [shape = 'u32[144,128]{1,0:T(1,128)}', space=vmem, size = 0x12000, scoped, tag = 'internal scratch']
  %s0 = inlined_call_operand.vmem [shape: f32[4,8,32], index: 0, kind: input, shape index: {}]
  %s1 = inlined_call_operand.vmem [shape: f32[24,128], index: 1, kind: input, shape index: {}]
  %s2 = inlined_call_operand.vmem [shape: f32[384,96], index: 2, kind: input, shape index: {}]
  %s3 = inlined_call_operand.vmem [shape: bf16[2,32,288], index: 3, kind: input, shape index: {}]
  %s4 = inlined_call_operand.vmem [shape: bf16[2,128,32], index: 4, kind: input, shape index: {}]
  %s5 = inlined_call_operand.vmem [shape: bf16[32,160], index: 5, kind: input, shape index: {}]
  %s6 = inlined_call_operand.hbm [shape: f32[4,16,128], index: 6, kind: output, shape index: {}]
  %s7 = sld [smem:[#allocation0]]
  $region34: #{tpu_custom_call.1} parent=0
    _
  %s9 = ssub.s32 1, %s7
  %s10 = scalar_select 0, %s9, %s7
  $region1: #{tpu_custom_call.1} parent=0
    #allocation2 [shape = 'u8[32768]{0}', space=vmem, size = 0x8000, scoped, tag = 'output window, operand 0, single buffered']
    #allocation3 [shape = 's32[1]{0}', space=sflag, size = 0x4, scoped, tag = 'scoped memory for tpu_custom_call.1']
    %11 = vsyncpa [#allocation3], 0
    // Predicated region
    $region2: #{tpu_custom_call.1} parent=1 // pred_check
      _
    $region3: #{tpu_custom_call.1} parent=1 // pred_check_branch
      %13 = sbr.rel (0) target = $region5
    $region4: #{tpu_custom_call.1} parent=1 // pred_region
      _
    $region5: #{tpu_custom_call.1} parent=1 // pred_fallthru
      _
    // Predicated region
    $region6: #{tpu_custom_call.1} parent=1 // pred_check
      _
    $region7: #{tpu_custom_call.1} parent=1 // pred_check_branch
      %15 = sbr.rel (0) target = $region9
    $region8: #{tpu_custom_call.1} parent=1 // pred_region
      _
    $region9: #{tpu_custom_call.1} parent=1 // pred_fallthru
      _
    // Predicated region
    $region10: #{tpu_custom_call.1} parent=1 // pred_check
      _
    $region11: #{tpu_custom_call.1} parent=1 // pred_check_branch
      %17 = sbr.rel (0) target = $region13
    $region12: #{tpu_custom_call.1} parent=1 // pred_region
      _
    $region13: #{tpu_custom_call.1} parent=1 // pred_fallthru
      _
    // Predicated region
    $region14: #{tpu_custom_call.1} parent=1 // pred_check
      _
    $region15: #{tpu_custom_call.1} parent=1 // pred_check_branch
      %19 = sbr.rel (0) target = $region17
    $region16: #{tpu_custom_call.1} parent=1 // pred_region
      _
    $region17: #{tpu_custom_call.1} parent=1 // pred_fallthru
      _
    // Predicated region
    $region18: #{tpu_custom_call.1} parent=1 // pred_check
      _
    $region19: #{tpu_custom_call.1} parent=1 // pred_check_branch
      %21 = sbr.rel (0) target = $region21
    $region20: #{tpu_custom_call.1} parent=1 // pred_region
      _
    $region21: #{tpu_custom_call.1} parent=1 // pred_fallthru
      _
    // Predicated region
    $region22: #{tpu_custom_call.1} parent=1 // pred_check
      _
    $region23: #{tpu_custom_call.1} parent=1 // pred_check_branch
      %23 = sbr.rel (0) target = $region25
    $region24: #{tpu_custom_call.1} parent=1 // pred_region
      _
    $region25: #{tpu_custom_call.1} parent=1 // pred_fallthru
      _
    %v25 = vld [vmem:[%s2] sm:$0xff]
    %v26 = vld [vmem:[%s2 + $0x8] sm:$0xff]
    %v27 = vld [vmem:[%s2 + $0x10] sm:$0xff]
    %v28 = vld [vmem:[%s2 + $0x18] sm:$0xff]
    %v29 = vld [vmem:[%s2 + $0x20] sm:$0xff]
    %v30 = vld [vmem:[%s2 + $0x28] sm:$0xff]
    %v31 = vld [vmem:[%s2 + $0x30] sm:$0xff]
    %v32 = vld [vmem:[%s2 + $0x38] sm:$0xff]
    %v33 = vld [vmem:[%s2 + $0x40] sm:$0xff]
    %v34 = vld [vmem:[%s2 + $0x48] sm:$0xff]
    %v35 = vld [vmem:[%s2 + $0x50] sm:$0xff]
    %v36 = vld [vmem:[%s2 + $0x58] sm:$0xff]
    %v37 = vld [vmem:[%s2 + $0x60] sm:$0xff]
    %v38 = vld [vmem:[%s2 + $0x68] sm:$0xff]
    %v39 = vld [vmem:[%s2 + $0x70] sm:$0xff]
    %v40 = vld [vmem:[%s2 + $0x78] sm:$0xff]
    %v41 = vld [vmem:[%s2 + $0x80] sm:$0xff]
    %v42 = vld [vmem:[%s2 + $0x88] sm:$0xff]
    %v43 = vld [vmem:[%s2 + $0x90] sm:$0xff]
    %v44 = vld [vmem:[%s2 + $0x98] sm:$0xff]
    %v45 = vld [vmem:[%s2 + $0xa0] sm:$0xff]
    %v46 = vld [vmem:[%s2 + $0xa8] sm:$0xff]
    %v47 = vld [vmem:[%s2 + $0xb0] sm:$0xff]
    %v48 = vld [vmem:[%s2 + $0xb8] sm:$0xff]
    %v49 = vld [vmem:[%s2 + $0xc0] sm:$0xff]
    %v50 = vld [vmem:[%s2 + $0xc8] sm:$0xff]
    %v51 = vld [vmem:[%s2 + $0xd0] sm:$0xff]
    %v52 = vld [vmem:[%s2 + $0xd8] sm:$0xff]
    %v53 = vld [vmem:[%s2 + $0xe0] sm:$0xff]
    %v54 = vld [vmem:[%s2 + $0xe8] sm:$0xff]
    %v55 = vld [vmem:[%s2 + $0xf0] sm:$0xff]
    %v56 = vld [vmem:[%s2 + $0xf8] sm:$0xff]
    %v57 = vld [vmem:[%s2 + $0x100] sm:$0xff]
    %v58 = vld [vmem:[%s2 + $0x108] sm:$0xff]
    %v59 = vld [vmem:[%s2 + $0x110] sm:$0xff]
    %v60 = vld [vmem:[%s2 + $0x118] sm:$0xff]
    %v61 = vld [vmem:[%s2 + $0x120] sm:$0xff]
    %v62 = vld [vmem:[%s2 + $0x128] sm:$0xff]
    %v63 = vld [vmem:[%s2 + $0x130] sm:$0xff]
    %v64 = vld [vmem:[%s2 + $0x138] sm:$0xff]
    %v65 = vld [vmem:[%s2 + $0x140] sm:$0xff]
    %v66 = vld [vmem:[%s2 + $0x148] sm:$0xff]
    %v67 = vld [vmem:[%s2 + $0x150] sm:$0xff]
    %v68 = vld [vmem:[%s2 + $0x158] sm:$0xff]
    %v69 = vld [vmem:[%s2 + $0x160] sm:$0xff]
    %v70 = vld [vmem:[%s2 + $0x168] sm:$0xff]
    %v71 = vld [vmem:[%s2 + $0x170] sm:$0xff]
    %v72 = vld [vmem:[%s2 + $0x178] sm:$0xff]
    %v73 = vld [vmem:[%s0] sm:$0xff]
    %v74 = vld [vmem:[%s0 + $0x8] sm:$0xff]
    %v75 = vld [vmem:[%s0 + $0x10] sm:$0xff]
    %v76 = vld [vmem:[%s0 + $0x18] sm:$0xff]
    %v77 = vld [vmem:[%s5 + $0x4] sm:$0xf]
    %v78 = vld [vmem:[%s5 + $0xc] sm:$0xf]
    %v79 = vld [vmem:[%s5 + $0x14] sm:$0xf]
    %v80 = vld [vmem:[%s5 + $0x1c] sm:$0xf]
    %v81 = vpack.c.bf16 %v74, %v73
    %v82 = vpack.c.bf16 %v76, %v75
    %v83 = vld [vmem:[%s1 + $0x1] sm:$0x1]
    %v84 = vlaneseq
    %v85 = vshrl.u32 %v84, 7
    %v86 = vsub.s32 0, %v85
    %v87 = vrot.slane %v83, %v86
    %v92 = vunpack.c.l.b16 %v77
    %v93 = vunpack.c.l.b16 %v78
    %v94 = vunpack.c.l.b16 %v79
    %v95 = vunpack.c.l.b16 %v80
    %v96 = vpack.c.b16 %v93, %v92
    %v97 = vpack.c.b16 %v95, %v94
    %vm100 = vcmask 261120
    %v102 = vsel %vm100, %v81, 0
    %v105 = vsel %vm100, %v82, 0
    %107 = vmatprep.subr.bf16.mxu0 0
    %108 = vmatpush1.bf16.msra.mxu0 0
    %109 = vmatprep.subr.bf16.mxu0 0
    %110 = vmatpush1.bf16.msra.mxu0 0
    %111 = vmatprep.subr.bf16.mxu0 0
    %112 = vmatpush1.bf16.msra.mxu0 0
    %113 = vmatprep.subr.bf16.mxu0 0
    %114 = vmatpush1.bf16.msra.mxu0 0
    %115 = vmatprep.subr.bf16.mxu0 0
    %116 = vmatpush1.bf16.msra.mxu0 0
    %117 = vmatprep.subr.bf16.mxu0 0
    %118 = vmatpush1.bf16.msra.mxu0 0
    %119 = vmatprep.subr.bf16.mxu0 0
    %120 = vmatpush1.bf16.msra.mxu0 %v97
    %121 = vmatprep.subr.bf16.mxu0 0
    %122 = vmatpush1.bf16.msra.mxu0 %v96
    %123 = vmatprep.subr.bf16.mxu0 0
    %124 = vmatpush2.bf16.msra.mxu0 0
    %125 = vmatprep.subr.bf16.mxu0 0
    %126 = vmatpush2.bf16.msra.mxu0 0
    %127 = vmatprep.subr.bf16.mxu0 0
    %128 = vmatpush2.bf16.msra.mxu0 0
    %129 = vmatprep.subr.bf16.mxu0 0
    %130 = vmatpush2.bf16.msra.mxu0 0
    %131 = vmatprep.subr.bf16.mxu0 0
    %132 = vmatpush2.bf16.msra.mxu0 0
    %133 = vmatprep.subr.bf16.mxu0 0
    %134 = vmatpush2.bf16.msra.mxu0 0
    %135 = vmatprep.subr.bf16.mxu0 0
    %136 = vmatpush2.bf16.msra.mxu0 0
    %137 = vmatprep.subr.bf16.mxu0 0
    %138 = vmatpush2.bf16.msra.mxu0 0
    %139 = vmatprep.mubr.bf16.mxu0 0
    %140 = vmatmul.mubr.bf16.gmra.mxu0 %v102
    %v141 = vpop.f32.mrf.mxu0
    %v142 = vadd.f32 %v87, %v141
    %v143 = vpop.f32.mrf.mxu0
    %v144 = vpop.f32.mrf.mxu0
    %v145 = vadd.f32 %v87, %v144
    %v146 = vpop.f32.mrf.mxu0
    %147 = vmatprep.mubr.bf16.mxu0 0
    %148 = vmatmul.mubr.bf16.gmra.mxu0 %v105
    %v149 = vpop.f32.mrf.mxu0
    %v150 = vadd.f32 %v87, %v149
    %v151 = vpop.f32.mrf.mxu0
    %v152 = vpop.f32.mrf.mxu0
    %v153 = vadd.f32 %v87, %v152
    %v154 = vpop.f32.mrf.mxu0
    %155 = vdwg.mxu0
    %v156 = vld [vmem:[%s1] sm:$0x1]
    %v157 = vlaneseq
    %v158 = vshrl.u32 %v157, 7
    %v159 = vsub.s32 0, %v158
    %v160 = vrot.slane %v156, %v159
    %v161 = vld [vmem:[%s3] sm:$0xff]
    %v162 = vld [vmem:[%s3 + $0x8] sm:$0xf]
    %v163 = vld [vmem:[%s3 + $0xc] sm:$0xff]
    %v164 = vld [vmem:[%s3 + $0x14] sm:$0xf]
    %v165 = vld [vmem:[%s3 + $0x18] sm:$0xff]
    %v166 = vld [vmem:[%s3 + $0x20] sm:$0xf]
    %v167 = vld [vmem:[%s3 + $0x24] sm:$0xff]
    %v168 = vld [vmem:[%s3 + $0x2c] sm:$0xf]
    %v169 = vld [vmem:[%s1 + $0x5] sm:$0x1]
    %v170 = vld [vmem:[%s1 + $0x6] sm:$0x1]
    %v171 = vsel %vm100, %v142, 0.0
    %172 = vadd.xlane.f32.xlu0 %v171
    %v173 = vpop.xlane.xlu0 %172
    %v174 = vsel %vm100, %v160, 0.0
    %175 = vadd.xlane.f32.xlu0 %v174
    %v176 = vpop.xlane.xlu0 %175
    %v177 = vsel %vm100, %v145, 0.0
    %178 = vadd.xlane.f32.xlu0 %v177
    %v179 = vpop.xlane.xlu0 %178
    %v180 = vsel %vm100, %v150, 0.0
    %181 = vadd.xlane.f32.xlu0 %v180
    %v182 = vpop.xlane.xlu0 %181
    %v183 = vsel %vm100, %v153, 0.0
    %184 = vadd.xlane.f32.xlu0 %v183
    %v185 = vpop.xlane.xlu0 %184
    %v186 = vrcp.pop 32.0
    %v187 = vmul.f32 %v173, %v186
    %v188 = vmul.f32 %v176, %v186
    %v189 = vmul.f32 %v179, %v186
    %v190 = vmul.f32 %v182, %v186
    %v191 = vmul.f32 %v185, %v186
    %v192 = vsub.f32 %v142, %v187
    %v193 = vsub.f32 %v160, %v188
    %v194 = vsub.f32 %v145, %v189
    %v195 = vsub.f32 %v150, %v190
    %v196 = vsub.f32 %v153, %v191
    %v197 = vmul.f32 %v192, %v192
    %v198 = vmul.f32 %v193, %v193
    %v199 = vmul.f32 %v194, %v194
    %v200 = vmul.f32 %v195, %v195
    %v201 = vmul.f32 %v196, %v196
    %v202 = vsel %vm100, %v197, 0.0
    %203 = vadd.xlane.f32.xlu0 %v202
    %v204 = vpop.xlane.xlu0 %203
    %v205 = vsel %vm100, %v198, 0.0
    %206 = vadd.xlane.f32.xlu0 %v205
    %v207 = vpop.xlane.xlu0 %206
    %v208 = vsel %vm100, %v199, 0.0
    %209 = vadd.xlane.f32.xlu0 %v208
    %v210 = vpop.xlane.xlu0 %209
    %v211 = vsel %vm100, %v200, 0.0
    %212 = vadd.xlane.f32.xlu0 %v211
    %v213 = vpop.xlane.xlu0 %212
    %v214 = vsel %vm100, %v201, 0.0
    %215 = vadd.xlane.f32.xlu0 %v214
    %v216 = vpop.xlane.xlu0 %215
    %v217 = vmul.f32 %v204, %v186
    %v218 = vmul.f32 %v207, %v186
    %v219 = vmul.f32 %v210, %v186
    %v220 = vmul.f32 %v213, %v186
    %v221 = vmul.f32 %v216, %v186
    %v222 = vadd.f32 %v217, 1e-05
    %v223 = vadd.f32 %v218, 1e-05
    %v224 = vadd.f32 %v219, 1e-05
    %v225 = vadd.f32 %v220, 1e-05
    %v226 = vadd.f32 %v221, 1e-05
    %v227 = vrsqrt.pop %v222
    %v228 = vrsqrt.pop %v223
    %v229 = vrsqrt.pop %v224
    %v230 = vrsqrt.pop %v225
    %v231 = vrsqrt.pop %v226
    %v232 = vmul.f32 %v192, %v227
    %v233 = vmul.f32 %v193, %v228
    %v234 = vmul.f32 %v194, %v229
    %v235 = vmul.f32 %v195, %v230
    %v236 = vmul.f32 %v196, %v231
    %v237 = vlaneseq
    %v238 = vshrl.u32 %v237, 7
    %v239 = vsub.s32 0, %v238
    %v240 = vrot.slane %v169, %v239
    %v241 = vmul.f32 %v232, %v240
    %v242 = vmul.f32 %v233, %v240
    %v243 = vmul.f32 %v234, %v240
    %v244 = vmul.f32 %v235, %v240
    %v245 = vmul.f32 %v236, %v240
    %v246 = vlaneseq
    %v247 = vshrl.u32 %v246, 7
    %v248 = vsub.s32 0, %v247
    %v249 = vrot.slane %v170, %v248
    %v250 = vadd.f32 %v241, %v249
    %v251 = vadd.f32 %v242, %v249
    %v252 = vadd.f32 %v243, %v249
    %v253 = vadd.f32 %v244, %v249
    %v254 = vadd.f32 %v245, %v249
    %v255 = vpack.c.bf16 %v251, %v250
    %v256 = vpack.c.bf16 %v252, %v251
    %v257 = vpack.c.bf16 %v251, %v251
    %v258 = vpack.c.bf16 %v251, %v253
    %v259 = vpack.c.bf16 %v254, %v251
    %v260 = vld [vmem:[%s1 + $0x7] sm:$0x1]
    %v261 = vlaneseq
    %v262 = vshrl.u32 %v261, 7
    %v263 = vsub.s32 0, %v262
    %v264 = vrot.slane %v260, %v263
    %v269 = vunpack.c.l.b16 %v161
    %v270 = vunpack.c.l.b16 %v163
    %v271 = vunpack.c.l.b16 %v165
    %v272 = vunpack.c.l.b16 %v167
    %v273 = vpack.c.b16 %v270, %v269
    %v274 = vpack.c.b16 %v272, %v271
    %v278 = vsel %vm100, %v255, 0
    %v281 = vsel %vm100, %v256, 0
    %v284 = vsel %vm100, %v257, 0
    %v287 = vsel %vm100, %v258, 0
    %v290 = vsel %vm100, %v259, 0
    %292 = vmatprep.subr.bf16.mxu0 0
    %293 = vmatpush1.bf16.msra.mxu0 0
    %294 = vmatprep.subr.bf16.mxu0 0
    %295 = vmatpush1.bf16.msra.mxu0 0
    %296 = vmatprep.subr.bf16.mxu0 0
    %297 = vmatpush1.bf16.msra.mxu0 0
    %298 = vmatprep.subr.bf16.mxu0 0
    %299 = vmatpush1.bf16.msra.mxu0 0
    %300 = vmatprep.subr.bf16.mxu0 0
    %301 = vmatpush1.bf16.msra.mxu0 0
    %302 = vmatprep.subr.bf16.mxu0 0
    %303 = vmatpush1.bf16.msra.mxu0 0
    %304 = vmatprep.subr.bf16.mxu0 0
    %305 = vmatpush1.bf16.msra.mxu0 %v274
    %306 = vmatprep.subr.bf16.mxu0 0
    %307 = vmatpush1.bf16.msra.mxu0 %v273
    %308 = vmatprep.subr.bf16.mxu0 0
    %309 = vmatpush2.bf16.msra.mxu0 0
    %310 = vmatprep.subr.bf16.mxu0 0
    %311 = vmatpush2.bf16.msra.mxu0 0
    %312 = vmatprep.subr.bf16.mxu0 0
    %313 = vmatpush2.bf16.msra.mxu0 0
    %314 = vmatprep.subr.bf16.mxu0 0
    %315 = vmatpush2.bf16.msra.mxu0 0
    %316 = vmatprep.subr.bf16.mxu0 0
    %317 = vmatpush2.bf16.msra.mxu0 0
    %318 = vmatprep.subr.bf16.mxu0 0
    %319 = vmatpush2.bf16.msra.mxu0 0
    %320 = vmatprep.subr.bf16.mxu0 0
    %321 = vmatpush2.bf16.msra.mxu0 0
    %322 = vmatprep.subr.bf16.mxu0 0
    %323 = vmatpush2.bf16.msra.mxu0 0
    %324 = vmatprep.mubr.bf16.mxu0 0
    %325 = vmatmul.mubr.bf16.gmra.mxu0 %v278
    %v326 = vpop.f32.mrf.mxu0
    %v327 = vadd.f32 %v264, %v326
    %v328 = vpop.f32.mrf.mxu0
    %v329 = vpop.f32.mrf.mxu0
    %v330 = vadd.f32 %v264, %v329
    %v331 = vpop.f32.mrf.mxu0
    %332 = vmatprep.mubr.bf16.mxu0 0
    %333 = vmatmul.mubr.bf16.gmra.mxu0 %v281
    %v334 = vpop.f32.mrf.mxu0
    %v335 = vadd.f32 %v264, %v334
    %v336 = vpop.f32.mrf.mxu0
    %v337 = vpop.f32.mrf.mxu0
    %v338 = vadd.f32 %v264, %v337
    %v339 = vpop.f32.mrf.mxu0
    %340 = vmatprep.mubr.bf16.mxu0 0
    %341 = vmatmul.mubr.bf16.gmra.mxu0 %v284
    %v342 = vpop.f32.mrf.mxu0
    %v343 = vadd.f32 %v264, %v342
    %v344 = vpop.f32.mrf.mxu0
    %v345 = vpop.f32.mrf.mxu0
    %v346 = vadd.f32 %v264, %v345
    %v347 = vpop.f32.mrf.mxu0
    %348 = vmatprep.mubr.bf16.mxu0 0
    %349 = vmatmul.mubr.bf16.gmra.mxu0 %v287
    %v350 = vpop.f32.mrf.mxu0
    %v351 = vadd.f32 %v264, %v350
    %v352 = vpop.f32.mrf.mxu0
    %v353 = vpop.f32.mrf.mxu0
    %v354 = vadd.f32 %v264, %v353
    %v355 = vpop.f32.mrf.mxu0
    %356 = vmatprep.mubr.bf16.mxu0 0
    %357 = vmatmul.mubr.bf16.gmra.mxu0 %v290
    %v358 = vpop.f32.mrf.mxu0
    %v359 = vadd.f32 %v264, %v358
    %v360 = vpop.f32.mrf.mxu0
    %v361 = vpop.f32.mrf.mxu0
    %v362 = vadd.f32 %v264, %v361
    %v363 = vpop.f32.mrf.mxu0
    %364 = vmatprep.mubr.bf16.mxu0 0
    %365 = vmatmul.mubr.bf16.gmra.mxu0 %v284
    %v366 = vpop.f32.mrf.mxu0
    %v367 = vadd.f32 %v264, %v366
    %v368 = vpop.f32.mrf.mxu0
    %v369 = vpop.f32.mrf.mxu0
    %v370 = vadd.f32 %v264, %v369
    %v371 = vpop.f32.mrf.mxu0
    %372 = vdwg.mxu0
    %v373 = vmul.f32 %v327, %v25
    %v374 = vmul.f32 %v330, %v26
    %v375 = vmul.f32 %v335, %v27
    %v376 = vmul.f32 %v327, %v28
    %v377 = vmul.f32 %v330, %v29
    %v378 = vmul.f32 %v335, %v30
    %v379 = vmul.f32 %v327, %v31
    %v380 = vmul.f32 %v330, %v32
    %v381 = vmul.f32 %v335, %v33
    %v382 = vmul.f32 %v327, %v34
    %v383 = vmul.f32 %v330, %v35
    %v384 = vmul.f32 %v335, %v36
    %v385 = vmul.f32 %v327, %v37
    %v386 = vmul.f32 %v330, %v38
    %v387 = vmul.f32 %v335, %v39
    %v388 = vmul.f32 %v327, %v40
    %v389 = vmul.f32 %v330, %v41
    %v390 = vmul.f32 %v335, %v42
    %v391 = vmul.f32 %v327, %v43
    %v392 = vmul.f32 %v330, %v44
    %v393 = vmul.f32 %v335, %v45
    %v394 = vmul.f32 %v327, %v46
    %v395 = vmul.f32 %v330, %v47
    %v396 = vmul.f32 %v335, %v48
    %v397 = vmul.f32 %v327, %v49
    %v398 = vmul.f32 %v330, %v50
    %v399 = vmul.f32 %v335, %v51
    %v400 = vmul.f32 %v327, %v52
    %v401 = vmul.f32 %v330, %v53
    %v402 = vmul.f32 %v335, %v54
    %v403 = vmul.f32 %v327, %v55
    %v404 = vmul.f32 %v330, %v56
    %v405 = vmul.f32 %v335, %v57
    %v406 = vmul.f32 %v327, %v58
    %v407 = vmul.f32 %v330, %v59
    %v408 = vmul.f32 %v335, %v60
    %v409 = vmul.f32 %v327, %v61
    %v410 = vmul.f32 %v330, %v62
    %v411 = vmul.f32 %v335, %v63
    %v412 = vmul.f32 %v327, %v64
    %v413 = vmul.f32 %v330, %v65
    %v414 = vmul.f32 %v335, %v66
    %v415 = vmul.f32 %v327, %v67
    %v416 = vmul.f32 %v330, %v68
    %v417 = vmul.f32 %v335, %v69
    %v418 = vmul.f32 %v327, %v70
    %v419 = vmul.f32 %v330, %v71
    %v420 = vmul.f32 %v335, %v72
    %v421 = vmul.f32 %v338, %v25
    %v422 = vmul.f32 %v343, %v26
    %v423 = vmul.f32 %v346, %v27
    %v424 = vmul.f32 %v338, %v28
    %v425 = vmul.f32 %v343, %v29
    %v426 = vmul.f32 %v346, %v30
    %v427 = vmul.f32 %v338, %v31
    %v428 = vmul.f32 %v343, %v32
    %v429 = vmul.f32 %v346, %v33
    %v430 = vmul.f32 %v338, %v34
    %v431 = vmul.f32 %v343, %v35
    %v432 = vmul.f32 %v346, %v36
    %v433 = vmul.f32 %v338, %v37
    %v434 = vmul.f32 %v343, %v38
    %v435 = vmul.f32 %v346, %v39
    %v436 = vmul.f32 %v338, %v40
    %v437 = vmul.f32 %v343, %v41
    %v438 = vmul.f32 %v346, %v42
    %v439 = vmul.f32 %v338, %v43
    %v440 = vmul.f32 %v343, %v44
    %v441 = vmul.f32 %v346, %v45
    %v442 = vmul.f32 %v338, %v46
    %v443 = vmul.f32 %v343, %v47
    %v444 = vmul.f32 %v346, %v48
    %v445 = vmul.f32 %v338, %v49
    %v446 = vmul.f32 %v343, %v50
    %v447 = vmul.f32 %v346, %v51
    %v448 = vmul.f32 %v338, %v52
    %v449 = vmul.f32 %v343, %v53
    %v450 = vmul.f32 %v346, %v54
    %v451 = vmul.f32 %v338, %v55
    %v452 = vmul.f32 %v343, %v56
    %v453 = vmul.f32 %v346, %v57
    %v454 = vmul.f32 %v338, %v58
    %v455 = vmul.f32 %v343, %v59
    %v456 = vmul.f32 %v346, %v60
    %v457 = vmul.f32 %v338, %v61
    %v458 = vmul.f32 %v343, %v62
    %v459 = vmul.f32 %v346, %v63
    %v460 = vmul.f32 %v338, %v64
    %v461 = vmul.f32 %v343, %v65
    %v462 = vmul.f32 %v346, %v66
    %v463 = vmul.f32 %v338, %v67
    %v464 = vmul.f32 %v343, %v68
    %v465 = vmul.f32 %v346, %v69
    %v466 = vmul.f32 %v338, %v70
    %v467 = vmul.f32 %v343, %v71
    %v468 = vmul.f32 %v346, %v72
    %v469 = vmul.f32 %v351, %v25
    %v470 = vmul.f32 %v354, %v26
    %v471 = vmul.f32 %v359, %v27
    %v472 = vmul.f32 %v351, %v28
    %v473 = vmul.f32 %v354, %v29
    %v474 = vmul.f32 %v359, %v30
    %v475 = vmul.f32 %v351, %v31
    %v476 = vmul.f32 %v354, %v32
    %v477 = vmul.f32 %v359, %v33
    %v478 = vmul.f32 %v351, %v34
    %v479 = vmul.f32 %v354, %v35
    %v480 = vmul.f32 %v359, %v36
    %v481 = vmul.f32 %v351, %v37
    %v482 = vmul.f32 %v354, %v38
    %v483 = vmul.f32 %v359, %v39
    %v484 = vmul.f32 %v351, %v40
    %v485 = vmul.f32 %v354, %v41
    %v486 = vmul.f32 %v359, %v42
    %v487 = vmul.f32 %v351, %v43
    %v488 = vmul.f32 %v354, %v44
    %v489 = vmul.f32 %v359, %v45
    %v490 = vmul.f32 %v351, %v46
    %v491 = vmul.f32 %v354, %v47
    %v492 = vmul.f32 %v359, %v48
    %v493 = vmul.f32 %v351, %v49
    %v494 = vmul.f32 %v354, %v50
    %v495 = vmul.f32 %v359, %v51
    %v496 = vmul.f32 %v351, %v52
    %v497 = vmul.f32 %v354, %v53
    %v498 = vmul.f32 %v359, %v54
    %v499 = vmul.f32 %v351, %v55
    %v500 = vmul.f32 %v354, %v56
    %v501 = vmul.f32 %v359, %v57
    %v502 = vmul.f32 %v351, %v58
    %v503 = vmul.f32 %v354, %v59
    %v504 = vmul.f32 %v359, %v60
    %v505 = vmul.f32 %v351, %v61
    %v506 = vmul.f32 %v354, %v62
    %v507 = vmul.f32 %v359, %v63
    %v508 = vmul.f32 %v351, %v64
    %v509 = vmul.f32 %v354, %v65
    %v510 = vmul.f32 %v359, %v66
    %v511 = vmul.f32 %v351, %v67
    %v512 = vmul.f32 %v354, %v68
    %v513 = vmul.f32 %v359, %v69
    %v514 = vmul.f32 %v351, %v70
    %v515 = vmul.f32 %v354, %v71
    %v516 = vmul.f32 %v359, %v72
    %v517 = vmul.f32 %v362, %v25
    %v518 = vmul.f32 %v367, %v26
    %v519 = vmul.f32 %v370, %v27
    %v520 = vmul.f32 %v362, %v28
    %v521 = vmul.f32 %v367, %v29
    %v522 = vmul.f32 %v370, %v30
    %v523 = vmul.f32 %v362, %v31
    %v524 = vmul.f32 %v367, %v32
    %v525 = vmul.f32 %v370, %v33
    %v526 = vmul.f32 %v362, %v34
    %v527 = vmul.f32 %v367, %v35
    %v528 = vmul.f32 %v370, %v36
    %v529 = vmul.f32 %v362, %v37
    %v530 = vmul.f32 %v367, %v38
    %v531 = vmul.f32 %v370, %v39
    %v532 = vmul.f32 %v362, %v40
    %v533 = vmul.f32 %v367, %v41
    %v534 = vmul.f32 %v370, %v42
    %v535 = vmul.f32 %v362, %v43
    %v536 = vmul.f32 %v367, %v44
    %v537 = vmul.f32 %v370, %v45
    %v538 = vmul.f32 %v362, %v46
    %v539 = vmul.f32 %v367, %v47
    %v540 = vmul.f32 %v370, %v48
    %v541 = vmul.f32 %v362, %v49
    %v542 = vmul.f32 %v367, %v50
    %v543 = vmul.f32 %v370, %v51
    %v544 = vmul.f32 %v362, %v52
    %v545 = vmul.f32 %v367, %v53
    %v546 = vmul.f32 %v370, %v54
    %v547 = vmul.f32 %v362, %v55
    %v548 = vmul.f32 %v367, %v56
    %v549 = vmul.f32 %v370, %v57
    %v550 = vmul.f32 %v362, %v58
    %v551 = vmul.f32 %v367, %v59
    %v552 = vmul.f32 %v370, %v60
    %v553 = vmul.f32 %v362, %v61
    %v554 = vmul.f32 %v367, %v62
    %v555 = vmul.f32 %v370, %v63
    %v556 = vmul.f32 %v362, %v64
    %v557 = vmul.f32 %v367, %v65
    %v558 = vmul.f32 %v370, %v66
    %v559 = vmul.f32 %v362, %v67
    %v560 = vmul.f32 %v367, %v68
    %v561 = vmul.f32 %v370, %v69
    %v562 = vmul.f32 %v362, %v70
    %v563 = vmul.f32 %v367, %v71
    %v564 = vmul.f32 %v370, %v72
    %v565 = vpack.c.bf16 %v330, %v327
    %v566 = vpack.c.bf16 %v335, %v335
    %v567 = vpack.c.bf16 %v343, %v338
    %v568 = vpack.c.bf16 %v346, %v346
    %v569 = vpack.c.bf16 %v354, %v351
    %v570 = vpack.c.bf16 %v359, %v359
    %v571 = vpack.c.bf16 %v367, %v362
    %v572 = vpack.c.bf16 %v370, %v370
    %v573 = vpack.c.bf16 %v374, %v373
    %v574 = vpack.c.bf16 %v376, %v375
    %v575 = vpack.c.bf16 %v378, %v377
    %v576 = vpack.c.bf16 %v380, %v379
    %v577 = vpack.c.bf16 %v382, %v381
    %v578 = vpack.c.bf16 %v384, %v383
    %v579 = vpack.c.bf16 %v386, %v385
    %v580 = vpack.c.bf16 %v388, %v387
    %v581 = vpack.c.bf16 %v390, %v389
    %v582 = vpack.c.bf16 %v392, %v391
    %v583 = vpack.c.bf16 %v394, %v393
    %v584 = vpack.c.bf16 %v396, %v395
    %v585 = vpack.c.bf16 %v398, %v397
    %v586 = vpack.c.bf16 %v400, %v399
    %v587 = vpack.c.bf16 %v402, %v401
    %v588 = vpack.c.bf16 %v404, %v403
    %v589 = vpack.c.bf16 %v406, %v405
    %v590 = vpack.c.bf16 %v408, %v407
    %v591 = vpack.c.bf16 %v410, %v409
    %v592 = vpack.c.bf16 %v412, %v411
    %v593 = vpack.c.bf16 %v414, %v413
    %v594 = vpack.c.bf16 %v416, %v415
    %v595 = vpack.c.bf16 %v418, %v417
    %v596 = vpack.c.bf16 %v420, %v419
    %v597 = vpack.c.bf16 %v422, %v421
    %v598 = vpack.c.bf16 %v424, %v423
    %v599 = vpack.c.bf16 %v426, %v425
    %v600 = vpack.c.bf16 %v428, %v427
    %v601 = vpack.c.bf16 %v430, %v429
    %v602 = vpack.c.bf16 %v432, %v431
    %v603 = vpack.c.bf16 %v434, %v433
    %v604 = vpack.c.bf16 %v436, %v435
    %v605 = vpack.c.bf16 %v438, %v437
    %v606 = vpack.c.bf16 %v440, %v439
    %v607 = vpack.c.bf16 %v442, %v441
    %v608 = vpack.c.bf16 %v444, %v443
    %v609 = vpack.c.bf16 %v446, %v445
    %v610 = vpack.c.bf16 %v448, %v447
    %v611 = vpack.c.bf16 %v450, %v449
    %v612 = vpack.c.bf16 %v452, %v451
    %v613 = vpack.c.bf16 %v454, %v453
    %v614 = vpack.c.bf16 %v456, %v455
    %v615 = vpack.c.bf16 %v458, %v457
    %v616 = vpack.c.bf16 %v460, %v459
    %v617 = vpack.c.bf16 %v462, %v461
    %v618 = vpack.c.bf16 %v464, %v463
    %v619 = vpack.c.bf16 %v466, %v465
    %v620 = vpack.c.bf16 %v468, %v467
    %v621 = vpack.c.bf16 %v470, %v469
    %v622 = vpack.c.bf16 %v472, %v471
    %v623 = vpack.c.bf16 %v474, %v473
    %v624 = vpack.c.bf16 %v476, %v475
    %v625 = vpack.c.bf16 %v478, %v477
    %v626 = vpack.c.bf16 %v480, %v479
    %v627 = vpack.c.bf16 %v482, %v481
    %v628 = vpack.c.bf16 %v484, %v483
    %v629 = vpack.c.bf16 %v486, %v485
    %v630 = vpack.c.bf16 %v488, %v487
    %v631 = vpack.c.bf16 %v490, %v489
    %v632 = vpack.c.bf16 %v492, %v491
    %v633 = vpack.c.bf16 %v494, %v493
    %v634 = vpack.c.bf16 %v496, %v495
    %v635 = vpack.c.bf16 %v498, %v497
    %v636 = vpack.c.bf16 %v500, %v499
    %v637 = vpack.c.bf16 %v502, %v501
    %v638 = vpack.c.bf16 %v504, %v503
    %v639 = vpack.c.bf16 %v506, %v505
    %v640 = vpack.c.bf16 %v508, %v507
    %v641 = vpack.c.bf16 %v510, %v509
    %v642 = vpack.c.bf16 %v512, %v511
    %v643 = vpack.c.bf16 %v514, %v513
    %v644 = vpack.c.bf16 %v516, %v515
    %v645 = vpack.c.bf16 %v518, %v517
    %v646 = vpack.c.bf16 %v520, %v519
    %v647 = vpack.c.bf16 %v522, %v521
    %v648 = vpack.c.bf16 %v524, %v523
    %v649 = vpack.c.bf16 %v526, %v525
    %v650 = vpack.c.bf16 %v528, %v527
    %v651 = vpack.c.bf16 %v530, %v529
    %v652 = vpack.c.bf16 %v532, %v531
    %v653 = vpack.c.bf16 %v534, %v533
    %v654 = vpack.c.bf16 %v536, %v535
    %v655 = vpack.c.bf16 %v538, %v537
    %v656 = vpack.c.bf16 %v540, %v539
    %v657 = vpack.c.bf16 %v542, %v541
    %v658 = vpack.c.bf16 %v544, %v543
    %v659 = vpack.c.bf16 %v546, %v545
    %v660 = vpack.c.bf16 %v548, %v547
    %v661 = vpack.c.bf16 %v550, %v549
    %v662 = vpack.c.bf16 %v552, %v551
    %v663 = vpack.c.bf16 %v554, %v553
    %v664 = vpack.c.bf16 %v556, %v555
    %v665 = vpack.c.bf16 %v558, %v557
    %v666 = vpack.c.bf16 %v560, %v559
    %v667 = vpack.c.bf16 %v562, %v561
    %v668 = vpack.c.bf16 %v564, %v563
    %671 = vrot.lane.b32.xlu0 %v565, 32
    %v672 = vpop.permute.xlu0 %671
    %673 = vrot.lane.b32.xlu0 %v566, 32
    %v674 = vpop.permute.xlu0 %673
    %v676 = vsel %vm100, %v672, 0
    %v679 = vsel %vm100, %v674, 0
    %v682 = vsel %vm100, %v573, 0
    %v685 = vsel %vm100, %v574, 0
    %v688 = vsel %vm100, %v575, 0
    %v691 = vsel %vm100, %v576, 0
    %v694 = vsel %vm100, %v577, 0
    %v697 = vsel %vm100, %v578, 0
    %v700 = vsel %vm100, %v579, 0
    %v703 = vsel %vm100, %v580, 0
    %v706 = vsel %vm100, %v581, 0
    %v709 = vsel %vm100, %v582, 0
    %v712 = vsel %vm100, %v583, 0
    %v715 = vsel %vm100, %v584, 0
    %v718 = vsel %vm100, %v585, 0
    %v721 = vsel %vm100, %v586, 0
    %v724 = vsel %vm100, %v587, 0
    %v727 = vsel %vm100, %v588, 0
    %v730 = vsel %vm100, %v589, 0
    %v733 = vsel %vm100, %v590, 0
    %v736 = vsel %vm100, %v591, 0
    %v739 = vsel %vm100, %v592, 0
    %v742 = vsel %vm100, %v593, 0
    %v745 = vsel %vm100, %v594, 0
    %v748 = vsel %vm100, %v595, 0
    %v751 = vsel %vm100, %v596, 0
    %753 = vmatprep.subr.bf16.mxu0 0
    %754 = vmatpush1.bf16.xpose.msra.mxu0 %v703
    %755 = vmatprep.subr.bf16.mxu0 0
    %756 = vmatpush1.bf16.xpose.msra.mxu0 %v700
    %757 = vmatprep.subr.bf16.mxu0 0
    %758 = vmatpush1.bf16.xpose.msra.mxu0 %v697
    %759 = vmatprep.subr.bf16.mxu0 0
    %760 = vmatpush1.bf16.xpose.msra.mxu0 %v694
    %761 = vmatprep.subr.bf16.mxu0 0
    %762 = vmatpush1.bf16.xpose.msra.mxu0 %v691
    %763 = vmatprep.subr.bf16.mxu0 0
    %764 = vmatpush1.bf16.xpose.msra.mxu0 %v688
    %765 = vmatprep.subr.bf16.mxu0 0
    %766 = vmatpush1.bf16.xpose.msra.mxu0 %v685
    %767 = vmatprep.subr.bf16.mxu0 0
    %768 = vmatpush1.bf16.xpose.msra.mxu0 %v682
    %769 = vmatprep.subr.bf16.mxu0 0
    %770 = vmatpush2.bf16.xpose.msra.mxu0 %v727
    %771 = vmatprep.subr.bf16.mxu0 0
    %772 = vmatpush2.bf16.xpose.msra.mxu0 %v724
    %773 = vmatprep.subr.bf16.mxu0 0
    %774 = vmatpush2.bf16.xpose.msra.mxu0 %v721
    %775 = vmatprep.subr.bf16.mxu0 0
    %776 = vmatpush2.bf16.xpose.msra.mxu0 %v718
    %777 = vmatprep.subr.bf16.mxu0 0
    %778 = vmatpush2.bf16.xpose.msra.mxu0 %v715
    %779 = vmatprep.subr.bf16.mxu0 0
    %780 = vmatpush2.bf16.xpose.msra.mxu0 %v712
    %781 = vmatprep.subr.bf16.mxu0 0
    %782 = vmatpush2.bf16.xpose.msra.mxu0 %v709
    %783 = vmatprep.subr.bf16.mxu0 0
    %784 = vmatpush2.bf16.xpose.msra.mxu0 %v706
    %785 = vmatprep.mubr.bf16.mxu0 0
    %786 = vmatmul.mubr.bf16.gmra.mxu0 %v676
    %v787 = vpop.f32.mrf.mxu0
    %v788 = vadd.f32 0.0, %v787
    %v789 = vpop.f32.mrf.mxu0
    %v790 = vadd.f32 0.0, %v789
    %v791 = vpop.f32.mrf.mxu0
    %v792 = vadd.f32 0.0, %v791
    %v793 = vpop.f32.mrf.mxu0
    %v794 = vadd.f32 0.0, %v793
    %795 = vmatprep.mubr.bf16.mxu0 0
    %796 = vmatmul.mubr.bf16.gmra.mxu0 %v679
    %v797 = vpop.f32.mrf.mxu0
    %v798 = vadd.f32 0.0, %v797
    %v799 = vpop.f32.mrf.mxu0
    %v800 = vadd.f32 0.0, %v799
    %v801 = vpop.f32.mrf.mxu0
    %v802 = vpop.f32.mrf.mxu0
    %803 = vdwg.mxu0
    %804 = vmatprep.subr.bf16.mxu0 0
    %805 = vmatpush1.bf16.xpose.msra.mxu0 %v751
    %806 = vmatprep.subr.bf16.mxu0 0
    %807 = vmatpush1.bf16.xpose.msra.mxu0 %v748
    %808 = vmatprep.subr.bf16.mxu0 0
    %809 = vmatpush1.bf16.xpose.msra.mxu0 %v745
    %810 = vmatprep.subr.bf16.mxu0 0
    %811 = vmatpush1.bf16.xpose.msra.mxu0 %v742
    %812 = vmatprep.subr.bf16.mxu0 0
    %813 = vmatpush1.bf16.xpose.msra.mxu0 %v739
    %814 = vmatprep.subr.bf16.mxu0 0
    %815 = vmatpush1.bf16.xpose.msra.mxu0 %v736
    %816 = vmatprep.subr.bf16.mxu0 0
    %817 = vmatpush1.bf16.xpose.msra.mxu0 %v733
    %818 = vmatprep.subr.bf16.mxu0 0
    %819 = vmatpush1.bf16.xpose.msra.mxu0 %v730
    %820 = vmatprep.subr.bf16.mxu0 0
    %821 = vmatpush2.bf16.xpose.msra.mxu0 0
    %822 = vmatprep.subr.bf16.mxu0 0
    %823 = vmatpush2.bf16.xpose.msra.mxu0 0
    %824 = vmatprep.subr.bf16.mxu0 0
    %825 = vmatpush2.bf16.xpose.msra.mxu0 0
    %826 = vmatprep.subr.bf16.mxu0 0
    %827 = vmatpush2.bf16.xpose.msra.mxu0 0
    %828 = vmatprep.subr.bf16.mxu0 0
    %829 = vmatpush2.bf16.xpose.msra.mxu0 0
    %830 = vmatprep.subr.bf16.mxu0 0
    %831 = vmatpush2.bf16.xpose.msra.mxu0 0
    %832 = vmatprep.subr.bf16.mxu0 0
    %833 = vmatpush2.bf16.xpose.msra.mxu0 0
    %834 = vmatprep.subr.bf16.mxu0 0
    %835 = vmatpush2.bf16.xpose.msra.mxu0 0
    %836 = vmatprep.mubr.bf16.mxu0 0
    %837 = vmatmul.mubr.bf16.gmra.mxu0 %v676
    %v838 = vpop.f32.mrf.mxu0
    %v839 = vadd.f32 0.0, %v838
    %v840 = vpop.f32.mrf.mxu0
    %v841 = vpop.f32.mrf.mxu0
    %v842 = vadd.f32 0.0, %v841
    %v843 = vpop.f32.mrf.mxu0
    %844 = vmatprep.mubr.bf16.mxu0 0
    %845 = vmatmul.mubr.bf16.gmra.mxu0 %v679
    %v846 = vpop.f32.mrf.mxu0
    %v847 = vadd.f32 0.0, %v846
    %v848 = vpop.f32.mrf.mxu0
    %v849 = vpop.f32.mrf.mxu0
    %v850 = vpop.f32.mrf.mxu0
    %851 = vdwg.mxu0
    %854 = vrot.lane.b32.xlu0 %v567, 32
    %v855 = vpop.permute.xlu0 %854
    %856 = vrot.lane.b32.xlu0 %v568, 32
    %v857 = vpop.permute.xlu0 %856
    %v859 = vsel %vm100, %v855, 0
    %v862 = vsel %vm100, %v857, 0
    %v865 = vsel %vm100, %v597, 0
    %v868 = vsel %vm100, %v598, 0
    %v871 = vsel %vm100, %v599, 0
    %v874 = vsel %vm100, %v600, 0
    %v877 = vsel %vm100, %v601, 0
    %v880 = vsel %vm100, %v602, 0
    %v883 = vsel %vm100, %v603, 0
    %v886 = vsel %vm100, %v604, 0
    %v889 = vsel %vm100, %v605, 0
    %v892 = vsel %vm100, %v606, 0
    %v895 = vsel %vm100, %v607, 0
    %v898 = vsel %vm100, %v608, 0
    %v901 = vsel %vm100, %v609, 0
    %v904 = vsel %vm100, %v610, 0
    %v907 = vsel %vm100, %v611, 0
    %v910 = vsel %vm100, %v612, 0
    %v913 = vsel %vm100, %v613, 0
    %v916 = vsel %vm100, %v614, 0
    %v919 = vsel %vm100, %v615, 0
    %v922 = vsel %vm100, %v616, 0
    %v925 = vsel %vm100, %v617, 0
    %v928 = vsel %vm100, %v618, 0
    %v931 = vsel %vm100, %v619, 0
    %v934 = vsel %vm100, %v620, 0
    %936 = vmatprep.subr.bf16.mxu0 0
    %937 = vmatpush1.bf16.xpose.msra.mxu0 %v886
    %938 = vmatprep.subr.bf16.mxu0 0
    %939 = vmatpush1.bf16.xpose.msra.mxu0 %v883
    %940 = vmatprep.subr.bf16.mxu0 0
    %941 = vmatpush1.bf16.xpose.msra.mxu0 %v880
    %942 = vmatprep.subr.bf16.mxu0 0
    %943 = vmatpush1.bf16.xpose.msra.mxu0 %v877
    %944 = vmatprep.subr.bf16.mxu0 0
    %945 = vmatpush1.bf16.xpose.msra.mxu0 %v874
    %946 = vmatprep.subr.bf16.mxu0 0
    %947 = vmatpush1.bf16.xpose.msra.mxu0 %v871
    %948 = vmatprep.subr.bf16.mxu0 0
    %949 = vmatpush1.bf16.xpose.msra.mxu0 %v868
    %950 = vmatprep.subr.bf16.mxu0 0
    %951 = vmatpush1.bf16.xpose.msra.mxu0 %v865
    %952 = vmatprep.subr.bf16.mxu0 0
    %953 = vmatpush2.bf16.xpose.msra.mxu0 %v910
    %954 = vmatprep.subr.bf16.mxu0 0
    %955 = vmatpush2.bf16.xpose.msra.mxu0 %v907
    %956 = vmatprep.subr.bf16.mxu0 0
    %957 = vmatpush2.bf16.xpose.msra.mxu0 %v904
    %958 = vmatprep.subr.bf16.mxu0 0
    %959 = vmatpush2.bf16.xpose.msra.mxu0 %v901
    %960 = vmatprep.subr.bf16.mxu0 0
    %961 = vmatpush2.bf16.xpose.msra.mxu0 %v898
    %962 = vmatprep.subr.bf16.mxu0 0
    %963 = vmatpush2.bf16.xpose.msra.mxu0 %v895
    %964 = vmatprep.subr.bf16.mxu0 0
    %965 = vmatpush2.bf16.xpose.msra.mxu0 %v892
    %966 = vmatprep.subr.bf16.mxu0 0
    %967 = vmatpush2.bf16.xpose.msra.mxu0 %v889
    %968 = vmatprep.mubr.bf16.mxu0 0
    %969 = vmatmul.mubr.bf16.gmra.mxu0 %v859
    %v970 = vpop.f32.mrf.mxu0
    %v971 = vadd.f32 0.0, %v970
    %v972 = vpop.f32.mrf.mxu0
    %v973 = vadd.f32 0.0, %v972
    %v974 = vpop.f32.mrf.mxu0
    %v975 = vadd.f32 0.0, %v974
    %v976 = vpop.f32.mrf.mxu0
    %v977 = vadd.f32 0.0, %v976
    %978 = vmatprep.mubr.bf16.mxu0 0
    %979 = vmatmul.mubr.bf16.gmra.mxu0 %v862
    %v980 = vpop.f32.mrf.mxu0
    %v981 = vadd.f32 0.0, %v980
    %v982 = vpop.f32.mrf.mxu0
    %v983 = vadd.f32 0.0, %v982
    %v984 = vpop.f32.mrf.mxu0
    %v985 = vpop.f32.mrf.mxu0
    %986 = vdwg.mxu0
    %987 = vmatprep.subr.bf16.mxu0 0
    %988 = vmatpush1.bf16.xpose.msra.mxu0 %v934
    %989 = vmatprep.subr.bf16.mxu0 0
    %990 = vmatpush1.bf16.xpose.msra.mxu0 %v931
    %991 = vmatprep.subr.bf16.mxu0 0
    %992 = vmatpush1.bf16.xpose.msra.mxu0 %v928
    %993 = vmatprep.subr.bf16.mxu0 0
    %994 = vmatpush1.bf16.xpose.msra.mxu0 %v925
    %995 = vmatprep.subr.bf16.mxu0 0
    %996 = vmatpush1.bf16.xpose.msra.mxu0 %v922
    %997 = vmatprep.subr.bf16.mxu0 0
    %998 = vmatpush1.bf16.xpose.msra.mxu0 %v919
    %999 = vmatprep.subr.bf16.mxu0 0
    %1000 = vmatpush1.bf16.xpose.msra.mxu0 %v916
    %1001 = vmatprep.subr.bf16.mxu0 0
    %1002 = vmatpush1.bf16.xpose.msra.mxu0 %v913
    %1003 = vmatprep.subr.bf16.mxu0 0
    %1004 = vmatpush2.bf16.xpose.msra.mxu0 0
    %1005 = vmatprep.subr.bf16.mxu0 0
    %1006 = vmatpush2.bf16.xpose.msra.mxu0 0
    %1007 = vmatprep.subr.bf16.mxu0 0
    %1008 = vmatpush2.bf16.xpose.msra.mxu0 0
    %1009 = vmatprep.subr.bf16.mxu0 0
    %1010 = vmatpush2.bf16.xpose.msra.mxu0 0
    %1011 = vmatprep.subr.bf16.mxu0 0
    %1012 = vmatpush2.bf16.xpose.msra.mxu0 0
    %1013 = vmatprep.subr.bf16.mxu0 0
    %1014 = vmatpush2.bf16.xpose.msra.mxu0 0
    %1015 = vmatprep.subr.bf16.mxu0 0
    %1016 = vmatpush2.bf16.xpose.msra.mxu0 0
    %1017 = vmatprep.subr.bf16.mxu0 0
    %1018 = vmatpush2.bf16.xpose.msra.mxu0 0
    %1019 = vmatprep.mubr.bf16.mxu0 0
    %1020 = vmatmul.mubr.bf16.gmra.mxu0 %v859
    %v1021 = vpop.f32.mrf.mxu0
    %v1022 = vadd.f32 0.0, %v1021
    %v1023 = vpop.f32.mrf.mxu0
    %v1024 = vpop.f32.mrf.mxu0
    %v1025 = vadd.f32 0.0, %v1024
    %v1026 = vpop.f32.mrf.mxu0
    %1027 = vmatprep.mubr.bf16.mxu0 0
    %1028 = vmatmul.mubr.bf16.gmra.mxu0 %v862
    %v1029 = vpop.f32.mrf.mxu0
    %v1030 = vadd.f32 0.0, %v1029
    %v1031 = vpop.f32.mrf.mxu0
    %v1032 = vpop.f32.mrf.mxu0
    %v1033 = vpop.f32.mrf.mxu0
    %1034 = vdwg.mxu0
    %1037 = vrot.lane.b32.xlu0 %v569, 32
    %v1038 = vpop.permute.xlu0 %1037
    %1039 = vrot.lane.b32.xlu0 %v570, 32
    %v1040 = vpop.permute.xlu0 %1039
    %v1042 = vsel %vm100, %v1038, 0
    %v1045 = vsel %vm100, %v1040, 0
    %v1048 = vsel %vm100, %v621, 0
    %v1051 = vsel %vm100, %v622, 0
    %v1054 = vsel %vm100, %v623, 0
    %v1057 = vsel %vm100, %v624, 0
    %v1060 = vsel %vm100, %v625, 0
    %v1063 = vsel %vm100, %v626, 0
    %v1066 = vsel %vm100, %v627, 0
    %v1069 = vsel %vm100, %v628, 0
    %v1072 = vsel %vm100, %v629, 0
    %v1075 = vsel %vm100, %v630, 0
    %v1078 = vsel %vm100, %v631, 0
    %v1081 = vsel %vm100, %v632, 0
    %v1084 = vsel %vm100, %v633, 0
    %v1087 = vsel %vm100, %v634, 0
    %v1090 = vsel %vm100, %v635, 0
    %v1093 = vsel %vm100, %v636, 0
    %v1096 = vsel %vm100, %v637, 0
    %v1099 = vsel %vm100, %v638, 0
    %v1102 = vsel %vm100, %v639, 0
    %v1105 = vsel %vm100, %v640, 0
    %v1108 = vsel %vm100, %v641, 0
    %v1111 = vsel %vm100, %v642, 0
    %v1114 = vsel %vm100, %v643, 0
    %v1117 = vsel %vm100, %v644, 0
    %1119 = vmatprep.subr.bf16.mxu0 0
    %1120 = vmatpush1.bf16.xpose.msra.mxu0 %v1069
    %1121 = vmatprep.subr.bf16.mxu0 0
    %1122 = vmatpush1.bf16.xpose.msra.mxu0 %v1066
    %1123 = vmatprep.subr.bf16.mxu0 0
    %1124 = vmatpush1.bf16.xpose.msra.mxu0 %v1063
    %1125 = vmatprep.subr.bf16.mxu0 0
    %1126 = vmatpush1.bf16.xpose.msra.mxu0 %v1060
    %1127 = vmatprep.subr.bf16.mxu0 0
    %1128 = vmatpush1.bf16.xpose.msra.mxu0 %v1057
    %1129 = vmatprep.subr.bf16.mxu0 0
    %1130 = vmatpush1.bf16.xpose.msra.mxu0 %v1054
    %1131 = vmatprep.subr.bf16.mxu0 0
    %1132 = vmatpush1.bf16.xpose.msra.mxu0 %v1051
    %1133 = vmatprep.subr.bf16.mxu0 0
    %1134 = vmatpush1.bf16.xpose.msra.mxu0 %v1048
    %1135 = vmatprep.subr.bf16.mxu0 0
    %1136 = vmatpush2.bf16.xpose.msra.mxu0 %v1093
    %1137 = vmatprep.subr.bf16.mxu0 0
    %1138 = vmatpush2.bf16.xpose.msra.mxu0 %v1090
    %1139 = vmatprep.subr.bf16.mxu0 0
    %1140 = vmatpush2.bf16.xpose.msra.mxu0 %v1087
    %1141 = vmatprep.subr.bf16.mxu0 0
    %1142 = vmatpush2.bf16.xpose.msra.mxu0 %v1084
    %1143 = vmatprep.subr.bf16.mxu0 0
    %1144 = vmatpush2.bf16.xpose.msra.mxu0 %v1081
    %1145 = vmatprep.subr.bf16.mxu0 0
    %1146 = vmatpush2.bf16.xpose.msra.mxu0 %v1078
    %1147 = vmatprep.subr.bf16.mxu0 0
    %1148 = vmatpush2.bf16.xpose.msra.mxu0 %v1075
    %1149 = vmatprep.subr.bf16.mxu0 0
    %1150 = vmatpush2.bf16.xpose.msra.mxu0 %v1072
    %1151 = vmatprep.mubr.bf16.mxu0 0
    %1152 = vmatmul.mubr.bf16.gmra.mxu0 %v1042
    %v1153 = vpop.f32.mrf.mxu0
    %v1154 = vadd.f32 0.0, %v1153
    %v1155 = vpop.f32.mrf.mxu0
    %v1156 = vadd.f32 0.0, %v1155
    %v1157 = vpop.f32.mrf.mxu0
    %v1158 = vadd.f32 0.0, %v1157
    %v1159 = vpop.f32.mrf.mxu0
    %v1160 = vadd.f32 0.0, %v1159
    %1161 = vmatprep.mubr.bf16.mxu0 0
    %1162 = vmatmul.mubr.bf16.gmra.mxu0 %v1045
    %v1163 = vpop.f32.mrf.mxu0
    %v1164 = vadd.f32 0.0, %v1163
    %v1165 = vpop.f32.mrf.mxu0
    %v1166 = vadd.f32 0.0, %v1165
    %v1167 = vpop.f32.mrf.mxu0
    %v1168 = vpop.f32.mrf.mxu0
    %1169 = vdwg.mxu0
    %1170 = vmatprep.subr.bf16.mxu0 0
    %1171 = vmatpush1.bf16.xpose.msra.mxu0 %v1117
    %1172 = vmatprep.subr.bf16.mxu0 0
    %1173 = vmatpush1.bf16.xpose.msra.mxu0 %v1114
    %1174 = vmatprep.subr.bf16.mxu0 0
    %1175 = vmatpush1.bf16.xpose.msra.mxu0 %v1111
    %1176 = vmatprep.subr.bf16.mxu0 0
    %1177 = vmatpush1.bf16.xpose.msra.mxu0 %v1108
    %1178 = vmatprep.subr.bf16.mxu0 0
    %1179 = vmatpush1.bf16.xpose.msra.mxu0 %v1105
    %1180 = vmatprep.subr.bf16.mxu0 0
    %1181 = vmatpush1.bf16.xpose.msra.mxu0 %v1102
    %1182 = vmatprep.subr.bf16.mxu0 0
    %1183 = vmatpush1.bf16.xpose.msra.mxu0 %v1099
    %1184 = vmatprep.subr.bf16.mxu0 0
    %1185 = vmatpush1.bf16.xpose.msra.mxu0 %v1096
    %1186 = vmatprep.subr.bf16.mxu0 0
    %1187 = vmatpush2.bf16.xpose.msra.mxu0 0
    %1188 = vmatprep.subr.bf16.mxu0 0
    %1189 = vmatpush2.bf16.xpose.msra.mxu0 0
    %1190 = vmatprep.subr.bf16.mxu0 0
    %1191 = vmatpush2.bf16.xpose.msra.mxu0 0
    %1192 = vmatprep.subr.bf16.mxu0 0
    %1193 = vmatpush2.bf16.xpose.msra.mxu0 0
    %1194 = vmatprep.subr.bf16.mxu0 0
    %1195 = vmatpush2.bf16.xpose.msra.mxu0 0
    %1196 = vmatprep.subr.bf16.mxu0 0
    %1197 = vmatpush2.bf16.xpose.msra.mxu0 0
    %1198 = vmatprep.subr.bf16.mxu0 0
    %1199 = vmatpush2.bf16.xpose.msra.mxu0 0
    %1200 = vmatprep.subr.bf16.mxu0 0
    %1201 = vmatpush2.bf16.xpose.msra.mxu0 0
    %1202 = vmatprep.mubr.bf16.mxu0 0
    %1203 = vmatmul.mubr.bf16.gmra.mxu0 %v1042
    %v1204 = vpop.f32.mrf.mxu0
    %v1205 = vadd.f32 0.0, %v1204
    %v1206 = vpop.f32.mrf.mxu0
    %v1207 = vpop.f32.mrf.mxu0
    %v1208 = vadd.f32 0.0, %v1207
    %v1209 = vpop.f32.mrf.mxu0
    %1210 = vmatprep.mubr.bf16.mxu0 0
    %1211 = vmatmul.mubr.bf16.gmra.mxu0 %v1045
    %v1212 = vpop.f32.mrf.mxu0
    %v1213 = vadd.f32 0.0, %v1212
    %v1214 = vpop.f32.mrf.mxu0
    %v1215 = vpop.f32.mrf.mxu0
    %v1216 = vpop.f32.mrf.mxu0
    %1217 = vdwg.mxu0
    %1220 = vrot.lane.b32.xlu0 %v571, 32
    %v1221 = vpop.permute.xlu0 %1220
    %1222 = vrot.lane.b32.xlu0 %v572, 32
    %v1223 = vpop.permute.xlu0 %1222
    %v1225 = vsel %vm100, %v1221, 0
    %v1228 = vsel %vm100, %v1223, 0
    %v1231 = vsel %vm100, %v645, 0
    %v1234 = vsel %vm100, %v646, 0
    %v1237 = vsel %vm100, %v647, 0
    %v1240 = vsel %vm100, %v648, 0
    %v1243 = vsel %vm100, %v649, 0
    %v1246 = vsel %vm100, %v650, 0
    %v1249 = vsel %vm100, %v651, 0
    %v1252 = vsel %vm100, %v652, 0
    %v1255 = vsel %vm100, %v653, 0
    %v1258 = vsel %vm100, %v654, 0
    %v1261 = vsel %vm100, %v655, 0
    %v1264 = vsel %vm100, %v656, 0
    %v1267 = vsel %vm100, %v657, 0
    %v1270 = vsel %vm100, %v658, 0
    %v1273 = vsel %vm100, %v659, 0
    %v1276 = vsel %vm100, %v660, 0
    %v1279 = vsel %vm100, %v661, 0
    %v1282 = vsel %vm100, %v662, 0
    %v1285 = vsel %vm100, %v663, 0
    %v1288 = vsel %vm100, %v664, 0
    %v1291 = vsel %vm100, %v665, 0
    %v1294 = vsel %vm100, %v666, 0
    %v1297 = vsel %vm100, %v667, 0
    %v1300 = vsel %vm100, %v668, 0
    %1302 = vmatprep.subr.bf16.mxu0 0
    %1303 = vmatpush1.bf16.xpose.msra.mxu0 %v1252
    %1304 = vmatprep.subr.bf16.mxu0 0
    %1305 = vmatpush1.bf16.xpose.msra.mxu0 %v1249
    %1306 = vmatprep.subr.bf16.mxu0 0
    %1307 = vmatpush1.bf16.xpose.msra.mxu0 %v1246
    %1308 = vmatprep.subr.bf16.mxu0 0
    %1309 = vmatpush1.bf16.xpose.msra.mxu0 %v1243
    %1310 = vmatprep.subr.bf16.mxu0 0
    %1311 = vmatpush1.bf16.xpose.msra.mxu0 %v1240
    %1312 = vmatprep.subr.bf16.mxu0 0
    %1313 = vmatpush1.bf16.xpose.msra.mxu0 %v1237
    %1314 = vmatprep.subr.bf16.mxu0 0
    %1315 = vmatpush1.bf16.xpose.msra.mxu0 %v1234
    %1316 = vmatprep.subr.bf16.mxu0 0
    %1317 = vmatpush1.bf16.xpose.msra.mxu0 %v1231
    %1318 = vmatprep.subr.bf16.mxu0 0
    %1319 = vmatpush2.bf16.xpose.msra.mxu0 %v1276
    %1320 = vmatprep.subr.bf16.mxu0 0
    %1321 = vmatpush2.bf16.xpose.msra.mxu0 %v1273
    %1322 = vmatprep.subr.bf16.mxu0 0
    %1323 = vmatpush2.bf16.xpose.msra.mxu0 %v1270
    %1324 = vmatprep.subr.bf16.mxu0 0
    %1325 = vmatpush2.bf16.xpose.msra.mxu0 %v1267
    %1326 = vmatprep.subr.bf16.mxu0 0
    %1327 = vmatpush2.bf16.xpose.msra.mxu0 %v1264
    %1328 = vmatprep.subr.bf16.mxu0 0
    %1329 = vmatpush2.bf16.xpose.msra.mxu0 %v1261
    %1330 = vmatprep.subr.bf16.mxu0 0
    %1331 = vmatpush2.bf16.xpose.msra.mxu0 %v1258
    %1332 = vmatprep.subr.bf16.mxu0 0
    %1333 = vmatpush2.bf16.xpose.msra.mxu0 %v1255
    %1334 = vmatprep.mubr.bf16.mxu0 0
    %1335 = vmatmul.mubr.bf16.gmra.mxu0 %v1225
    %v1336 = vpop.f32.mrf.mxu0
    %v1337 = vadd.f32 0.0, %v1336
    %v1338 = vpop.f32.mrf.mxu0
    %v1339 = vadd.f32 0.0, %v1338
    %v1340 = vpop.f32.mrf.mxu0
    %v1341 = vadd.f32 0.0, %v1340
    %v1342 = vpop.f32.mrf.mxu0
    %v1343 = vadd.f32 0.0, %v1342
    %1344 = vmatprep.mubr.bf16.mxu0 0
    %1345 = vmatmul.mubr.bf16.gmra.mxu0 %v1228
    %v1346 = vpop.f32.mrf.mxu0
    %v1347 = vadd.f32 0.0, %v1346
    %v1348 = vpop.f32.mrf.mxu0
    %v1349 = vadd.f32 0.0, %v1348
    %v1350 = vpop.f32.mrf.mxu0
    %v1351 = vpop.f32.mrf.mxu0
    %1352 = vdwg.mxu0
    %1353 = vmatprep.subr.bf16.mxu0 0
    %1354 = vmatpush1.bf16.xpose.msra.mxu0 %v1300
    %1355 = vmatprep.subr.bf16.mxu0 0
    %1356 = vmatpush1.bf16.xpose.msra.mxu0 %v1297
    %1357 = vmatprep.subr.bf16.mxu0 0
    %1358 = vmatpush1.bf16.xpose.msra.mxu0 %v1294
    %1359 = vmatprep.subr.bf16.mxu0 0
    %1360 = vmatpush1.bf16.xpose.msra.mxu0 %v1291
    %1361 = vmatprep.subr.bf16.mxu0 0
    %1362 = vmatpush1.bf16.xpose.msra.mxu0 %v1288
    %1363 = vmatprep.subr.bf16.mxu0 0
    %1364 = vmatpush1.bf16.xpose.msra.mxu0 %v1285
    %1365 = vmatprep.subr.bf16.mxu0 0
    %1366 = vmatpush1.bf16.xpose.msra.mxu0 %v1282
    %1367 = vmatprep.subr.bf16.mxu0 0
    %1368 = vmatpush1.bf16.xpose.msra.mxu0 %v1279
    %1369 = vmatprep.subr.bf16.mxu0 0
    %1370 = vmatpush2.bf16.xpose.msra.mxu0 0
    %1371 = vmatprep.subr.bf16.mxu0 0
    %1372 = vmatpush2.bf16.xpose.msra.mxu0 0
    %1373 = vmatprep.subr.bf16.mxu0 0
    %1374 = vmatpush2.bf16.xpose.msra.mxu0 0
    %1375 = vmatprep.subr.bf16.mxu0 0
    %1376 = vmatpush2.bf16.xpose.msra.mxu0 0
    %1377 = vmatprep.subr.bf16.mxu0 0
    %1378 = vmatpush2.bf16.xpose.msra.mxu0 0
    %1379 = vmatprep.subr.bf16.mxu0 0
    %1380 = vmatpush2.bf16.xpose.msra.mxu0 0
    %1381 = vmatprep.subr.bf16.mxu0 0
    %1382 = vmatpush2.bf16.xpose.msra.mxu0 0
    %1383 = vmatprep.subr.bf16.mxu0 0
    %1384 = vmatpush2.bf16.xpose.msra.mxu0 0
    %1385 = vmatprep.mubr.bf16.mxu0 0
    %1386 = vmatmul.mubr.bf16.gmra.mxu0 %v1225
    %v1387 = vpop.f32.mrf.mxu0
    %v1388 = vadd.f32 0.0, %v1387
    %v1389 = vpop.f32.mrf.mxu0
    %v1390 = vpop.f32.mrf.mxu0
    %v1391 = vadd.f32 0.0, %v1390
    %v1392 = vpop.f32.mrf.mxu0
    %1393 = vmatprep.mubr.bf16.mxu0 0
    %1394 = vmatmul.mubr.bf16.gmra.mxu0 %v1228
    %v1395 = vpop.f32.mrf.mxu0
    %v1396 = vadd.f32 0.0, %v1395
    %v1397 = vpop.f32.mrf.mxu0
    %v1398 = vpop.f32.mrf.mxu0
    %v1399 = vpop.f32.mrf.mxu0
    %1400 = vdwg.mxu0
    %v1401 = vmax.f32 %v788, %v790
    %v1402 = vmax.f32 %v1401, %v839
    %1403 = vmax.xlane.f32.xlu0 %v1402
    %v1404 = vpop.xlane.xlu0 %1403
    %v1405 = vmax.f32 %v792, %v794
    %v1406 = vmax.f32 %v1405, %v842
    %1407 = vmax.xlane.f32.xlu0 %v1406
    %v1408 = vpop.xlane.xlu0 %1407
    %v1409 = vmax.f32 %v798, %v800
    %v1410 = vmax.f32 %v1409, %v847
    %1411 = vmax.xlane.f32.xlu0 %v1410
    %v1412 = vpop.xlane.xlu0 %1411
    %v1413 = vmax.f32 %v971, %v973
    %v1414 = vmax.f32 %v1413, %v1022
    %1415 = vmax.xlane.f32.xlu0 %v1414
    %v1416 = vpop.xlane.xlu0 %1415
    %v1417 = vmax.f32 %v975, %v977
    %v1418 = vmax.f32 %v1417, %v1025
    %1419 = vmax.xlane.f32.xlu0 %v1418
    %v1420 = vpop.xlane.xlu0 %1419
    %v1421 = vmax.f32 %v981, %v983
    %v1422 = vmax.f32 %v1421, %v1030
    %1423 = vmax.xlane.f32.xlu0 %v1422
    %v1424 = vpop.xlane.xlu0 %1423
    %v1425 = vmax.f32 %v1154, %v1156
    %v1426 = vmax.f32 %v1425, %v1205
    %1427 = vmax.xlane.f32.xlu0 %v1426
    %v1428 = vpop.xlane.xlu0 %1427
    %v1429 = vmax.f32 %v1158, %v1160
    %v1430 = vmax.f32 %v1429, %v1208
    %1431 = vmax.xlane.f32.xlu0 %v1430
    %v1432 = vpop.xlane.xlu0 %1431
    %v1433 = vmax.f32 %v1164, %v1166
    %v1434 = vmax.f32 %v1433, %v1213
    %1435 = vmax.xlane.f32.xlu0 %v1434
    %v1436 = vpop.xlane.xlu0 %1435
    %v1437 = vmax.f32 %v1337, %v1339
    %v1438 = vmax.f32 %v1437, %v1388
    %1439 = vmax.xlane.f32.xlu0 %v1438
    %v1440 = vpop.xlane.xlu0 %1439
    %v1441 = vmax.f32 %v1341, %v1343
    %v1442 = vmax.f32 %v1441, %v1391
    %1443 = vmax.xlane.f32.xlu0 %v1442
    %v1444 = vpop.xlane.xlu0 %1443
    %v1445 = vmax.f32 %v1347, %v1349
    %v1446 = vmax.f32 %v1445, %v1396
    %1447 = vmax.xlane.f32.xlu0 %v1446
    %v1448 = vpop.xlane.xlu0 %1447
    %v1449 = vsub.f32 %v788, %v1404
    %v1450 = vsub.f32 %v790, %v1404
    %v1451 = vsub.f32 %v839, %v1404
    %v1452 = vsub.f32 %v792, %v1408
    %v1453 = vsub.f32 %v794, %v1408
    %v1454 = vsub.f32 %v842, %v1408
    %v1455 = vsub.f32 %v798, %v1412
    %v1456 = vsub.f32 %v800, %v1412
    %v1457 = vsub.f32 %v847, %v1412
    %v1458 = vsub.f32 %v971, %v1416
    %v1459 = vsub.f32 %v973, %v1416
    %v1460 = vsub.f32 %v1022, %v1416
    %v1461 = vsub.f32 %v975, %v1420
    %v1462 = vsub.f32 %v977, %v1420
    %v1463 = vsub.f32 %v1025, %v1420
    %v1464 = vsub.f32 %v981, %v1424
    %v1465 = vsub.f32 %v983, %v1424
    %v1466 = vsub.f32 %v1030, %v1424
    %v1467 = vsub.f32 %v1154, %v1428
    %v1468 = vsub.f32 %v1156, %v1428
    %v1469 = vsub.f32 %v1205, %v1428
    %v1470 = vsub.f32 %v1158, %v1432
    %v1471 = vsub.f32 %v1160, %v1432
    %v1472 = vsub.f32 %v1208, %v1432
    %v1473 = vsub.f32 %v1164, %v1436
    %v1474 = vsub.f32 %v1166, %v1436
    %v1475 = vsub.f32 %v1213, %v1436
    %v1476 = vsub.f32 %v1337, %v1440
    %v1477 = vsub.f32 %v1339, %v1440
    %v1478 = vsub.f32 %v1388, %v1440
    %v1479 = vsub.f32 %v1341, %v1444
    %v1480 = vsub.f32 %v1343, %v1444
    %v1481 = vsub.f32 %v1391, %v1444
    %v1482 = vsub.f32 %v1347, %v1448
    %v1483 = vsub.f32 %v1349, %v1448
    %v1484 = vsub.f32 %v1396, %v1448
    %v1485 = vmul.f32 %v1449, 1.442695
    %v1486 = vpow.pop %v1485
    %v1487 = vmul.f32 %v1450, 1.442695
    %v1488 = vpow.pop %v1487
    %v1489 = vmul.f32 %v1451, 1.442695
    %v1490 = vpow.pop %v1489
    %v1491 = vmul.f32 %v1452, 1.442695
    %v1492 = vpow.pop %v1491
    %v1493 = vmul.f32 %v1453, 1.442695
    %v1494 = vpow.pop %v1493
    %v1495 = vmul.f32 %v1454, 1.442695
    %v1496 = vpow.pop %v1495
    %v1497 = vmul.f32 %v1455, 1.442695
    %v1498 = vpow.pop %v1497
    %v1499 = vmul.f32 %v1456, 1.442695
    %v1500 = vpow.pop %v1499
    %v1501 = vmul.f32 %v1457, 1.442695
    %v1502 = vpow.pop %v1501
    %v1503 = vmul.f32 %v1458, 1.442695
    %v1504 = vpow.pop %v1503
    %v1505 = vmul.f32 %v1459, 1.442695
    %v1506 = vpow.pop %v1505
    %v1507 = vmul.f32 %v1460, 1.442695
    %v1508 = vpow.pop %v1507
    %v1509 = vmul.f32 %v1461, 1.442695
    %v1510 = vpow.pop %v1509
    %v1511 = vmul.f32 %v1462, 1.442695
    %v1512 = vpow.pop %v1511
    %v1513 = vmul.f32 %v1463, 1.442695
    %v1514 = vpow.pop %v1513
    %v1515 = vmul.f32 %v1464, 1.442695
    %v1516 = vpow.pop %v1515
    %v1517 = vmul.f32 %v1465, 1.442695
    %v1518 = vpow.pop %v1517
    %v1519 = vmul.f32 %v1466, 1.442695
    %v1520 = vpow.pop %v1519
    %v1521 = vmul.f32 %v1467, 1.442695
    %v1522 = vpow.pop %v1521
    %v1523 = vmul.f32 %v1468, 1.442695
    %v1524 = vpow.pop %v1523
    %v1525 = vmul.f32 %v1469, 1.442695
    %v1526 = vpow.pop %v1525
    %v1527 = vmul.f32 %v1470, 1.442695
    %v1528 = vpow.pop %v1527
    %v1529 = vmul.f32 %v1471, 1.442695
    %v1530 = vpow.pop %v1529
    %v1531 = vmul.f32 %v1472, 1.442695
    %v1532 = vpow.pop %v1531
    %v1533 = vmul.f32 %v1473, 1.442695
    %v1534 = vpow.pop %v1533
    %v1535 = vmul.f32 %v1474, 1.442695
    %v1536 = vpow.pop %v1535
    %v1537 = vmul.f32 %v1475, 1.442695
    %v1538 = vpow.pop %v1537
    %v1539 = vmul.f32 %v1476, 1.442695
    %v1540 = vpow.pop %v1539
    %v1541 = vmul.f32 %v1477, 1.442695
    %v1542 = vpow.pop %v1541
    %v1543 = vmul.f32 %v1478, 1.442695
    %v1544 = vpow.pop %v1543
    %v1545 = vmul.f32 %v1479, 1.442695
    %v1546 = vpow.pop %v1545
    %v1547 = vmul.f32 %v1480, 1.442695
    %v1548 = vpow.pop %v1547
    %v1549 = vmul.f32 %v1481, 1.442695
    %v1550 = vpow.pop %v1549
    %v1551 = vmul.f32 %v1482, 1.442695
    %v1552 = vpow.pop %v1551
    %v1553 = vmul.f32 %v1483, 1.442695
    %v1554 = vpow.pop %v1553
    %v1555 = vmul.f32 %v1484, 1.442695
    %v1556 = vpow.pop %v1555
    %v1557 = vpack.c.bf16 %v1492, %v1486
    %v1558 = vpack.c.bf16 %v1494, %v1488
    %v1559 = vpack.c.bf16 %v1496, %v1490
    %v1560 = vpack.c.bf16 %v1498, %v1498
    %v1561 = vpack.c.bf16 %v1500, %v1500
    %v1562 = vpack.c.bf16 %v1502, %v1502
    %v1563 = vpack.c.bf16 %v1510, %v1504
    %v1564 = vpack.c.bf16 %v1512, %v1506
    %v1565 = vpack.c.bf16 %v1514, %v1508
    %v1566 = vpack.c.bf16 %v1516, %v1516
    %v1567 = vpack.c.bf16 %v1518, %v1518
    %v1568 = vpack.c.bf16 %v1520, %v1520
    %v1569 = vpack.c.bf16 %v1528, %v1522
    %v1570 = vpack.c.bf16 %v1530, %v1524
    %v1571 = vpack.c.bf16 %v1532, %v1526
    %v1572 = vpack.c.bf16 %v1534, %v1534
    %v1573 = vpack.c.bf16 %v1536, %v1536
    %v1574 = vpack.c.bf16 %v1538, %v1538
    %v1575 = vpack.c.bf16 %v1546, %v1540
    %v1576 = vpack.c.bf16 %v1548, %v1542
    %v1577 = vpack.c.bf16 %v1550, %v1544
    %v1578 = vpack.c.bf16 %v1552, %v1552
    %v1579 = vpack.c.bf16 %v1554, %v1554
    %v1580 = vpack.c.bf16 %v1556, %v1556
    %1605 = vrot.lane.b32.xlu0 %v573, 96
    %v1606 = vpop.permute.xlu0 %1605
    %1607 = vrot.lane.b32.xlu0 %v574, 96
    %v1608 = vpop.permute.xlu0 %1607
    %1609 = vrot.lane.b32.xlu0 %v575, 96
    %v1610 = vpop.permute.xlu0 %1609
    %1611 = vrot.lane.b32.xlu0 %v576, 96
    %v1612 = vpop.permute.xlu0 %1611
    %1613 = vrot.lane.b32.xlu0 %v577, 96
    %v1614 = vpop.permute.xlu0 %1613
    %1615 = vrot.lane.b32.xlu0 %v578, 96
    %v1616 = vpop.permute.xlu0 %1615
    %1617 = vrot.lane.b32.xlu0 %v579, 96
    %v1618 = vpop.permute.xlu0 %1617
    %1619 = vrot.lane.b32.xlu0 %v580, 96
    %v1620 = vpop.permute.xlu0 %1619
    %1621 = vrot.lane.b32.xlu0 %v581, 96
    %v1622 = vpop.permute.xlu0 %1621
    %1623 = vrot.lane.b32.xlu0 %v582, 96
    %v1624 = vpop.permute.xlu0 %1623
    %1625 = vrot.lane.b32.xlu0 %v583, 96
    %v1626 = vpop.permute.xlu0 %1625
    %1627 = vrot.lane.b32.xlu0 %v584, 96
    %v1628 = vpop.permute.xlu0 %1627
    %1629 = vrot.lane.b32.xlu0 %v585, 96
    %v1630 = vpop.permute.xlu0 %1629
    %1631 = vrot.lane.b32.xlu0 %v586, 96
    %v1632 = vpop.permute.xlu0 %1631
    %1633 = vrot.lane.b32.xlu0 %v587, 96
    %v1634 = vpop.permute.xlu0 %1633
    %1635 = vrot.lane.b32.xlu0 %v588, 96
    %v1636 = vpop.permute.xlu0 %1635
    %1637 = vrot.lane.b32.xlu0 %v589, 96
    %v1638 = vpop.permute.xlu0 %1637
    %1639 = vrot.lane.b32.xlu0 %v590, 96
    %v1640 = vpop.permute.xlu0 %1639
    %1641 = vrot.lane.b32.xlu0 %v591, 96
    %v1642 = vpop.permute.xlu0 %1641
    %1643 = vrot.lane.b32.xlu0 %v592, 96
    %v1644 = vpop.permute.xlu0 %1643
    %1645 = vrot.lane.b32.xlu0 %v593, 96
    %v1646 = vpop.permute.xlu0 %1645
    %1647 = vrot.lane.b32.xlu0 %v594, 96
    %v1648 = vpop.permute.xlu0 %1647
    %1649 = vrot.lane.b32.xlu0 %v595, 96
    %v1650 = vpop.permute.xlu0 %1649
    %1651 = vrot.lane.b32.xlu0 %v596, 96
    %v1652 = vpop.permute.xlu0 %1651
    %1677 = vmatprep.subr.bf16.mxu0 0
    %1678 = vmatpush1.bf16.msra.mxu0 %v1620
    %1679 = vmatprep.subr.bf16.mxu0 0
    %1680 = vmatpush1.bf16.msra.mxu0 %v1618
    %1681 = vmatprep.subr.bf16.mxu0 0
    %1682 = vmatpush1.bf16.msra.mxu0 %v1616
    %1683 = vmatprep.subr.bf16.mxu0 0
    %1684 = vmatpush1.bf16.msra.mxu0 %v1614
    %1685 = vmatprep.subr.bf16.mxu0 0
    %1686 = vmatpush1.bf16.msra.mxu0 %v1612
    %1687 = vmatprep.subr.bf16.mxu0 0
    %1688 = vmatpush1.bf16.msra.mxu0 %v1610
    %1689 = vmatprep.subr.bf16.mxu0 0
    %1690 = vmatpush1.bf16.msra.mxu0 %v1608
    %1691 = vmatprep.subr.bf16.mxu0 0
    %1692 = vmatpush1.bf16.msra.mxu0 %v1606
    %1693 = vmatprep.subr.bf16.mxu0 0
    %1694 = vmatpush2.bf16.msra.mxu0 %v1636
    %1695 = vmatprep.subr.bf16.mxu0 0
    %1696 = vmatpush2.bf16.msra.mxu0 %v1634
    %1697 = vmatprep.subr.bf16.mxu0 0
    %1698 = vmatpush2.bf16.msra.mxu0 %v1632
    %1699 = vmatprep.subr.bf16.mxu0 0
    %1700 = vmatpush2.bf16.msra.mxu0 %v1630
    %1701 = vmatprep.subr.bf16.mxu0 0
    %1702 = vmatpush2.bf16.msra.mxu0 %v1628
    %1703 = vmatprep.subr.bf16.mxu0 0
    %1704 = vmatpush2.bf16.msra.mxu0 %v1626
    %1705 = vmatprep.subr.bf16.mxu0 0
    %1706 = vmatpush2.bf16.msra.mxu0 %v1624
    %1707 = vmatprep.subr.bf16.mxu0 0
    %1708 = vmatpush2.bf16.msra.mxu0 %v1622
    %1709 = vmatprep.mubr.bf16.mxu0 %v1558
    %1710 = vmatmul.mubr.bf16.gmra.mxu0 %v1557
    %v1711 = vpop.f32.mrf.mxu0
    %v1712 = vadd.f32 0.0, %v1711
    %v1713 = vpop.f32.mrf.mxu0
    %v1714 = vpop.f32.mrf.mxu0
    %v1715 = vadd.f32 0.0, %v1714
    %v1716 = vpop.f32.mrf.mxu0
    %1717 = vmatprep.mubr.bf16.mxu0 %v1561
    %1718 = vmatmul.mubr.bf16.gmra.mxu0 %v1560
    %v1719 = vpop.f32.mrf.mxu0
    %v1720 = vadd.f32 0.0, %v1719
    %v1721 = vpop.f32.mrf.mxu0
    %v1722 = vpop.f32.mrf.mxu0
    %v1723 = vpop.f32.mrf.mxu0
    %1724 = vdwg.mxu0
    %1725 = vmatprep.subr.bf16.mxu0 0
    %1726 = vmatpush1.bf16.msra.mxu0 %v1652
    %1727 = vmatprep.subr.bf16.mxu0 0
    %1728 = vmatpush1.bf16.msra.mxu0 %v1650
    %1729 = vmatprep.subr.bf16.mxu0 0
    %1730 = vmatpush1.bf16.msra.mxu0 %v1648
    %1731 = vmatprep.subr.bf16.mxu0 0
    %1732 = vmatpush1.bf16.msra.mxu0 %v1646
    %1733 = vmatprep.subr.bf16.mxu0 0
    %1734 = vmatpush1.bf16.msra.mxu0 %v1644
    %1735 = vmatprep.subr.bf16.mxu0 0
    %1736 = vmatpush1.bf16.msra.mxu0 %v1642
    %1737 = vmatprep.subr.bf16.mxu0 0
    %1738 = vmatpush1.bf16.msra.mxu0 %v1640
    %1739 = vmatprep.subr.bf16.mxu0 0
    %1740 = vmatpush1.bf16.msra.mxu0 %v1638
    %1741 = vmatprep.subr.bf16.mxu0 0
    %1742 = vmatpush2.bf16.msra.mxu0 0
    %1743 = vmatprep.subr.bf16.mxu0 0
    %1744 = vmatpush2.bf16.msra.mxu0 0
    %1745 = vmatprep.subr.bf16.mxu0 0
    %1746 = vmatpush2.bf16.msra.mxu0 0
    %1747 = vmatprep.subr.bf16.mxu0 0
    %1748 = vmatpush2.bf16.msra.mxu0 0
    %1749 = vmatprep.subr.bf16.mxu0 0
    %1750 = vmatpush2.bf16.msra.mxu0 0
    %1751 = vmatprep.subr.bf16.mxu0 0
    %1752 = vmatpush2.bf16.msra.mxu0 0
    %1753 = vmatprep.subr.bf16.mxu0 0
    %1754 = vmatpush2.bf16.msra.mxu0 0
    %1755 = vmatprep.subr.bf16.mxu0 0
    %1756 = vmatpush2.bf16.msra.mxu0 0
    %1757 = vmatprep.mubr.bf16.mxu0 0
    %1758 = vmatmul.mubr.bf16.gmra.mxu0 %v1559
    %v1759 = vpop.f32.mrf.mxu0
    %v1760 = vadd.f32 %v1712, %v1759
    %v1761 = vpop.f32.mrf.mxu0
    %v1762 = vpop.f32.mrf.mxu0
    %v1763 = vadd.f32 %v1715, %v1762
    %v1764 = vpop.f32.mrf.mxu0
    %1765 = vmatprep.mubr.bf16.mxu0 0
    %1766 = vmatmul.mubr.bf16.gmra.mxu0 %v1562
    %v1767 = vpop.f32.mrf.mxu0
    %v1768 = vadd.f32 %v1720, %v1767
    %v1769 = vpop.f32.mrf.mxu0
    %v1770 = vpop.f32.mrf.mxu0
    %v1771 = vpop.f32.mrf.mxu0
    %1772 = vdwg.mxu0
    %1797 = vrot.lane.b32.xlu0 %v597, 96
    %v1798 = vpop.permute.xlu0 %1797
    %1799 = vrot.lane.b32.xlu0 %v598, 96
    %v1800 = vpop.permute.xlu0 %1799
    %1801 = vrot.lane.b32.xlu0 %v599, 96
    %v1802 = vpop.permute.xlu0 %1801
    %1803 = vrot.lane.b32.xlu0 %v600, 96
    %v1804 = vpop.permute.xlu0 %1803
    %1805 = vrot.lane.b32.xlu0 %v601, 96
    %v1806 = vpop.permute.xlu0 %1805
    %1807 = vrot.lane.b32.xlu0 %v602, 96
    %v1808 = vpop.permute.xlu0 %1807
    %1809 = vrot.lane.b32.xlu0 %v603, 96
    %v1810 = vpop.permute.xlu0 %1809
    %1811 = vrot.lane.b32.xlu0 %v604, 96
    %v1812 = vpop.permute.xlu0 %1811
    %1813 = vrot.lane.b32.xlu0 %v605, 96
    %v1814 = vpop.permute.xlu0 %1813
    %1815 = vrot.lane.b32.xlu0 %v606, 96
    %v1816 = vpop.permute.xlu0 %1815
    %1817 = vrot.lane.b32.xlu0 %v607, 96
    %v1818 = vpop.permute.xlu0 %1817
    %1819 = vrot.lane.b32.xlu0 %v608, 96
    %v1820 = vpop.permute.xlu0 %1819
    %1821 = vrot.lane.b32.xlu0 %v609, 96
    %v1822 = vpop.permute.xlu0 %1821
    %1823 = vrot.lane.b32.xlu0 %v610, 96
    %v1824 = vpop.permute.xlu0 %1823
    %1825 = vrot.lane.b32.xlu0 %v611, 96
    %v1826 = vpop.permute.xlu0 %1825
    %1827 = vrot.lane.b32.xlu0 %v612, 96
    %v1828 = vpop.permute.xlu0 %1827
    %1829 = vrot.lane.b32.xlu0 %v613, 96
    %v1830 = vpop.permute.xlu0 %1829
    %1831 = vrot.lane.b32.xlu0 %v614, 96
    %v1832 = vpop.permute.xlu0 %1831
    %1833 = vrot.lane.b32.xlu0 %v615, 96
    %v1834 = vpop.permute.xlu0 %1833
    %1835 = vrot.lane.b32.xlu0 %v616, 96
    %v1836 = vpop.permute.xlu0 %1835
    %1837 = vrot.lane.b32.xlu0 %v617, 96
    %v1838 = vpop.permute.xlu0 %1837
    %1839 = vrot.lane.b32.xlu0 %v618, 96
    %v1840 = vpop.permute.xlu0 %1839
    %1841 = vrot.lane.b32.xlu0 %v619, 96
    %v1842 = vpop.permute.xlu0 %1841
    %1843 = vrot.lane.b32.xlu0 %v620, 96
    %v1844 = vpop.permute.xlu0 %1843
    %1869 = vmatprep.subr.bf16.mxu0 0
    %1870 = vmatpush1.bf16.msra.mxu0 %v1812
    %1871 = vmatprep.subr.bf16.mxu0 0
    %1872 = vmatpush1.bf16.msra.mxu0 %v1810
    %1873 = vmatprep.subr.bf16.mxu0 0
    %1874 = vmatpush1.bf16.msra.mxu0 %v1808
    %1875 = vmatprep.subr.bf16.mxu0 0
    %1876 = vmatpush1.bf16.msra.mxu0 %v1806
    %1877 = vmatprep.subr.bf16.mxu0 0
    %1878 = vmatpush1.bf16.msra.mxu0 %v1804
    %1879 = vmatprep.subr.bf16.mxu0 0
    %1880 = vmatpush1.bf16.msra.mxu0 %v1802
    %1881 = vmatprep.subr.bf16.mxu0 0
    %1882 = vmatpush1.bf16.msra.mxu0 %v1800
    %1883 = vmatprep.subr.bf16.mxu0 0
    %1884 = vmatpush1.bf16.msra.mxu0 %v1798
    %1885 = vmatprep.subr.bf16.mxu0 0
    %1886 = vmatpush2.bf16.msra.mxu0 %v1828
    %1887 = vmatprep.subr.bf16.mxu0 0
    %1888 = vmatpush2.bf16.msra.mxu0 %v1826
    %1889 = vmatprep.subr.bf16.mxu0 0
    %1890 = vmatpush2.bf16.msra.mxu0 %v1824
    %1891 = vmatprep.subr.bf16.mxu0 0
    %1892 = vmatpush2.bf16.msra.mxu0 %v1822
    %1893 = vmatprep.subr.bf16.mxu0 0
    %1894 = vmatpush2.bf16.msra.mxu0 %v1820
    %1895 = vmatprep.subr.bf16.mxu0 0
    %1896 = vmatpush2.bf16.msra.mxu0 %v1818
    %1897 = vmatprep.subr.bf16.mxu0 0
    %1898 = vmatpush2.bf16.msra.mxu0 %v1816
    %1899 = vmatprep.subr.bf16.mxu0 0
    %1900 = vmatpush2.bf16.msra.mxu0 %v1814
    %1901 = vmatprep.mubr.bf16.mxu0 %v1564
    %1902 = vmatmul.mubr.bf16.gmra.mxu0 %v1563
    %v1903 = vpop.f32.mrf.mxu0
    %v1904 = vadd.f32 0.0, %v1903
    %v1905 = vpop.f32.mrf.mxu0
    %v1906 = vpop.f32.mrf.mxu0
    %v1907 = vadd.f32 0.0, %v1906
    %v1908 = vpop.f32.mrf.mxu0
    %1909 = vmatprep.mubr.bf16.mxu0 %v1567
    %1910 = vmatmul.mubr.bf16.gmra.mxu0 %v1566
    %v1911 = vpop.f32.mrf.mxu0
    %v1912 = vadd.f32 0.0, %v1911
    %v1913 = vpop.f32.mrf.mxu0
    %v1914 = vpop.f32.mrf.mxu0
    %v1915 = vpop.f32.mrf.mxu0
    %1916 = vdwg.mxu0
    %1917 = vmatprep.subr.bf16.mxu0 0
    %1918 = vmatpush1.bf16.msra.mxu0 %v1844
    %1919 = vmatprep.subr.bf16.mxu0 0
    %1920 = vmatpush1.bf16.msra.mxu0 %v1842
    %1921 = vmatprep.subr.bf16.mxu0 0
    %1922 = vmatpush1.bf16.msra.mxu0 %v1840
    %1923 = vmatprep.subr.bf16.mxu0 0
    %1924 = vmatpush1.bf16.msra.mxu0 %v1838
    %1925 = vmatprep.subr.bf16.mxu0 0
    %1926 = vmatpush1.bf16.msra.mxu0 %v1836
    %1927 = vmatprep.subr.bf16.mxu0 0
    %1928 = vmatpush1.bf16.msra.mxu0 %v1834
    %1929 = vmatprep.subr.bf16.mxu0 0
    %1930 = vmatpush1.bf16.msra.mxu0 %v1832
    %1931 = vmatprep.subr.bf16.mxu0 0
    %1932 = vmatpush1.bf16.msra.mxu0 %v1830
    %1933 = vmatprep.subr.bf16.mxu0 0
    %1934 = vmatpush2.bf16.msra.mxu0 0
    %1935 = vmatprep.subr.bf16.mxu0 0
    %1936 = vmatpush2.bf16.msra.mxu0 0
    %1937 = vmatprep.subr.bf16.mxu0 0
    %1938 = vmatpush2.bf16.msra.mxu0 0
    %1939 = vmatprep.subr.bf16.mxu0 0
    %1940 = vmatpush2.bf16.msra.mxu0 0
    %1941 = vmatprep.subr.bf16.mxu0 0
    %1942 = vmatpush2.bf16.msra.mxu0 0
    %1943 = vmatprep.subr.bf16.mxu0 0
    %1944 = vmatpush2.bf16.msra.mxu0 0
    %1945 = vmatprep.subr.bf16.mxu0 0
    %1946 = vmatpush2.bf16.msra.mxu0 0
    %1947 = vmatprep.subr.bf16.mxu0 0
    %1948 = vmatpush2.bf16.msra.mxu0 0
    %1949 = vmatprep.mubr.bf16.mxu0 0
    %1950 = vmatmul.mubr.bf16.gmra.mxu0 %v1565
    %v1951 = vpop.f32.mrf.mxu0
    %v1952 = vadd.f32 %v1904, %v1951
    %v1953 = vpop.f32.mrf.mxu0
    %v1954 = vpop.f32.mrf.mxu0
    %v1955 = vadd.f32 %v1907, %v1954
    %v1956 = vpop.f32.mrf.mxu0
    %1957 = vmatprep.mubr.bf16.mxu0 0
    %1958 = vmatmul.mubr.bf16.gmra.mxu0 %v1568
    %v1959 = vpop.f32.mrf.mxu0
    %v1960 = vadd.f32 %v1912, %v1959
    %v1961 = vpop.f32.mrf.mxu0
    %v1962 = vpop.f32.mrf.mxu0
    %v1963 = vpop.f32.mrf.mxu0
    %1964 = vdwg.mxu0
    %1989 = vrot.lane.b32.xlu0 %v621, 96
    %v1990 = vpop.permute.xlu0 %1989
    %1991 = vrot.lane.b32.xlu0 %v622, 96
    %v1992 = vpop.permute.xlu0 %1991
    %1993 = vrot.lane.b32.xlu0 %v623, 96
    %v1994 = vpop.permute.xlu0 %1993
    %1995 = vrot.lane.b32.xlu0 %v624, 96
    %v1996 = vpop.permute.xlu0 %1995
    %1997 = vrot.lane.b32.xlu0 %v625, 96
    %v1998 = vpop.permute.xlu0 %1997
    %1999 = vrot.lane.b32.xlu0 %v626, 96
    %v2000 = vpop.permute.xlu0 %1999
    %2001 = vrot.lane.b32.xlu0 %v627, 96
    %v2002 = vpop.permute.xlu0 %2001
    %2003 = vrot.lane.b32.xlu0 %v628, 96
    %v2004 = vpop.permute.xlu0 %2003
    %2005 = vrot.lane.b32.xlu0 %v629, 96
    %v2006 = vpop.permute.xlu0 %2005
    %2007 = vrot.lane.b32.xlu0 %v630, 96
    %v2008 = vpop.permute.xlu0 %2007
    %2009 = vrot.lane.b32.xlu0 %v631, 96
    %v2010 = vpop.permute.xlu0 %2009
    %2011 = vrot.lane.b32.xlu0 %v632, 96
    %v2012 = vpop.permute.xlu0 %2011
    %2013 = vrot.lane.b32.xlu0 %v633, 96
    %v2014 = vpop.permute.xlu0 %2013
    %2015 = vrot.lane.b32.xlu0 %v634, 96
    %v2016 = vpop.permute.xlu0 %2015
    %2017 = vrot.lane.b32.xlu0 %v635, 96
    %v2018 = vpop.permute.xlu0 %2017
    %2019 = vrot.lane.b32.xlu0 %v636, 96
    %v2020 = vpop.permute.xlu0 %2019
    %2021 = vrot.lane.b32.xlu0 %v637, 96
    %v2022 = vpop.permute.xlu0 %2021
    %2023 = vrot.lane.b32.xlu0 %v638, 96
    %v2024 = vpop.permute.xlu0 %2023
    %2025 = vrot.lane.b32.xlu0 %v639, 96
    %v2026 = vpop.permute.xlu0 %2025
    %2027 = vrot.lane.b32.xlu0 %v640, 96
    %v2028 = vpop.permute.xlu0 %2027
    %2029 = vrot.lane.b32.xlu0 %v641, 96
    %v2030 = vpop.permute.xlu0 %2029
    %2031 = vrot.lane.b32.xlu0 %v642, 96
    %v2032 = vpop.permute.xlu0 %2031
    %2033 = vrot.lane.b32.xlu0 %v643, 96
    %v2034 = vpop.permute.xlu0 %2033
    %2035 = vrot.lane.b32.xlu0 %v644, 96
    %v2036 = vpop.permute.xlu0 %2035
    %2061 = vmatprep.subr.bf16.mxu0 0
    %2062 = vmatpush1.bf16.msra.mxu0 %v2004
    %2063 = vmatprep.subr.bf16.mxu0 0
    %2064 = vmatpush1.bf16.msra.mxu0 %v2002
    %2065 = vmatprep.subr.bf16.mxu0 0
    %2066 = vmatpush1.bf16.msra.mxu0 %v2000
    %2067 = vmatprep.subr.bf16.mxu0 0
    %2068 = vmatpush1.bf16.msra.mxu0 %v1998
    %2069 = vmatprep.subr.bf16.mxu0 0
    %2070 = vmatpush1.bf16.msra.mxu0 %v1996
    %2071 = vmatprep.subr.bf16.mxu0 0
    %2072 = vmatpush1.bf16.msra.mxu0 %v1994
    %2073 = vmatprep.subr.bf16.mxu0 0
    %2074 = vmatpush1.bf16.msra.mxu0 %v1992
    %2075 = vmatprep.subr.bf16.mxu0 0
    %2076 = vmatpush1.bf16.msra.mxu0 %v1990
    %2077 = vmatprep.subr.bf16.mxu0 0
    %2078 = vmatpush2.bf16.msra.mxu0 %v2020
    %2079 = vmatprep.subr.bf16.mxu0 0
    %2080 = vmatpush2.bf16.msra.mxu0 %v2018
    %2081 = vmatprep.subr.bf16.mxu0 0
    %2082 = vmatpush2.bf16.msra.mxu0 %v2016
    %2083 = vmatprep.subr.bf16.mxu0 0
    %2084 = vmatpush2.bf16.msra.mxu0 %v2014
    %2085 = vmatprep.subr.bf16.mxu0 0
    %2086 = vmatpush2.bf16.msra.mxu0 %v2012
    %2087 = vmatprep.subr.bf16.mxu0 0
    %2088 = vmatpush2.bf16.msra.mxu0 %v2010
    %2089 = vmatprep.subr.bf16.mxu0 0
    %2090 = vmatpush2.bf16.msra.mxu0 %v2008
    %2091 = vmatprep.subr.bf16.mxu0 0
    %2092 = vmatpush2.bf16.msra.mxu0 %v2006
    %2093 = vmatprep.mubr.bf16.mxu0 %v1570
    %2094 = vmatmul.mubr.bf16.gmra.mxu0 %v1569
    %v2095 = vpop.f32.mrf.mxu0
    %v2096 = vadd.f32 0.0, %v2095
    %v2097 = vpop.f32.mrf.mxu0
    %v2098 = vpop.f32.mrf.mxu0
    %v2099 = vadd.f32 0.0, %v2098
    %v2100 = vpop.f32.mrf.mxu0
    %2101 = vmatprep.mubr.bf16.mxu0 %v1573
    %2102 = vmatmul.mubr.bf16.gmra.mxu0 %v1572
    %v2103 = vpop.f32.mrf.mxu0
    %v2104 = vadd.f32 0.0, %v2103
    %v2105 = vpop.f32.mrf.mxu0
    %v2106 = vpop.f32.mrf.mxu0
    %v2107 = vpop.f32.mrf.mxu0
    %2108 = vdwg.mxu0
    %2109 = vmatprep.subr.bf16.mxu0 0
    %2110 = vmatpush1.bf16.msra.mxu0 %v2036
    %2111 = vmatprep.subr.bf16.mxu0 0
    %2112 = vmatpush1.bf16.msra.mxu0 %v2034
    %2113 = vmatprep.subr.bf16.mxu0 0
    %2114 = vmatpush1.bf16.msra.mxu0 %v2032
    %2115 = vmatprep.subr.bf16.mxu0 0
    %2116 = vmatpush1.bf16.msra.mxu0 %v2030
    %2117 = vmatprep.subr.bf16.mxu0 0
    %2118 = vmatpush1.bf16.msra.mxu0 %v2028
    %2119 = vmatprep.subr.bf16.mxu0 0
    %2120 = vmatpush1.bf16.msra.mxu0 %v2026
    %2121 = vmatprep.subr.bf16.mxu0 0
    %2122 = vmatpush1.bf16.msra.mxu0 %v2024
    %2123 = vmatprep.subr.bf16.mxu0 0
    %2124 = vmatpush1.bf16.msra.mxu0 %v2022
    %2125 = vmatprep.subr.bf16.mxu0 0
    %2126 = vmatpush2.bf16.msra.mxu0 0
    %2127 = vmatprep.subr.bf16.mxu0 0
    %2128 = vmatpush2.bf16.msra.mxu0 0
    %2129 = vmatprep.subr.bf16.mxu0 0
    %2130 = vmatpush2.bf16.msra.mxu0 0
    %2131 = vmatprep.subr.bf16.mxu0 0
    %2132 = vmatpush2.bf16.msra.mxu0 0
    %2133 = vmatprep.subr.bf16.mxu0 0
    %2134 = vmatpush2.bf16.msra.mxu0 0
    %2135 = vmatprep.subr.bf16.mxu0 0
    %2136 = vmatpush2.bf16.msra.mxu0 0
    %2137 = vmatprep.subr.bf16.mxu0 0
    %2138 = vmatpush2.bf16.msra.mxu0 0
    %2139 = vmatprep.subr.bf16.mxu0 0
    %2140 = vmatpush2.bf16.msra.mxu0 0
    %2141 = vmatprep.mubr.bf16.mxu0 0
    %2142 = vmatmul.mubr.bf16.gmra.mxu0 %v1571
    %v2143 = vpop.f32.mrf.mxu0
    %v2144 = vadd.f32 %v2096, %v2143
    %v2145 = vpop.f32.mrf.mxu0
    %v2146 = vpop.f32.mrf.mxu0
    %v2147 = vadd.f32 %v2099, %v2146
    %v2148 = vpop.f32.mrf.mxu0
    %2149 = vmatprep.mubr.bf16.mxu0 0
    %2150 = vmatmul.mubr.bf16.gmra.mxu0 %v1574
    %v2151 = vpop.f32.mrf.mxu0
    %v2152 = vadd.f32 %v2104, %v2151
    %v2153 = vpop.f32.mrf.mxu0
    %v2154 = vpop.f32.mrf.mxu0
    %v2155 = vpop.f32.mrf.mxu0
    %2156 = vdwg.mxu0
    %2181 = vrot.lane.b32.xlu0 %v645, 96
    %v2182 = vpop.permute.xlu0 %2181
    %2183 = vrot.lane.b32.xlu0 %v646, 96
    %v2184 = vpop.permute.xlu0 %2183
    %2185 = vrot.lane.b32.xlu0 %v647, 96
    %v2186 = vpop.permute.xlu0 %2185
    %2187 = vrot.lane.b32.xlu0 %v648, 96
    %v2188 = vpop.permute.xlu0 %2187
    %2189 = vrot.lane.b32.xlu0 %v649, 96
    %v2190 = vpop.permute.xlu0 %2189
    %2191 = vrot.lane.b32.xlu0 %v650, 96
    %v2192 = vpop.permute.xlu0 %2191
    %2193 = vrot.lane.b32.xlu0 %v651, 96
    %v2194 = vpop.permute.xlu0 %2193
    %2195 = vrot.lane.b32.xlu0 %v652, 96
    %v2196 = vpop.permute.xlu0 %2195
    %2197 = vrot.lane.b32.xlu0 %v653, 96
    %v2198 = vpop.permute.xlu0 %2197
    %2199 = vrot.lane.b32.xlu0 %v654, 96
    %v2200 = vpop.permute.xlu0 %2199
    %2201 = vrot.lane.b32.xlu0 %v655, 96
    %v2202 = vpop.permute.xlu0 %2201
    %2203 = vrot.lane.b32.xlu0 %v656, 96
    %v2204 = vpop.permute.xlu0 %2203
    %2205 = vrot.lane.b32.xlu0 %v657, 96
    %v2206 = vpop.permute.xlu0 %2205
    %2207 = vrot.lane.b32.xlu0 %v658, 96
    %v2208 = vpop.permute.xlu0 %2207
    %2209 = vrot.lane.b32.xlu0 %v659, 96
    %v2210 = vpop.permute.xlu0 %2209
    %2211 = vrot.lane.b32.xlu0 %v660, 96
    %v2212 = vpop.permute.xlu0 %2211
    %2213 = vrot.lane.b32.xlu0 %v661, 96
    %v2214 = vpop.permute.xlu0 %2213
    %2215 = vrot.lane.b32.xlu0 %v662, 96
    %v2216 = vpop.permute.xlu0 %2215
    %2217 = vrot.lane.b32.xlu0 %v663, 96
    %v2218 = vpop.permute.xlu0 %2217
    %2219 = vrot.lane.b32.xlu0 %v664, 96
    %v2220 = vpop.permute.xlu0 %2219
    %2221 = vrot.lane.b32.xlu0 %v665, 96
    %v2222 = vpop.permute.xlu0 %2221
    %2223 = vrot.lane.b32.xlu0 %v666, 96
    %v2224 = vpop.permute.xlu0 %2223
    %2225 = vrot.lane.b32.xlu0 %v667, 96
    %v2226 = vpop.permute.xlu0 %2225
    %2227 = vrot.lane.b32.xlu0 %v668, 96
    %v2228 = vpop.permute.xlu0 %2227
    %2253 = vmatprep.subr.bf16.mxu0 0
    %2254 = vmatpush1.bf16.msra.mxu0 %v2196
    %2255 = vmatprep.subr.bf16.mxu0 0
    %2256 = vmatpush1.bf16.msra.mxu0 %v2194
    %2257 = vmatprep.subr.bf16.mxu0 0
    %2258 = vmatpush1.bf16.msra.mxu0 %v2192
    %2259 = vmatprep.subr.bf16.mxu0 0
    %2260 = vmatpush1.bf16.msra.mxu0 %v2190
    %2261 = vmatprep.subr.bf16.mxu0 0
    %2262 = vmatpush1.bf16.msra.mxu0 %v2188
    %2263 = vmatprep.subr.bf16.mxu0 0
    %2264 = vmatpush1.bf16.msra.mxu0 %v2186
    %2265 = vmatprep.subr.bf16.mxu0 0
    %2266 = vmatpush1.bf16.msra.mxu0 %v2184
    %2267 = vmatprep.subr.bf16.mxu0 0
    %2268 = vmatpush1.bf16.msra.mxu0 %v2182
    %2269 = vmatprep.subr.bf16.mxu0 0
    %2270 = vmatpush2.bf16.msra.mxu0 %v2212
    %2271 = vmatprep.subr.bf16.mxu0 0
    %2272 = vmatpush2.bf16.msra.mxu0 %v2210
    %2273 = vmatprep.subr.bf16.mxu0 0
    %2274 = vmatpush2.bf16.msra.mxu0 %v2208
    %2275 = vmatprep.subr.bf16.mxu0 0
    %2276 = vmatpush2.bf16.msra.mxu0 %v2206
    %2277 = vmatprep.subr.bf16.mxu0 0
    %2278 = vmatpush2.bf16.msra.mxu0 %v2204
    %2279 = vmatprep.subr.bf16.mxu0 0
    %2280 = vmatpush2.bf16.msra.mxu0 %v2202
    %2281 = vmatprep.subr.bf16.mxu0 0
    %2282 = vmatpush2.bf16.msra.mxu0 %v2200
    %2283 = vmatprep.subr.bf16.mxu0 0
    %2284 = vmatpush2.bf16.msra.mxu0 %v2198
    %2285 = vmatprep.mubr.bf16.mxu0 %v1576
    %2286 = vmatmul.mubr.bf16.gmra.mxu0 %v1575
    %v2287 = vpop.f32.mrf.mxu0
    %v2288 = vadd.f32 0.0, %v2287
    %v2289 = vpop.f32.mrf.mxu0
    %v2290 = vpop.f32.mrf.mxu0
    %v2291 = vadd.f32 0.0, %v2290
    %v2292 = vpop.f32.mrf.mxu0
    %2293 = vmatprep.mubr.bf16.mxu0 %v1579
    %2294 = vmatmul.mubr.bf16.gmra.mxu0 %v1578
    %v2295 = vpop.f32.mrf.mxu0
    %v2296 = vadd.f32 0.0, %v2295
    %v2297 = vpop.f32.mrf.mxu0
    %v2298 = vpop.f32.mrf.mxu0
    %v2299 = vpop.f32.mrf.mxu0
    %2300 = vdwg.mxu0
    %2301 = vmatprep.subr.bf16.mxu0 0
    %2302 = vmatpush1.bf16.msra.mxu0 %v2228
    %2303 = vmatprep.subr.bf16.mxu0 0
    %2304 = vmatpush1.bf16.msra.mxu0 %v2226
    %2305 = vmatprep.subr.bf16.mxu0 0
    %2306 = vmatpush1.bf16.msra.mxu0 %v2224
    %2307 = vmatprep.subr.bf16.mxu0 0
    %2308 = vmatpush1.bf16.msra.mxu0 %v2222
    %2309 = vmatprep.subr.bf16.mxu0 0
    %2310 = vmatpush1.bf16.msra.mxu0 %v2220
    %2311 = vmatprep.subr.bf16.mxu0 0
    %2312 = vmatpush1.bf16.msra.mxu0 %v2218
    %2313 = vmatprep.subr.bf16.mxu0 0
    %2314 = vmatpush1.bf16.msra.mxu0 %v2216
    %2315 = vmatprep.subr.bf16.mxu0 0
    %2316 = vmatpush1.bf16.msra.mxu0 %v2214
    %2317 = vmatprep.subr.bf16.mxu0 0
    %2318 = vmatpush2.bf16.msra.mxu0 0
    %2319 = vmatprep.subr.bf16.mxu0 0
    %2320 = vmatpush2.bf16.msra.mxu0 0
    %2321 = vmatprep.subr.bf16.mxu0 0
    %2322 = vmatpush2.bf16.msra.mxu0 0
    %2323 = vmatprep.subr.bf16.mxu0 0
    %2324 = vmatpush2.bf16.msra.mxu0 0
    %2325 = vmatprep.subr.bf16.mxu0 0
    %2326 = vmatpush2.bf16.msra.mxu0 0
    %2327 = vmatprep.subr.bf16.mxu0 0
    %2328 = vmatpush2.bf16.msra.mxu0 0
    %2329 = vmatprep.subr.bf16.mxu0 0
    %2330 = vmatpush2.bf16.msra.mxu0 0
    %2331 = vmatprep.subr.bf16.mxu0 0
    %2332 = vmatpush2.bf16.msra.mxu0 0
    %2333 = vmatprep.mubr.bf16.mxu0 0
    %2334 = vmatmul.mubr.bf16.gmra.mxu0 %v1577
    %v2335 = vpop.f32.mrf.mxu0
    %v2336 = vadd.f32 %v2288, %v2335
    %v2337 = vpop.f32.mrf.mxu0
    %v2338 = vpop.f32.mrf.mxu0
    %v2339 = vadd.f32 %v2291, %v2338
    %v2340 = vpop.f32.mrf.mxu0
    %2341 = vmatprep.mubr.bf16.mxu0 0
    %2342 = vmatmul.mubr.bf16.gmra.mxu0 %v1580
    %v2343 = vpop.f32.mrf.mxu0
    %v2344 = vadd.f32 %v2296, %v2343
    %v2345 = vpop.f32.mrf.mxu0
    %v2346 = vpop.f32.mrf.mxu0
    %v2347 = vpop.f32.mrf.mxu0
    %2348 = vdwg.mxu0
    %v2349 = vmax.f32 %v1760, 1e-30
    %v2350 = vmax.f32 %v1763, 1e-30
    %v2351 = vmax.f32 %v1768, 1e-30
    %v2352 = vmax.f32 %v1952, 1e-30
    %v2353 = vmax.f32 %v1955, 1e-30
    %v2354 = vmax.f32 %v1960, 1e-30
    %v2355 = vmax.f32 %v2144, 1e-30
    %v2356 = vmax.f32 %v2147, 1e-30
    %v2357 = vmax.f32 %v2152, 1e-30
    %v2358 = vmax.f32 %v2336, 1e-30
    %v2359 = vmax.f32 %v2339, 1e-30
    %v2360 = vmax.f32 %v2344, 1e-30
    %v2361 = vrcp.pop %v2349
    %v2362 = vrcp.pop %v2350
    %v2363 = vrcp.pop %v2351
    %v2364 = vrcp.pop %v2352
    %v2365 = vrcp.pop %v2353
    %v2366 = vrcp.pop %v2354
    %v2367 = vrcp.pop %v2355
    %v2368 = vrcp.pop %v2356
    %v2369 = vrcp.pop %v2357
    %v2370 = vrcp.pop %v2358
    %v2371 = vrcp.pop %v2359
    %v2372 = vrcp.pop %v2360
    %2385 = vrot.lane.b32.xlu0 %v2361, 96
    %v2386 = vpop.permute.xlu0 %2385
    %2387 = vrot.lane.b32.xlu0 %v2362, 96
    %v2388 = vpop.permute.xlu0 %2387
    %2389 = vrot.lane.b32.xlu0 %v2363, 96
    %v2390 = vpop.permute.xlu0 %2389
    %2391 = vrot.lane.b32.xlu0 %v2364, 96
    %v2392 = vpop.permute.xlu0 %2391
    %2393 = vrot.lane.b32.xlu0 %v2365, 96
    %v2394 = vpop.permute.xlu0 %2393
    %2395 = vrot.lane.b32.xlu0 %v2366, 96
    %v2396 = vpop.permute.xlu0 %2395
    %2397 = vrot.lane.b32.xlu0 %v2367, 96
    %v2398 = vpop.permute.xlu0 %2397
    %2399 = vrot.lane.b32.xlu0 %v2368, 96
    %v2400 = vpop.permute.xlu0 %2399
    %2401 = vrot.lane.b32.xlu0 %v2369, 96
    %v2402 = vpop.permute.xlu0 %2401
    %2403 = vrot.lane.b32.xlu0 %v2370, 96
    %v2404 = vpop.permute.xlu0 %2403
    %2405 = vrot.lane.b32.xlu0 %v2371, 96
    %v2406 = vpop.permute.xlu0 %2405
    %2407 = vrot.lane.b32.xlu0 %v2372, 96
    %v2408 = vpop.permute.xlu0 %2407
    %v2421 = vmul.f32 %v1760, %v2386
    %v2422 = vmul.f32 %v1763, %v2388
    %v2423 = vmul.f32 %v1768, %v2390
    %v2424 = vmul.f32 %v1952, %v2392
    %v2425 = vmul.f32 %v1955, %v2394
    %v2426 = vmul.f32 %v1960, %v2396
    %v2427 = vmul.f32 %v2144, %v2398
    %v2428 = vmul.f32 %v2147, %v2400
    %v2429 = vmul.f32 %v2152, %v2402
    %v2430 = vmul.f32 %v2336, %v2404
    %v2431 = vmul.f32 %v2339, %v2406
    %v2432 = vmul.f32 %v2344, %v2408
    %v2433 = vpack.c.bf16 %v2422, %v2421
    %v2434 = vpack.c.bf16 %v2424, %v2423
    %v2435 = vpack.c.bf16 %v2426, %v2425
    %v2436 = vpack.c.bf16 %v2428, %v2427
    %v2437 = vpack.c.bf16 %v2430, %v2429
    %v2438 = vpack.c.bf16 %v2432, %v2431
    %v2443 = vunpack.c.l.b16 %v162
    %v2444 = vunpack.c.l.b16 %v164
    %v2445 = vunpack.c.l.b16 %v166
    %v2446 = vunpack.c.l.b16 %v168
    %v2447 = vpack.c.b16 %v2444, %v2443
    %v2448 = vpack.c.b16 %v2446, %v2445
    %v2452 = vsel %vm100, %v2433, 0
    %v2455 = vsel %vm100, %v2434, 0
    %v2458 = vsel %vm100, %v2435, 0
    %v2461 = vsel %vm100, %v2436, 0
    %v2464 = vsel %vm100, %v2437, 0
    %v2467 = vsel %vm100, %v2438, 0
    %2469 = vmatprep.subr.bf16.mxu0 0
    %2470 = vmatpush1.bf16.msra.mxu0 0
    %2471 = vmatprep.subr.bf16.mxu0 0
    %2472 = vmatpush1.bf16.msra.mxu0 0
    %2473 = vmatprep.subr.bf16.mxu0 0
    %2474 = vmatpush1.bf16.msra.mxu0 0
    %2475 = vmatprep.subr.bf16.mxu0 0
    %2476 = vmatpush1.bf16.msra.mxu0 0
    %2477 = vmatprep.subr.bf16.mxu0 0
    %2478 = vmatpush1.bf16.msra.mxu0 0
    %2479 = vmatprep.subr.bf16.mxu0 0
    %2480 = vmatpush1.bf16.msra.mxu0 0
    %2481 = vmatprep.subr.bf16.mxu0 0
    %2482 = vmatpush1.bf16.msra.mxu0 %v2448
    %2483 = vmatprep.subr.bf16.mxu0 0
    %2484 = vmatpush1.bf16.msra.mxu0 %v2447
    %2485 = vmatprep.subr.bf16.mxu0 0
    %2486 = vmatpush2.bf16.msra.mxu0 0
    %2487 = vmatprep.subr.bf16.mxu0 0
    %2488 = vmatpush2.bf16.msra.mxu0 0
    %2489 = vmatprep.subr.bf16.mxu0 0
    %2490 = vmatpush2.bf16.msra.mxu0 0
    %2491 = vmatprep.subr.bf16.mxu0 0
    %2492 = vmatpush2.bf16.msra.mxu0 0
    %2493 = vmatprep.subr.bf16.mxu0 0
    %2494 = vmatpush2.bf16.msra.mxu0 0
    %2495 = vmatprep.subr.bf16.mxu0 0
    %2496 = vmatpush2.bf16.msra.mxu0 0
    %2497 = vmatprep.subr.bf16.mxu0 0
    %2498 = vmatpush2.bf16.msra.mxu0 0
    %2499 = vmatprep.subr.bf16.mxu0 0
    %2500 = vmatpush2.bf16.msra.mxu0 0
    %2501 = vmatprep.mubr.bf16.mxu0 0
    %2502 = vmatmul.mubr.bf16.gmra.mxu0 %v2452
    %v2503 = vpop.f32.mrf.mxu0
    %v2504 = vadd.f32 0.0, %v2503
    %v2505 = vpop.f32.mrf.mxu0
    %v2506 = vpop.f32.mrf.mxu0
    %v2507 = vadd.f32 0.0, %v2506
    %v2508 = vpop.f32.mrf.mxu0
    %2509 = vmatprep.mubr.bf16.mxu0 0
    %2510 = vmatmul.mubr.bf16.gmra.mxu0 %v2455
    %v2511 = vpop.f32.mrf.mxu0
    %v2512 = vadd.f32 0.0, %v2511
    %v2513 = vpop.f32.mrf.mxu0
    %v2514 = vpop.f32.mrf.mxu0
    %v2515 = vadd.f32 0.0, %v2514
    %v2516 = vpop.f32.mrf.mxu0
    %2517 = vmatprep.mubr.bf16.mxu0 0
    %2518 = vmatmul.mubr.bf16.gmra.mxu0 %v2458
    %v2519 = vpop.f32.mrf.mxu0
    %v2520 = vadd.f32 0.0, %v2519
    %v2521 = vpop.f32.mrf.mxu0
    %v2522 = vpop.f32.mrf.mxu0
    %v2523 = vadd.f32 0.0, %v2522
    %v2524 = vpop.f32.mrf.mxu0
    %2525 = vmatprep.mubr.bf16.mxu0 0
    %2526 = vmatmul.mubr.bf16.gmra.mxu0 %v2461
    %v2527 = vpop.f32.mrf.mxu0
    %v2528 = vadd.f32 0.0, %v2527
    %v2529 = vpop.f32.mrf.mxu0
    %v2530 = vpop.f32.mrf.mxu0
    %v2531 = vadd.f32 0.0, %v2530
    %v2532 = vpop.f32.mrf.mxu0
    %2533 = vmatprep.mubr.bf16.mxu0 0
    %2534 = vmatmul.mubr.bf16.gmra.mxu0 %v2464
    %v2535 = vpop.f32.mrf.mxu0
    %v2536 = vadd.f32 0.0, %v2535
    %v2537 = vpop.f32.mrf.mxu0
    %v2538 = vpop.f32.mrf.mxu0
    %v2539 = vadd.f32 0.0, %v2538
    %v2540 = vpop.f32.mrf.mxu0
    %2541 = vmatprep.mubr.bf16.mxu0 0
    %2542 = vmatmul.mubr.bf16.gmra.mxu0 %v2467
    %v2543 = vpop.f32.mrf.mxu0
    %v2544 = vadd.f32 0.0, %v2543
    %v2545 = vpop.f32.mrf.mxu0
    %v2546 = vpop.f32.mrf.mxu0
    %v2547 = vadd.f32 0.0, %v2546
    %v2548 = vpop.f32.mrf.mxu0
    %2549 = vdwg.mxu0
    %v2550 = vadd.f32 %v142, %v2504
    %v2551 = vadd.f32 %v160, %v2507
    %v2552 = vadd.f32 %v160, %v2512
    %v2553 = vadd.f32 %v145, %v2515
    %v2554 = vadd.f32 %v160, %v2520
    %v2555 = vadd.f32 %v160, %v2523
    %v2556 = vadd.f32 %v150, %v2528
    %v2557 = vadd.f32 %v160, %v2531
    %v2558 = vadd.f32 %v160, %v2536
    %v2559 = vadd.f32 %v153, %v2539
    %v2560 = vadd.f32 %v160, %v2544
    %v2561 = vadd.f32 %v160, %v2547
    %v2562 = vld [vmem:[%s1 + $0x8] sm:$0x1]
    %v2563 = vlaneseq
    %v2564 = vshrl.u32 %v2563, 7
    %v2565 = vsub.s32 0, %v2564
    %v2566 = vrot.slane %v2562, %v2565
    %v2567 = vadd.f32 %v2550, %v2566
    %v2568 = vadd.f32 %v2551, %v2566
    %v2569 = vadd.f32 %v2552, %v2566
    %v2570 = vadd.f32 %v2553, %v2566
    %v2571 = vadd.f32 %v2554, %v2566
    %v2572 = vadd.f32 %v2555, %v2566
    %v2573 = vadd.f32 %v2556, %v2566
    %v2574 = vadd.f32 %v2557, %v2566
    %v2575 = vadd.f32 %v2558, %v2566
    %v2576 = vadd.f32 %v2559, %v2566
    %v2577 = vadd.f32 %v2560, %v2566
    %v2578 = vadd.f32 %v2561, %v2566
    %v2579 = vld [vmem:[%s1 + $0x9] sm:$0x1]
    %v2580 = vld [vmem:[%s1 + $0xa] sm:$0x1]
    %v2581 = vsel %vm100, %v2567, 0.0
    %2582 = vadd.xlane.f32.xlu0 %v2581
    %v2583 = vpop.xlane.xlu0 %2582
    %v2584 = vsel %vm100, %v2568, 0.0
    %2585 = vadd.xlane.f32.xlu0 %v2584
    %v2586 = vpop.xlane.xlu0 %2585
    %v2587 = vsel %vm100, %v2569, 0.0
    %2588 = vadd.xlane.f32.xlu0 %v2587
    %v2589 = vpop.xlane.xlu0 %2588
    %v2590 = vsel %vm100, %v2570, 0.0
    %2591 = vadd.xlane.f32.xlu0 %v2590
    %v2592 = vpop.xlane.xlu0 %2591
    %v2593 = vsel %vm100, %v2571, 0.0
    %2594 = vadd.xlane.f32.xlu0 %v2593
    %v2595 = vpop.xlane.xlu0 %2594
    %v2596 = vsel %vm100, %v2572, 0.0
    %2597 = vadd.xlane.f32.xlu0 %v2596
    %v2598 = vpop.xlane.xlu0 %2597
    %v2599 = vsel %vm100, %v2573, 0.0
    %2600 = vadd.xlane.f32.xlu0 %v2599
    %v2601 = vpop.xlane.xlu0 %2600
    %v2602 = vsel %vm100, %v2574, 0.0
    %2603 = vadd.xlane.f32.xlu0 %v2602
    %v2604 = vpop.xlane.xlu0 %2603
    %v2605 = vsel %vm100, %v2575, 0.0
    %2606 = vadd.xlane.f32.xlu0 %v2605
    %v2607 = vpop.xlane.xlu0 %2606
    %v2608 = vsel %vm100, %v2576, 0.0
    %2609 = vadd.xlane.f32.xlu0 %v2608
    %v2610 = vpop.xlane.xlu0 %2609
    %v2611 = vsel %vm100, %v2577, 0.0
    %2612 = vadd.xlane.f32.xlu0 %v2611
    %v2613 = vpop.xlane.xlu0 %2612
    %v2614 = vsel %vm100, %v2578, 0.0
    %2615 = vadd.xlane.f32.xlu0 %v2614
    %v2616 = vpop.xlane.xlu0 %2615
    %v2617 = vmul.f32 %v2583, %v186
    %v2618 = vmul.f32 %v2586, %v186
    %v2619 = vmul.f32 %v2589, %v186
    %v2620 = vmul.f32 %v2592, %v186
    %v2621 = vmul.f32 %v2595, %v186
    %v2622 = vmul.f32 %v2598, %v186
    %v2623 = vmul.f32 %v2601, %v186
    %v2624 = vmul.f32 %v2604, %v186
    %v2625 = vmul.f32 %v2607, %v186
    %v2626 = vmul.f32 %v2610, %v186
    %v2627 = vmul.f32 %v2613, %v186
    %v2628 = vmul.f32 %v2616, %v186
    %v2629 = vsub.f32 %v2567, %v2617
    %v2630 = vsub.f32 %v2568, %v2618
    %v2631 = vsub.f32 %v2569, %v2619
    %v2632 = vsub.f32 %v2570, %v2620
    %v2633 = vsub.f32 %v2571, %v2621
    %v2634 = vsub.f32 %v2572, %v2622
    %v2635 = vsub.f32 %v2573, %v2623
    %v2636 = vsub.f32 %v2574, %v2624
    %v2637 = vsub.f32 %v2575, %v2625
    %v2638 = vsub.f32 %v2576, %v2626
    %v2639 = vsub.f32 %v2577, %v2627
    %v2640 = vsub.f32 %v2578, %v2628
    %v2641 = vmul.f32 %v2629, %v2629
    %v2642 = vmul.f32 %v2630, %v2630
    %v2643 = vmul.f32 %v2631, %v2631
    %v2644 = vmul.f32 %v2632, %v2632
    %v2645 = vmul.f32 %v2633, %v2633
    %v2646 = vmul.f32 %v2634, %v2634
    %v2647 = vmul.f32 %v2635, %v2635
    %v2648 = vmul.f32 %v2636, %v2636
    %v2649 = vmul.f32 %v2637, %v2637
    %v2650 = vmul.f32 %v2638, %v2638
    %v2651 = vmul.f32 %v2639, %v2639
    %v2652 = vmul.f32 %v2640, %v2640
    %v2653 = vsel %vm100, %v2641, 0.0
    %2654 = vadd.xlane.f32.xlu0 %v2653
    %v2655 = vpop.xlane.xlu0 %2654
    %v2656 = vsel %vm100, %v2642, 0.0
    %2657 = vadd.xlane.f32.xlu0 %v2656
    %v2658 = vpop.xlane.xlu0 %2657
    %v2659 = vsel %vm100, %v2643, 0.0
    %2660 = vadd.xlane.f32.xlu0 %v2659
    %v2661 = vpop.xlane.xlu0 %2660
    %v2662 = vsel %vm100, %v2644, 0.0
    %2663 = vadd.xlane.f32.xlu0 %v2662
    %v2664 = vpop.xlane.xlu0 %2663
    %v2665 = vsel %vm100, %v2645, 0.0
    %2666 = vadd.xlane.f32.xlu0 %v2665
    %v2667 = vpop.xlane.xlu0 %2666
    %v2668 = vsel %vm100, %v2646, 0.0
    %2669 = vadd.xlane.f32.xlu0 %v2668
    %v2670 = vpop.xlane.xlu0 %2669
    %v2671 = vsel %vm100, %v2647, 0.0
    %2672 = vadd.xlane.f32.xlu0 %v2671
    %v2673 = vpop.xlane.xlu0 %2672
    %v2674 = vsel %vm100, %v2648, 0.0
    %2675 = vadd.xlane.f32.xlu0 %v2674
    %v2676 = vpop.xlane.xlu0 %2675
    %v2677 = vsel %vm100, %v2649, 0.0
    %2678 = vadd.xlane.f32.xlu0 %v2677
    %v2679 = vpop.xlane.xlu0 %2678
    %v2680 = vsel %vm100, %v2650, 0.0
    %2681 = vadd.xlane.f32.xlu0 %v2680
    %v2682 = vpop.xlane.xlu0 %2681
    %v2683 = vsel %vm100, %v2651, 0.0
    %2684 = vadd.xlane.f32.xlu0 %v2683
    %v2685 = vpop.xlane.xlu0 %2684
    %v2686 = vsel %vm100, %v2652, 0.0
    %2687 = vadd.xlane.f32.xlu0 %v2686
    %v2688 = vpop.xlane.xlu0 %2687
    %v2689 = vmul.f32 %v2655, %v186
    %v2690 = vmul.f32 %v2658, %v186
    %v2691 = vmul.f32 %v2661, %v186
    %v2692 = vmul.f32 %v2664, %v186
    %v2693 = vmul.f32 %v2667, %v186
    %v2694 = vmul.f32 %v2670, %v186
    %v2695 = vmul.f32 %v2673, %v186
    %v2696 = vmul.f32 %v2676, %v186
    %v2697 = vmul.f32 %v2679, %v186
    %v2698 = vmul.f32 %v2682, %v186
    %v2699 = vmul.f32 %v2685, %v186
    %v2700 = vmul.f32 %v2688, %v186
    %v2701 = vadd.f32 %v2689, 1e-05
    %v2702 = vadd.f32 %v2690, 1e-05
    %v2703 = vadd.f32 %v2691, 1e-05
    %v2704 = vadd.f32 %v2692, 1e-05
    %v2705 = vadd.f32 %v2693, 1e-05
    %v2706 = vadd.f32 %v2694, 1e-05
    %v2707 = vadd.f32 %v2695, 1e-05
    %v2708 = vadd.f32 %v2696, 1e-05
    %v2709 = vadd.f32 %v2697, 1e-05
    %v2710 = vadd.f32 %v2698, 1e-05
    %v2711 = vadd.f32 %v2699, 1e-05
    %v2712 = vadd.f32 %v2700, 1e-05
    %v2713 = vrsqrt.pop %v2701
    %v2714 = vrsqrt.pop %v2702
    %v2715 = vrsqrt.pop %v2703
    %v2716 = vrsqrt.pop %v2704
    %v2717 = vrsqrt.pop %v2705
    %v2718 = vrsqrt.pop %v2706
    %v2719 = vrsqrt.pop %v2707
    %v2720 = vrsqrt.pop %v2708
    %v2721 = vrsqrt.pop %v2709
    %v2722 = vrsqrt.pop %v2710
    %v2723 = vrsqrt.pop %v2711
    %v2724 = vrsqrt.pop %v2712
    %v2725 = vmul.f32 %v2629, %v2713
    %v2726 = vmul.f32 %v2630, %v2714
    %v2727 = vmul.f32 %v2631, %v2715
    %v2728 = vmul.f32 %v2632, %v2716
    %v2729 = vmul.f32 %v2633, %v2717
    %v2730 = vmul.f32 %v2634, %v2718
    %v2731 = vmul.f32 %v2635, %v2719
    %v2732 = vmul.f32 %v2636, %v2720
    %v2733 = vmul.f32 %v2637, %v2721
    %v2734 = vmul.f32 %v2638, %v2722
    %v2735 = vmul.f32 %v2639, %v2723
    %v2736 = vmul.f32 %v2640, %v2724
    %v2737 = vlaneseq
    %v2738 = vshrl.u32 %v2737, 7
    %v2739 = vsub.s32 0, %v2738
    %v2740 = vrot.slane %v2579, %v2739
    %v2741 = vmul.f32 %v2725, %v2740
    %v2742 = vmul.f32 %v2726, %v2740
    %v2743 = vmul.f32 %v2727, %v2740
    %v2744 = vmul.f32 %v2728, %v2740
    %v2745 = vmul.f32 %v2729, %v2740
    %v2746 = vmul.f32 %v2730, %v2740
    %v2747 = vmul.f32 %v2731, %v2740
    %v2748 = vmul.f32 %v2732, %v2740
    %v2749 = vmul.f32 %v2733, %v2740
    %v2750 = vmul.f32 %v2734, %v2740
    %v2751 = vmul.f32 %v2735, %v2740
    %v2752 = vmul.f32 %v2736, %v2740
    %v2753 = vlaneseq
    %v2754 = vshrl.u32 %v2753, 7
    %v2755 = vsub.s32 0, %v2754
    %v2756 = vrot.slane %v2580, %v2755
    %v2757 = vadd.f32 %v2741, %v2756
    %v2758 = vadd.f32 %v2742, %v2756
    %v2759 = vadd.f32 %v2743, %v2756
    %v2760 = vadd.f32 %v2744, %v2756
    %v2761 = vadd.f32 %v2745, %v2756
    %v2762 = vadd.f32 %v2746, %v2756
    %v2763 = vadd.f32 %v2747, %v2756
    %v2764 = vadd.f32 %v2748, %v2756
    %v2765 = vadd.f32 %v2749, %v2756
    %v2766 = vadd.f32 %v2750, %v2756
    %v2767 = vadd.f32 %v2751, %v2756
    %v2768 = vadd.f32 %v2752, %v2756
    %v2769 = vpack.c.bf16 %v2758, %v2757
    %v2770 = vpack.c.bf16 %v2760, %v2759
    %v2771 = vpack.c.bf16 %v2762, %v2761
    %v2772 = vpack.c.bf16 %v2764, %v2763
    %v2773 = vpack.c.bf16 %v2766, %v2765
    %v2774 = vpack.c.bf16 %v2768, %v2767
    %v2775 = vld [vmem:[%s1 + $0xb] sm:$0x1]
    %v2776 = vlaneseq
    %v2777 = vshrl.u32 %v2776, 7
    %v2778 = vsub.s32 0, %v2777
    %v2779 = vrot.slane %v2775, %v2778
    %v2780 = vunpack.c.h.b16 %v161
    %v2781 = vunpack.c.h.b16 %v163
    %v2782 = vunpack.c.h.b16 %v165
    %v2783 = vunpack.c.h.b16 %v167
    %v2784 = vpack.c.b16 %v2781, %v2780
    %v2785 = vpack.c.b16 %v2783, %v2782
    %v2789 = vsel %vm100, %v2769, 0
    %v2792 = vsel %vm100, %v2770, 0
    %v2795 = vsel %vm100, %v2771, 0
    %v2798 = vsel %vm100, %v2772, 0
    %v2801 = vsel %vm100, %v2773, 0
    %v2804 = vsel %vm100, %v2774, 0
    %2806 = vmatprep.subr.bf16.mxu0 0
    %2807 = vmatpush1.bf16.msra.mxu0 0
    %2808 = vmatprep.subr.bf16.mxu0 0
    %2809 = vmatpush1.bf16.msra.mxu0 0
    %2810 = vmatprep.subr.bf16.mxu0 0
    %2811 = vmatpush1.bf16.msra.mxu0 0
    %2812 = vmatprep.subr.bf16.mxu0 0
    %2813 = vmatpush1.bf16.msra.mxu0 0
    %2814 = vmatprep.subr.bf16.mxu0 0
    %2815 = vmatpush1.bf16.msra.mxu0 0
    %2816 = vmatprep.subr.bf16.mxu0 0
    %2817 = vmatpush1.bf16.msra.mxu0 0
    %2818 = vmatprep.subr.bf16.mxu0 0
    %2819 = vmatpush1.bf16.msra.mxu0 %v2785
    %2820 = vmatprep.subr.bf16.mxu0 0
    %2821 = vmatpush1.bf16.msra.mxu0 %v2784
    %2822 = vmatprep.subr.bf16.mxu0 0
    %2823 = vmatpush2.bf16.msra.mxu0 0
    %2824 = vmatprep.subr.bf16.mxu0 0
    %2825 = vmatpush2.bf16.msra.mxu0 0
    %2826 = vmatprep.subr.bf16.mxu0 0
    %2827 = vmatpush2.bf16.msra.mxu0 0
    %2828 = vmatprep.subr.bf16.mxu0 0
    %2829 = vmatpush2.bf16.msra.mxu0 0
    %2830 = vmatprep.subr.bf16.mxu0 0
    %2831 = vmatpush2.bf16.msra.mxu0 0
    %2832 = vmatprep.subr.bf16.mxu0 0
    %2833 = vmatpush2.bf16.msra.mxu0 0
    %2834 = vmatprep.subr.bf16.mxu0 0
    %2835 = vmatpush2.bf16.msra.mxu0 0
    %2836 = vmatprep.subr.bf16.mxu0 0
    %2837 = vmatpush2.bf16.msra.mxu0 0
    %2838 = vmatprep.mubr.bf16.mxu0 0
    %2839 = vmatmul.mubr.bf16.gmra.mxu0 %v2789
    %v2840 = vpop.f32.mrf.mxu0
    %v2841 = vadd.f32 %v2779, %v2840
    %v2842 = vpop.f32.mrf.mxu0
    %v2843 = vpop.f32.mrf.mxu0
    %v2844 = vadd.f32 %v2779, %v2843
    %v2845 = vpop.f32.mrf.mxu0
    %2846 = vmatprep.mubr.bf16.mxu0 0
    %2847 = vmatmul.mubr.bf16.gmra.mxu0 %v2792
    %v2848 = vpop.f32.mrf.mxu0
    %v2849 = vadd.f32 %v2779, %v2848
    %v2850 = vpop.f32.mrf.mxu0
    %v2851 = vpop.f32.mrf.mxu0
    %v2852 = vadd.f32 %v2779, %v2851
    %v2853 = vpop.f32.mrf.mxu0
    %2854 = vmatprep.mubr.bf16.mxu0 0
    %2855 = vmatmul.mubr.bf16.gmra.mxu0 %v2795
    %v2856 = vpop.f32.mrf.mxu0
    %v2857 = vadd.f32 %v2779, %v2856
    %v2858 = vpop.f32.mrf.mxu0
    %v2859 = vpop.f32.mrf.mxu0
    %v2860 = vadd.f32 %v2779, %v2859
    %v2861 = vpop.f32.mrf.mxu0
    %2862 = vmatprep.mubr.bf16.mxu0 0
    %2863 = vmatmul.mubr.bf16.gmra.mxu0 %v2798
    %v2864 = vpop.f32.mrf.mxu0
    %v2865 = vadd.f32 %v2779, %v2864
    %v2866 = vpop.f32.mrf.mxu0
    %v2867 = vpop.f32.mrf.mxu0
    %v2868 = vadd.f32 %v2779, %v2867
    %v2869 = vpop.f32.mrf.mxu0
    %2870 = vmatprep.mubr.bf16.mxu0 0
    %2871 = vmatmul.mubr.bf16.gmra.mxu0 %v2801
    %v2872 = vpop.f32.mrf.mxu0
    %v2873 = vadd.f32 %v2779, %v2872
    %v2874 = vpop.f32.mrf.mxu0
    %v2875 = vpop.f32.mrf.mxu0
    %v2876 = vadd.f32 %v2779, %v2875
    %v2877 = vpop.f32.mrf.mxu0
    %2878 = vmatprep.mubr.bf16.mxu0 0
    %2879 = vmatmul.mubr.bf16.gmra.mxu0 %v2804
    %v2880 = vpop.f32.mrf.mxu0
    %v2881 = vadd.f32 %v2779, %v2880
    %v2882 = vpop.f32.mrf.mxu0
    %v2883 = vpop.f32.mrf.mxu0
    %v2884 = vadd.f32 %v2779, %v2883
    %v2885 = vpop.f32.mrf.mxu0
    %2886 = vdwg.mxu0
    %v2887 = vmul.f32 %v2841, 0.5
    %v2888 = vmul.f32 %v2844, 0.5
    %v2889 = vmul.f32 %v2849, 0.5
    %v2890 = vmul.f32 %v2852, 0.5
    %v2891 = vmul.f32 %v2857, 0.5
    %v2892 = vmul.f32 %v2860, 0.5
    %v2893 = vmul.f32 %v2865, 0.5
    %v2894 = vmul.f32 %v2868, 0.5
    %v2895 = vmul.f32 %v2873, 0.5
    %v2896 = vmul.f32 %v2876, 0.5
    %v2897 = vmul.f32 %v2881, 0.5
    %v2898 = vmul.f32 %v2884, 0.5
    %v2899 = vmul.f32 %v2841, 0.70710677
    %v2900 = vmul.f32 %v2844, 0.70710677
    %v2901 = vmul.f32 %v2849, 0.70710677
    %v2902 = vmul.f32 %v2852, 0.70710677
    %v2903 = vmul.f32 %v2857, 0.70710677
    %v2904 = vmul.f32 %v2860, 0.70710677
    %v2905 = vmul.f32 %v2865, 0.70710677
    %v2906 = vmul.f32 %v2868, 0.70710677
    %v2907 = vmul.f32 %v2873, 0.70710677
    %v2908 = vmul.f32 %v2876, 0.70710677
    %v2909 = vmul.f32 %v2881, 0.70710677
    %v2910 = vmul.f32 %v2884, 0.70710677
    %vm2911 = vcmp.ge.f32.partialorder %v2899, 0.0
    %vm2912 = vcmp.ge.f32.partialorder %v2900, 0.0
    %vm2913 = vcmp.ge.f32.partialorder %v2901, 0.0
    %vm2914 = vcmp.ge.f32.partialorder %v2902, 0.0
    %vm2915 = vcmp.ge.f32.partialorder %v2903, 0.0
    %vm2916 = vcmp.ge.f32.partialorder %v2904, 0.0
    %vm2917 = vcmp.ge.f32.partialorder %v2905, 0.0
    %vm2918 = vcmp.ge.f32.partialorder %v2906, 0.0
    %vm2919 = vcmp.ge.f32.partialorder %v2907, 0.0
    %vm2920 = vcmp.ge.f32.partialorder %v2908, 0.0
    %vm2921 = vcmp.ge.f32.partialorder %v2909, 0.0
    %vm2922 = vcmp.ge.f32.partialorder %v2910, 0.0
    %v2923 = vsel %vm2911, 1.0, -1.0
    %v2924 = vsel %vm2912, 1.0, -1.0
    %v2925 = vsel %vm2913, 1.0, -1.0
    %v2926 = vsel %vm2914, 1.0, -1.0
    %v2927 = vsel %vm2915, 1.0, -1.0
    %v2928 = vsel %vm2916, 1.0, -1.0
    %v2929 = vsel %vm2917, 1.0, -1.0
    %v2930 = vsel %vm2918, 1.0, -1.0
    %v2931 = vsel %vm2919, 1.0, -1.0
    %v2932 = vsel %vm2920, 1.0, -1.0
    %v2933 = vsel %vm2921, 1.0, -1.0
    %v2934 = vsel %vm2922, 1.0, -1.0
    %v2935 = vand.u32 2147483647, %v2899
    %v2936 = vand.u32 2147483647, %v2900
    %v2937 = vand.u32 2147483647, %v2901
    %v2938 = vand.u32 2147483647, %v2902
    %v2939 = vand.u32 2147483647, %v2903
    %v2940 = vand.u32 2147483647, %v2904
    %v2941 = vand.u32 2147483647, %v2905
    %v2942 = vand.u32 2147483647, %v2906
    %v2943 = vand.u32 2147483647, %v2907
    %v2944 = vand.u32 2147483647, %v2908
    %v2945 = vand.u32 2147483647, %v2909
    %v2946 = vand.u32 2147483647, %v2910
    %v2947 = vmul.f32 %v2935, 0.3275911
    %v2948 = vmul.f32 %v2936, 0.3275911
    %v2949 = vmul.f32 %v2937, 0.3275911
    %v2950 = vmul.f32 %v2938, 0.3275911
    %v2951 = vmul.f32 %v2939, 0.3275911
    %v2952 = vmul.f32 %v2940, 0.3275911
    %v2953 = vmul.f32 %v2941, 0.3275911
    %v2954 = vmul.f32 %v2942, 0.3275911
    %v2955 = vmul.f32 %v2943, 0.3275911
    %v2956 = vmul.f32 %v2944, 0.3275911
    %v2957 = vmul.f32 %v2945, 0.3275911
    %v2958 = vmul.f32 %v2946, 0.3275911
    %v2959 = vadd.f32 %v2947, 1.0
    %v2960 = vadd.f32 %v2948, 1.0
    %v2961 = vadd.f32 %v2949, 1.0
    %v2962 = vadd.f32 %v2950, 1.0
    %v2963 = vadd.f32 %v2951, 1.0
    %v2964 = vadd.f32 %v2952, 1.0
    %v2965 = vadd.f32 %v2953, 1.0
    %v2966 = vadd.f32 %v2954, 1.0
    %v2967 = vadd.f32 %v2955, 1.0
    %v2968 = vadd.f32 %v2956, 1.0
    %v2969 = vadd.f32 %v2957, 1.0
    %v2970 = vadd.f32 %v2958, 1.0
    %v2971 = vrcp.pop %v2959
    %v2972 = vmul.f32 1.0, %v2971
    %v2973 = vrcp.pop %v2960
    %v2974 = vmul.f32 1.0, %v2973
    %v2975 = vrcp.pop %v2961
    %v2976 = vmul.f32 1.0, %v2975
    %v2977 = vrcp.pop %v2962
    %v2978 = vmul.f32 1.0, %v2977
    %v2979 = vrcp.pop %v2963
    %v2980 = vmul.f32 1.0, %v2979
    %v2981 = vrcp.pop %v2964
    %v2982 = vmul.f32 1.0, %v2981
    %v2983 = vrcp.pop %v2965
    %v2984 = vmul.f32 1.0, %v2983
    %v2985 = vrcp.pop %v2966
    %v2986 = vmul.f32 1.0, %v2985
    %v2987 = vrcp.pop %v2967
    %v2988 = vmul.f32 1.0, %v2987
    %v2989 = vrcp.pop %v2968
    %v2990 = vmul.f32 1.0, %v2989
    %v2991 = vrcp.pop %v2969
    %v2992 = vmul.f32 1.0, %v2991
    %v2993 = vrcp.pop %v2970
    %v2994 = vmul.f32 1.0, %v2993
    %v2995 = vmul.f32 %v2972, 1.0614054
    %v2996 = vmul.f32 %v2974, 1.0614054
    %v2997 = vmul.f32 %v2976, 1.0614054
    %v2998 = vmul.f32 %v2978, 1.0614054
    %v2999 = vmul.f32 %v2980, 1.0614054
    %v3000 = vmul.f32 %v2982, 1.0614054
    %v3001 = vmul.f32 %v2984, 1.0614054
    %v3002 = vmul.f32 %v2986, 1.0614054
    %v3003 = vmul.f32 %v2988, 1.0614054
    %v3004 = vmul.f32 %v2990, 1.0614054
    %v3005 = vmul.f32 %v2992, 1.0614054
    %v3006 = vmul.f32 %v2994, 1.0614054
    %v3007 = vadd.f32 %v2995, -1.4531521
    %v3008 = vadd.f32 %v2996, -1.4531521
    %v3009 = vadd.f32 %v2997, -1.4531521
    %v3010 = vadd.f32 %v2998, -1.4531521
    %v3011 = vadd.f32 %v2999, -1.4531521
    %v3012 = vadd.f32 %v3000, -1.4531521
    %v3013 = vadd.f32 %v3001, -1.4531521
    %v3014 = vadd.f32 %v3002, -1.4531521
    %v3015 = vadd.f32 %v3003, -1.4531521
    %v3016 = vadd.f32 %v3004, -1.4531521
    %v3017 = vadd.f32 %v3005, -1.4531521
    %v3018 = vadd.f32 %v3006, -1.4531521
    %v3019 = vmul.f32 %v3007, %v2972
    %v3020 = vmul.f32 %v3008, %v2974
    %v3021 = vmul.f32 %v3009, %v2976
    %v3022 = vmul.f32 %v3010, %v2978
    %v3023 = vmul.f32 %v3011, %v2980
    %v3024 = vmul.f32 %v3012, %v2982
    %v3025 = vmul.f32 %v3013, %v2984
    %v3026 = vmul.f32 %v3014, %v2986
    %v3027 = vmul.f32 %v3015, %v2988
    %v3028 = vmul.f32 %v3016, %v2990
    %v3029 = vmul.f32 %v3017, %v2992
    %v3030 = vmul.f32 %v3018, %v2994
    %v3031 = vadd.f32 %v3019, 1.4214138
    %v3032 = vadd.f32 %v3020, 1.4214138
    %v3033 = vadd.f32 %v3021, 1.4214138
    %v3034 = vadd.f32 %v3022, 1.4214138
    %v3035 = vadd.f32 %v3023, 1.4214138
    %v3036 = vadd.f32 %v3024, 1.4214138
    %v3037 = vadd.f32 %v3025, 1.4214138
    %v3038 = vadd.f32 %v3026, 1.4214138
    %v3039 = vadd.f32 %v3027, 1.4214138
    %v3040 = vadd.f32 %v3028, 1.4214138
    %v3041 = vadd.f32 %v3029, 1.4214138
    %v3042 = vadd.f32 %v3030, 1.4214138
    %v3043 = vmul.f32 %v3031, %v2972
    %v3044 = vmul.f32 %v3032, %v2974
    %v3045 = vmul.f32 %v3033, %v2976
    %v3046 = vmul.f32 %v3034, %v2978
    %v3047 = vmul.f32 %v3035, %v2980
    %v3048 = vmul.f32 %v3036, %v2982
    %v3049 = vmul.f32 %v3037, %v2984
    %v3050 = vmul.f32 %v3038, %v2986
    %v3051 = vmul.f32 %v3039, %v2988
    %v3052 = vmul.f32 %v3040, %v2990
    %v3053 = vmul.f32 %v3041, %v2992
    %v3054 = vmul.f32 %v3042, %v2994
    %v3055 = vadd.f32 %v3043, -0.28449672
    %v3056 = vadd.f32 %v3044, -0.28449672
    %v3057 = vadd.f32 %v3045, -0.28449672
    %v3058 = vadd.f32 %v3046, -0.28449672
    %v3059 = vadd.f32 %v3047, -0.28449672
    %v3060 = vadd.f32 %v3048, -0.28449672
    %v3061 = vadd.f32 %v3049, -0.28449672
    %v3062 = vadd.f32 %v3050, -0.28449672
    %v3063 = vadd.f32 %v3051, -0.28449672
    %v3064 = vadd.f32 %v3052, -0.28449672
    %v3065 = vadd.f32 %v3053, -0.28449672
    %v3066 = vadd.f32 %v3054, -0.28449672
    %v3067 = vmul.f32 %v3055, %v2972
    %v3068 = vmul.f32 %v3056, %v2974
    %v3069 = vmul.f32 %v3057, %v2976
    %v3070 = vmul.f32 %v3058, %v2978
    %v3071 = vmul.f32 %v3059, %v2980
    %v3072 = vmul.f32 %v3060, %v2982
    %v3073 = vmul.f32 %v3061, %v2984
    %v3074 = vmul.f32 %v3062, %v2986
    %v3075 = vmul.f32 %v3063, %v2988
    %v3076 = vmul.f32 %v3064, %v2990
    %v3077 = vmul.f32 %v3065, %v2992
    %v3078 = vmul.f32 %v3066, %v2994
    %v3079 = vadd.f32 %v3067, 0.2548296
    %v3080 = vadd.f32 %v3068, 0.2548296
    %v3081 = vadd.f32 %v3069, 0.2548296
    %v3082 = vadd.f32 %v3070, 0.2548296
    %v3083 = vadd.f32 %v3071, 0.2548296
    %v3084 = vadd.f32 %v3072, 0.2548296
    %v3085 = vadd.f32 %v3073, 0.2548296
    %v3086 = vadd.f32 %v3074, 0.2548296
    %v3087 = vadd.f32 %v3075, 0.2548296
    %v3088 = vadd.f32 %v3076, 0.2548296
    %v3089 = vadd.f32 %v3077, 0.2548296
    %v3090 = vadd.f32 %v3078, 0.2548296
    %v3091 = vmul.f32 %v3079, %v2972
    %v3092 = vmul.f32 %v3080, %v2974
    %v3093 = vmul.f32 %v3081, %v2976
    %v3094 = vmul.f32 %v3082, %v2978
    %v3095 = vmul.f32 %v3083, %v2980
    %v3096 = vmul.f32 %v3084, %v2982
    %v3097 = vmul.f32 %v3085, %v2984
    %v3098 = vmul.f32 %v3086, %v2986
    %v3099 = vmul.f32 %v3087, %v2988
    %v3100 = vmul.f32 %v3088, %v2990
    %v3101 = vmul.f32 %v3089, %v2992
    %v3102 = vmul.f32 %v3090, %v2994
    %v3103 = vsub.f32 0.0, %v2935
    %v3104 = vsub.f32 0.0, %v2936
    %v3105 = vsub.f32 0.0, %v2937
    %v3106 = vsub.f32 0.0, %v2938
    %v3107 = vsub.f32 0.0, %v2939
    %v3108 = vsub.f32 0.0, %v2940
    %v3109 = vsub.f32 0.0, %v2941
    %v3110 = vsub.f32 0.0, %v2942
    %v3111 = vsub.f32 0.0, %v2943
    %v3112 = vsub.f32 0.0, %v2944
    %v3113 = vsub.f32 0.0, %v2945
    %v3114 = vsub.f32 0.0, %v2946
    %v3115 = vmul.f32 %v3103, %v2935
    %v3116 = vmul.f32 %v3104, %v2936
    %v3117 = vmul.f32 %v3105, %v2937
    %v3118 = vmul.f32 %v3106, %v2938
    %v3119 = vmul.f32 %v3107, %v2939
    %v3120 = vmul.f32 %v3108, %v2940
    %v3121 = vmul.f32 %v3109, %v2941
    %v3122 = vmul.f32 %v3110, %v2942
    %v3123 = vmul.f32 %v3111, %v2943
    %v3124 = vmul.f32 %v3112, %v2944
    %v3125 = vmul.f32 %v3113, %v2945
    %v3126 = vmul.f32 %v3114, %v2946
    %v3127 = vmul.f32 %v3115, 1.442695
    %v3128 = vpow.pop %v3127
    %v3129 = vmul.f32 %v3116, 1.442695
    %v3130 = vpow.pop %v3129
    %v3131 = vmul.f32 %v3117, 1.442695
    %v3132 = vpow.pop %v3131
    %v3133 = vmul.f32 %v3118, 1.442695
    %v3134 = vpow.pop %v3133
    %v3135 = vmul.f32 %v3119, 1.442695
    %v3136 = vpow.pop %v3135
    %v3137 = vmul.f32 %v3120, 1.442695
    %v3138 = vpow.pop %v3137
    %v3139 = vmul.f32 %v3121, 1.442695
    %v3140 = vpow.pop %v3139
    %v3141 = vmul.f32 %v3122, 1.442695
    %v3142 = vpow.pop %v3141
    %v3143 = vmul.f32 %v3123, 1.442695
    %v3144 = vpow.pop %v3143
    %v3145 = vmul.f32 %v3124, 1.442695
    %v3146 = vpow.pop %v3145
    %v3147 = vmul.f32 %v3125, 1.442695
    %v3148 = vpow.pop %v3147
    %v3149 = vmul.f32 %v3126, 1.442695
    %v3150 = vpow.pop %v3149
    %v3151 = vmul.f32 %v3091, %v3128
    %v3152 = vmul.f32 %v3092, %v3130
    %v3153 = vmul.f32 %v3093, %v3132
    %v3154 = vmul.f32 %v3094, %v3134
    %v3155 = vmul.f32 %v3095, %v3136
    %v3156 = vmul.f32 %v3096, %v3138
    %v3157 = vmul.f32 %v3097, %v3140
    %v3158 = vmul.f32 %v3098, %v3142
    %v3159 = vmul.f32 %v3099, %v3144
    %v3160 = vmul.f32 %v3100, %v3146
    %v3161 = vmul.f32 %v3101, %v3148
    %v3162 = vmul.f32 %v3102, %v3150
    %v3163 = vsub.f32 1.0, %v3151
    %v3164 = vsub.f32 1.0, %v3152
    %v3165 = vsub.f32 1.0, %v3153
    %v3166 = vsub.f32 1.0, %v3154
    %v3167 = vsub.f32 1.0, %v3155
    %v3168 = vsub.f32 1.0, %v3156
    %v3169 = vsub.f32 1.0, %v3157
    %v3170 = vsub.f32 1.0, %v3158
    %v3171 = vsub.f32 1.0, %v3159
    %v3172 = vsub.f32 1.0, %v3160
    %v3173 = vsub.f32 1.0, %v3161
    %v3174 = vsub.f32 1.0, %v3162
    %v3175 = vmul.f32 %v2923, %v3163
    %v3176 = vmul.f32 %v2924, %v3164
    %v3177 = vmul.f32 %v2925, %v3165
    %v3178 = vmul.f32 %v2926, %v3166
    %v3179 = vmul.f32 %v2927, %v3167
    %v3180 = vmul.f32 %v2928, %v3168
    %v3181 = vmul.f32 %v2929, %v3169
    %v3182 = vmul.f32 %v2930, %v3170
    %v3183 = vmul.f32 %v2931, %v3171
    %v3184 = vmul.f32 %v2932, %v3172
    %v3185 = vmul.f32 %v2933, %v3173
    %v3186 = vmul.f32 %v2934, %v3174
    %v3187 = vadd.f32 %v3175, 1.0
    %v3188 = vadd.f32 %v3176, 1.0
    %v3189 = vadd.f32 %v3177, 1.0
    %v3190 = vadd.f32 %v3178, 1.0
    %v3191 = vadd.f32 %v3179, 1.0
    %v3192 = vadd.f32 %v3180, 1.0
    %v3193 = vadd.f32 %v3181, 1.0
    %v3194 = vadd.f32 %v3182, 1.0
    %v3195 = vadd.f32 %v3183, 1.0
    %v3196 = vadd.f32 %v3184, 1.0
    %v3197 = vadd.f32 %v3185, 1.0
    %v3198 = vadd.f32 %v3186, 1.0
    %v3199 = vmul.f32 %v2887, %v3187
    %v3200 = vmul.f32 %v2888, %v3188
    %v3201 = vmul.f32 %v2889, %v3189
    %v3202 = vmul.f32 %v2890, %v3190
    %v3203 = vmul.f32 %v2891, %v3191
    %v3204 = vmul.f32 %v2892, %v3192
    %v3205 = vmul.f32 %v2893, %v3193
    %v3206 = vmul.f32 %v2894, %v3194
    %v3207 = vmul.f32 %v2895, %v3195
    %v3208 = vmul.f32 %v2896, %v3196
    %v3209 = vmul.f32 %v2897, %v3197
    %v3210 = vmul.f32 %v2898, %v3198
    %v3211 = vld [vmem:[%s4] sm:$0xf]
    %v3212 = vld [vmem:[%s4 + $0x4] sm:$0xf]
    %v3213 = vld [vmem:[%s4 + $0x8] sm:$0xf]
    %v3214 = vld [vmem:[%s4 + $0xc] sm:$0xf]
    %v3215 = vld [vmem:[%s4 + $0x10] sm:$0xf]
    %v3216 = vld [vmem:[%s4 + $0x14] sm:$0xf]
    %v3217 = vld [vmem:[%s4 + $0x18] sm:$0xf]
    %v3218 = vld [vmem:[%s4 + $0x1c] sm:$0xf]
    %v3219 = vld [vmem:[%s4 + $0x20] sm:$0xf]
    %v3220 = vld [vmem:[%s4 + $0x24] sm:$0xf]
    %v3221 = vld [vmem:[%s4 + $0x28] sm:$0xf]
    %v3222 = vld [vmem:[%s4 + $0x2c] sm:$0xf]
    %v3223 = vld [vmem:[%s4 + $0x30] sm:$0xf]
    %v3224 = vld [vmem:[%s4 + $0x34] sm:$0xf]
    %v3225 = vld [vmem:[%s4 + $0x38] sm:$0xf]
    %v3226 = vld [vmem:[%s4 + $0x3c] sm:$0xf]
    %v3227 = vpack.c.bf16 %v3200, %v3199
    %v3228 = vpack.c.bf16 %v3202, %v3201
    %v3229 = vpack.c.bf16 %v3204, %v3203
    %v3230 = vpack.c.bf16 %v3206, %v3205
    %v3231 = vpack.c.bf16 %v3208, %v3207
    %v3232 = vpack.c.bf16 %v3210, %v3209
    %v3249 = vunpack.c.l.b16 %v3211
    %v3250 = vunpack.c.l.b16 %v3212
    %v3251 = vunpack.c.l.b16 %v3213
    %v3252 = vunpack.c.l.b16 %v3214
    %v3253 = vunpack.c.l.b16 %v3215
    %v3254 = vunpack.c.l.b16 %v3216
    %v3255 = vunpack.c.l.b16 %v3217
    %v3256 = vunpack.c.l.b16 %v3218
    %v3257 = vunpack.c.l.b16 %v3219
    %v3258 = vunpack.c.l.b16 %v3220
    %v3259 = vunpack.c.l.b16 %v3221
    %v3260 = vunpack.c.l.b16 %v3222
    %v3261 = vunpack.c.l.b16 %v3223
    %v3262 = vunpack.c.l.b16 %v3224
    %v3263 = vunpack.c.l.b16 %v3225
    %v3264 = vunpack.c.l.b16 %v3226
    %v3265 = vpack.c.b16 %v3250, %v3249
    %v3266 = vpack.c.b16 %v3252, %v3251
    %v3267 = vpack.c.b16 %v3254, %v3253
    %v3268 = vpack.c.b16 %v3256, %v3255
    %v3269 = vpack.c.b16 %v3258, %v3257
    %v3270 = vpack.c.b16 %v3260, %v3259
    %v3271 = vpack.c.b16 %v3262, %v3261
    %v3272 = vpack.c.b16 %v3264, %v3263
    %3281 = vmatprep.subr.bf16.mxu0 0
    %3282 = vmatpush1.bf16.msra.mxu0 %v3272
    %3283 = vmatprep.subr.bf16.mxu0 0
    %3284 = vmatpush1.bf16.msra.mxu0 %v3271
    %3285 = vmatprep.subr.bf16.mxu0 0
    %3286 = vmatpush1.bf16.msra.mxu0 %v3270
    %3287 = vmatprep.subr.bf16.mxu0 0
    %3288 = vmatpush1.bf16.msra.mxu0 %v3269
    %3289 = vmatprep.subr.bf16.mxu0 0
    %3290 = vmatpush1.bf16.msra.mxu0 %v3268
    %3291 = vmatprep.subr.bf16.mxu0 0
    %3292 = vmatpush1.bf16.msra.mxu0 %v3267
    %3293 = vmatprep.subr.bf16.mxu0 0
    %3294 = vmatpush1.bf16.msra.mxu0 %v3266
    %3295 = vmatprep.subr.bf16.mxu0 0
    %3296 = vmatpush1.bf16.msra.mxu0 %v3265
    %3297 = vmatprep.subr.bf16.mxu0 0
    %3298 = vmatpush2.bf16.msra.mxu0 0
    %3299 = vmatprep.subr.bf16.mxu0 0
    %3300 = vmatpush2.bf16.msra.mxu0 0
    %3301 = vmatprep.subr.bf16.mxu0 0
    %3302 = vmatpush2.bf16.msra.mxu0 0
    %3303 = vmatprep.subr.bf16.mxu0 0
    %3304 = vmatpush2.bf16.msra.mxu0 0
    %3305 = vmatprep.subr.bf16.mxu0 0
    %3306 = vmatpush2.bf16.msra.mxu0 0
    %3307 = vmatprep.subr.bf16.mxu0 0
    %3308 = vmatpush2.bf16.msra.mxu0 0
    %3309 = vmatprep.subr.bf16.mxu0 0
    %3310 = vmatpush2.bf16.msra.mxu0 0
    %3311 = vmatprep.subr.bf16.mxu0 0
    %3312 = vmatpush2.bf16.msra.mxu0 0
    %3313 = vmatprep.mubr.bf16.mxu0 0
    %3314 = vmatmul.mubr.bf16.gmra.mxu0 %v3227
    %v3315 = vpop.f32.mrf.mxu0
    %v3316 = vadd.f32 0.0, %v3315
    %v3317 = vpop.f32.mrf.mxu0
    %v3318 = vpop.f32.mrf.mxu0
    %v3319 = vadd.f32 0.0, %v3318
    %v3320 = vpop.f32.mrf.mxu0
    %3321 = vmatprep.mubr.bf16.mxu0 0
    %3322 = vmatmul.mubr.bf16.gmra.mxu0 %v3228
    %v3323 = vpop.f32.mrf.mxu0
    %v3324 = vadd.f32 0.0, %v3323
    %v3325 = vpop.f32.mrf.mxu0
    %v3326 = vpop.f32.mrf.mxu0
    %v3327 = vadd.f32 0.0, %v3326
    %v3328 = vpop.f32.mrf.mxu0
    %3329 = vmatprep.mubr.bf16.mxu0 0
    %3330 = vmatmul.mubr.bf16.gmra.mxu0 %v3229
    %v3331 = vpop.f32.mrf.mxu0
    %v3332 = vadd.f32 0.0, %v3331
    %v3333 = vpop.f32.mrf.mxu0
    %v3334 = vpop.f32.mrf.mxu0
    %v3335 = vadd.f32 0.0, %v3334
    %v3336 = vpop.f32.mrf.mxu0
    %3337 = vmatprep.mubr.bf16.mxu0 0
    %3338 = vmatmul.mubr.bf16.gmra.mxu0 %v3230
    %v3339 = vpop.f32.mrf.mxu0
    %v3340 = vadd.f32 0.0, %v3339
    %v3341 = vpop.f32.mrf.mxu0
    %v3342 = vpop.f32.mrf.mxu0
    %v3343 = vadd.f32 0.0, %v3342
    %v3344 = vpop.f32.mrf.mxu0
    %3345 = vmatprep.mubr.bf16.mxu0 0
    %3346 = vmatmul.mubr.bf16.gmra.mxu0 %v3231
    %v3347 = vpop.f32.mrf.mxu0
    %v3348 = vadd.f32 0.0, %v3347
    %v3349 = vpop.f32.mrf.mxu0
    %v3350 = vpop.f32.mrf.mxu0
    %v3351 = vadd.f32 0.0, %v3350
    %v3352 = vpop.f32.mrf.mxu0
    %3353 = vmatprep.mubr.bf16.mxu0 0
    %3354 = vmatmul.mubr.bf16.gmra.mxu0 %v3232
    %v3355 = vpop.f32.mrf.mxu0
    %v3356 = vadd.f32 0.0, %v3355
    %v3357 = vpop.f32.mrf.mxu0
    %v3358 = vpop.f32.mrf.mxu0
    %v3359 = vadd.f32 0.0, %v3358
    %v3360 = vpop.f32.mrf.mxu0
    %3361 = vdwg.mxu0
    %v3362 = vadd.f32 %v2567, %v3316
    %v3363 = vadd.f32 %v2568, %v3319
    %v3364 = vadd.f32 %v2569, %v3324
    %v3365 = vadd.f32 %v2570, %v3327
    %v3366 = vadd.f32 %v2571, %v3332
    %v3367 = vadd.f32 %v2572, %v3335
    %v3368 = vadd.f32 %v2573, %v3340
    %v3369 = vadd.f32 %v2574, %v3343
    %v3370 = vadd.f32 %v2575, %v3348
    %v3371 = vadd.f32 %v2576, %v3351
    %v3372 = vadd.f32 %v2577, %v3356
    %v3373 = vadd.f32 %v2578, %v3359
    %v3374 = vld [vmem:[%s1 + $0xc] sm:$0x1]
    %v3375 = vlaneseq
    %v3376 = vshrl.u32 %v3375, 7
    %v3377 = vsub.s32 0, %v3376
    %v3378 = vrot.slane %v3374, %v3377
    %v3379 = vadd.f32 %v3362, %v3378
    %v3380 = vadd.f32 %v3363, %v3378
    %v3381 = vadd.f32 %v3364, %v3378
    %v3382 = vadd.f32 %v3365, %v3378
    %v3383 = vadd.f32 %v3366, %v3378
    %v3384 = vadd.f32 %v3367, %v3378
    %v3385 = vadd.f32 %v3368, %v3378
    %v3386 = vadd.f32 %v3369, %v3378
    %v3387 = vadd.f32 %v3370, %v3378
    %v3388 = vadd.f32 %v3371, %v3378
    %v3389 = vadd.f32 %v3372, %v3378
    %v3390 = vadd.f32 %v3373, %v3378
    %s3391 = scalar_lea.vmem %s3, 48
    %v3392 = vld [vmem:[%s3391] sm:$0xff]
    %v3393 = vld [vmem:[%s3391 + $0x8] sm:$0xf]
    %v3394 = vld [vmem:[%s3391 + $0xc] sm:$0xff]
    %v3395 = vld [vmem:[%s3391 + $0x14] sm:$0xf]
    %v3396 = vld [vmem:[%s3391 + $0x18] sm:$0xff]
    %v3397 = vld [vmem:[%s3391 + $0x20] sm:$0xf]
    %v3398 = vld [vmem:[%s3391 + $0x24] sm:$0xff]
    %v3399 = vld [vmem:[%s3391 + $0x2c] sm:$0xf]
    %v3400 = vld [vmem:[%s1 + $0xd] sm:$0x1]
    %v3401 = vld [vmem:[%s1 + $0xe] sm:$0x1]
    %v3402 = vsel %vm100, %v3379, 0.0
    %3403 = vadd.xlane.f32.xlu0 %v3402
    %v3404 = vpop.xlane.xlu0 %3403
    %v3405 = vsel %vm100, %v3380, 0.0
    %3406 = vadd.xlane.f32.xlu0 %v3405
    %v3407 = vpop.xlane.xlu0 %3406
    %v3408 = vsel %vm100, %v3381, 0.0
    %3409 = vadd.xlane.f32.xlu0 %v3408
    %v3410 = vpop.xlane.xlu0 %3409
    %v3411 = vsel %vm100, %v3382, 0.0
    %3412 = vadd.xlane.f32.xlu0 %v3411
    %v3413 = vpop.xlane.xlu0 %3412
    %v3414 = vsel %vm100, %v3383, 0.0
    %3415 = vadd.xlane.f32.xlu0 %v3414
    %v3416 = vpop.xlane.xlu0 %3415
    %v3417 = vsel %vm100, %v3384, 0.0
    %3418 = vadd.xlane.f32.xlu0 %v3417
    %v3419 = vpop.xlane.xlu0 %3418
    %v3420 = vsel %vm100, %v3385, 0.0
    %3421 = vadd.xlane.f32.xlu0 %v3420
    %v3422 = vpop.xlane.xlu0 %3421
    %v3423 = vsel %vm100, %v3386, 0.0
    %3424 = vadd.xlane.f32.xlu0 %v3423
    %v3425 = vpop.xlane.xlu0 %3424
    %v3426 = vsel %vm100, %v3387, 0.0
    %3427 = vadd.xlane.f32.xlu0 %v3426
    %v3428 = vpop.xlane.xlu0 %3427
    %v3429 = vsel %vm100, %v3388, 0.0
    %3430 = vadd.xlane.f32.xlu0 %v3429
    %v3431 = vpop.xlane.xlu0 %3430
    %v3432 = vsel %vm100, %v3389, 0.0
    %3433 = vadd.xlane.f32.xlu0 %v3432
    %v3434 = vpop.xlane.xlu0 %3433
    %v3435 = vsel %vm100, %v3390, 0.0
    %3436 = vadd.xlane.f32.xlu0 %v3435
    %v3437 = vpop.xlane.xlu0 %3436
    %v3438 = vmul.f32 %v3404, %v186
    %v3439 = vmul.f32 %v3407, %v186
    %v3440 = vmul.f32 %v3410, %v186
    %v3441 = vmul.f32 %v3413, %v186
    %v3442 = vmul.f32 %v3416, %v186
    %v3443 = vmul.f32 %v3419, %v186
    %v3444 = vmul.f32 %v3422, %v186
    %v3445 = vmul.f32 %v3425, %v186
    %v3446 = vmul.f32 %v3428, %v186
    %v3447 = vmul.f32 %v3431, %v186
    %v3448 = vmul.f32 %v3434, %v186
    %v3449 = vmul.f32 %v3437, %v186
    %v3450 = vsub.f32 %v3379, %v3438
    %v3451 = vsub.f32 %v3380, %v3439
    %v3452 = vsub.f32 %v3381, %v3440
    %v3453 = vsub.f32 %v3382, %v3441
    %v3454 = vsub.f32 %v3383, %v3442
    %v3455 = vsub.f32 %v3384, %v3443
    %v3456 = vsub.f32 %v3385, %v3444
    %v3457 = vsub.f32 %v3386, %v3445
    %v3458 = vsub.f32 %v3387, %v3446
    %v3459 = vsub.f32 %v3388, %v3447
    %v3460 = vsub.f32 %v3389, %v3448
    %v3461 = vsub.f32 %v3390, %v3449
    %v3462 = vmul.f32 %v3450, %v3450
    %v3463 = vmul.f32 %v3451, %v3451
    %v3464 = vmul.f32 %v3452, %v3452
    %v3465 = vmul.f32 %v3453, %v3453
    %v3466 = vmul.f32 %v3454, %v3454
    %v3467 = vmul.f32 %v3455, %v3455
    %v3468 = vmul.f32 %v3456, %v3456
    %v3469 = vmul.f32 %v3457, %v3457
    %v3470 = vmul.f32 %v3458, %v3458
    %v3471 = vmul.f32 %v3459, %v3459
    %v3472 = vmul.f32 %v3460, %v3460
    %v3473 = vmul.f32 %v3461, %v3461
    %v3474 = vsel %vm100, %v3462, 0.0
    %3475 = vadd.xlane.f32.xlu0 %v3474
    %v3476 = vpop.xlane.xlu0 %3475
    %v3477 = vsel %vm100, %v3463, 0.0
    %3478 = vadd.xlane.f32.xlu0 %v3477
    %v3479 = vpop.xlane.xlu0 %3478
    %v3480 = vsel %vm100, %v3464, 0.0
    %3481 = vadd.xlane.f32.xlu0 %v3480
    %v3482 = vpop.xlane.xlu0 %3481
    %v3483 = vsel %vm100, %v3465, 0.0
    %3484 = vadd.xlane.f32.xlu0 %v3483
    %v3485 = vpop.xlane.xlu0 %3484
    %v3486 = vsel %vm100, %v3466, 0.0
    %3487 = vadd.xlane.f32.xlu0 %v3486
    %v3488 = vpop.xlane.xlu0 %3487
    %v3489 = vsel %vm100, %v3467, 0.0
    %3490 = vadd.xlane.f32.xlu0 %v3489
    %v3491 = vpop.xlane.xlu0 %3490
    %v3492 = vsel %vm100, %v3468, 0.0
    %3493 = vadd.xlane.f32.xlu0 %v3492
    %v3494 = vpop.xlane.xlu0 %3493
    %v3495 = vsel %vm100, %v3469, 0.0
    %3496 = vadd.xlane.f32.xlu0 %v3495
    %v3497 = vpop.xlane.xlu0 %3496
    %v3498 = vsel %vm100, %v3470, 0.0
    %3499 = vadd.xlane.f32.xlu0 %v3498
    %v3500 = vpop.xlane.xlu0 %3499
    %v3501 = vsel %vm100, %v3471, 0.0
    %3502 = vadd.xlane.f32.xlu0 %v3501
    %v3503 = vpop.xlane.xlu0 %3502
    %v3504 = vsel %vm100, %v3472, 0.0
    %3505 = vadd.xlane.f32.xlu0 %v3504
    %v3506 = vpop.xlane.xlu0 %3505
    %v3507 = vsel %vm100, %v3473, 0.0
    %3508 = vadd.xlane.f32.xlu0 %v3507
    %v3509 = vpop.xlane.xlu0 %3508
    %v3510 = vmul.f32 %v3476, %v186
    %v3511 = vmul.f32 %v3479, %v186
    %v3512 = vmul.f32 %v3482, %v186
    %v3513 = vmul.f32 %v3485, %v186
    %v3514 = vmul.f32 %v3488, %v186
    %v3515 = vmul.f32 %v3491, %v186
    %v3516 = vmul.f32 %v3494, %v186
    %v3517 = vmul.f32 %v3497, %v186
    %v3518 = vmul.f32 %v3500, %v186
    %v3519 = vmul.f32 %v3503, %v186
    %v3520 = vmul.f32 %v3506, %v186
    %v3521 = vmul.f32 %v3509, %v186
    %v3522 = vadd.f32 %v3510, 1e-05
    %v3523 = vadd.f32 %v3511, 1e-05
    %v3524 = vadd.f32 %v3512, 1e-05
    %v3525 = vadd.f32 %v3513, 1e-05
    %v3526 = vadd.f32 %v3514, 1e-05
    %v3527 = vadd.f32 %v3515, 1e-05
    %v3528 = vadd.f32 %v3516, 1e-05
    %v3529 = vadd.f32 %v3517, 1e-05
    %v3530 = vadd.f32 %v3518, 1e-05
    %v3531 = vadd.f32 %v3519, 1e-05
    %v3532 = vadd.f32 %v3520, 1e-05
    %v3533 = vadd.f32 %v3521, 1e-05
    %v3534 = vrsqrt.pop %v3522
    %v3535 = vrsqrt.pop %v3523
    %v3536 = vrsqrt.pop %v3524
    %v3537 = vrsqrt.pop %v3525
    %v3538 = vrsqrt.pop %v3526
    %v3539 = vrsqrt.pop %v3527
    %v3540 = vrsqrt.pop %v3528
    %v3541 = vrsqrt.pop %v3529
    %v3542 = vrsqrt.pop %v3530
    %v3543 = vrsqrt.pop %v3531
    %v3544 = vrsqrt.pop %v3532
    %v3545 = vrsqrt.pop %v3533
    %v3546 = vmul.f32 %v3450, %v3534
    %v3547 = vmul.f32 %v3451, %v3535
    %v3548 = vmul.f32 %v3452, %v3536
    %v3549 = vmul.f32 %v3453, %v3537
    %v3550 = vmul.f32 %v3454, %v3538
    %v3551 = vmul.f32 %v3455, %v3539
    %v3552 = vmul.f32 %v3456, %v3540
    %v3553 = vmul.f32 %v3457, %v3541
    %v3554 = vmul.f32 %v3458, %v3542
    %v3555 = vmul.f32 %v3459, %v3543
    %v3556 = vmul.f32 %v3460, %v3544
    %v3557 = vmul.f32 %v3461, %v3545
    %v3558 = vlaneseq
    %v3559 = vshrl.u32 %v3558, 7
    %v3560 = vsub.s32 0, %v3559
    %v3561 = vrot.slane %v3400, %v3560
    %v3562 = vmul.f32 %v3546, %v3561
    %v3563 = vmul.f32 %v3547, %v3561
    %v3564 = vmul.f32 %v3548, %v3561
    %v3565 = vmul.f32 %v3549, %v3561
    %v3566 = vmul.f32 %v3550, %v3561
    %v3567 = vmul.f32 %v3551, %v3561
    %v3568 = vmul.f32 %v3552, %v3561
    %v3569 = vmul.f32 %v3553, %v3561
    %v3570 = vmul.f32 %v3554, %v3561
    %v3571 = vmul.f32 %v3555, %v3561
    %v3572 = vmul.f32 %v3556, %v3561
    %v3573 = vmul.f32 %v3557, %v3561
    %v3574 = vlaneseq
    %v3575 = vshrl.u32 %v3574, 7
    %v3576 = vsub.s32 0, %v3575
    %v3577 = vrot.slane %v3401, %v3576
    %v3578 = vadd.f32 %v3562, %v3577
    %v3579 = vadd.f32 %v3563, %v3577
    %v3580 = vadd.f32 %v3564, %v3577
    %v3581 = vadd.f32 %v3565, %v3577
    %v3582 = vadd.f32 %v3566, %v3577
    %v3583 = vadd.f32 %v3567, %v3577
    %v3584 = vadd.f32 %v3568, %v3577
    %v3585 = vadd.f32 %v3569, %v3577
    %v3586 = vadd.f32 %v3570, %v3577
    %v3587 = vadd.f32 %v3571, %v3577
    %v3588 = vadd.f32 %v3572, %v3577
    %v3589 = vadd.f32 %v3573, %v3577
    %v3590 = vpack.c.bf16 %v3579, %v3578
    %v3591 = vpack.c.bf16 %v3581, %v3580
    %v3592 = vpack.c.bf16 %v3583, %v3582
    %v3593 = vpack.c.bf16 %v3585, %v3584
    %v3594 = vpack.c.bf16 %v3587, %v3586
    %v3595 = vpack.c.bf16 %v3589, %v3588
    %v3596 = vld [vmem:[%s1 + $0xf] sm:$0x1]
    %v3597 = vlaneseq
    %v3598 = vshrl.u32 %v3597, 7
    %v3599 = vsub.s32 0, %v3598
    %v3600 = vrot.slane %v3596, %v3599
    %v3605 = vunpack.c.l.b16 %v3392
    %v3606 = vunpack.c.l.b16 %v3394
    %v3607 = vunpack.c.l.b16 %v3396
    %v3608 = vunpack.c.l.b16 %v3398
    %v3609 = vpack.c.b16 %v3606, %v3605
    %v3610 = vpack.c.b16 %v3608, %v3607
    %v3614 = vsel %vm100, %v3590, 0
    %v3617 = vsel %vm100, %v3591, 0
    %v3620 = vsel %vm100, %v3592, 0
    %v3623 = vsel %vm100, %v3593, 0
    %v3626 = vsel %vm100, %v3594, 0
    %v3629 = vsel %vm100, %v3595, 0
    %3631 = vmatprep.subr.bf16.mxu0 0
    %3632 = vmatpush1.bf16.msra.mxu0 0
    %3633 = vmatprep.subr.bf16.mxu0 0
    %3634 = vmatpush1.bf16.msra.mxu0 0
    %3635 = vmatprep.subr.bf16.mxu0 0
    %3636 = vmatpush1.bf16.msra.mxu0 0
    %3637 = vmatprep.subr.bf16.mxu0 0
    %3638 = vmatpush1.bf16.msra.mxu0 0
    %3639 = vmatprep.subr.bf16.mxu0 0
    %3640 = vmatpush1.bf16.msra.mxu0 0
    %3641 = vmatprep.subr.bf16.mxu0 0
    %3642 = vmatpush1.bf16.msra.mxu0 0
    %3643 = vmatprep.subr.bf16.mxu0 0
    %3644 = vmatpush1.bf16.msra.mxu0 %v3610
    %3645 = vmatprep.subr.bf16.mxu0 0
    %3646 = vmatpush1.bf16.msra.mxu0 %v3609
    %3647 = vmatprep.subr.bf16.mxu0 0
    %3648 = vmatpush2.bf16.msra.mxu0 0
    %3649 = vmatprep.subr.bf16.mxu0 0
    %3650 = vmatpush2.bf16.msra.mxu0 0
    %3651 = vmatprep.subr.bf16.mxu0 0
    %3652 = vmatpush2.bf16.msra.mxu0 0
    %3653 = vmatprep.subr.bf16.mxu0 0
    %3654 = vmatpush2.bf16.msra.mxu0 0
    %3655 = vmatprep.subr.bf16.mxu0 0
    %3656 = vmatpush2.bf16.msra.mxu0 0
    %3657 = vmatprep.subr.bf16.mxu0 0
    %3658 = vmatpush2.bf16.msra.mxu0 0
    %3659 = vmatprep.subr.bf16.mxu0 0
    %3660 = vmatpush2.bf16.msra.mxu0 0
    %3661 = vmatprep.subr.bf16.mxu0 0
    %3662 = vmatpush2.bf16.msra.mxu0 0
    %3663 = vmatprep.mubr.bf16.mxu0 0
    %3664 = vmatmul.mubr.bf16.gmra.mxu0 %v3614
    %v3665 = vpop.f32.mrf.mxu0
    %v3666 = vadd.f32 %v3600, %v3665
    %v3667 = vpop.f32.mrf.mxu0
    %v3668 = vpop.f32.mrf.mxu0
    %v3669 = vadd.f32 %v3600, %v3668
    %v3670 = vpop.f32.mrf.mxu0
    %3671 = vmatprep.mubr.bf16.mxu0 0
    %3672 = vmatmul.mubr.bf16.gmra.mxu0 %v3617
    %v3673 = vpop.f32.mrf.mxu0
    %v3674 = vadd.f32 %v3600, %v3673
    %v3675 = vpop.f32.mrf.mxu0
    %v3676 = vpop.f32.mrf.mxu0
    %v3677 = vadd.f32 %v3600, %v3676
    %v3678 = vpop.f32.mrf.mxu0
    %3679 = vmatprep.mubr.bf16.mxu0 0
    %3680 = vmatmul.mubr.bf16.gmra.mxu0 %v3620
    %v3681 = vpop.f32.mrf.mxu0
    %v3682 = vadd.f32 %v3600, %v3681
    %v3683 = vpop.f32.mrf.mxu0
    %v3684 = vpop.f32.mrf.mxu0
    %v3685 = vadd.f32 %v3600, %v3684
    %v3686 = vpop.f32.mrf.mxu0
    %3687 = vmatprep.mubr.bf16.mxu0 0
    %3688 = vmatmul.mubr.bf16.gmra.mxu0 %v3623
    %v3689 = vpop.f32.mrf.mxu0
    %v3690 = vadd.f32 %v3600, %v3689
    %v3691 = vpop.f32.mrf.mxu0
    %v3692 = vpop.f32.mrf.mxu0
    %v3693 = vadd.f32 %v3600, %v3692
    %v3694 = vpop.f32.mrf.mxu0
    %3695 = vmatprep.mubr.bf16.mxu0 0
    %3696 = vmatmul.mubr.bf16.gmra.mxu0 %v3626
    %v3697 = vpop.f32.mrf.mxu0
    %v3698 = vadd.f32 %v3600, %v3697
    %v3699 = vpop.f32.mrf.mxu0
    %v3700 = vpop.f32.mrf.mxu0
    %v3701 = vadd.f32 %v3600, %v3700
    %v3702 = vpop.f32.mrf.mxu0
    %3703 = vmatprep.mubr.bf16.mxu0 0
    %3704 = vmatmul.mubr.bf16.gmra.mxu0 %v3629
    %v3705 = vpop.f32.mrf.mxu0
    %v3706 = vadd.f32 %v3600, %v3705
    %v3707 = vpop.f32.mrf.mxu0
    %v3708 = vpop.f32.mrf.mxu0
    %v3709 = vadd.f32 %v3600, %v3708
    %v3710 = vpop.f32.mrf.mxu0
    %3711 = vdwg.mxu0
    %v3712 = vmul.f32 %v3666, %v25
    %v3713 = vmul.f32 %v3669, %v26
    %v3714 = vmul.f32 %v3674, %v27
    %v3715 = vmul.f32 %v3666, %v28
    %v3716 = vmul.f32 %v3669, %v29
    %v3717 = vmul.f32 %v3674, %v30
    %v3718 = vmul.f32 %v3666, %v31
    %v3719 = vmul.f32 %v3669, %v32
    %v3720 = vmul.f32 %v3674, %v33
    %v3721 = vmul.f32 %v3666, %v34
    %v3722 = vmul.f32 %v3669, %v35
    %v3723 = vmul.f32 %v3674, %v36
    %v3724 = vmul.f32 %v3666, %v37
    %v3725 = vmul.f32 %v3669, %v38
    %v3726 = vmul.f32 %v3674, %v39
    %v3727 = vmul.f32 %v3666, %v40
    %v3728 = vmul.f32 %v3669, %v41
    %v3729 = vmul.f32 %v3674, %v42
    %v3730 = vmul.f32 %v3666, %v43
    %v3731 = vmul.f32 %v3669, %v44
    %v3732 = vmul.f32 %v3674, %v45
    %v3733 = vmul.f32 %v3666, %v46
    %v3734 = vmul.f32 %v3669, %v47
    %v3735 = vmul.f32 %v3674, %v48
    %v3736 = vmul.f32 %v3666, %v49
    %v3737 = vmul.f32 %v3669, %v50
    %v3738 = vmul.f32 %v3674, %v51
    %v3739 = vmul.f32 %v3666, %v52
    %v3740 = vmul.f32 %v3669, %v53
    %v3741 = vmul.f32 %v3674, %v54
    %v3742 = vmul.f32 %v3666, %v55
    %v3743 = vmul.f32 %v3669, %v56
    %v3744 = vmul.f32 %v3674, %v57
    %v3745 = vmul.f32 %v3666, %v58
    %v3746 = vmul.f32 %v3669, %v59
    %v3747 = vmul.f32 %v3674, %v60
    %v3748 = vmul.f32 %v3666, %v61
    %v3749 = vmul.f32 %v3669, %v62
    %v3750 = vmul.f32 %v3674, %v63
    %v3751 = vmul.f32 %v3666, %v64
    %v3752 = vmul.f32 %v3669, %v65
    %v3753 = vmul.f32 %v3674, %v66
    %v3754 = vmul.f32 %v3666, %v67
    %v3755 = vmul.f32 %v3669, %v68
    %v3756 = vmul.f32 %v3674, %v69
    %v3757 = vmul.f32 %v3666, %v70
    %v3758 = vmul.f32 %v3669, %v71
    %v3759 = vmul.f32 %v3674, %v72
    %v3760 = vmul.f32 %v3677, %v25
    %v3761 = vmul.f32 %v3682, %v26
    %v3762 = vmul.f32 %v3685, %v27
    %v3763 = vmul.f32 %v3677, %v28
    %v3764 = vmul.f32 %v3682, %v29
    %v3765 = vmul.f32 %v3685, %v30
    %v3766 = vmul.f32 %v3677, %v31
    %v3767 = vmul.f32 %v3682, %v32
    %v3768 = vmul.f32 %v3685, %v33
    %v3769 = vmul.f32 %v3677, %v34
    %v3770 = vmul.f32 %v3682, %v35
    %v3771 = vmul.f32 %v3685, %v36
    %v3772 = vmul.f32 %v3677, %v37
    %v3773 = vmul.f32 %v3682, %v38
    %v3774 = vmul.f32 %v3685, %v39
    %v3775 = vmul.f32 %v3677, %v40
    %v3776 = vmul.f32 %v3682, %v41
    %v3777 = vmul.f32 %v3685, %v42
    %v3778 = vmul.f32 %v3677, %v43
    %v3779 = vmul.f32 %v3682, %v44
    %v3780 = vmul.f32 %v3685, %v45
    %v3781 = vmul.f32 %v3677, %v46
    %v3782 = vmul.f32 %v3682, %v47
    %v3783 = vmul.f32 %v3685, %v48
    %v3784 = vmul.f32 %v3677, %v49
    %v3785 = vmul.f32 %v3682, %v50
    %v3786 = vmul.f32 %v3685, %v51
    %v3787 = vmul.f32 %v3677, %v52
    %v3788 = vmul.f32 %v3682, %v53
    %v3789 = vmul.f32 %v3685, %v54
    %v3790 = vmul.f32 %v3677, %v55
    %v3791 = vmul.f32 %v3682, %v56
    %v3792 = vmul.f32 %v3685, %v57
    %v3793 = vmul.f32 %v3677, %v58
    %v3794 = vmul.f32 %v3682, %v59
    %v3795 = vmul.f32 %v3685, %v60
    %v3796 = vmul.f32 %v3677, %v61
    %v3797 = vmul.f32 %v3682, %v62
    %v3798 = vmul.f32 %v3685, %v63
    %v3799 = vmul.f32 %v3677, %v64
    %v3800 = vmul.f32 %v3682, %v65
    %v3801 = vmul.f32 %v3685, %v66
    %v3802 = vmul.f32 %v3677, %v67
    %v3803 = vmul.f32 %v3682, %v68
    %v3804 = vmul.f32 %v3685, %v69
    %v3805 = vmul.f32 %v3677, %v70
    %v3806 = vmul.f32 %v3682, %v71
    %v3807 = vmul.f32 %v3685, %v72
    %v3808 = vmul.f32 %v3690, %v25
    %v3809 = vmul.f32 %v3693, %v26
    %v3810 = vmul.f32 %v3698, %v27
    %v3811 = vmul.f32 %v3690, %v28
    %v3812 = vmul.f32 %v3693, %v29
    %v3813 = vmul.f32 %v3698, %v30
    %v3814 = vmul.f32 %v3690, %v31
    %v3815 = vmul.f32 %v3693, %v32
    %v3816 = vmul.f32 %v3698, %v33
    %v3817 = vmul.f32 %v3690, %v34
    %v3818 = vmul.f32 %v3693, %v35
    %v3819 = vmul.f32 %v3698, %v36
    %v3820 = vmul.f32 %v3690, %v37
    %v3821 = vmul.f32 %v3693, %v38
    %v3822 = vmul.f32 %v3698, %v39
    %v3823 = vmul.f32 %v3690, %v40
    %v3824 = vmul.f32 %v3693, %v41
    %v3825 = vmul.f32 %v3698, %v42
    %v3826 = vmul.f32 %v3690, %v43
    %v3827 = vmul.f32 %v3693, %v44
    %v3828 = vmul.f32 %v3698, %v45
    %v3829 = vmul.f32 %v3690, %v46
    %v3830 = vmul.f32 %v3693, %v47
    %v3831 = vmul.f32 %v3698, %v48
    %v3832 = vmul.f32 %v3690, %v49
    %v3833 = vmul.f32 %v3693, %v50
    %v3834 = vmul.f32 %v3698, %v51
    %v3835 = vmul.f32 %v3690, %v52
    %v3836 = vmul.f32 %v3693, %v53
    %v3837 = vmul.f32 %v3698, %v54
    %v3838 = vmul.f32 %v3690, %v55
    %v3839 = vmul.f32 %v3693, %v56
    %v3840 = vmul.f32 %v3698, %v57
    %v3841 = vmul.f32 %v3690, %v58
    %v3842 = vmul.f32 %v3693, %v59
    %v3843 = vmul.f32 %v3698, %v60
    %v3844 = vmul.f32 %v3690, %v61
    %v3845 = vmul.f32 %v3693, %v62
    %v3846 = vmul.f32 %v3698, %v63
    %v3847 = vmul.f32 %v3690, %v64
    %v3848 = vmul.f32 %v3693, %v65
    %v3849 = vmul.f32 %v3698, %v66
    %v3850 = vmul.f32 %v3690, %v67
    %v3851 = vmul.f32 %v3693, %v68
    %v3852 = vmul.f32 %v3698, %v69
    %v3853 = vmul.f32 %v3690, %v70
    %v3854 = vmul.f32 %v3693, %v71
    %v3855 = vmul.f32 %v3698, %v72
    %v3856 = vmul.f32 %v3701, %v25
    %v3857 = vmul.f32 %v3706, %v26
    %v3858 = vmul.f32 %v3709, %v27
    %v3859 = vmul.f32 %v3701, %v28
    %v3860 = vmul.f32 %v3706, %v29
    %v3861 = vmul.f32 %v3709, %v30
    %v3862 = vmul.f32 %v3701, %v31
    %v3863 = vmul.f32 %v3706, %v32
    %v3864 = vmul.f32 %v3709, %v33
    %v3865 = vmul.f32 %v3701, %v34
    %v3866 = vmul.f32 %v3706, %v35
    %v3867 = vmul.f32 %v3709, %v36
    %v3868 = vmul.f32 %v3701, %v37
    %v3869 = vmul.f32 %v3706, %v38
    %v3870 = vmul.f32 %v3709, %v39
    %v3871 = vmul.f32 %v3701, %v40
    %v3872 = vmul.f32 %v3706, %v41
    %v3873 = vmul.f32 %v3709, %v42
    %v3874 = vmul.f32 %v3701, %v43
    %v3875 = vmul.f32 %v3706, %v44
    %v3876 = vmul.f32 %v3709, %v45
    %v3877 = vmul.f32 %v3701, %v46
    %v3878 = vmul.f32 %v3706, %v47
    %v3879 = vmul.f32 %v3709, %v48
    %v3880 = vmul.f32 %v3701, %v49
    %v3881 = vmul.f32 %v3706, %v50
    %v3882 = vmul.f32 %v3709, %v51
    %v3883 = vmul.f32 %v3701, %v52
    %v3884 = vmul.f32 %v3706, %v53
    %v3885 = vmul.f32 %v3709, %v54
    %v3886 = vmul.f32 %v3701, %v55
    %v3887 = vmul.f32 %v3706, %v56
    %v3888 = vmul.f32 %v3709, %v57
    %v3889 = vmul.f32 %v3701, %v58
    %v3890 = vmul.f32 %v3706, %v59
    %v3891 = vmul.f32 %v3709, %v60
    %v3892 = vmul.f32 %v3701, %v61
    %v3893 = vmul.f32 %v3706, %v62
    %v3894 = vmul.f32 %v3709, %v63
    %v3895 = vmul.f32 %v3701, %v64
    %v3896 = vmul.f32 %v3706, %v65
    %v3897 = vmul.f32 %v3709, %v66
    %v3898 = vmul.f32 %v3701, %v67
    %v3899 = vmul.f32 %v3706, %v68
    %v3900 = vmul.f32 %v3709, %v69
    %v3901 = vmul.f32 %v3701, %v70
    %v3902 = vmul.f32 %v3706, %v71
    %v3903 = vmul.f32 %v3709, %v72
    %v3904 = vpack.c.bf16 %v3669, %v3666
    %v3905 = vpack.c.bf16 %v3674, %v3674
    %v3906 = vpack.c.bf16 %v3682, %v3677
    %v3907 = vpack.c.bf16 %v3685, %v3685
    %v3908 = vpack.c.bf16 %v3693, %v3690
    %v3909 = vpack.c.bf16 %v3698, %v3698
    %v3910 = vpack.c.bf16 %v3706, %v3701
    %v3911 = vpack.c.bf16 %v3709, %v3709
    %v3912 = vpack.c.bf16 %v3713, %v3712
    %v3913 = vpack.c.bf16 %v3715, %v3714
    %v3914 = vpack.c.bf16 %v3717, %v3716
    %v3915 = vpack.c.bf16 %v3719, %v3718
    %v3916 = vpack.c.bf16 %v3721, %v3720
    %v3917 = vpack.c.bf16 %v3723, %v3722
    %v3918 = vpack.c.bf16 %v3725, %v3724
    %v3919 = vpack.c.bf16 %v3727, %v3726
    %v3920 = vpack.c.bf16 %v3729, %v3728
    %v3921 = vpack.c.bf16 %v3731, %v3730
    %v3922 = vpack.c.bf16 %v3733, %v3732
    %v3923 = vpack.c.bf16 %v3735, %v3734
    %v3924 = vpack.c.bf16 %v3737, %v3736
    %v3925 = vpack.c.bf16 %v3739, %v3738
    %v3926 = vpack.c.bf16 %v3741, %v3740
    %v3927 = vpack.c.bf16 %v3743, %v3742
    %v3928 = vpack.c.bf16 %v3745, %v3744
    %v3929 = vpack.c.bf16 %v3747, %v3746
    %v3930 = vpack.c.bf16 %v3749, %v3748
    %v3931 = vpack.c.bf16 %v3751, %v3750
    %v3932 = vpack.c.bf16 %v3753, %v3752
    %v3933 = vpack.c.bf16 %v3755, %v3754
    %v3934 = vpack.c.bf16 %v3757, %v3756
    %v3935 = vpack.c.bf16 %v3759, %v3758
    %v3936 = vpack.c.bf16 %v3761, %v3760
    %v3937 = vpack.c.bf16 %v3763, %v3762
    %v3938 = vpack.c.bf16 %v3765, %v3764
    %v3939 = vpack.c.bf16 %v3767, %v3766
    %v3940 = vpack.c.bf16 %v3769, %v3768
    %v3941 = vpack.c.bf16 %v3771, %v3770
    %v3942 = vpack.c.bf16 %v3773, %v3772
    %v3943 = vpack.c.bf16 %v3775, %v3774
    %v3944 = vpack.c.bf16 %v3777, %v3776
    %v3945 = vpack.c.bf16 %v3779, %v3778
    %v3946 = vpack.c.bf16 %v3781, %v3780
    %v3947 = vpack.c.bf16 %v3783, %v3782
    %v3948 = vpack.c.bf16 %v3785, %v3784
    %v3949 = vpack.c.bf16 %v3787, %v3786
    %v3950 = vpack.c.bf16 %v3789, %v3788
    %v3951 = vpack.c.bf16 %v3791, %v3790
    %v3952 = vpack.c.bf16 %v3793, %v3792
    %v3953 = vpack.c.bf16 %v3795, %v3794
    %v3954 = vpack.c.bf16 %v3797, %v3796
    %v3955 = vpack.c.bf16 %v3799, %v3798
    %v3956 = vpack.c.bf16 %v3801, %v3800
    %v3957 = vpack.c.bf16 %v3803, %v3802
    %v3958 = vpack.c.bf16 %v3805, %v3804
    %v3959 = vpack.c.bf16 %v3807, %v3806
    %v3960 = vpack.c.bf16 %v3809, %v3808
    %v3961 = vpack.c.bf16 %v3811, %v3810
    %v3962 = vpack.c.bf16 %v3813, %v3812
    %v3963 = vpack.c.bf16 %v3815, %v3814
    %v3964 = vpack.c.bf16 %v3817, %v3816
    %v3965 = vpack.c.bf16 %v3819, %v3818
    %v3966 = vpack.c.bf16 %v3821, %v3820
    %v3967 = vpack.c.bf16 %v3823, %v3822
    %v3968 = vpack.c.bf16 %v3825, %v3824
    %v3969 = vpack.c.bf16 %v3827, %v3826
    %v3970 = vpack.c.bf16 %v3829, %v3828
    %v3971 = vpack.c.bf16 %v3831, %v3830
    %v3972 = vpack.c.bf16 %v3833, %v3832
    %v3973 = vpack.c.bf16 %v3835, %v3834
    %v3974 = vpack.c.bf16 %v3837, %v3836
    %v3975 = vpack.c.bf16 %v3839, %v3838
    %v3976 = vpack.c.bf16 %v3841, %v3840
    %v3977 = vpack.c.bf16 %v3843, %v3842
    %v3978 = vpack.c.bf16 %v3845, %v3844
    %v3979 = vpack.c.bf16 %v3847, %v3846
    %v3980 = vpack.c.bf16 %v3849, %v3848
    %v3981 = vpack.c.bf16 %v3851, %v3850
    %v3982 = vpack.c.bf16 %v3853, %v3852
    %v3983 = vpack.c.bf16 %v3855, %v3854
    %v3984 = vpack.c.bf16 %v3857, %v3856
    %v3985 = vpack.c.bf16 %v3859, %v3858
    %v3986 = vpack.c.bf16 %v3861, %v3860
    %v3987 = vpack.c.bf16 %v3863, %v3862
    %v3988 = vpack.c.bf16 %v3865, %v3864
    %v3989 = vpack.c.bf16 %v3867, %v3866
    %v3990 = vpack.c.bf16 %v3869, %v3868
    %v3991 = vpack.c.bf16 %v3871, %v3870
    %v3992 = vpack.c.bf16 %v3873, %v3872
    %v3993 = vpack.c.bf16 %v3875, %v3874
    %v3994 = vpack.c.bf16 %v3877, %v3876
    %v3995 = vpack.c.bf16 %v3879, %v3878
    %v3996 = vpack.c.bf16 %v3881, %v3880
    %v3997 = vpack.c.bf16 %v3883, %v3882
    %v3998 = vpack.c.bf16 %v3885, %v3884
    %v3999 = vpack.c.bf16 %v3887, %v3886
    %v4000 = vpack.c.bf16 %v3889, %v3888
    %v4001 = vpack.c.bf16 %v3891, %v3890
    %v4002 = vpack.c.bf16 %v3893, %v3892
    %v4003 = vpack.c.bf16 %v3895, %v3894
    %v4004 = vpack.c.bf16 %v3897, %v3896
    %v4005 = vpack.c.bf16 %v3899, %v3898
    %v4006 = vpack.c.bf16 %v3901, %v3900
    %v4007 = vpack.c.bf16 %v3903, %v3902
    %4010 = vrot.lane.b32.xlu0 %v3904, 32
    %v4011 = vpop.permute.xlu0 %4010
    %4012 = vrot.lane.b32.xlu0 %v3905, 32
    %v4013 = vpop.permute.xlu0 %4012
    %v4015 = vsel %vm100, %v4011, 0
    %v4018 = vsel %vm100, %v4013, 0
    %v4021 = vsel %vm100, %v3912, 0
    %v4024 = vsel %vm100, %v3913, 0
    %v4027 = vsel %vm100, %v3914, 0
    %v4030 = vsel %vm100, %v3915, 0
    %v4033 = vsel %vm100, %v3916, 0
    %v4036 = vsel %vm100, %v3917, 0
    %v4039 = vsel %vm100, %v3918, 0
    %v4042 = vsel %vm100, %v3919, 0
    %v4045 = vsel %vm100, %v3920, 0
    %v4048 = vsel %vm100, %v3921, 0
    %v4051 = vsel %vm100, %v3922, 0
    %v4054 = vsel %vm100, %v3923, 0
    %v4057 = vsel %vm100, %v3924, 0
    %v4060 = vsel %vm100, %v3925, 0
    %v4063 = vsel %vm100, %v3926, 0
    %v4066 = vsel %vm100, %v3927, 0
    %v4069 = vsel %vm100, %v3928, 0
    %v4072 = vsel %vm100, %v3929, 0
    %v4075 = vsel %vm100, %v3930, 0
    %v4078 = vsel %vm100, %v3931, 0
    %v4081 = vsel %vm100, %v3932, 0
    %v4084 = vsel %vm100, %v3933, 0
    %v4087 = vsel %vm100, %v3934, 0
    %v4090 = vsel %vm100, %v3935, 0
    %4092 = vmatprep.subr.bf16.mxu0 0
    %4093 = vmatpush1.bf16.xpose.msra.mxu0 %v4042
    %4094 = vmatprep.subr.bf16.mxu0 0
    %4095 = vmatpush1.bf16.xpose.msra.mxu0 %v4039
    %4096 = vmatprep.subr.bf16.mxu0 0
    %4097 = vmatpush1.bf16.xpose.msra.mxu0 %v4036
    %4098 = vmatprep.subr.bf16.mxu0 0
    %4099 = vmatpush1.bf16.xpose.msra.mxu0 %v4033
    %4100 = vmatprep.subr.bf16.mxu0 0
    %4101 = vmatpush1.bf16.xpose.msra.mxu0 %v4030
    %4102 = vmatprep.subr.bf16.mxu0 0
    %4103 = vmatpush1.bf16.xpose.msra.mxu0 %v4027
    %4104 = vmatprep.subr.bf16.mxu0 0
    %4105 = vmatpush1.bf16.xpose.msra.mxu0 %v4024
    %4106 = vmatprep.subr.bf16.mxu0 0
    %4107 = vmatpush1.bf16.xpose.msra.mxu0 %v4021
    %4108 = vmatprep.subr.bf16.mxu0 0
    %4109 = vmatpush2.bf16.xpose.msra.mxu0 %v4066
    %4110 = vmatprep.subr.bf16.mxu0 0
    %4111 = vmatpush2.bf16.xpose.msra.mxu0 %v4063
    %4112 = vmatprep.subr.bf16.mxu0 0
    %4113 = vmatpush2.bf16.xpose.msra.mxu0 %v4060
    %4114 = vmatprep.subr.bf16.mxu0 0
    %4115 = vmatpush2.bf16.xpose.msra.mxu0 %v4057
    %4116 = vmatprep.subr.bf16.mxu0 0
    %4117 = vmatpush2.bf16.xpose.msra.mxu0 %v4054
    %4118 = vmatprep.subr.bf16.mxu0 0
    %4119 = vmatpush2.bf16.xpose.msra.mxu0 %v4051
    %4120 = vmatprep.subr.bf16.mxu0 0
    %4121 = vmatpush2.bf16.xpose.msra.mxu0 %v4048
    %4122 = vmatprep.subr.bf16.mxu0 0
    %4123 = vmatpush2.bf16.xpose.msra.mxu0 %v4045
    %4124 = vmatprep.mubr.bf16.mxu0 0
    %4125 = vmatmul.mubr.bf16.gmra.mxu0 %v4015
    %v4126 = vpop.f32.mrf.mxu0
    %v4127 = vadd.f32 0.0, %v4126
    %v4128 = vpop.f32.mrf.mxu0
    %v4129 = vadd.f32 0.0, %v4128
    %v4130 = vpop.f32.mrf.mxu0
    %v4131 = vadd.f32 0.0, %v4130
    %v4132 = vpop.f32.mrf.mxu0
    %v4133 = vadd.f32 0.0, %v4132
    %4134 = vmatprep.mubr.bf16.mxu0 0
    %4135 = vmatmul.mubr.bf16.gmra.mxu0 %v4018
    %v4136 = vpop.f32.mrf.mxu0
    %v4137 = vadd.f32 0.0, %v4136
    %v4138 = vpop.f32.mrf.mxu0
    %v4139 = vadd.f32 0.0, %v4138
    %v4140 = vpop.f32.mrf.mxu0
    %v4141 = vpop.f32.mrf.mxu0
    %4142 = vdwg.mxu0
    %4143 = vmatprep.subr.bf16.mxu0 0
    %4144 = vmatpush1.bf16.xpose.msra.mxu0 %v4090
    %4145 = vmatprep.subr.bf16.mxu0 0
    %4146 = vmatpush1.bf16.xpose.msra.mxu0 %v4087
    %4147 = vmatprep.subr.bf16.mxu0 0
    %4148 = vmatpush1.bf16.xpose.msra.mxu0 %v4084
    %4149 = vmatprep.subr.bf16.mxu0 0
    %4150 = vmatpush1.bf16.xpose.msra.mxu0 %v4081
    %4151 = vmatprep.subr.bf16.mxu0 0
    %4152 = vmatpush1.bf16.xpose.msra.mxu0 %v4078
    %4153 = vmatprep.subr.bf16.mxu0 0
    %4154 = vmatpush1.bf16.xpose.msra.mxu0 %v4075
    %4155 = vmatprep.subr.bf16.mxu0 0
    %4156 = vmatpush1.bf16.xpose.msra.mxu0 %v4072
    %4157 = vmatprep.subr.bf16.mxu0 0
    %4158 = vmatpush1.bf16.xpose.msra.mxu0 %v4069
    %4159 = vmatprep.subr.bf16.mxu0 0
    %4160 = vmatpush2.bf16.xpose.msra.mxu0 0
    %4161 = vmatprep.subr.bf16.mxu0 0
    %4162 = vmatpush2.bf16.xpose.msra.mxu0 0
    %4163 = vmatprep.subr.bf16.mxu0 0
    %4164 = vmatpush2.bf16.xpose.msra.mxu0 0
    %4165 = vmatprep.subr.bf16.mxu0 0
    %4166 = vmatpush2.bf16.xpose.msra.mxu0 0
    %4167 = vmatprep.subr.bf16.mxu0 0
    %4168 = vmatpush2.bf16.xpose.msra.mxu0 0
    %4169 = vmatprep.subr.bf16.mxu0 0
    %4170 = vmatpush2.bf16.xpose.msra.mxu0 0
    %4171 = vmatprep.subr.bf16.mxu0 0
    %4172 = vmatpush2.bf16.xpose.msra.mxu0 0
    %4173 = vmatprep.subr.bf16.mxu0 0
    %4174 = vmatpush2.bf16.xpose.msra.mxu0 0
    %4175 = vmatprep.mubr.bf16.mxu0 0
    %4176 = vmatmul.mubr.bf16.gmra.mxu0 %v4015
    %v4177 = vpop.f32.mrf.mxu0
    %v4178 = vadd.f32 0.0, %v4177
    %v4179 = vpop.f32.mrf.mxu0
    %v4180 = vpop.f32.mrf.mxu0
    %v4181 = vadd.f32 0.0, %v4180
    %v4182 = vpop.f32.mrf.mxu0
    %4183 = vmatprep.mubr.bf16.mxu0 0
    %4184 = vmatmul.mubr.bf16.gmra.mxu0 %v4018
    %v4185 = vpop.f32.mrf.mxu0
    %v4186 = vadd.f32 0.0, %v4185
    %v4187 = vpop.f32.mrf.mxu0
    %v4188 = vpop.f32.mrf.mxu0
    %v4189 = vpop.f32.mrf.mxu0
    %4190 = vdwg.mxu0
    %4193 = vrot.lane.b32.xlu0 %v3906, 32
    %v4194 = vpop.permute.xlu0 %4193
    %4195 = vrot.lane.b32.xlu0 %v3907, 32
    %v4196 = vpop.permute.xlu0 %4195
    %v4198 = vsel %vm100, %v4194, 0
    %v4201 = vsel %vm100, %v4196, 0
    %v4204 = vsel %vm100, %v3936, 0
    %v4207 = vsel %vm100, %v3937, 0
    %v4210 = vsel %vm100, %v3938, 0
    %v4213 = vsel %vm100, %v3939, 0
    %v4216 = vsel %vm100, %v3940, 0
    %v4219 = vsel %vm100, %v3941, 0
    %v4222 = vsel %vm100, %v3942, 0
    %v4225 = vsel %vm100, %v3943, 0
    %v4228 = vsel %vm100, %v3944, 0
    %v4231 = vsel %vm100, %v3945, 0
    %v4234 = vsel %vm100, %v3946, 0
    %v4237 = vsel %vm100, %v3947, 0
    %v4240 = vsel %vm100, %v3948, 0
    %v4243 = vsel %vm100, %v3949, 0
    %v4246 = vsel %vm100, %v3950, 0
    %v4249 = vsel %vm100, %v3951, 0
    %v4252 = vsel %vm100, %v3952, 0
    %v4255 = vsel %vm100, %v3953, 0
    %v4258 = vsel %vm100, %v3954, 0
    %v4261 = vsel %vm100, %v3955, 0
    %v4264 = vsel %vm100, %v3956, 0
    %v4267 = vsel %vm100, %v3957, 0
    %v4270 = vsel %vm100, %v3958, 0
    %v4273 = vsel %vm100, %v3959, 0
    %4275 = vmatprep.subr.bf16.mxu0 0
    %4276 = vmatpush1.bf16.xpose.msra.mxu0 %v4225
    %4277 = vmatprep.subr.bf16.mxu0 0
    %4278 = vmatpush1.bf16.xpose.msra.mxu0 %v4222
    %4279 = vmatprep.subr.bf16.mxu0 0
    %4280 = vmatpush1.bf16.xpose.msra.mxu0 %v4219
    %4281 = vmatprep.subr.bf16.mxu0 0
    %4282 = vmatpush1.bf16.xpose.msra.mxu0 %v4216
    %4283 = vmatprep.subr.bf16.mxu0 0
    %4284 = vmatpush1.bf16.xpose.msra.mxu0 %v4213
    %4285 = vmatprep.subr.bf16.mxu0 0
    %4286 = vmatpush1.bf16.xpose.msra.mxu0 %v4210
    %4287 = vmatprep.subr.bf16.mxu0 0
    %4288 = vmatpush1.bf16.xpose.msra.mxu0 %v4207
    %4289 = vmatprep.subr.bf16.mxu0 0
    %4290 = vmatpush1.bf16.xpose.msra.mxu0 %v4204
    %4291 = vmatprep.subr.bf16.mxu0 0
    %4292 = vmatpush2.bf16.xpose.msra.mxu0 %v4249
    %4293 = vmatprep.subr.bf16.mxu0 0
    %4294 = vmatpush2.bf16.xpose.msra.mxu0 %v4246
    %4295 = vmatprep.subr.bf16.mxu0 0
    %4296 = vmatpush2.bf16.xpose.msra.mxu0 %v4243
    %4297 = vmatprep.subr.bf16.mxu0 0
    %4298 = vmatpush2.bf16.xpose.msra.mxu0 %v4240
    %4299 = vmatprep.subr.bf16.mxu0 0
    %4300 = vmatpush2.bf16.xpose.msra.mxu0 %v4237
    %4301 = vmatprep.subr.bf16.mxu0 0
    %4302 = vmatpush2.bf16.xpose.msra.mxu0 %v4234
    %4303 = vmatprep.subr.bf16.mxu0 0
    %4304 = vmatpush2.bf16.xpose.msra.mxu0 %v4231
    %4305 = vmatprep.subr.bf16.mxu0 0
    %4306 = vmatpush2.bf16.xpose.msra.mxu0 %v4228
    %4307 = vmatprep.mubr.bf16.mxu0 0
    %4308 = vmatmul.mubr.bf16.gmra.mxu0 %v4198
    %v4309 = vpop.f32.mrf.mxu0
    %v4310 = vadd.f32 0.0, %v4309
    %v4311 = vpop.f32.mrf.mxu0
    %v4312 = vadd.f32 0.0, %v4311
    %v4313 = vpop.f32.mrf.mxu0
    %v4314 = vadd.f32 0.0, %v4313
    %v4315 = vpop.f32.mrf.mxu0
    %v4316 = vadd.f32 0.0, %v4315
    %4317 = vmatprep.mubr.bf16.mxu0 0
    %4318 = vmatmul.mubr.bf16.gmra.mxu0 %v4201
    %v4319 = vpop.f32.mrf.mxu0
    %v4320 = vadd.f32 0.0, %v4319
    %v4321 = vpop.f32.mrf.mxu0
    %v4322 = vadd.f32 0.0, %v4321
    %v4323 = vpop.f32.mrf.mxu0
    %v4324 = vpop.f32.mrf.mxu0
    %4325 = vdwg.mxu0
    %4326 = vmatprep.subr.bf16.mxu0 0
    %4327 = vmatpush1.bf16.xpose.msra.mxu0 %v4273
    %4328 = vmatprep.subr.bf16.mxu0 0
    %4329 = vmatpush1.bf16.xpose.msra.mxu0 %v4270
    %4330 = vmatprep.subr.bf16.mxu0 0
    %4331 = vmatpush1.bf16.xpose.msra.mxu0 %v4267
    %4332 = vmatprep.subr.bf16.mxu0 0
    %4333 = vmatpush1.bf16.xpose.msra.mxu0 %v4264
    %4334 = vmatprep.subr.bf16.mxu0 0
    %4335 = vmatpush1.bf16.xpose.msra.mxu0 %v4261
    %4336 = vmatprep.subr.bf16.mxu0 0
    %4337 = vmatpush1.bf16.xpose.msra.mxu0 %v4258
    %4338 = vmatprep.subr.bf16.mxu0 0
    %4339 = vmatpush1.bf16.xpose.msra.mxu0 %v4255
    %4340 = vmatprep.subr.bf16.mxu0 0
    %4341 = vmatpush1.bf16.xpose.msra.mxu0 %v4252
    %4342 = vmatprep.subr.bf16.mxu0 0
    %4343 = vmatpush2.bf16.xpose.msra.mxu0 0
    %4344 = vmatprep.subr.bf16.mxu0 0
    %4345 = vmatpush2.bf16.xpose.msra.mxu0 0
    %4346 = vmatprep.subr.bf16.mxu0 0
    %4347 = vmatpush2.bf16.xpose.msra.mxu0 0
    %4348 = vmatprep.subr.bf16.mxu0 0
    %4349 = vmatpush2.bf16.xpose.msra.mxu0 0
    %4350 = vmatprep.subr.bf16.mxu0 0
    %4351 = vmatpush2.bf16.xpose.msra.mxu0 0
    %4352 = vmatprep.subr.bf16.mxu0 0
    %4353 = vmatpush2.bf16.xpose.msra.mxu0 0
    %4354 = vmatprep.subr.bf16.mxu0 0
    %4355 = vmatpush2.bf16.xpose.msra.mxu0 0
    %4356 = vmatprep.subr.bf16.mxu0 0
    %4357 = vmatpush2.bf16.xpose.msra.mxu0 0
    %4358 = vmatprep.mubr.bf16.mxu0 0
    %4359 = vmatmul.mubr.bf16.gmra.mxu0 %v4198
    %v4360 = vpop.f32.mrf.mxu0
    %v4361 = vadd.f32 0.0, %v4360
    %v4362 = vpop.f32.mrf.mxu0
    %v4363 = vpop.f32.mrf.mxu0
    %v4364 = vadd.f32 0.0, %v4363
    %v4365 = vpop.f32.mrf.mxu0
    %4366 = vmatprep.mubr.bf16.mxu0 0
    %4367 = vmatmul.mubr.bf16.gmra.mxu0 %v4201
    %v4368 = vpop.f32.mrf.mxu0
    %v4369 = vadd.f32 0.0, %v4368
    %v4370 = vpop.f32.mrf.mxu0
    %v4371 = vpop.f32.mrf.mxu0
    %v4372 = vpop.f32.mrf.mxu0
    %4373 = vdwg.mxu0
    %4376 = vrot.lane.b32.xlu0 %v3908, 32
    %v4377 = vpop.permute.xlu0 %4376
    %4378 = vrot.lane.b32.xlu0 %v3909, 32
    %v4379 = vpop.permute.xlu0 %4378
    %v4381 = vsel %vm100, %v4377, 0
    %v4384 = vsel %vm100, %v4379, 0
    %v4387 = vsel %vm100, %v3960, 0
    %v4390 = vsel %vm100, %v3961, 0
    %v4393 = vsel %vm100, %v3962, 0
    %v4396 = vsel %vm100, %v3963, 0
    %v4399 = vsel %vm100, %v3964, 0
    %v4402 = vsel %vm100, %v3965, 0
    %v4405 = vsel %vm100, %v3966, 0
    %v4408 = vsel %vm100, %v3967, 0
    %v4411 = vsel %vm100, %v3968, 0
    %v4414 = vsel %vm100, %v3969, 0
    %v4417 = vsel %vm100, %v3970, 0
    %v4420 = vsel %vm100, %v3971, 0
    %v4423 = vsel %vm100, %v3972, 0
    %v4426 = vsel %vm100, %v3973, 0
    %v4429 = vsel %vm100, %v3974, 0
    %v4432 = vsel %vm100, %v3975, 0
    %v4435 = vsel %vm100, %v3976, 0
    %v4438 = vsel %vm100, %v3977, 0
    %v4441 = vsel %vm100, %v3978, 0
    %v4444 = vsel %vm100, %v3979, 0
    %v4447 = vsel %vm100, %v3980, 0
    %v4450 = vsel %vm100, %v3981, 0
    %v4453 = vsel %vm100, %v3982, 0
    %v4456 = vsel %vm100, %v3983, 0
    %4458 = vmatprep.subr.bf16.mxu0 0
    %4459 = vmatpush1.bf16.xpose.msra.mxu0 %v4408
    %4460 = vmatprep.subr.bf16.mxu0 0
    %4461 = vmatpush1.bf16.xpose.msra.mxu0 %v4405
    %4462 = vmatprep.subr.bf16.mxu0 0
    %4463 = vmatpush1.bf16.xpose.msra.mxu0 %v4402
    %4464 = vmatprep.subr.bf16.mxu0 0
    %4465 = vmatpush1.bf16.xpose.msra.mxu0 %v4399
    %4466 = vmatprep.subr.bf16.mxu0 0
    %4467 = vmatpush1.bf16.xpose.msra.mxu0 %v4396
    %4468 = vmatprep.subr.bf16.mxu0 0
    %4469 = vmatpush1.bf16.xpose.msra.mxu0 %v4393
    %4470 = vmatprep.subr.bf16.mxu0 0
    %4471 = vmatpush1.bf16.xpose.msra.mxu0 %v4390
    %4472 = vmatprep.subr.bf16.mxu0 0
    %4473 = vmatpush1.bf16.xpose.msra.mxu0 %v4387
    %4474 = vmatprep.subr.bf16.mxu0 0
    %4475 = vmatpush2.bf16.xpose.msra.mxu0 %v4432
    %4476 = vmatprep.subr.bf16.mxu0 0
    %4477 = vmatpush2.bf16.xpose.msra.mxu0 %v4429
    %4478 = vmatprep.subr.bf16.mxu0 0
    %4479 = vmatpush2.bf16.xpose.msra.mxu0 %v4426
    %4480 = vmatprep.subr.bf16.mxu0 0
    %4481 = vmatpush2.bf16.xpose.msra.mxu0 %v4423
    %4482 = vmatprep.subr.bf16.mxu0 0
    %4483 = vmatpush2.bf16.xpose.msra.mxu0 %v4420
    %4484 = vmatprep.subr.bf16.mxu0 0
    %4485 = vmatpush2.bf16.xpose.msra.mxu0 %v4417
    %4486 = vmatprep.subr.bf16.mxu0 0
    %4487 = vmatpush2.bf16.xpose.msra.mxu0 %v4414
    %4488 = vmatprep.subr.bf16.mxu0 0
    %4489 = vmatpush2.bf16.xpose.msra.mxu0 %v4411
    %4490 = vmatprep.mubr.bf16.mxu0 0
    %4491 = vmatmul.mubr.bf16.gmra.mxu0 %v4381
    %v4492 = vpop.f32.mrf.mxu0
    %v4493 = vadd.f32 0.0, %v4492
    %v4494 = vpop.f32.mrf.mxu0
    %v4495 = vadd.f32 0.0, %v4494
    %v4496 = vpop.f32.mrf.mxu0
    %v4497 = vadd.f32 0.0, %v4496
    %v4498 = vpop.f32.mrf.mxu0
    %v4499 = vadd.f32 0.0, %v4498
    %4500 = vmatprep.mubr.bf16.mxu0 0
    %4501 = vmatmul.mubr.bf16.gmra.mxu0 %v4384
    %v4502 = vpop.f32.mrf.mxu0
    %v4503 = vadd.f32 0.0, %v4502
    %v4504 = vpop.f32.mrf.mxu0
    %v4505 = vadd.f32 0.0, %v4504
    %v4506 = vpop.f32.mrf.mxu0
    %v4507 = vpop.f32.mrf.mxu0
    %4508 = vdwg.mxu0
    %4509 = vmatprep.subr.bf16.mxu0 0
    %4510 = vmatpush1.bf16.xpose.msra.mxu0 %v4456
    %4511 = vmatprep.subr.bf16.mxu0 0
    %4512 = vmatpush1.bf16.xpose.msra.mxu0 %v4453
    %4513 = vmatprep.subr.bf16.mxu0 0
    %4514 = vmatpush1.bf16.xpose.msra.mxu0 %v4450
    %4515 = vmatprep.subr.bf16.mxu0 0
    %4516 = vmatpush1.bf16.xpose.msra.mxu0 %v4447
    %4517 = vmatprep.subr.bf16.mxu0 0
    %4518 = vmatpush1.bf16.xpose.msra.mxu0 %v4444
    %4519 = vmatprep.subr.bf16.mxu0 0
    %4520 = vmatpush1.bf16.xpose.msra.mxu0 %v4441
    %4521 = vmatprep.subr.bf16.mxu0 0
    %4522 = vmatpush1.bf16.xpose.msra.mxu0 %v4438
    %4523 = vmatprep.subr.bf16.mxu0 0
    %4524 = vmatpush1.bf16.xpose.msra.mxu0 %v4435
    %4525 = vmatprep.subr.bf16.mxu0 0
    %4526 = vmatpush2.bf16.xpose.msra.mxu0 0
    %4527 = vmatprep.subr.bf16.mxu0 0
    %4528 = vmatpush2.bf16.xpose.msra.mxu0 0
    %4529 = vmatprep.subr.bf16.mxu0 0
    %4530 = vmatpush2.bf16.xpose.msra.mxu0 0
    %4531 = vmatprep.subr.bf16.mxu0 0
    %4532 = vmatpush2.bf16.xpose.msra.mxu0 0
    %4533 = vmatprep.subr.bf16.mxu0 0
    %4534 = vmatpush2.bf16.xpose.msra.mxu0 0
    %4535 = vmatprep.subr.bf16.mxu0 0
    %4536 = vmatpush2.bf16.xpose.msra.mxu0 0
    %4537 = vmatprep.subr.bf16.mxu0 0
    %4538 = vmatpush2.bf16.xpose.msra.mxu0 0
    %4539 = vmatprep.subr.bf16.mxu0 0
    %4540 = vmatpush2.bf16.xpose.msra.mxu0 0
    %4541 = vmatprep.mubr.bf16.mxu0 0
    %4542 = vmatmul.mubr.bf16.gmra.mxu0 %v4381
    %v4543 = vpop.f32.mrf.mxu0
    %v4544 = vadd.f32 0.0, %v4543
    %v4545 = vpop.f32.mrf.mxu0
    %v4546 = vpop.f32.mrf.mxu0
    %v4547 = vadd.f32 0.0, %v4546
    %v4548 = vpop.f32.mrf.mxu0
    %4549 = vmatprep.mubr.bf16.mxu0 0
    %4550 = vmatmul.mubr.bf16.gmra.mxu0 %v4384
    %v4551 = vpop.f32.mrf.mxu0
    %v4552 = vadd.f32 0.0, %v4551
    %v4553 = vpop.f32.mrf.mxu0
    %v4554 = vpop.f32.mrf.mxu0
    %v4555 = vpop.f32.mrf.mxu0
    %4556 = vdwg.mxu0
    %4559 = vrot.lane.b32.xlu0 %v3910, 32
    %v4560 = vpop.permute.xlu0 %4559
    %4561 = vrot.lane.b32.xlu0 %v3911, 32
    %v4562 = vpop.permute.xlu0 %4561
    %v4564 = vsel %vm100, %v4560, 0
    %v4567 = vsel %vm100, %v4562, 0
    %v4570 = vsel %vm100, %v3984, 0
    %v4573 = vsel %vm100, %v3985, 0
    %v4576 = vsel %vm100, %v3986, 0
    %v4579 = vsel %vm100, %v3987, 0
    %v4582 = vsel %vm100, %v3988, 0
    %v4585 = vsel %vm100, %v3989, 0
    %v4588 = vsel %vm100, %v3990, 0
    %v4591 = vsel %vm100, %v3991, 0
    %v4594 = vsel %vm100, %v3992, 0
    %v4597 = vsel %vm100, %v3993, 0
    %v4600 = vsel %vm100, %v3994, 0
    %v4603 = vsel %vm100, %v3995, 0
    %v4606 = vsel %vm100, %v3996, 0
    %v4609 = vsel %vm100, %v3997, 0
    %v4612 = vsel %vm100, %v3998, 0
    %v4615 = vsel %vm100, %v3999, 0
    %v4618 = vsel %vm100, %v4000, 0
    %v4621 = vsel %vm100, %v4001, 0
    %v4624 = vsel %vm100, %v4002, 0
    %v4627 = vsel %vm100, %v4003, 0
    %v4630 = vsel %vm100, %v4004, 0
    %v4633 = vsel %vm100, %v4005, 0
    %v4636 = vsel %vm100, %v4006, 0
    %v4639 = vsel %vm100, %v4007, 0
    %4641 = vmatprep.subr.bf16.mxu0 0
    %4642 = vmatpush1.bf16.xpose.msra.mxu0 %v4591
    %4643 = vmatprep.subr.bf16.mxu0 0
    %4644 = vmatpush1.bf16.xpose.msra.mxu0 %v4588
    %4645 = vmatprep.subr.bf16.mxu0 0
    %4646 = vmatpush1.bf16.xpose.msra.mxu0 %v4585
    %4647 = vmatprep.subr.bf16.mxu0 0
    %4648 = vmatpush1.bf16.xpose.msra.mxu0 %v4582
    %4649 = vmatprep.subr.bf16.mxu0 0
    %4650 = vmatpush1.bf16.xpose.msra.mxu0 %v4579
    %4651 = vmatprep.subr.bf16.mxu0 0
    %4652 = vmatpush1.bf16.xpose.msra.mxu0 %v4576
    %4653 = vmatprep.subr.bf16.mxu0 0
    %4654 = vmatpush1.bf16.xpose.msra.mxu0 %v4573
    %4655 = vmatprep.subr.bf16.mxu0 0
    %4656 = vmatpush1.bf16.xpose.msra.mxu0 %v4570
    %4657 = vmatprep.subr.bf16.mxu0 0
    %4658 = vmatpush2.bf16.xpose.msra.mxu0 %v4615
    %4659 = vmatprep.subr.bf16.mxu0 0
    %4660 = vmatpush2.bf16.xpose.msra.mxu0 %v4612
    %4661 = vmatprep.subr.bf16.mxu0 0
    %4662 = vmatpush2.bf16.xpose.msra.mxu0 %v4609
    %4663 = vmatprep.subr.bf16.mxu0 0
    %4664 = vmatpush2.bf16.xpose.msra.mxu0 %v4606
    %4665 = vmatprep.subr.bf16.mxu0 0
    %4666 = vmatpush2.bf16.xpose.msra.mxu0 %v4603
    %4667 = vmatprep.subr.bf16.mxu0 0
    %4668 = vmatpush2.bf16.xpose.msra.mxu0 %v4600
    %4669 = vmatprep.subr.bf16.mxu0 0
    %4670 = vmatpush2.bf16.xpose.msra.mxu0 %v4597
    %4671 = vmatprep.subr.bf16.mxu0 0
    %4672 = vmatpush2.bf16.xpose.msra.mxu0 %v4594
    %4673 = vmatprep.mubr.bf16.mxu0 0
    %4674 = vmatmul.mubr.bf16.gmra.mxu0 %v4564
    %v4675 = vpop.f32.mrf.mxu0
    %v4676 = vadd.f32 0.0, %v4675
    %v4677 = vpop.f32.mrf.mxu0
    %v4678 = vadd.f32 0.0, %v4677
    %v4679 = vpop.f32.mrf.mxu0
    %v4680 = vadd.f32 0.0, %v4679
    %v4681 = vpop.f32.mrf.mxu0
    %v4682 = vadd.f32 0.0, %v4681
    %4683 = vmatprep.mubr.bf16.mxu0 0
    %4684 = vmatmul.mubr.bf16.gmra.mxu0 %v4567
    %v4685 = vpop.f32.mrf.mxu0
    %v4686 = vadd.f32 0.0, %v4685
    %v4687 = vpop.f32.mrf.mxu0
    %v4688 = vadd.f32 0.0, %v4687
    %v4689 = vpop.f32.mrf.mxu0
    %v4690 = vpop.f32.mrf.mxu0
    %4691 = vdwg.mxu0
    %4692 = vmatprep.subr.bf16.mxu0 0
    %4693 = vmatpush1.bf16.xpose.msra.mxu0 %v4639
    %4694 = vmatprep.subr.bf16.mxu0 0
    %4695 = vmatpush1.bf16.xpose.msra.mxu0 %v4636
    %4696 = vmatprep.subr.bf16.mxu0 0
    %4697 = vmatpush1.bf16.xpose.msra.mxu0 %v4633
    %4698 = vmatprep.subr.bf16.mxu0 0
    %4699 = vmatpush1.bf16.xpose.msra.mxu0 %v4630
    %4700 = vmatprep.subr.bf16.mxu0 0
    %4701 = vmatpush1.bf16.xpose.msra.mxu0 %v4627
    %4702 = vmatprep.subr.bf16.mxu0 0
    %4703 = vmatpush1.bf16.xpose.msra.mxu0 %v4624
    %4704 = vmatprep.subr.bf16.mxu0 0
    %4705 = vmatpush1.bf16.xpose.msra.mxu0 %v4621
    %4706 = vmatprep.subr.bf16.mxu0 0
    %4707 = vmatpush1.bf16.xpose.msra.mxu0 %v4618
    %4708 = vmatprep.subr.bf16.mxu0 0
    %4709 = vmatpush2.bf16.xpose.msra.mxu0 0
    %4710 = vmatprep.subr.bf16.mxu0 0
    %4711 = vmatpush2.bf16.xpose.msra.mxu0 0
    %4712 = vmatprep.subr.bf16.mxu0 0
    %4713 = vmatpush2.bf16.xpose.msra.mxu0 0
    %4714 = vmatprep.subr.bf16.mxu0 0
    %4715 = vmatpush2.bf16.xpose.msra.mxu0 0
    %4716 = vmatprep.subr.bf16.mxu0 0
    %4717 = vmatpush2.bf16.xpose.msra.mxu0 0
    %4718 = vmatprep.subr.bf16.mxu0 0
    %4719 = vmatpush2.bf16.xpose.msra.mxu0 0
    %4720 = vmatprep.subr.bf16.mxu0 0
    %4721 = vmatpush2.bf16.xpose.msra.mxu0 0
    %4722 = vmatprep.subr.bf16.mxu0 0
    %4723 = vmatpush2.bf16.xpose.msra.mxu0 0
    %4724 = vmatprep.mubr.bf16.mxu0 0
    %4725 = vmatmul.mubr.bf16.gmra.mxu0 %v4564
    %v4726 = vpop.f32.mrf.mxu0
    %v4727 = vadd.f32 0.0, %v4726
    %v4728 = vpop.f32.mrf.mxu0
    %v4729 = vpop.f32.mrf.mxu0
    %v4730 = vadd.f32 0.0, %v4729
    %v4731 = vpop.f32.mrf.mxu0
    %4732 = vmatprep.mubr.bf16.mxu0 0
    %4733 = vmatmul.mubr.bf16.gmra.mxu0 %v4567
    %v4734 = vpop.f32.mrf.mxu0
    %v4735 = vadd.f32 0.0, %v4734
    %v4736 = vpop.f32.mrf.mxu0
    %v4737 = vpop.f32.mrf.mxu0
    %v4738 = vpop.f32.mrf.mxu0
    %4739 = vdwg.mxu0
    %v4740 = vmax.f32 %v4127, %v4129
    %v4741 = vmax.f32 %v4740, %v4178
    %4742 = vmax.xlane.f32.xlu0 %v4741
    %v4743 = vpop.xlane.xlu0 %4742
    %v4744 = vmax.f32 %v4131, %v4133
    %v4745 = vmax.f32 %v4744, %v4181
    %4746 = vmax.xlane.f32.xlu0 %v4745
    %v4747 = vpop.xlane.xlu0 %4746
    %v4748 = vmax.f32 %v4137, %v4139
    %v4749 = vmax.f32 %v4748, %v4186
    %4750 = vmax.xlane.f32.xlu0 %v4749
    %v4751 = vpop.xlane.xlu0 %4750
    %v4752 = vmax.f32 %v4310, %v4312
    %v4753 = vmax.f32 %v4752, %v4361
    %4754 = vmax.xlane.f32.xlu0 %v4753
    %v4755 = vpop.xlane.xlu0 %4754
    %v4756 = vmax.f32 %v4314, %v4316
    %v4757 = vmax.f32 %v4756, %v4364
    %4758 = vmax.xlane.f32.xlu0 %v4757
    %v4759 = vpop.xlane.xlu0 %4758
    %v4760 = vmax.f32 %v4320, %v4322
    %v4761 = vmax.f32 %v4760, %v4369
    %4762 = vmax.xlane.f32.xlu0 %v4761
    %v4763 = vpop.xlane.xlu0 %4762
    %v4764 = vmax.f32 %v4493, %v4495
    %v4765 = vmax.f32 %v4764, %v4544
    %4766 = vmax.xlane.f32.xlu0 %v4765
    %v4767 = vpop.xlane.xlu0 %4766
    %v4768 = vmax.f32 %v4497, %v4499
    %v4769 = vmax.f32 %v4768, %v4547
    %4770 = vmax.xlane.f32.xlu0 %v4769
    %v4771 = vpop.xlane.xlu0 %4770
    %v4772 = vmax.f32 %v4503, %v4505
    %v4773 = vmax.f32 %v4772, %v4552
    %4774 = vmax.xlane.f32.xlu0 %v4773
    %v4775 = vpop.xlane.xlu0 %4774
    %v4776 = vmax.f32 %v4676, %v4678
    %v4777 = vmax.f32 %v4776, %v4727
    %4778 = vmax.xlane.f32.xlu0 %v4777
    %v4779 = vpop.xlane.xlu0 %4778
    %v4780 = vmax.f32 %v4680, %v4682
    %v4781 = vmax.f32 %v4780, %v4730
    %4782 = vmax.xlane.f32.xlu0 %v4781
    %v4783 = vpop.xlane.xlu0 %4782
    %v4784 = vmax.f32 %v4686, %v4688
    %v4785 = vmax.f32 %v4784, %v4735
    %4786 = vmax.xlane.f32.xlu0 %v4785
    %v4787 = vpop.xlane.xlu0 %4786
    %v4788 = vsub.f32 %v4127, %v4743
    %v4789 = vsub.f32 %v4129, %v4743
    %v4790 = vsub.f32 %v4178, %v4743
    %v4791 = vsub.f32 %v4131, %v4747
    %v4792 = vsub.f32 %v4133, %v4747
    %v4793 = vsub.f32 %v4181, %v4747
    %v4794 = vsub.f32 %v4137, %v4751
    %v4795 = vsub.f32 %v4139, %v4751
    %v4796 = vsub.f32 %v4186, %v4751
    %v4797 = vsub.f32 %v4310, %v4755
    %v4798 = vsub.f32 %v4312, %v4755
    %v4799 = vsub.f32 %v4361, %v4755
    %v4800 = vsub.f32 %v4314, %v4759
    %v4801 = vsub.f32 %v4316, %v4759
    %v4802 = vsub.f32 %v4364, %v4759
    %v4803 = vsub.f32 %v4320, %v4763
    %v4804 = vsub.f32 %v4322, %v4763
    %v4805 = vsub.f32 %v4369, %v4763
    %v4806 = vsub.f32 %v4493, %v4767
    %v4807 = vsub.f32 %v4495, %v4767
    %v4808 = vsub.f32 %v4544, %v4767
    %v4809 = vsub.f32 %v4497, %v4771
    %v4810 = vsub.f32 %v4499, %v4771
    %v4811 = vsub.f32 %v4547, %v4771
    %v4812 = vsub.f32 %v4503, %v4775
    %v4813 = vsub.f32 %v4505, %v4775
    %v4814 = vsub.f32 %v4552, %v4775
    %v4815 = vsub.f32 %v4676, %v4779
    %v4816 = vsub.f32 %v4678, %v4779
    %v4817 = vsub.f32 %v4727, %v4779
    %v4818 = vsub.f32 %v4680, %v4783
    %v4819 = vsub.f32 %v4682, %v4783
    %v4820 = vsub.f32 %v4730, %v4783
    %v4821 = vsub.f32 %v4686, %v4787
    %v4822 = vsub.f32 %v4688, %v4787
    %v4823 = vsub.f32 %v4735, %v4787
    %v4824 = vmul.f32 %v4788, 1.442695
    %v4825 = vpow.pop %v4824
    %v4826 = vmul.f32 %v4789, 1.442695
    %v4827 = vpow.pop %v4826
    %v4828 = vmul.f32 %v4790, 1.442695
    %v4829 = vpow.pop %v4828
    %v4830 = vmul.f32 %v4791, 1.442695
    %v4831 = vpow.pop %v4830
    %v4832 = vmul.f32 %v4792, 1.442695
    %v4833 = vpow.pop %v4832
    %v4834 = vmul.f32 %v4793, 1.442695
    %v4835 = vpow.pop %v4834
    %v4836 = vmul.f32 %v4794, 1.442695
    %v4837 = vpow.pop %v4836
    %v4838 = vmul.f32 %v4795, 1.442695
    %v4839 = vpow.pop %v4838
    %v4840 = vmul.f32 %v4796, 1.442695
    %v4841 = vpow.pop %v4840
    %v4842 = vmul.f32 %v4797, 1.442695
    %v4843 = vpow.pop %v4842
    %v4844 = vmul.f32 %v4798, 1.442695
    %v4845 = vpow.pop %v4844
    %v4846 = vmul.f32 %v4799, 1.442695
    %v4847 = vpow.pop %v4846
    %v4848 = vmul.f32 %v4800, 1.442695
    %v4849 = vpow.pop %v4848
    %v4850 = vmul.f32 %v4801, 1.442695
    %v4851 = vpow.pop %v4850
    %v4852 = vmul.f32 %v4802, 1.442695
    %v4853 = vpow.pop %v4852
    %v4854 = vmul.f32 %v4803, 1.442695
    %v4855 = vpow.pop %v4854
    %v4856 = vmul.f32 %v4804, 1.442695
    %v4857 = vpow.pop %v4856
    %v4858 = vmul.f32 %v4805, 1.442695
    %v4859 = vpow.pop %v4858
    %v4860 = vmul.f32 %v4806, 1.442695
    %v4861 = vpow.pop %v4860
    %v4862 = vmul.f32 %v4807, 1.442695
    %v4863 = vpow.pop %v4862
    %v4864 = vmul.f32 %v4808, 1.442695
    %v4865 = vpow.pop %v4864
    %v4866 = vmul.f32 %v4809, 1.442695
    %v4867 = vpow.pop %v4866
    %v4868 = vmul.f32 %v4810, 1.442695
    %v4869 = vpow.pop %v4868
    %v4870 = vmul.f32 %v4811, 1.442695
    %v4871 = vpow.pop %v4870
    %v4872 = vmul.f32 %v4812, 1.442695
    %v4873 = vpow.pop %v4872
    %v4874 = vmul.f32 %v4813, 1.442695
    %v4875 = vpow.pop %v4874
    %v4876 = vmul.f32 %v4814, 1.442695
    %v4877 = vpow.pop %v4876
    %v4878 = vmul.f32 %v4815, 1.442695
    %v4879 = vpow.pop %v4878
    %v4880 = vmul.f32 %v4816, 1.442695
    %v4881 = vpow.pop %v4880
    %v4882 = vmul.f32 %v4817, 1.442695
    %v4883 = vpow.pop %v4882
    %v4884 = vmul.f32 %v4818, 1.442695
    %v4885 = vpow.pop %v4884
    %v4886 = vmul.f32 %v4819, 1.442695
    %v4887 = vpow.pop %v4886
    %v4888 = vmul.f32 %v4820, 1.442695
    %v4889 = vpow.pop %v4888
    %v4890 = vmul.f32 %v4821, 1.442695
    %v4891 = vpow.pop %v4890
    %v4892 = vmul.f32 %v4822, 1.442695
    %v4893 = vpow.pop %v4892
    %v4894 = vmul.f32 %v4823, 1.442695
    %v4895 = vpow.pop %v4894
    %v4896 = vpack.c.bf16 %v4831, %v4825
    %v4897 = vpack.c.bf16 %v4833, %v4827
    %v4898 = vpack.c.bf16 %v4835, %v4829
    %v4899 = vpack.c.bf16 %v4837, %v4837
    %v4900 = vpack.c.bf16 %v4839, %v4839
    %v4901 = vpack.c.bf16 %v4841, %v4841
    %v4902 = vpack.c.bf16 %v4849, %v4843
    %v4903 = vpack.c.bf16 %v4851, %v4845
    %v4904 = vpack.c.bf16 %v4853, %v4847
    %v4905 = vpack.c.bf16 %v4855, %v4855
    %v4906 = vpack.c.bf16 %v4857, %v4857
    %v4907 = vpack.c.bf16 %v4859, %v4859
    %v4908 = vpack.c.bf16 %v4867, %v4861
    %v4909 = vpack.c.bf16 %v4869, %v4863
    %v4910 = vpack.c.bf16 %v4871, %v4865
    %v4911 = vpack.c.bf16 %v4873, %v4873
    %v4912 = vpack.c.bf16 %v4875, %v4875
    %v4913 = vpack.c.bf16 %v4877, %v4877
    %v4914 = vpack.c.bf16 %v4885, %v4879
    %v4915 = vpack.c.bf16 %v4887, %v4881
    %v4916 = vpack.c.bf16 %v4889, %v4883
    %v4917 = vpack.c.bf16 %v4891, %v4891
    %v4918 = vpack.c.bf16 %v4893, %v4893
    %v4919 = vpack.c.bf16 %v4895, %v4895
    %4944 = vrot.lane.b32.xlu0 %v3912, 96
    %v4945 = vpop.permute.xlu0 %4944
    %4946 = vrot.lane.b32.xlu0 %v3913, 96
    %v4947 = vpop.permute.xlu0 %4946
    %4948 = vrot.lane.b32.xlu0 %v3914, 96
    %v4949 = vpop.permute.xlu0 %4948
    %4950 = vrot.lane.b32.xlu0 %v3915, 96
    %v4951 = vpop.permute.xlu0 %4950
    %4952 = vrot.lane.b32.xlu0 %v3916, 96
    %v4953 = vpop.permute.xlu0 %4952
    %4954 = vrot.lane.b32.xlu0 %v3917, 96
    %v4955 = vpop.permute.xlu0 %4954
    %4956 = vrot.lane.b32.xlu0 %v3918, 96
    %v4957 = vpop.permute.xlu0 %4956
    %4958 = vrot.lane.b32.xlu0 %v3919, 96
    %v4959 = vpop.permute.xlu0 %4958
    %4960 = vrot.lane.b32.xlu0 %v3920, 96
    %v4961 = vpop.permute.xlu0 %4960
    %4962 = vrot.lane.b32.xlu0 %v3921, 96
    %v4963 = vpop.permute.xlu0 %4962
    %4964 = vrot.lane.b32.xlu0 %v3922, 96
    %v4965 = vpop.permute.xlu0 %4964
    %4966 = vrot.lane.b32.xlu0 %v3923, 96
    %v4967 = vpop.permute.xlu0 %4966
    %4968 = vrot.lane.b32.xlu0 %v3924, 96
    %v4969 = vpop.permute.xlu0 %4968
    %4970 = vrot.lane.b32.xlu0 %v3925, 96
    %v4971 = vpop.permute.xlu0 %4970
    %4972 = vrot.lane.b32.xlu0 %v3926, 96
    %v4973 = vpop.permute.xlu0 %4972
    %4974 = vrot.lane.b32.xlu0 %v3927, 96
    %v4975 = vpop.permute.xlu0 %4974
    %4976 = vrot.lane.b32.xlu0 %v3928, 96
    %v4977 = vpop.permute.xlu0 %4976
    %4978 = vrot.lane.b32.xlu0 %v3929, 96
    %v4979 = vpop.permute.xlu0 %4978
    %4980 = vrot.lane.b32.xlu0 %v3930, 96
    %v4981 = vpop.permute.xlu0 %4980
    %4982 = vrot.lane.b32.xlu0 %v3931, 96
    %v4983 = vpop.permute.xlu0 %4982
    %4984 = vrot.lane.b32.xlu0 %v3932, 96
    %v4985 = vpop.permute.xlu0 %4984
    %4986 = vrot.lane.b32.xlu0 %v3933, 96
    %v4987 = vpop.permute.xlu0 %4986
    %4988 = vrot.lane.b32.xlu0 %v3934, 96
    %v4989 = vpop.permute.xlu0 %4988
    %4990 = vrot.lane.b32.xlu0 %v3935, 96
    %v4991 = vpop.permute.xlu0 %4990
    %5016 = vmatprep.subr.bf16.mxu0 0
    %5017 = vmatpush1.bf16.msra.mxu0 %v4959
    %5018 = vmatprep.subr.bf16.mxu0 0
    %5019 = vmatpush1.bf16.msra.mxu0 %v4957
    %5020 = vmatprep.subr.bf16.mxu0 0
    %5021 = vmatpush1.bf16.msra.mxu0 %v4955
    %5022 = vmatprep.subr.bf16.mxu0 0
    %5023 = vmatpush1.bf16.msra.mxu0 %v4953
    %5024 = vmatprep.subr.bf16.mxu0 0
    %5025 = vmatpush1.bf16.msra.mxu0 %v4951
    %5026 = vmatprep.subr.bf16.mxu0 0
    %5027 = vmatpush1.bf16.msra.mxu0 %v4949
    %5028 = vmatprep.subr.bf16.mxu0 0
    %5029 = vmatpush1.bf16.msra.mxu0 %v4947
    %5030 = vmatprep.subr.bf16.mxu0 0
    %5031 = vmatpush1.bf16.msra.mxu0 %v4945
    %5032 = vmatprep.subr.bf16.mxu0 0
    %5033 = vmatpush2.bf16.msra.mxu0 %v4975
    %5034 = vmatprep.subr.bf16.mxu0 0
    %5035 = vmatpush2.bf16.msra.mxu0 %v4973
    %5036 = vmatprep.subr.bf16.mxu0 0
    %5037 = vmatpush2.bf16.msra.mxu0 %v4971
    %5038 = vmatprep.subr.bf16.mxu0 0
    %5039 = vmatpush2.bf16.msra.mxu0 %v4969
    %5040 = vmatprep.subr.bf16.mxu0 0
    %5041 = vmatpush2.bf16.msra.mxu0 %v4967
    %5042 = vmatprep.subr.bf16.mxu0 0
    %5043 = vmatpush2.bf16.msra.mxu0 %v4965
    %5044 = vmatprep.subr.bf16.mxu0 0
    %5045 = vmatpush2.bf16.msra.mxu0 %v4963
    %5046 = vmatprep.subr.bf16.mxu0 0
    %5047 = vmatpush2.bf16.msra.mxu0 %v4961
    %5048 = vmatprep.mubr.bf16.mxu0 %v4897
    %5049 = vmatmul.mubr.bf16.gmra.mxu0 %v4896
    %v5050 = vpop.f32.mrf.mxu0
    %v5051 = vadd.f32 0.0, %v5050
    %v5052 = vpop.f32.mrf.mxu0
    %v5053 = vpop.f32.mrf.mxu0
    %v5054 = vadd.f32 0.0, %v5053
    %v5055 = vpop.f32.mrf.mxu0
    %5056 = vmatprep.mubr.bf16.mxu0 %v4900
    %5057 = vmatmul.mubr.bf16.gmra.mxu0 %v4899
    %v5058 = vpop.f32.mrf.mxu0
    %v5059 = vadd.f32 0.0, %v5058
    %v5060 = vpop.f32.mrf.mxu0
    %v5061 = vpop.f32.mrf.mxu0
    %v5062 = vpop.f32.mrf.mxu0
    %5063 = vdwg.mxu0
    %5064 = vmatprep.subr.bf16.mxu0 0
    %5065 = vmatpush1.bf16.msra.mxu0 %v4991
    %5066 = vmatprep.subr.bf16.mxu0 0
    %5067 = vmatpush1.bf16.msra.mxu0 %v4989
    %5068 = vmatprep.subr.bf16.mxu0 0
    %5069 = vmatpush1.bf16.msra.mxu0 %v4987
    %5070 = vmatprep.subr.bf16.mxu0 0
    %5071 = vmatpush1.bf16.msra.mxu0 %v4985
    %5072 = vmatprep.subr.bf16.mxu0 0
    %5073 = vmatpush1.bf16.msra.mxu0 %v4983
    %5074 = vmatprep.subr.bf16.mxu0 0
    %5075 = vmatpush1.bf16.msra.mxu0 %v4981
    %5076 = vmatprep.subr.bf16.mxu0 0
    %5077 = vmatpush1.bf16.msra.mxu0 %v4979
    %5078 = vmatprep.subr.bf16.mxu0 0
    %5079 = vmatpush1.bf16.msra.mxu0 %v4977
    %5080 = vmatprep.subr.bf16.mxu0 0
    %5081 = vmatpush2.bf16.msra.mxu0 0
    %5082 = vmatprep.subr.bf16.mxu0 0
    %5083 = vmatpush2.bf16.msra.mxu0 0
    %5084 = vmatprep.subr.bf16.mxu0 0
    %5085 = vmatpush2.bf16.msra.mxu0 0
    %5086 = vmatprep.subr.bf16.mxu0 0
    %5087 = vmatpush2.bf16.msra.mxu0 0
    %5088 = vmatprep.subr.bf16.mxu0 0
    %5089 = vmatpush2.bf16.msra.mxu0 0
    %5090 = vmatprep.subr.bf16.mxu0 0
    %5091 = vmatpush2.bf16.msra.mxu0 0
    %5092 = vmatprep.subr.bf16.mxu0 0
    %5093 = vmatpush2.bf16.msra.mxu0 0
    %5094 = vmatprep.subr.bf16.mxu0 0
    %5095 = vmatpush2.bf16.msra.mxu0 0
    %5096 = vmatprep.mubr.bf16.mxu0 0
    %5097 = vmatmul.mubr.bf16.gmra.mxu0 %v4898
    %v5098 = vpop.f32.mrf.mxu0
    %v5099 = vadd.f32 %v5051, %v5098
    %v5100 = vpop.f32.mrf.mxu0
    %v5101 = vpop.f32.mrf.mxu0
    %v5102 = vadd.f32 %v5054, %v5101
    %v5103 = vpop.f32.mrf.mxu0
    %5104 = vmatprep.mubr.bf16.mxu0 0
    %5105 = vmatmul.mubr.bf16.gmra.mxu0 %v4901
    %v5106 = vpop.f32.mrf.mxu0
    %v5107 = vadd.f32 %v5059, %v5106
    %v5108 = vpop.f32.mrf.mxu0
    %v5109 = vpop.f32.mrf.mxu0
    %v5110 = vpop.f32.mrf.mxu0
    %5111 = vdwg.mxu0
    %5136 = vrot.lane.b32.xlu0 %v3936, 96
    %v5137 = vpop.permute.xlu0 %5136
    %5138 = vrot.lane.b32.xlu0 %v3937, 96
    %v5139 = vpop.permute.xlu0 %5138
    %5140 = vrot.lane.b32.xlu0 %v3938, 96
    %v5141 = vpop.permute.xlu0 %5140
    %5142 = vrot.lane.b32.xlu0 %v3939, 96
    %v5143 = vpop.permute.xlu0 %5142
    %5144 = vrot.lane.b32.xlu0 %v3940, 96
    %v5145 = vpop.permute.xlu0 %5144
    %5146 = vrot.lane.b32.xlu0 %v3941, 96
    %v5147 = vpop.permute.xlu0 %5146
    %5148 = vrot.lane.b32.xlu0 %v3942, 96
    %v5149 = vpop.permute.xlu0 %5148
    %5150 = vrot.lane.b32.xlu0 %v3943, 96
    %v5151 = vpop.permute.xlu0 %5150
    %5152 = vrot.lane.b32.xlu0 %v3944, 96
    %v5153 = vpop.permute.xlu0 %5152
    %5154 = vrot.lane.b32.xlu0 %v3945, 96
    %v5155 = vpop.permute.xlu0 %5154
    %5156 = vrot.lane.b32.xlu0 %v3946, 96
    %v5157 = vpop.permute.xlu0 %5156
    %5158 = vrot.lane.b32.xlu0 %v3947, 96
    %v5159 = vpop.permute.xlu0 %5158
    %5160 = vrot.lane.b32.xlu0 %v3948, 96
    %v5161 = vpop.permute.xlu0 %5160
    %5162 = vrot.lane.b32.xlu0 %v3949, 96
    %v5163 = vpop.permute.xlu0 %5162
    %5164 = vrot.lane.b32.xlu0 %v3950, 96
    %v5165 = vpop.permute.xlu0 %5164
    %5166 = vrot.lane.b32.xlu0 %v3951, 96
    %v5167 = vpop.permute.xlu0 %5166
    %5168 = vrot.lane.b32.xlu0 %v3952, 96
    %v5169 = vpop.permute.xlu0 %5168
    %5170 = vrot.lane.b32.xlu0 %v3953, 96
    %v5171 = vpop.permute.xlu0 %5170
    %5172 = vrot.lane.b32.xlu0 %v3954, 96
    %v5173 = vpop.permute.xlu0 %5172
    %5174 = vrot.lane.b32.xlu0 %v3955, 96
    %v5175 = vpop.permute.xlu0 %5174
    %5176 = vrot.lane.b32.xlu0 %v3956, 96
    %v5177 = vpop.permute.xlu0 %5176
    %5178 = vrot.lane.b32.xlu0 %v3957, 96
    %v5179 = vpop.permute.xlu0 %5178
    %5180 = vrot.lane.b32.xlu0 %v3958, 96
    %v5181 = vpop.permute.xlu0 %5180
    %5182 = vrot.lane.b32.xlu0 %v3959, 96
    %v5183 = vpop.permute.xlu0 %5182
    %5208 = vmatprep.subr.bf16.mxu0 0
    %5209 = vmatpush1.bf16.msra.mxu0 %v5151
    %5210 = vmatprep.subr.bf16.mxu0 0
    %5211 = vmatpush1.bf16.msra.mxu0 %v5149
    %5212 = vmatprep.subr.bf16.mxu0 0
    %5213 = vmatpush1.bf16.msra.mxu0 %v5147
    %5214 = vmatprep.subr.bf16.mxu0 0
    %5215 = vmatpush1.bf16.msra.mxu0 %v5145
    %5216 = vmatprep.subr.bf16.mxu0 0
    %5217 = vmatpush1.bf16.msra.mxu0 %v5143
    %5218 = vmatprep.subr.bf16.mxu0 0
    %5219 = vmatpush1.bf16.msra.mxu0 %v5141
    %5220 = vmatprep.subr.bf16.mxu0 0
    %5221 = vmatpush1.bf16.msra.mxu0 %v5139
    %5222 = vmatprep.subr.bf16.mxu0 0
    %5223 = vmatpush1.bf16.msra.mxu0 %v5137
    %5224 = vmatprep.subr.bf16.mxu0 0
    %5225 = vmatpush2.bf16.msra.mxu0 %v5167
    %5226 = vmatprep.subr.bf16.mxu0 0
    %5227 = vmatpush2.bf16.msra.mxu0 %v5165
    %5228 = vmatprep.subr.bf16.mxu0 0
    %5229 = vmatpush2.bf16.msra.mxu0 %v5163
    %5230 = vmatprep.subr.bf16.mxu0 0
    %5231 = vmatpush2.bf16.msra.mxu0 %v5161
    %5232 = vmatprep.subr.bf16.mxu0 0
    %5233 = vmatpush2.bf16.msra.mxu0 %v5159
    %5234 = vmatprep.subr.bf16.mxu0 0
    %5235 = vmatpush2.bf16.msra.mxu0 %v5157
    %5236 = vmatprep.subr.bf16.mxu0 0
    %5237 = vmatpush2.bf16.msra.mxu0 %v5155
    %5238 = vmatprep.subr.bf16.mxu0 0
    %5239 = vmatpush2.bf16.msra.mxu0 %v5153
    %5240 = vmatprep.mubr.bf16.mxu0 %v4903
    %5241 = vmatmul.mubr.bf16.gmra.mxu0 %v4902
    %v5242 = vpop.f32.mrf.mxu0
    %v5243 = vadd.f32 0.0, %v5242
    %v5244 = vpop.f32.mrf.mxu0
    %v5245 = vpop.f32.mrf.mxu0
    %v5246 = vadd.f32 0.0, %v5245
    %v5247 = vpop.f32.mrf.mxu0
    %5248 = vmatprep.mubr.bf16.mxu0 %v4906
    %5249 = vmatmul.mubr.bf16.gmra.mxu0 %v4905
    %v5250 = vpop.f32.mrf.mxu0
    %v5251 = vadd.f32 0.0, %v5250
    %v5252 = vpop.f32.mrf.mxu0
    %v5253 = vpop.f32.mrf.mxu0
    %v5254 = vpop.f32.mrf.mxu0
    %5255 = vdwg.mxu0
    %5256 = vmatprep.subr.bf16.mxu0 0
    %5257 = vmatpush1.bf16.msra.mxu0 %v5183
    %5258 = vmatprep.subr.bf16.mxu0 0
    %5259 = vmatpush1.bf16.msra.mxu0 %v5181
    %5260 = vmatprep.subr.bf16.mxu0 0
    %5261 = vmatpush1.bf16.msra.mxu0 %v5179
    %5262 = vmatprep.subr.bf16.mxu0 0
    %5263 = vmatpush1.bf16.msra.mxu0 %v5177
    %5264 = vmatprep.subr.bf16.mxu0 0
    %5265 = vmatpush1.bf16.msra.mxu0 %v5175
    %5266 = vmatprep.subr.bf16.mxu0 0
    %5267 = vmatpush1.bf16.msra.mxu0 %v5173
    %5268 = vmatprep.subr.bf16.mxu0 0
    %5269 = vmatpush1.bf16.msra.mxu0 %v5171
    %5270 = vmatprep.subr.bf16.mxu0 0
    %5271 = vmatpush1.bf16.msra.mxu0 %v5169
    %5272 = vmatprep.subr.bf16.mxu0 0
    %5273 = vmatpush2.bf16.msra.mxu0 0
    %5274 = vmatprep.subr.bf16.mxu0 0
    %5275 = vmatpush2.bf16.msra.mxu0 0
    %5276 = vmatprep.subr.bf16.mxu0 0
    %5277 = vmatpush2.bf16.msra.mxu0 0
    %5278 = vmatprep.subr.bf16.mxu0 0
    %5279 = vmatpush2.bf16.msra.mxu0 0
    %5280 = vmatprep.subr.bf16.mxu0 0
    %5281 = vmatpush2.bf16.msra.mxu0 0
    %5282 = vmatprep.subr.bf16.mxu0 0
    %5283 = vmatpush2.bf16.msra.mxu0 0
    %5284 = vmatprep.subr.bf16.mxu0 0
    %5285 = vmatpush2.bf16.msra.mxu0 0
    %5286 = vmatprep.subr.bf16.mxu0 0
    %5287 = vmatpush2.bf16.msra.mxu0 0
    %5288 = vmatprep.mubr.bf16.mxu0 0
    %5289 = vmatmul.mubr.bf16.gmra.mxu0 %v4904
    %v5290 = vpop.f32.mrf.mxu0
    %v5291 = vadd.f32 %v5243, %v5290
    %v5292 = vpop.f32.mrf.mxu0
    %v5293 = vpop.f32.mrf.mxu0
    %v5294 = vadd.f32 %v5246, %v5293
    %v5295 = vpop.f32.mrf.mxu0
    %5296 = vmatprep.mubr.bf16.mxu0 0
    %5297 = vmatmul.mubr.bf16.gmra.mxu0 %v4907
    %v5298 = vpop.f32.mrf.mxu0
    %v5299 = vadd.f32 %v5251, %v5298
    %v5300 = vpop.f32.mrf.mxu0
    %v5301 = vpop.f32.mrf.mxu0
    %v5302 = vpop.f32.mrf.mxu0
    %5303 = vdwg.mxu0
    %5328 = vrot.lane.b32.xlu0 %v3960, 96
    %v5329 = vpop.permute.xlu0 %5328
    %5330 = vrot.lane.b32.xlu0 %v3961, 96
    %v5331 = vpop.permute.xlu0 %5330
    %5332 = vrot.lane.b32.xlu0 %v3962, 96
    %v5333 = vpop.permute.xlu0 %5332
    %5334 = vrot.lane.b32.xlu0 %v3963, 96
    %v5335 = vpop.permute.xlu0 %5334
    %5336 = vrot.lane.b32.xlu0 %v3964, 96
    %v5337 = vpop.permute.xlu0 %5336
    %5338 = vrot.lane.b32.xlu0 %v3965, 96
    %v5339 = vpop.permute.xlu0 %5338
    %5340 = vrot.lane.b32.xlu0 %v3966, 96
    %v5341 = vpop.permute.xlu0 %5340
    %5342 = vrot.lane.b32.xlu0 %v3967, 96
    %v5343 = vpop.permute.xlu0 %5342
    %5344 = vrot.lane.b32.xlu0 %v3968, 96
    %v5345 = vpop.permute.xlu0 %5344
    %5346 = vrot.lane.b32.xlu0 %v3969, 96
    %v5347 = vpop.permute.xlu0 %5346
    %5348 = vrot.lane.b32.xlu0 %v3970, 96
    %v5349 = vpop.permute.xlu0 %5348
    %5350 = vrot.lane.b32.xlu0 %v3971, 96
    %v5351 = vpop.permute.xlu0 %5350
    %5352 = vrot.lane.b32.xlu0 %v3972, 96
    %v5353 = vpop.permute.xlu0 %5352
    %5354 = vrot.lane.b32.xlu0 %v3973, 96
    %v5355 = vpop.permute.xlu0 %5354
    %5356 = vrot.lane.b32.xlu0 %v3974, 96
    %v5357 = vpop.permute.xlu0 %5356
    %5358 = vrot.lane.b32.xlu0 %v3975, 96
    %v5359 = vpop.permute.xlu0 %5358
    %5360 = vrot.lane.b32.xlu0 %v3976, 96
    %v5361 = vpop.permute.xlu0 %5360
    %5362 = vrot.lane.b32.xlu0 %v3977, 96
    %v5363 = vpop.permute.xlu0 %5362
    %5364 = vrot.lane.b32.xlu0 %v3978, 96
    %v5365 = vpop.permute.xlu0 %5364
    %5366 = vrot.lane.b32.xlu0 %v3979, 96
    %v5367 = vpop.permute.xlu0 %5366
    %5368 = vrot.lane.b32.xlu0 %v3980, 96
    %v5369 = vpop.permute.xlu0 %5368
    %5370 = vrot.lane.b32.xlu0 %v3981, 96
    %v5371 = vpop.permute.xlu0 %5370
    %5372 = vrot.lane.b32.xlu0 %v3982, 96
    %v5373 = vpop.permute.xlu0 %5372
    %5374 = vrot.lane.b32.xlu0 %v3983, 96
    %v5375 = vpop.permute.xlu0 %5374
    %5400 = vmatprep.subr.bf16.mxu0 0
    %5401 = vmatpush1.bf16.msra.mxu0 %v5343
    %5402 = vmatprep.subr.bf16.mxu0 0
    %5403 = vmatpush1.bf16.msra.mxu0 %v5341
    %5404 = vmatprep.subr.bf16.mxu0 0
    %5405 = vmatpush1.bf16.msra.mxu0 %v5339
    %5406 = vmatprep.subr.bf16.mxu0 0
    %5407 = vmatpush1.bf16.msra.mxu0 %v5337
    %5408 = vmatprep.subr.bf16.mxu0 0
    %5409 = vmatpush1.bf16.msra.mxu0 %v5335
    %5410 = vmatprep.subr.bf16.mxu0 0
    %5411 = vmatpush1.bf16.msra.mxu0 %v5333
    %5412 = vmatprep.subr.bf16.mxu0 0
    %5413 = vmatpush1.bf16.msra.mxu0 %v5331
    %5414 = vmatprep.subr.bf16.mxu0 0
    %5415 = vmatpush1.bf16.msra.mxu0 %v5329
    %5416 = vmatprep.subr.bf16.mxu0 0
    %5417 = vmatpush2.bf16.msra.mxu0 %v5359
    %5418 = vmatprep.subr.bf16.mxu0 0
    %5419 = vmatpush2.bf16.msra.mxu0 %v5357
    %5420 = vmatprep.subr.bf16.mxu0 0
    %5421 = vmatpush2.bf16.msra.mxu0 %v5355
    %5422 = vmatprep.subr.bf16.mxu0 0
    %5423 = vmatpush2.bf16.msra.mxu0 %v5353
    %5424 = vmatprep.subr.bf16.mxu0 0
    %5425 = vmatpush2.bf16.msra.mxu0 %v5351
    %5426 = vmatprep.subr.bf16.mxu0 0
    %5427 = vmatpush2.bf16.msra.mxu0 %v5349
    %5428 = vmatprep.subr.bf16.mxu0 0
    %5429 = vmatpush2.bf16.msra.mxu0 %v5347
    %5430 = vmatprep.subr.bf16.mxu0 0
    %5431 = vmatpush2.bf16.msra.mxu0 %v5345
    %5432 = vmatprep.mubr.bf16.mxu0 %v4909
    %5433 = vmatmul.mubr.bf16.gmra.mxu0 %v4908
    %v5434 = vpop.f32.mrf.mxu0
    %v5435 = vadd.f32 0.0, %v5434
    %v5436 = vpop.f32.mrf.mxu0
    %v5437 = vpop.f32.mrf.mxu0
    %v5438 = vadd.f32 0.0, %v5437
    %v5439 = vpop.f32.mrf.mxu0
    %5440 = vmatprep.mubr.bf16.mxu0 %v4912
    %5441 = vmatmul.mubr.bf16.gmra.mxu0 %v4911
    %v5442 = vpop.f32.mrf.mxu0
    %v5443 = vadd.f32 0.0, %v5442
    %v5444 = vpop.f32.mrf.mxu0
    %v5445 = vpop.f32.mrf.mxu0
    %v5446 = vpop.f32.mrf.mxu0
    %5447 = vdwg.mxu0
    %5448 = vmatprep.subr.bf16.mxu0 0
    %5449 = vmatpush1.bf16.msra.mxu0 %v5375
    %5450 = vmatprep.subr.bf16.mxu0 0
    %5451 = vmatpush1.bf16.msra.mxu0 %v5373
    %5452 = vmatprep.subr.bf16.mxu0 0
    %5453 = vmatpush1.bf16.msra.mxu0 %v5371
    %5454 = vmatprep.subr.bf16.mxu0 0
    %5455 = vmatpush1.bf16.msra.mxu0 %v5369
    %5456 = vmatprep.subr.bf16.mxu0 0
    %5457 = vmatpush1.bf16.msra.mxu0 %v5367
    %5458 = vmatprep.subr.bf16.mxu0 0
    %5459 = vmatpush1.bf16.msra.mxu0 %v5365
    %5460 = vmatprep.subr.bf16.mxu0 0
    %5461 = vmatpush1.bf16.msra.mxu0 %v5363
    %5462 = vmatprep.subr.bf16.mxu0 0
    %5463 = vmatpush1.bf16.msra.mxu0 %v5361
    %5464 = vmatprep.subr.bf16.mxu0 0
    %5465 = vmatpush2.bf16.msra.mxu0 0
    %5466 = vmatprep.subr.bf16.mxu0 0
    %5467 = vmatpush2.bf16.msra.mxu0 0
    %5468 = vmatprep.subr.bf16.mxu0 0
    %5469 = vmatpush2.bf16.msra.mxu0 0
    %5470 = vmatprep.subr.bf16.mxu0 0
    %5471 = vmatpush2.bf16.msra.mxu0 0
    %5472 = vmatprep.subr.bf16.mxu0 0
    %5473 = vmatpush2.bf16.msra.mxu0 0
    %5474 = vmatprep.subr.bf16.mxu0 0
    %5475 = vmatpush2.bf16.msra.mxu0 0
    %5476 = vmatprep.subr.bf16.mxu0 0
    %5477 = vmatpush2.bf16.msra.mxu0 0
    %5478 = vmatprep.subr.bf16.mxu0 0
    %5479 = vmatpush2.bf16.msra.mxu0 0
    %5480 = vmatprep.mubr.bf16.mxu0 0
    %5481 = vmatmul.mubr.bf16.gmra.mxu0 %v4910
    %v5482 = vpop.f32.mrf.mxu0
    %v5483 = vadd.f32 %v5435, %v5482
    %v5484 = vpop.f32.mrf.mxu0
    %v5485 = vpop.f32.mrf.mxu0
    %v5486 = vadd.f32 %v5438, %v5485
    %v5487 = vpop.f32.mrf.mxu0
    %5488 = vmatprep.mubr.bf16.mxu0 0
    %5489 = vmatmul.mubr.bf16.gmra.mxu0 %v4913
    %v5490 = vpop.f32.mrf.mxu0
    %v5491 = vadd.f32 %v5443, %v5490
    %v5492 = vpop.f32.mrf.mxu0
    %v5493 = vpop.f32.mrf.mxu0
    %v5494 = vpop.f32.mrf.mxu0
    %5495 = vdwg.mxu0
    %5520 = vrot.lane.b32.xlu0 %v3984, 96
    %v5521 = vpop.permute.xlu0 %5520
    %5522 = vrot.lane.b32.xlu0 %v3985, 96
    %v5523 = vpop.permute.xlu0 %5522
    %5524 = vrot.lane.b32.xlu0 %v3986, 96
    %v5525 = vpop.permute.xlu0 %5524
    %5526 = vrot.lane.b32.xlu0 %v3987, 96
    %v5527 = vpop.permute.xlu0 %5526
    %5528 = vrot.lane.b32.xlu0 %v3988, 96
    %v5529 = vpop.permute.xlu0 %5528
    %5530 = vrot.lane.b32.xlu0 %v3989, 96
    %v5531 = vpop.permute.xlu0 %5530
    %5532 = vrot.lane.b32.xlu0 %v3990, 96
    %v5533 = vpop.permute.xlu0 %5532
    %5534 = vrot.lane.b32.xlu0 %v3991, 96
    %v5535 = vpop.permute.xlu0 %5534
    %5536 = vrot.lane.b32.xlu0 %v3992, 96
    %v5537 = vpop.permute.xlu0 %5536
    %5538 = vrot.lane.b32.xlu0 %v3993, 96
    %v5539 = vpop.permute.xlu0 %5538
    %5540 = vrot.lane.b32.xlu0 %v3994, 96
    %v5541 = vpop.permute.xlu0 %5540
    %5542 = vrot.lane.b32.xlu0 %v3995, 96
    %v5543 = vpop.permute.xlu0 %5542
    %5544 = vrot.lane.b32.xlu0 %v3996, 96
    %v5545 = vpop.permute.xlu0 %5544
    %5546 = vrot.lane.b32.xlu0 %v3997, 96
    %v5547 = vpop.permute.xlu0 %5546
    %5548 = vrot.lane.b32.xlu0 %v3998, 96
    %v5549 = vpop.permute.xlu0 %5548
    %5550 = vrot.lane.b32.xlu0 %v3999, 96
    %v5551 = vpop.permute.xlu0 %5550
    %5552 = vrot.lane.b32.xlu0 %v4000, 96
    %v5553 = vpop.permute.xlu0 %5552
    %5554 = vrot.lane.b32.xlu0 %v4001, 96
    %v5555 = vpop.permute.xlu0 %5554
    %5556 = vrot.lane.b32.xlu0 %v4002, 96
    %v5557 = vpop.permute.xlu0 %5556
    %5558 = vrot.lane.b32.xlu0 %v4003, 96
    %v5559 = vpop.permute.xlu0 %5558
    %5560 = vrot.lane.b32.xlu0 %v4004, 96
    %v5561 = vpop.permute.xlu0 %5560
    %5562 = vrot.lane.b32.xlu0 %v4005, 96
    %v5563 = vpop.permute.xlu0 %5562
    %5564 = vrot.lane.b32.xlu0 %v4006, 96
    %v5565 = vpop.permute.xlu0 %5564
    %5566 = vrot.lane.b32.xlu0 %v4007, 96
    %v5567 = vpop.permute.xlu0 %5566
    %5592 = vmatprep.subr.bf16.mxu0 0
    %5593 = vmatpush1.bf16.msra.mxu0 %v5535
    %5594 = vmatprep.subr.bf16.mxu0 0
    %5595 = vmatpush1.bf16.msra.mxu0 %v5533
    %5596 = vmatprep.subr.bf16.mxu0 0
    %5597 = vmatpush1.bf16.msra.mxu0 %v5531
    %5598 = vmatprep.subr.bf16.mxu0 0
    %5599 = vmatpush1.bf16.msra.mxu0 %v5529
    %5600 = vmatprep.subr.bf16.mxu0 0
    %5601 = vmatpush1.bf16.msra.mxu0 %v5527
    %5602 = vmatprep.subr.bf16.mxu0 0
    %5603 = vmatpush1.bf16.msra.mxu0 %v5525
    %5604 = vmatprep.subr.bf16.mxu0 0
    %5605 = vmatpush1.bf16.msra.mxu0 %v5523
    %5606 = vmatprep.subr.bf16.mxu0 0
    %5607 = vmatpush1.bf16.msra.mxu0 %v5521
    %5608 = vmatprep.subr.bf16.mxu0 0
    %5609 = vmatpush2.bf16.msra.mxu0 %v5551
    %5610 = vmatprep.subr.bf16.mxu0 0
    %5611 = vmatpush2.bf16.msra.mxu0 %v5549
    %5612 = vmatprep.subr.bf16.mxu0 0
    %5613 = vmatpush2.bf16.msra.mxu0 %v5547
    %5614 = vmatprep.subr.bf16.mxu0 0
    %5615 = vmatpush2.bf16.msra.mxu0 %v5545
    %5616 = vmatprep.subr.bf16.mxu0 0
    %5617 = vmatpush2.bf16.msra.mxu0 %v5543
    %5618 = vmatprep.subr.bf16.mxu0 0
    %5619 = vmatpush2.bf16.msra.mxu0 %v5541
    %5620 = vmatprep.subr.bf16.mxu0 0
    %5621 = vmatpush2.bf16.msra.mxu0 %v5539
    %5622 = vmatprep.subr.bf16.mxu0 0
    %5623 = vmatpush2.bf16.msra.mxu0 %v5537
    %5624 = vmatprep.mubr.bf16.mxu0 %v4915
    %5625 = vmatmul.mubr.bf16.gmra.mxu0 %v4914
    %v5626 = vpop.f32.mrf.mxu0
    %v5627 = vadd.f32 0.0, %v5626
    %v5628 = vpop.f32.mrf.mxu0
    %v5629 = vpop.f32.mrf.mxu0
    %v5630 = vadd.f32 0.0, %v5629
    %v5631 = vpop.f32.mrf.mxu0
    %5632 = vmatprep.mubr.bf16.mxu0 %v4918
    %5633 = vmatmul.mubr.bf16.gmra.mxu0 %v4917
    %v5634 = vpop.f32.mrf.mxu0
    %v5635 = vadd.f32 0.0, %v5634
    %v5636 = vpop.f32.mrf.mxu0
    %v5637 = vpop.f32.mrf.mxu0
    %v5638 = vpop.f32.mrf.mxu0
    %5639 = vdwg.mxu0
    %5640 = vmatprep.subr.bf16.mxu0 0
    %5641 = vmatpush1.bf16.msra.mxu0 %v5567
    %5642 = vmatprep.subr.bf16.mxu0 0
    %5643 = vmatpush1.bf16.msra.mxu0 %v5565
    %5644 = vmatprep.subr.bf16.mxu0 0
    %5645 = vmatpush1.bf16.msra.mxu0 %v5563
    %5646 = vmatprep.subr.bf16.mxu0 0
    %5647 = vmatpush1.bf16.msra.mxu0 %v5561
    %5648 = vmatprep.subr.bf16.mxu0 0
    %5649 = vmatpush1.bf16.msra.mxu0 %v5559
    %5650 = vmatprep.subr.bf16.mxu0 0
    %5651 = vmatpush1.bf16.msra.mxu0 %v5557
    %5652 = vmatprep.subr.bf16.mxu0 0
    %5653 = vmatpush1.bf16.msra.mxu0 %v5555
    %5654 = vmatprep.subr.bf16.mxu0 0
    %5655 = vmatpush1.bf16.msra.mxu0 %v5553
    %5656 = vmatprep.subr.bf16.mxu0 0
    %5657 = vmatpush2.bf16.msra.mxu0 0
    %5658 = vmatprep.subr.bf16.mxu0 0
    %5659 = vmatpush2.bf16.msra.mxu0 0
    %5660 = vmatprep.subr.bf16.mxu0 0
    %5661 = vmatpush2.bf16.msra.mxu0 0
    %5662 = vmatprep.subr.bf16.mxu0 0
    %5663 = vmatpush2.bf16.msra.mxu0 0
    %5664 = vmatprep.subr.bf16.mxu0 0
    %5665 = vmatpush2.bf16.msra.mxu0 0
    %5666 = vmatprep.subr.bf16.mxu0 0
    %5667 = vmatpush2.bf16.msra.mxu0 0
    %5668 = vmatprep.subr.bf16.mxu0 0
    %5669 = vmatpush2.bf16.msra.mxu0 0
    %5670 = vmatprep.subr.bf16.mxu0 0
    %5671 = vmatpush2.bf16.msra.mxu0 0
    %5672 = vmatprep.mubr.bf16.mxu0 0
    %5673 = vmatmul.mubr.bf16.gmra.mxu0 %v4916
    %v5674 = vpop.f32.mrf.mxu0
    %v5675 = vadd.f32 %v5627, %v5674
    %v5676 = vpop.f32.mrf.mxu0
    %v5677 = vpop.f32.mrf.mxu0
    %v5678 = vadd.f32 %v5630, %v5677
    %v5679 = vpop.f32.mrf.mxu0
    %5680 = vmatprep.mubr.bf16.mxu0 0
    %5681 = vmatmul.mubr.bf16.gmra.mxu0 %v4919
    %v5682 = vpop.f32.mrf.mxu0
    %v5683 = vadd.f32 %v5635, %v5682
    %v5684 = vpop.f32.mrf.mxu0
    %v5685 = vpop.f32.mrf.mxu0
    %v5686 = vpop.f32.mrf.mxu0
    %5687 = vdwg.mxu0
    %v5688 = vmax.f32 %v5099, 1e-30
    %v5689 = vmax.f32 %v5102, 1e-30
    %v5690 = vmax.f32 %v5107, 1e-30
    %v5691 = vmax.f32 %v5291, 1e-30
    %v5692 = vmax.f32 %v5294, 1e-30
    %v5693 = vmax.f32 %v5299, 1e-30
    %v5694 = vmax.f32 %v5483, 1e-30
    %v5695 = vmax.f32 %v5486, 1e-30
    %v5696 = vmax.f32 %v5491, 1e-30
    %v5697 = vmax.f32 %v5675, 1e-30
    %v5698 = vmax.f32 %v5678, 1e-30
    %v5699 = vmax.f32 %v5683, 1e-30
    %v5700 = vrcp.pop %v5688
    %v5701 = vrcp.pop %v5689
    %v5702 = vrcp.pop %v5690
    %v5703 = vrcp.pop %v5691
    %v5704 = vrcp.pop %v5692
    %v5705 = vrcp.pop %v5693
    %v5706 = vrcp.pop %v5694
    %v5707 = vrcp.pop %v5695
    %v5708 = vrcp.pop %v5696
    %v5709 = vrcp.pop %v5697
    %v5710 = vrcp.pop %v5698
    %v5711 = vrcp.pop %v5699
    %5724 = vrot.lane.b32.xlu0 %v5700, 96
    %v5725 = vpop.permute.xlu0 %5724
    %5726 = vrot.lane.b32.xlu0 %v5701, 96
    %v5727 = vpop.permute.xlu0 %5726
    %5728 = vrot.lane.b32.xlu0 %v5702, 96
    %v5729 = vpop.permute.xlu0 %5728
    %5730 = vrot.lane.b32.xlu0 %v5703, 96
    %v5731 = vpop.permute.xlu0 %5730
    %5732 = vrot.lane.b32.xlu0 %v5704, 96
    %v5733 = vpop.permute.xlu0 %5732
    %5734 = vrot.lane.b32.xlu0 %v5705, 96
    %v5735 = vpop.permute.xlu0 %5734
    %5736 = vrot.lane.b32.xlu0 %v5706, 96
    %v5737 = vpop.permute.xlu0 %5736
    %5738 = vrot.lane.b32.xlu0 %v5707, 96
    %v5739 = vpop.permute.xlu0 %5738
    %5740 = vrot.lane.b32.xlu0 %v5708, 96
    %v5741 = vpop.permute.xlu0 %5740
    %5742 = vrot.lane.b32.xlu0 %v5709, 96
    %v5743 = vpop.permute.xlu0 %5742
    %5744 = vrot.lane.b32.xlu0 %v5710, 96
    %v5745 = vpop.permute.xlu0 %5744
    %5746 = vrot.lane.b32.xlu0 %v5711, 96
    %v5747 = vpop.permute.xlu0 %5746
    %v5760 = vmul.f32 %v5099, %v5725
    %v5761 = vmul.f32 %v5102, %v5727
    %v5762 = vmul.f32 %v5107, %v5729
    %v5763 = vmul.f32 %v5291, %v5731
    %v5764 = vmul.f32 %v5294, %v5733
    %v5765 = vmul.f32 %v5299, %v5735
    %v5766 = vmul.f32 %v5483, %v5737
    %v5767 = vmul.f32 %v5486, %v5739
    %v5768 = vmul.f32 %v5491, %v5741
    %v5769 = vmul.f32 %v5675, %v5743
    %v5770 = vmul.f32 %v5678, %v5745
    %v5771 = vmul.f32 %v5683, %v5747
    %v5772 = vpack.c.bf16 %v5761, %v5760
    %v5773 = vpack.c.bf16 %v5763, %v5762
    %v5774 = vpack.c.bf16 %v5765, %v5764
    %v5775 = vpack.c.bf16 %v5767, %v5766
    %v5776 = vpack.c.bf16 %v5769, %v5768
    %v5777 = vpack.c.bf16 %v5771, %v5770
    %v5782 = vunpack.c.l.b16 %v3393
    %v5783 = vunpack.c.l.b16 %v3395
    %v5784 = vunpack.c.l.b16 %v3397
    %v5785 = vunpack.c.l.b16 %v3399
    %v5786 = vpack.c.b16 %v5783, %v5782
    %v5787 = vpack.c.b16 %v5785, %v5784
    %v5791 = vsel %vm100, %v5772, 0
    %v5794 = vsel %vm100, %v5773, 0
    %v5797 = vsel %vm100, %v5774, 0
    %v5800 = vsel %vm100, %v5775, 0
    %v5803 = vsel %vm100, %v5776, 0
    %v5806 = vsel %vm100, %v5777, 0
    %5808 = vmatprep.subr.bf16.mxu0 0
    %5809 = vmatpush1.bf16.msra.mxu0 0
    %5810 = vmatprep.subr.bf16.mxu0 0
    %5811 = vmatpush1.bf16.msra.mxu0 0
    %5812 = vmatprep.subr.bf16.mxu0 0
    %5813 = vmatpush1.bf16.msra.mxu0 0
    %5814 = vmatprep.subr.bf16.mxu0 0
    %5815 = vmatpush1.bf16.msra.mxu0 0
    %5816 = vmatprep.subr.bf16.mxu0 0
    %5817 = vmatpush1.bf16.msra.mxu0 0
    %5818 = vmatprep.subr.bf16.mxu0 0
    %5819 = vmatpush1.bf16.msra.mxu0 0
    %5820 = vmatprep.subr.bf16.mxu0 0
    %5821 = vmatpush1.bf16.msra.mxu0 %v5787
    %5822 = vmatprep.subr.bf16.mxu0 0
    %5823 = vmatpush1.bf16.msra.mxu0 %v5786
    %5824 = vmatprep.subr.bf16.mxu0 0
    %5825 = vmatpush2.bf16.msra.mxu0 0
    %5826 = vmatprep.subr.bf16.mxu0 0
    %5827 = vmatpush2.bf16.msra.mxu0 0
    %5828 = vmatprep.subr.bf16.mxu0 0
    %5829 = vmatpush2.bf16.msra.mxu0 0
    %5830 = vmatprep.subr.bf16.mxu0 0
    %5831 = vmatpush2.bf16.msra.mxu0 0
    %5832 = vmatprep.subr.bf16.mxu0 0
    %5833 = vmatpush2.bf16.msra.mxu0 0
    %5834 = vmatprep.subr.bf16.mxu0 0
    %5835 = vmatpush2.bf16.msra.mxu0 0
    %5836 = vmatprep.subr.bf16.mxu0 0
    %5837 = vmatpush2.bf16.msra.mxu0 0
    %5838 = vmatprep.subr.bf16.mxu0 0
    %5839 = vmatpush2.bf16.msra.mxu0 0
    %5840 = vmatprep.mubr.bf16.mxu0 0
    %5841 = vmatmul.mubr.bf16.gmra.mxu0 %v5791
    %v5842 = vpop.f32.mrf.mxu0
    %v5843 = vadd.f32 0.0, %v5842
    %v5844 = vpop.f32.mrf.mxu0
    %v5845 = vpop.f32.mrf.mxu0
    %v5846 = vadd.f32 0.0, %v5845
    %v5847 = vpop.f32.mrf.mxu0
    %5848 = vmatprep.mubr.bf16.mxu0 0
    %5849 = vmatmul.mubr.bf16.gmra.mxu0 %v5794
    %v5850 = vpop.f32.mrf.mxu0
    %v5851 = vadd.f32 0.0, %v5850
    %v5852 = vpop.f32.mrf.mxu0
    %v5853 = vpop.f32.mrf.mxu0
    %v5854 = vadd.f32 0.0, %v5853
    %v5855 = vpop.f32.mrf.mxu0
    %5856 = vmatprep.mubr.bf16.mxu0 0
    %5857 = vmatmul.mubr.bf16.gmra.mxu0 %v5797
    %v5858 = vpop.f32.mrf.mxu0
    %v5859 = vadd.f32 0.0, %v5858
    %v5860 = vpop.f32.mrf.mxu0
    %v5861 = vpop.f32.mrf.mxu0
    %v5862 = vadd.f32 0.0, %v5861
    %v5863 = vpop.f32.mrf.mxu0
    %5864 = vmatprep.mubr.bf16.mxu0 0
    %5865 = vmatmul.mubr.bf16.gmra.mxu0 %v5800
    %v5866 = vpop.f32.mrf.mxu0
    %v5867 = vadd.f32 0.0, %v5866
    %v5868 = vpop.f32.mrf.mxu0
    %v5869 = vpop.f32.mrf.mxu0
    %v5870 = vadd.f32 0.0, %v5869
    %v5871 = vpop.f32.mrf.mxu0
    %5872 = vmatprep.mubr.bf16.mxu0 0
    %5873 = vmatmul.mubr.bf16.gmra.mxu0 %v5803
    %v5874 = vpop.f32.mrf.mxu0
    %v5875 = vadd.f32 0.0, %v5874
    %v5876 = vpop.f32.mrf.mxu0
    %v5877 = vpop.f32.mrf.mxu0
    %v5878 = vadd.f32 0.0, %v5877
    %v5879 = vpop.f32.mrf.mxu0
    %5880 = vmatprep.mubr.bf16.mxu0 0
    %5881 = vmatmul.mubr.bf16.gmra.mxu0 %v5806
    %v5882 = vpop.f32.mrf.mxu0
    %v5883 = vadd.f32 0.0, %v5882
    %v5884 = vpop.f32.mrf.mxu0
    %v5885 = vpop.f32.mrf.mxu0
    %v5886 = vadd.f32 0.0, %v5885
    %v5887 = vpop.f32.mrf.mxu0
    %5888 = vdwg.mxu0
    %v5889 = vadd.f32 %v3379, %v5843
    %v5890 = vadd.f32 %v3380, %v5846
    %v5891 = vadd.f32 %v3381, %v5851
    %v5892 = vadd.f32 %v3382, %v5854
    %v5893 = vadd.f32 %v3383, %v5859
    %v5894 = vadd.f32 %v3384, %v5862
    %v5895 = vadd.f32 %v3385, %v5867
    %v5896 = vadd.f32 %v3386, %v5870
    %v5897 = vadd.f32 %v3387, %v5875
    %v5898 = vadd.f32 %v3388, %v5878
    %v5899 = vadd.f32 %v3389, %v5883
    %v5900 = vadd.f32 %v3390, %v5886
    %v5901 = vld [vmem:[%s1 + $0x10] sm:$0x1]
    %v5902 = vlaneseq
    %v5903 = vshrl.u32 %v5902, 7
    %v5904 = vsub.s32 0, %v5903
    %v5905 = vrot.slane %v5901, %v5904
    %v5906 = vadd.f32 %v5889, %v5905
    %v5907 = vadd.f32 %v5890, %v5905
    %v5908 = vadd.f32 %v5891, %v5905
    %v5909 = vadd.f32 %v5892, %v5905
    %v5910 = vadd.f32 %v5893, %v5905
    %v5911 = vadd.f32 %v5894, %v5905
    %v5912 = vadd.f32 %v5895, %v5905
    %v5913 = vadd.f32 %v5896, %v5905
    %v5914 = vadd.f32 %v5897, %v5905
    %v5915 = vadd.f32 %v5898, %v5905
    %v5916 = vadd.f32 %v5899, %v5905
    %v5917 = vadd.f32 %v5900, %v5905
    %v5918 = vld [vmem:[%s1 + $0x11] sm:$0x1]
    %v5919 = vld [vmem:[%s1 + $0x12] sm:$0x1]
    %v5920 = vsel %vm100, %v5906, 0.0
    %5921 = vadd.xlane.f32.xlu0 %v5920
    %v5922 = vpop.xlane.xlu0 %5921
    %v5923 = vsel %vm100, %v5907, 0.0
    %5924 = vadd.xlane.f32.xlu0 %v5923
    %v5925 = vpop.xlane.xlu0 %5924
    %v5926 = vsel %vm100, %v5908, 0.0
    %5927 = vadd.xlane.f32.xlu0 %v5926
    %v5928 = vpop.xlane.xlu0 %5927
    %v5929 = vsel %vm100, %v5909, 0.0
    %5930 = vadd.xlane.f32.xlu0 %v5929
    %v5931 = vpop.xlane.xlu0 %5930
    %v5932 = vsel %vm100, %v5910, 0.0
    %5933 = vadd.xlane.f32.xlu0 %v5932
    %v5934 = vpop.xlane.xlu0 %5933
    %v5935 = vsel %vm100, %v5911, 0.0
    %5936 = vadd.xlane.f32.xlu0 %v5935
    %v5937 = vpop.xlane.xlu0 %5936
    %v5938 = vsel %vm100, %v5912, 0.0
    %5939 = vadd.xlane.f32.xlu0 %v5938
    %v5940 = vpop.xlane.xlu0 %5939
    %v5941 = vsel %vm100, %v5913, 0.0
    %5942 = vadd.xlane.f32.xlu0 %v5941
    %v5943 = vpop.xlane.xlu0 %5942
    %v5944 = vsel %vm100, %v5914, 0.0
    %5945 = vadd.xlane.f32.xlu0 %v5944
    %v5946 = vpop.xlane.xlu0 %5945
    %v5947 = vsel %vm100, %v5915, 0.0
    %5948 = vadd.xlane.f32.xlu0 %v5947
    %v5949 = vpop.xlane.xlu0 %5948
    %v5950 = vsel %vm100, %v5916, 0.0
    %5951 = vadd.xlane.f32.xlu0 %v5950
    %v5952 = vpop.xlane.xlu0 %5951
    %v5953 = vsel %vm100, %v5917, 0.0
    %5954 = vadd.xlane.f32.xlu0 %v5953
    %v5955 = vpop.xlane.xlu0 %5954
    %v5956 = vmul.f32 %v5922, %v186
    %v5957 = vmul.f32 %v5925, %v186
    %v5958 = vmul.f32 %v5928, %v186
    %v5959 = vmul.f32 %v5931, %v186
    %v5960 = vmul.f32 %v5934, %v186
    %v5961 = vmul.f32 %v5937, %v186
    %v5962 = vmul.f32 %v5940, %v186
    %v5963 = vmul.f32 %v5943, %v186
    %v5964 = vmul.f32 %v5946, %v186
    %v5965 = vmul.f32 %v5949, %v186
    %v5966 = vmul.f32 %v5952, %v186
    %v5967 = vmul.f32 %v5955, %v186
    %v5968 = vsub.f32 %v5906, %v5956
    %v5969 = vsub.f32 %v5907, %v5957
    %v5970 = vsub.f32 %v5908, %v5958
    %v5971 = vsub.f32 %v5909, %v5959
    %v5972 = vsub.f32 %v5910, %v5960
    %v5973 = vsub.f32 %v5911, %v5961
    %v5974 = vsub.f32 %v5912, %v5962
    %v5975 = vsub.f32 %v5913, %v5963
    %v5976 = vsub.f32 %v5914, %v5964
    %v5977 = vsub.f32 %v5915, %v5965
    %v5978 = vsub.f32 %v5916, %v5966
    %v5979 = vsub.f32 %v5917, %v5967
    %v5980 = vmul.f32 %v5968, %v5968
    %v5981 = vmul.f32 %v5969, %v5969
    %v5982 = vmul.f32 %v5970, %v5970
    %v5983 = vmul.f32 %v5971, %v5971
    %v5984 = vmul.f32 %v5972, %v5972
    %v5985 = vmul.f32 %v5973, %v5973
    %v5986 = vmul.f32 %v5974, %v5974
    %v5987 = vmul.f32 %v5975, %v5975
    %v5988 = vmul.f32 %v5976, %v5976
    %v5989 = vmul.f32 %v5977, %v5977
    %v5990 = vmul.f32 %v5978, %v5978
    %v5991 = vmul.f32 %v5979, %v5979
    %v5992 = vsel %vm100, %v5980, 0.0
    %5993 = vadd.xlane.f32.xlu0 %v5992
    %v5994 = vpop.xlane.xlu0 %5993
    %v5995 = vsel %vm100, %v5981, 0.0
    %5996 = vadd.xlane.f32.xlu0 %v5995
    %v5997 = vpop.xlane.xlu0 %5996
    %v5998 = vsel %vm100, %v5982, 0.0
    %5999 = vadd.xlane.f32.xlu0 %v5998
    %v6000 = vpop.xlane.xlu0 %5999
    %v6001 = vsel %vm100, %v5983, 0.0
    %6002 = vadd.xlane.f32.xlu0 %v6001
    %v6003 = vpop.xlane.xlu0 %6002
    %v6004 = vsel %vm100, %v5984, 0.0
    %6005 = vadd.xlane.f32.xlu0 %v6004
    %v6006 = vpop.xlane.xlu0 %6005
    %v6007 = vsel %vm100, %v5985, 0.0
    %6008 = vadd.xlane.f32.xlu0 %v6007
    %v6009 = vpop.xlane.xlu0 %6008
    %v6010 = vsel %vm100, %v5986, 0.0
    %6011 = vadd.xlane.f32.xlu0 %v6010
    %v6012 = vpop.xlane.xlu0 %6011
    %v6013 = vsel %vm100, %v5987, 0.0
    %6014 = vadd.xlane.f32.xlu0 %v6013
    %v6015 = vpop.xlane.xlu0 %6014
    %v6016 = vsel %vm100, %v5988, 0.0
    %6017 = vadd.xlane.f32.xlu0 %v6016
    %v6018 = vpop.xlane.xlu0 %6017
    %v6019 = vsel %vm100, %v5989, 0.0
    %6020 = vadd.xlane.f32.xlu0 %v6019
    %v6021 = vpop.xlane.xlu0 %6020
    %v6022 = vsel %vm100, %v5990, 0.0
    %6023 = vadd.xlane.f32.xlu0 %v6022
    %v6024 = vpop.xlane.xlu0 %6023
    %v6025 = vsel %vm100, %v5991, 0.0
    %6026 = vadd.xlane.f32.xlu0 %v6025
    %v6027 = vpop.xlane.xlu0 %6026
    %v6028 = vmul.f32 %v5994, %v186
    %v6029 = vmul.f32 %v5997, %v186
    %v6030 = vmul.f32 %v6000, %v186
    %v6031 = vmul.f32 %v6003, %v186
    %v6032 = vmul.f32 %v6006, %v186
    %v6033 = vmul.f32 %v6009, %v186
    %v6034 = vmul.f32 %v6012, %v186
    %v6035 = vmul.f32 %v6015, %v186
    %v6036 = vmul.f32 %v6018, %v186
    %v6037 = vmul.f32 %v6021, %v186
    %v6038 = vmul.f32 %v6024, %v186
    %v6039 = vmul.f32 %v6027, %v186
    %v6040 = vadd.f32 %v6028, 1e-05
    %v6041 = vadd.f32 %v6029, 1e-05
    %v6042 = vadd.f32 %v6030, 1e-05
    %v6043 = vadd.f32 %v6031, 1e-05
    %v6044 = vadd.f32 %v6032, 1e-05
    %v6045 = vadd.f32 %v6033, 1e-05
    %v6046 = vadd.f32 %v6034, 1e-05
    %v6047 = vadd.f32 %v6035, 1e-05
    %v6048 = vadd.f32 %v6036, 1e-05
    %v6049 = vadd.f32 %v6037, 1e-05
    %v6050 = vadd.f32 %v6038, 1e-05
    %v6051 = vadd.f32 %v6039, 1e-05
    %v6052 = vrsqrt.pop %v6040
    %v6053 = vrsqrt.pop %v6041
    %v6054 = vrsqrt.pop %v6042
    %v6055 = vrsqrt.pop %v6043
    %v6056 = vrsqrt.pop %v6044
    %v6057 = vrsqrt.pop %v6045
    %v6058 = vrsqrt.pop %v6046
    %v6059 = vrsqrt.pop %v6047
    %v6060 = vrsqrt.pop %v6048
    %v6061 = vrsqrt.pop %v6049
    %v6062 = vrsqrt.pop %v6050
    %v6063 = vrsqrt.pop %v6051
    %v6064 = vmul.f32 %v5968, %v6052
    %v6065 = vmul.f32 %v5969, %v6053
    %v6066 = vmul.f32 %v5970, %v6054
    %v6067 = vmul.f32 %v5971, %v6055
    %v6068 = vmul.f32 %v5972, %v6056
    %v6069 = vmul.f32 %v5973, %v6057
    %v6070 = vmul.f32 %v5974, %v6058
    %v6071 = vmul.f32 %v5975, %v6059
    %v6072 = vmul.f32 %v5976, %v6060
    %v6073 = vmul.f32 %v5977, %v6061
    %v6074 = vmul.f32 %v5978, %v6062
    %v6075 = vmul.f32 %v5979, %v6063
    %v6076 = vlaneseq
    %v6077 = vshrl.u32 %v6076, 7
    %v6078 = vsub.s32 0, %v6077
    %v6079 = vrot.slane %v5918, %v6078
    %v6080 = vmul.f32 %v6064, %v6079
    %v6081 = vmul.f32 %v6065, %v6079
    %v6082 = vmul.f32 %v6066, %v6079
    %v6083 = vmul.f32 %v6067, %v6079
    %v6084 = vmul.f32 %v6068, %v6079
    %v6085 = vmul.f32 %v6069, %v6079
    %v6086 = vmul.f32 %v6070, %v6079
    %v6087 = vmul.f32 %v6071, %v6079
    %v6088 = vmul.f32 %v6072, %v6079
    %v6089 = vmul.f32 %v6073, %v6079
    %v6090 = vmul.f32 %v6074, %v6079
    %v6091 = vmul.f32 %v6075, %v6079
    %v6092 = vlaneseq
    %v6093 = vshrl.u32 %v6092, 7
    %v6094 = vsub.s32 0, %v6093
    %v6095 = vrot.slane %v5919, %v6094
    %v6096 = vadd.f32 %v6080, %v6095
    %v6097 = vadd.f32 %v6081, %v6095
    %v6098 = vadd.f32 %v6082, %v6095
    %v6099 = vadd.f32 %v6083, %v6095
    %v6100 = vadd.f32 %v6084, %v6095
    %v6101 = vadd.f32 %v6085, %v6095
    %v6102 = vadd.f32 %v6086, %v6095
    %v6103 = vadd.f32 %v6087, %v6095
    %v6104 = vadd.f32 %v6088, %v6095
    %v6105 = vadd.f32 %v6089, %v6095
    %v6106 = vadd.f32 %v6090, %v6095
    %v6107 = vadd.f32 %v6091, %v6095
    %v6108 = vpack.c.bf16 %v6097, %v6096
    %v6109 = vpack.c.bf16 %v6099, %v6098
    %v6110 = vpack.c.bf16 %v6101, %v6100
    %v6111 = vpack.c.bf16 %v6103, %v6102
    %v6112 = vpack.c.bf16 %v6105, %v6104
    %v6113 = vpack.c.bf16 %v6107, %v6106
    %v6114 = vld [vmem:[%s1 + $0x13] sm:$0x1]
    %v6115 = vlaneseq
    %v6116 = vshrl.u32 %v6115, 7
    %v6117 = vsub.s32 0, %v6116
    %v6118 = vrot.slane %v6114, %v6117
    %v6119 = vunpack.c.h.b16 %v3392
    %v6120 = vunpack.c.h.b16 %v3394
    %v6121 = vunpack.c.h.b16 %v3396
    %v6122 = vunpack.c.h.b16 %v3398
    %v6123 = vpack.c.b16 %v6120, %v6119
    %v6124 = vpack.c.b16 %v6122, %v6121
    %v6128 = vsel %vm100, %v6108, 0
    %v6131 = vsel %vm100, %v6109, 0
    %v6134 = vsel %vm100, %v6110, 0
    %v6137 = vsel %vm100, %v6111, 0
    %v6140 = vsel %vm100, %v6112, 0
    %v6143 = vsel %vm100, %v6113, 0
    %6145 = vmatprep.subr.bf16.mxu0 0
    %6146 = vmatpush1.bf16.msra.mxu0 0
    %6147 = vmatprep.subr.bf16.mxu0 0
    %6148 = vmatpush1.bf16.msra.mxu0 0
    %6149 = vmatprep.subr.bf16.mxu0 0
    %6150 = vmatpush1.bf16.msra.mxu0 0
    %6151 = vmatprep.subr.bf16.mxu0 0
    %6152 = vmatpush1.bf16.msra.mxu0 0
    %6153 = vmatprep.subr.bf16.mxu0 0
    %6154 = vmatpush1.bf16.msra.mxu0 0
    %6155 = vmatprep.subr.bf16.mxu0 0
    %6156 = vmatpush1.bf16.msra.mxu0 0
    %6157 = vmatprep.subr.bf16.mxu0 0
    %6158 = vmatpush1.bf16.msra.mxu0 %v6124
    %6159 = vmatprep.subr.bf16.mxu0 0
    %6160 = vmatpush1.bf16.msra.mxu0 %v6123
    %6161 = vmatprep.subr.bf16.mxu0 0
    %6162 = vmatpush2.bf16.msra.mxu0 0
    %6163 = vmatprep.subr.bf16.mxu0 0
    %6164 = vmatpush2.bf16.msra.mxu0 0
    %6165 = vmatprep.subr.bf16.mxu0 0
    %6166 = vmatpush2.bf16.msra.mxu0 0
    %6167 = vmatprep.subr.bf16.mxu0 0
    %6168 = vmatpush2.bf16.msra.mxu0 0
    %6169 = vmatprep.subr.bf16.mxu0 0
    %6170 = vmatpush2.bf16.msra.mxu0 0
    %6171 = vmatprep.subr.bf16.mxu0 0
    %6172 = vmatpush2.bf16.msra.mxu0 0
    %6173 = vmatprep.subr.bf16.mxu0 0
    %6174 = vmatpush2.bf16.msra.mxu0 0
    %6175 = vmatprep.subr.bf16.mxu0 0
    %6176 = vmatpush2.bf16.msra.mxu0 0
    %6177 = vmatprep.mubr.bf16.mxu0 0
    %6178 = vmatmul.mubr.bf16.gmra.mxu0 %v6128
    %v6179 = vpop.f32.mrf.mxu0
    %v6180 = vadd.f32 %v6118, %v6179
    %v6181 = vpop.f32.mrf.mxu0
    %v6182 = vpop.f32.mrf.mxu0
    %v6183 = vadd.f32 %v6118, %v6182
    %v6184 = vpop.f32.mrf.mxu0
    %6185 = vmatprep.mubr.bf16.mxu0 0
    %6186 = vmatmul.mubr.bf16.gmra.mxu0 %v6131
    %v6187 = vpop.f32.mrf.mxu0
    %v6188 = vadd.f32 %v6118, %v6187
    %v6189 = vpop.f32.mrf.mxu0
    %v6190 = vpop.f32.mrf.mxu0
    %v6191 = vadd.f32 %v6118, %v6190
    %v6192 = vpop.f32.mrf.mxu0
    %6193 = vmatprep.mubr.bf16.mxu0 0
    %6194 = vmatmul.mubr.bf16.gmra.mxu0 %v6134
    %v6195 = vpop.f32.mrf.mxu0
    %v6196 = vadd.f32 %v6118, %v6195
    %v6197 = vpop.f32.mrf.mxu0
    %v6198 = vpop.f32.mrf.mxu0
    %v6199 = vadd.f32 %v6118, %v6198
    %v6200 = vpop.f32.mrf.mxu0
    %6201 = vmatprep.mubr.bf16.mxu0 0
    %6202 = vmatmul.mubr.bf16.gmra.mxu0 %v6137
    %v6203 = vpop.f32.mrf.mxu0
    %v6204 = vadd.f32 %v6118, %v6203
    %v6205 = vpop.f32.mrf.mxu0
    %v6206 = vpop.f32.mrf.mxu0
    %v6207 = vadd.f32 %v6118, %v6206
    %v6208 = vpop.f32.mrf.mxu0
    %6209 = vmatprep.mubr.bf16.mxu0 0
    %6210 = vmatmul.mubr.bf16.gmra.mxu0 %v6140
    %v6211 = vpop.f32.mrf.mxu0
    %v6212 = vadd.f32 %v6118, %v6211
    %v6213 = vpop.f32.mrf.mxu0
    %v6214 = vpop.f32.mrf.mxu0
    %v6215 = vadd.f32 %v6118, %v6214
    %v6216 = vpop.f32.mrf.mxu0
    %6217 = vmatprep.mubr.bf16.mxu0 0
    %6218 = vmatmul.mubr.bf16.gmra.mxu0 %v6143
    %v6219 = vpop.f32.mrf.mxu0
    %v6220 = vadd.f32 %v6118, %v6219
    %v6221 = vpop.f32.mrf.mxu0
    %v6222 = vpop.f32.mrf.mxu0
    %v6223 = vadd.f32 %v6118, %v6222
    %v6224 = vpop.f32.mrf.mxu0
    %6225 = vdwg.mxu0
    %v6226 = vmul.f32 %v6180, 0.5
    %v6227 = vmul.f32 %v6183, 0.5
    %v6228 = vmul.f32 %v6188, 0.5
    %v6229 = vmul.f32 %v6191, 0.5
    %v6230 = vmul.f32 %v6196, 0.5
    %v6231 = vmul.f32 %v6199, 0.5
    %v6232 = vmul.f32 %v6204, 0.5
    %v6233 = vmul.f32 %v6207, 0.5
    %v6234 = vmul.f32 %v6212, 0.5
    %v6235 = vmul.f32 %v6215, 0.5
    %v6236 = vmul.f32 %v6220, 0.5
    %v6237 = vmul.f32 %v6223, 0.5
    %v6238 = vmul.f32 %v6180, 0.70710677
    %v6239 = vmul.f32 %v6183, 0.70710677
    %v6240 = vmul.f32 %v6188, 0.70710677
    %v6241 = vmul.f32 %v6191, 0.70710677
    %v6242 = vmul.f32 %v6196, 0.70710677
    %v6243 = vmul.f32 %v6199, 0.70710677
    %v6244 = vmul.f32 %v6204, 0.70710677
    %v6245 = vmul.f32 %v6207, 0.70710677
    %v6246 = vmul.f32 %v6212, 0.70710677
    %v6247 = vmul.f32 %v6215, 0.70710677
    %v6248 = vmul.f32 %v6220, 0.70710677
    %v6249 = vmul.f32 %v6223, 0.70710677
    %vm6250 = vcmp.ge.f32.partialorder %v6238, 0.0
    %vm6251 = vcmp.ge.f32.partialorder %v6239, 0.0
    %vm6252 = vcmp.ge.f32.partialorder %v6240, 0.0
    %vm6253 = vcmp.ge.f32.partialorder %v6241, 0.0
    %vm6254 = vcmp.ge.f32.partialorder %v6242, 0.0
    %vm6255 = vcmp.ge.f32.partialorder %v6243, 0.0
    %vm6256 = vcmp.ge.f32.partialorder %v6244, 0.0
    %vm6257 = vcmp.ge.f32.partialorder %v6245, 0.0
    %vm6258 = vcmp.ge.f32.partialorder %v6246, 0.0
    %vm6259 = vcmp.ge.f32.partialorder %v6247, 0.0
    %vm6260 = vcmp.ge.f32.partialorder %v6248, 0.0
    %vm6261 = vcmp.ge.f32.partialorder %v6249, 0.0
    %v6262 = vsel %vm6250, 1.0, -1.0
    %v6263 = vsel %vm6251, 1.0, -1.0
    %v6264 = vsel %vm6252, 1.0, -1.0
    %v6265 = vsel %vm6253, 1.0, -1.0
    %v6266 = vsel %vm6254, 1.0, -1.0
    %v6267 = vsel %vm6255, 1.0, -1.0
    %v6268 = vsel %vm6256, 1.0, -1.0
    %v6269 = vsel %vm6257, 1.0, -1.0
    %v6270 = vsel %vm6258, 1.0, -1.0
    %v6271 = vsel %vm6259, 1.0, -1.0
    %v6272 = vsel %vm6260, 1.0, -1.0
    %v6273 = vsel %vm6261, 1.0, -1.0
    %v6274 = vand.u32 2147483647, %v6238
    %v6275 = vand.u32 2147483647, %v6239
    %v6276 = vand.u32 2147483647, %v6240
    %v6277 = vand.u32 2147483647, %v6241
    %v6278 = vand.u32 2147483647, %v6242
    %v6279 = vand.u32 2147483647, %v6243
    %v6280 = vand.u32 2147483647, %v6244
    %v6281 = vand.u32 2147483647, %v6245
    %v6282 = vand.u32 2147483647, %v6246
    %v6283 = vand.u32 2147483647, %v6247
    %v6284 = vand.u32 2147483647, %v6248
    %v6285 = vand.u32 2147483647, %v6249
    %v6286 = vmul.f32 %v6274, 0.3275911
    %v6287 = vmul.f32 %v6275, 0.3275911
    %v6288 = vmul.f32 %v6276, 0.3275911
    %v6289 = vmul.f32 %v6277, 0.3275911
    %v6290 = vmul.f32 %v6278, 0.3275911
    %v6291 = vmul.f32 %v6279, 0.3275911
    %v6292 = vmul.f32 %v6280, 0.3275911
    %v6293 = vmul.f32 %v6281, 0.3275911
    %v6294 = vmul.f32 %v6282, 0.3275911
    %v6295 = vmul.f32 %v6283, 0.3275911
    %v6296 = vmul.f32 %v6284, 0.3275911
    %v6297 = vmul.f32 %v6285, 0.3275911
    %v6298 = vadd.f32 %v6286, 1.0
    %v6299 = vadd.f32 %v6287, 1.0
    %v6300 = vadd.f32 %v6288, 1.0
    %v6301 = vadd.f32 %v6289, 1.0
    %v6302 = vadd.f32 %v6290, 1.0
    %v6303 = vadd.f32 %v6291, 1.0
    %v6304 = vadd.f32 %v6292, 1.0
    %v6305 = vadd.f32 %v6293, 1.0
    %v6306 = vadd.f32 %v6294, 1.0
    %v6307 = vadd.f32 %v6295, 1.0
    %v6308 = vadd.f32 %v6296, 1.0
    %v6309 = vadd.f32 %v6297, 1.0
    %v6310 = vrcp.pop %v6298
    %v6311 = vmul.f32 1.0, %v6310
    %v6312 = vrcp.pop %v6299
    %v6313 = vmul.f32 1.0, %v6312
    %v6314 = vrcp.pop %v6300
    %v6315 = vmul.f32 1.0, %v6314
    %v6316 = vrcp.pop %v6301
    %v6317 = vmul.f32 1.0, %v6316
    %v6318 = vrcp.pop %v6302
    %v6319 = vmul.f32 1.0, %v6318
    %v6320 = vrcp.pop %v6303
    %v6321 = vmul.f32 1.0, %v6320
    %v6322 = vrcp.pop %v6304
    %v6323 = vmul.f32 1.0, %v6322
    %v6324 = vrcp.pop %v6305
    %v6325 = vmul.f32 1.0, %v6324
    %v6326 = vrcp.pop %v6306
    %v6327 = vmul.f32 1.0, %v6326
    %v6328 = vrcp.pop %v6307
    %v6329 = vmul.f32 1.0, %v6328
    %v6330 = vrcp.pop %v6308
    %v6331 = vmul.f32 1.0, %v6330
    %v6332 = vrcp.pop %v6309
    %v6333 = vmul.f32 1.0, %v6332
    %v6334 = vmul.f32 %v6311, 1.0614054
    %v6335 = vmul.f32 %v6313, 1.0614054
    %v6336 = vmul.f32 %v6315, 1.0614054
    %v6337 = vmul.f32 %v6317, 1.0614054
    %v6338 = vmul.f32 %v6319, 1.0614054
    %v6339 = vmul.f32 %v6321, 1.0614054
    %v6340 = vmul.f32 %v6323, 1.0614054
    %v6341 = vmul.f32 %v6325, 1.0614054
    %v6342 = vmul.f32 %v6327, 1.0614054
    %v6343 = vmul.f32 %v6329, 1.0614054
    %v6344 = vmul.f32 %v6331, 1.0614054
    %v6345 = vmul.f32 %v6333, 1.0614054
    %v6346 = vadd.f32 %v6334, -1.4531521
    %v6347 = vadd.f32 %v6335, -1.4531521
    %v6348 = vadd.f32 %v6336, -1.4531521
    %v6349 = vadd.f32 %v6337, -1.4531521
    %v6350 = vadd.f32 %v6338, -1.4531521
    %v6351 = vadd.f32 %v6339, -1.4531521
    %v6352 = vadd.f32 %v6340, -1.4531521
    %v6353 = vadd.f32 %v6341, -1.4531521
    %v6354 = vadd.f32 %v6342, -1.4531521
    %v6355 = vadd.f32 %v6343, -1.4531521
    %v6356 = vadd.f32 %v6344, -1.4531521
    %v6357 = vadd.f32 %v6345, -1.4531521
    %v6358 = vmul.f32 %v6346, %v6311
    %v6359 = vmul.f32 %v6347, %v6313
    %v6360 = vmul.f32 %v6348, %v6315
    %v6361 = vmul.f32 %v6349, %v6317
    %v6362 = vmul.f32 %v6350, %v6319
    %v6363 = vmul.f32 %v6351, %v6321
    %v6364 = vmul.f32 %v6352, %v6323
    %v6365 = vmul.f32 %v6353, %v6325
    %v6366 = vmul.f32 %v6354, %v6327
    %v6367 = vmul.f32 %v6355, %v6329
    %v6368 = vmul.f32 %v6356, %v6331
    %v6369 = vmul.f32 %v6357, %v6333
    %v6370 = vadd.f32 %v6358, 1.4214138
    %v6371 = vadd.f32 %v6359, 1.4214138
    %v6372 = vadd.f32 %v6360, 1.4214138
    %v6373 = vadd.f32 %v6361, 1.4214138
    %v6374 = vadd.f32 %v6362, 1.4214138
    %v6375 = vadd.f32 %v6363, 1.4214138
    %v6376 = vadd.f32 %v6364, 1.4214138
    %v6377 = vadd.f32 %v6365, 1.4214138
    %v6378 = vadd.f32 %v6366, 1.4214138
    %v6379 = vadd.f32 %v6367, 1.4214138
    %v6380 = vadd.f32 %v6368, 1.4214138
    %v6381 = vadd.f32 %v6369, 1.4214138
    %v6382 = vmul.f32 %v6370, %v6311
    %v6383 = vmul.f32 %v6371, %v6313
    %v6384 = vmul.f32 %v6372, %v6315
    %v6385 = vmul.f32 %v6373, %v6317
    %v6386 = vmul.f32 %v6374, %v6319
    %v6387 = vmul.f32 %v6375, %v6321
    %v6388 = vmul.f32 %v6376, %v6323
    %v6389 = vmul.f32 %v6377, %v6325
    %v6390 = vmul.f32 %v6378, %v6327
    %v6391 = vmul.f32 %v6379, %v6329
    %v6392 = vmul.f32 %v6380, %v6331
    %v6393 = vmul.f32 %v6381, %v6333
    %v6394 = vadd.f32 %v6382, -0.28449672
    %v6395 = vadd.f32 %v6383, -0.28449672
    %v6396 = vadd.f32 %v6384, -0.28449672
    %v6397 = vadd.f32 %v6385, -0.28449672
    %v6398 = vadd.f32 %v6386, -0.28449672
    %v6399 = vadd.f32 %v6387, -0.28449672
    %v6400 = vadd.f32 %v6388, -0.28449672
    %v6401 = vadd.f32 %v6389, -0.28449672
    %v6402 = vadd.f32 %v6390, -0.28449672
    %v6403 = vadd.f32 %v6391, -0.28449672
    %v6404 = vadd.f32 %v6392, -0.28449672
    %v6405 = vadd.f32 %v6393, -0.28449672
    %v6406 = vmul.f32 %v6394, %v6311
    %v6407 = vmul.f32 %v6395, %v6313
    %v6408 = vmul.f32 %v6396, %v6315
    %v6409 = vmul.f32 %v6397, %v6317
    %v6410 = vmul.f32 %v6398, %v6319
    %v6411 = vmul.f32 %v6399, %v6321
    %v6412 = vmul.f32 %v6400, %v6323
    %v6413 = vmul.f32 %v6401, %v6325
    %v6414 = vmul.f32 %v6402, %v6327
    %v6415 = vmul.f32 %v6403, %v6329
    %v6416 = vmul.f32 %v6404, %v6331
    %v6417 = vmul.f32 %v6405, %v6333
    %v6418 = vadd.f32 %v6406, 0.2548296
    %v6419 = vadd.f32 %v6407, 0.2548296
    %v6420 = vadd.f32 %v6408, 0.2548296
    %v6421 = vadd.f32 %v6409, 0.2548296
    %v6422 = vadd.f32 %v6410, 0.2548296
    %v6423 = vadd.f32 %v6411, 0.2548296
    %v6424 = vadd.f32 %v6412, 0.2548296
    %v6425 = vadd.f32 %v6413, 0.2548296
    %v6426 = vadd.f32 %v6414, 0.2548296
    %v6427 = vadd.f32 %v6415, 0.2548296
    %v6428 = vadd.f32 %v6416, 0.2548296
    %v6429 = vadd.f32 %v6417, 0.2548296
    %v6430 = vmul.f32 %v6418, %v6311
    %v6431 = vmul.f32 %v6419, %v6313
    %v6432 = vmul.f32 %v6420, %v6315
    %v6433 = vmul.f32 %v6421, %v6317
    %v6434 = vmul.f32 %v6422, %v6319
    %v6435 = vmul.f32 %v6423, %v6321
    %v6436 = vmul.f32 %v6424, %v6323
    %v6437 = vmul.f32 %v6425, %v6325
    %v6438 = vmul.f32 %v6426, %v6327
    %v6439 = vmul.f32 %v6427, %v6329
    %v6440 = vmul.f32 %v6428, %v6331
    %v6441 = vmul.f32 %v6429, %v6333
    %v6442 = vsub.f32 0.0, %v6274
    %v6443 = vsub.f32 0.0, %v6275
    %v6444 = vsub.f32 0.0, %v6276
    %v6445 = vsub.f32 0.0, %v6277
    %v6446 = vsub.f32 0.0, %v6278
    %v6447 = vsub.f32 0.0, %v6279
    %v6448 = vsub.f32 0.0, %v6280
    %v6449 = vsub.f32 0.0, %v6281
    %v6450 = vsub.f32 0.0, %v6282
    %v6451 = vsub.f32 0.0, %v6283
    %v6452 = vsub.f32 0.0, %v6284
    %v6453 = vsub.f32 0.0, %v6285
    %v6454 = vmul.f32 %v6442, %v6274
    %v6455 = vmul.f32 %v6443, %v6275
    %v6456 = vmul.f32 %v6444, %v6276
    %v6457 = vmul.f32 %v6445, %v6277
    %v6458 = vmul.f32 %v6446, %v6278
    %v6459 = vmul.f32 %v6447, %v6279
    %v6460 = vmul.f32 %v6448, %v6280
    %v6461 = vmul.f32 %v6449, %v6281
    %v6462 = vmul.f32 %v6450, %v6282
    %v6463 = vmul.f32 %v6451, %v6283
    %v6464 = vmul.f32 %v6452, %v6284
    %v6465 = vmul.f32 %v6453, %v6285
    %v6466 = vmul.f32 %v6454, 1.442695
    %v6467 = vpow.pop %v6466
    %v6468 = vmul.f32 %v6455, 1.442695
    %v6469 = vpow.pop %v6468
    %v6470 = vmul.f32 %v6456, 1.442695
    %v6471 = vpow.pop %v6470
    %v6472 = vmul.f32 %v6457, 1.442695
    %v6473 = vpow.pop %v6472
    %v6474 = vmul.f32 %v6458, 1.442695
    %v6475 = vpow.pop %v6474
    %v6476 = vmul.f32 %v6459, 1.442695
    %v6477 = vpow.pop %v6476
    %v6478 = vmul.f32 %v6460, 1.442695
    %v6479 = vpow.pop %v6478
    %v6480 = vmul.f32 %v6461, 1.442695
    %v6481 = vpow.pop %v6480
    %v6482 = vmul.f32 %v6462, 1.442695
    %v6483 = vpow.pop %v6482
    %v6484 = vmul.f32 %v6463, 1.442695
    %v6485 = vpow.pop %v6484
    %v6486 = vmul.f32 %v6464, 1.442695
    %v6487 = vpow.pop %v6486
    %v6488 = vmul.f32 %v6465, 1.442695
    %v6489 = vpow.pop %v6488
    %v6490 = vmul.f32 %v6430, %v6467
    %v6491 = vmul.f32 %v6431, %v6469
    %v6492 = vmul.f32 %v6432, %v6471
    %v6493 = vmul.f32 %v6433, %v6473
    %v6494 = vmul.f32 %v6434, %v6475
    %v6495 = vmul.f32 %v6435, %v6477
    %v6496 = vmul.f32 %v6436, %v6479
    %v6497 = vmul.f32 %v6437, %v6481
    %v6498 = vmul.f32 %v6438, %v6483
    %v6499 = vmul.f32 %v6439, %v6485
    %v6500 = vmul.f32 %v6440, %v6487
    %v6501 = vmul.f32 %v6441, %v6489
    %v6502 = vsub.f32 1.0, %v6490
    %v6503 = vsub.f32 1.0, %v6491
    %v6504 = vsub.f32 1.0, %v6492
    %v6505 = vsub.f32 1.0, %v6493
    %v6506 = vsub.f32 1.0, %v6494
    %v6507 = vsub.f32 1.0, %v6495
    %v6508 = vsub.f32 1.0, %v6496
    %v6509 = vsub.f32 1.0, %v6497
    %v6510 = vsub.f32 1.0, %v6498
    %v6511 = vsub.f32 1.0, %v6499
    %v6512 = vsub.f32 1.0, %v6500
    %v6513 = vsub.f32 1.0, %v6501
    %v6514 = vmul.f32 %v6262, %v6502
    %v6515 = vmul.f32 %v6263, %v6503
    %v6516 = vmul.f32 %v6264, %v6504
    %v6517 = vmul.f32 %v6265, %v6505
    %v6518 = vmul.f32 %v6266, %v6506
    %v6519 = vmul.f32 %v6267, %v6507
    %v6520 = vmul.f32 %v6268, %v6508
    %v6521 = vmul.f32 %v6269, %v6509
    %v6522 = vmul.f32 %v6270, %v6510
    %v6523 = vmul.f32 %v6271, %v6511
    %v6524 = vmul.f32 %v6272, %v6512
    %v6525 = vmul.f32 %v6273, %v6513
    %v6526 = vadd.f32 %v6514, 1.0
    %v6527 = vadd.f32 %v6515, 1.0
    %v6528 = vadd.f32 %v6516, 1.0
    %v6529 = vadd.f32 %v6517, 1.0
    %v6530 = vadd.f32 %v6518, 1.0
    %v6531 = vadd.f32 %v6519, 1.0
    %v6532 = vadd.f32 %v6520, 1.0
    %v6533 = vadd.f32 %v6521, 1.0
    %v6534 = vadd.f32 %v6522, 1.0
    %v6535 = vadd.f32 %v6523, 1.0
    %v6536 = vadd.f32 %v6524, 1.0
    %v6537 = vadd.f32 %v6525, 1.0
    %v6538 = vmul.f32 %v6226, %v6526
    %v6539 = vmul.f32 %v6227, %v6527
    %v6540 = vmul.f32 %v6228, %v6528
    %v6541 = vmul.f32 %v6229, %v6529
    %v6542 = vmul.f32 %v6230, %v6530
    %v6543 = vmul.f32 %v6231, %v6531
    %v6544 = vmul.f32 %v6232, %v6532
    %v6545 = vmul.f32 %v6233, %v6533
    %v6546 = vmul.f32 %v6234, %v6534
    %v6547 = vmul.f32 %v6235, %v6535
    %v6548 = vmul.f32 %v6236, %v6536
    %v6549 = vmul.f32 %v6237, %v6537
    %s6550 = scalar_lea.vmem %s4, 64
    %v6551 = vld [vmem:[%s6550] sm:$0xf]
    %v6552 = vld [vmem:[%s6550 + $0x4] sm:$0xf]
    %v6553 = vld [vmem:[%s6550 + $0x8] sm:$0xf]
    %v6554 = vld [vmem:[%s6550 + $0xc] sm:$0xf]
    %v6555 = vld [vmem:[%s6550 + $0x10] sm:$0xf]
    %v6556 = vld [vmem:[%s6550 + $0x14] sm:$0xf]
    %v6557 = vld [vmem:[%s6550 + $0x18] sm:$0xf]
    %v6558 = vld [vmem:[%s6550 + $0x1c] sm:$0xf]
    %v6559 = vld [vmem:[%s6550 + $0x20] sm:$0xf]
    %v6560 = vld [vmem:[%s6550 + $0x24] sm:$0xf]
    %v6561 = vld [vmem:[%s6550 + $0x28] sm:$0xf]
    %v6562 = vld [vmem:[%s6550 + $0x2c] sm:$0xf]
    %v6563 = vld [vmem:[%s6550 + $0x30] sm:$0xf]
    %v6564 = vld [vmem:[%s6550 + $0x34] sm:$0xf]
    %v6565 = vld [vmem:[%s6550 + $0x38] sm:$0xf]
    %v6566 = vld [vmem:[%s6550 + $0x3c] sm:$0xf]
    %v6567 = vpack.c.bf16 %v6539, %v6538
    %v6568 = vpack.c.bf16 %v6541, %v6540
    %v6569 = vpack.c.bf16 %v6543, %v6542
    %v6570 = vpack.c.bf16 %v6545, %v6544
    %v6571 = vpack.c.bf16 %v6547, %v6546
    %v6572 = vpack.c.bf16 %v6549, %v6548
    %v6589 = vunpack.c.l.b16 %v6551
    %v6590 = vunpack.c.l.b16 %v6552
    %v6591 = vunpack.c.l.b16 %v6553
    %v6592 = vunpack.c.l.b16 %v6554
    %v6593 = vunpack.c.l.b16 %v6555
    %v6594 = vunpack.c.l.b16 %v6556
    %v6595 = vunpack.c.l.b16 %v6557
    %v6596 = vunpack.c.l.b16 %v6558
    %v6597 = vunpack.c.l.b16 %v6559
    %v6598 = vunpack.c.l.b16 %v6560
    %v6599 = vunpack.c.l.b16 %v6561
    %v6600 = vunpack.c.l.b16 %v6562
    %v6601 = vunpack.c.l.b16 %v6563
    %v6602 = vunpack.c.l.b16 %v6564
    %v6603 = vunpack.c.l.b16 %v6565
    %v6604 = vunpack.c.l.b16 %v6566
    %v6605 = vpack.c.b16 %v6590, %v6589
    %v6606 = vpack.c.b16 %v6592, %v6591
    %v6607 = vpack.c.b16 %v6594, %v6593
    %v6608 = vpack.c.b16 %v6596, %v6595
    %v6609 = vpack.c.b16 %v6598, %v6597
    %v6610 = vpack.c.b16 %v6600, %v6599
    %v6611 = vpack.c.b16 %v6602, %v6601
    %v6612 = vpack.c.b16 %v6604, %v6603
    %6621 = vmatprep.subr.bf16.mxu0 0
    %6622 = vmatpush1.bf16.msra.mxu0 %v6612
    %6623 = vmatprep.subr.bf16.mxu0 0
    %6624 = vmatpush1.bf16.msra.mxu0 %v6611
    %6625 = vmatprep.subr.bf16.mxu0 0
    %6626 = vmatpush1.bf16.msra.mxu0 %v6610
    %6627 = vmatprep.subr.bf16.mxu0 0
    %6628 = vmatpush1.bf16.msra.mxu0 %v6609
    %6629 = vmatprep.subr.bf16.mxu0 0
    %6630 = vmatpush1.bf16.msra.mxu0 %v6608
    %6631 = vmatprep.subr.bf16.mxu0 0
    %6632 = vmatpush1.bf16.msra.mxu0 %v6607
    %6633 = vmatprep.subr.bf16.mxu0 0
    %6634 = vmatpush1.bf16.msra.mxu0 %v6606
    %6635 = vmatprep.subr.bf16.mxu0 0
    %6636 = vmatpush1.bf16.msra.mxu0 %v6605
    %6637 = vmatprep.subr.bf16.mxu0 0
    %6638 = vmatpush2.bf16.msra.mxu0 0
    %6639 = vmatprep.subr.bf16.mxu0 0
    %6640 = vmatpush2.bf16.msra.mxu0 0
    %6641 = vmatprep.subr.bf16.mxu0 0
    %6642 = vmatpush2.bf16.msra.mxu0 0
    %6643 = vmatprep.subr.bf16.mxu0 0
    %6644 = vmatpush2.bf16.msra.mxu0 0
    %6645 = vmatprep.subr.bf16.mxu0 0
    %6646 = vmatpush2.bf16.msra.mxu0 0
    %6647 = vmatprep.subr.bf16.mxu0 0
    %6648 = vmatpush2.bf16.msra.mxu0 0
    %6649 = vmatprep.subr.bf16.mxu0 0
    %6650 = vmatpush2.bf16.msra.mxu0 0
    %6651 = vmatprep.subr.bf16.mxu0 0
    %6652 = vmatpush2.bf16.msra.mxu0 0
    %6653 = vmatprep.mubr.bf16.mxu0 0
    %6654 = vmatmul.mubr.bf16.gmra.mxu0 %v6567
    %v6655 = vpop.f32.mrf.mxu0
    %v6656 = vpop.f32.mrf.mxu0
    %v6657 = vpop.f32.mrf.mxu0
    %v6658 = vadd.f32 0.0, %v6657
    %v6659 = vpop.f32.mrf.mxu0
    %6660 = vmatprep.mubr.bf16.mxu0 0
    %6661 = vmatmul.mubr.bf16.gmra.mxu0 %v6568
    %v6662 = vpop.f32.mrf.mxu0
    %v6663 = vadd.f32 0.0, %v6662
    %v6664 = vpop.f32.mrf.mxu0
    %v6665 = vpop.f32.mrf.mxu0
    %v6666 = vpop.f32.mrf.mxu0
    %6667 = vmatprep.mubr.bf16.mxu0 0
    %6668 = vmatmul.mubr.bf16.gmra.mxu0 %v6569
    %v6669 = vpop.f32.mrf.mxu0
    %v6670 = vadd.f32 0.0, %v6669
    %v6671 = vpop.f32.mrf.mxu0
    %v6672 = vpop.f32.mrf.mxu0
    %v6673 = vadd.f32 0.0, %v6672
    %v6674 = vpop.f32.mrf.mxu0
    %6675 = vmatprep.mubr.bf16.mxu0 0
    %6676 = vmatmul.mubr.bf16.gmra.mxu0 %v6570
    %v6677 = vpop.f32.mrf.mxu0
    %v6678 = vpop.f32.mrf.mxu0
    %v6679 = vpop.f32.mrf.mxu0
    %v6680 = vadd.f32 0.0, %v6679
    %v6681 = vpop.f32.mrf.mxu0
    %6682 = vmatprep.mubr.bf16.mxu0 0
    %6683 = vmatmul.mubr.bf16.gmra.mxu0 %v6571
    %v6684 = vpop.f32.mrf.mxu0
    %v6685 = vadd.f32 0.0, %v6684
    %v6686 = vpop.f32.mrf.mxu0
    %v6687 = vpop.f32.mrf.mxu0
    %v6688 = vpop.f32.mrf.mxu0
    %6689 = vmatprep.mubr.bf16.mxu0 0
    %6690 = vmatmul.mubr.bf16.gmra.mxu0 %v6572
    %v6691 = vpop.f32.mrf.mxu0
    %v6692 = vadd.f32 0.0, %v6691
    %v6693 = vpop.f32.mrf.mxu0
    %v6694 = vpop.f32.mrf.mxu0
    %v6695 = vadd.f32 0.0, %v6694
    %v6696 = vpop.f32.mrf.mxu0
    %6697 = vdwg.mxu0
    %v6698 = vadd.f32 %v5907, %v6658
    %v6699 = vadd.f32 %v5908, %v6663
    %v6700 = vadd.f32 %v5910, %v6670
    %v6701 = vadd.f32 %v5911, %v6673
    %v6702 = vadd.f32 %v5913, %v6680
    %v6703 = vadd.f32 %v5914, %v6685
    %v6704 = vadd.f32 %v5916, %v6692
    %v6705 = vadd.f32 %v5917, %v6695
    %v6706 = vld [vmem:[%s1 + $0x14] sm:$0x1]
    %v6707 = vlaneseq
    %v6708 = vshrl.u32 %v6707, 7
    %v6709 = vsub.s32 0, %v6708
    %v6710 = vrot.slane %v6706, %v6709
    %v6711 = vadd.f32 %v6698, %v6710
    %v6712 = vadd.f32 %v6699, %v6710
    %v6713 = vadd.f32 %v6700, %v6710
    %v6714 = vadd.f32 %v6701, %v6710
    %v6715 = vadd.f32 %v6702, %v6710
    %v6716 = vadd.f32 %v6703, %v6710
    %v6717 = vadd.f32 %v6704, %v6710
    %v6718 = vadd.f32 %v6705, %v6710
    %v6719 = vld [vmem:[%s1 + $0x2] sm:$0x1]
    %v6720 = vld [vmem:[%s1 + $0x3] sm:$0x1]
    %v6721 = vsel %vm100, %v6711, 0.0
    %6722 = vadd.xlane.f32.xlu0 %v6721
    %v6723 = vpop.xlane.xlu0 %6722
    %v6724 = vsel %vm100, %v6712, 0.0
    %6725 = vadd.xlane.f32.xlu0 %v6724
    %v6726 = vpop.xlane.xlu0 %6725
    %v6727 = vsel %vm100, %v6713, 0.0
    %6728 = vadd.xlane.f32.xlu0 %v6727
    %v6729 = vpop.xlane.xlu0 %6728
    %v6730 = vsel %vm100, %v6714, 0.0
    %6731 = vadd.xlane.f32.xlu0 %v6730
    %v6732 = vpop.xlane.xlu0 %6731
    %v6733 = vsel %vm100, %v6715, 0.0
    %6734 = vadd.xlane.f32.xlu0 %v6733
    %v6735 = vpop.xlane.xlu0 %6734
    %v6736 = vsel %vm100, %v6716, 0.0
    %6737 = vadd.xlane.f32.xlu0 %v6736
    %v6738 = vpop.xlane.xlu0 %6737
    %v6739 = vsel %vm100, %v6717, 0.0
    %6740 = vadd.xlane.f32.xlu0 %v6739
    %v6741 = vpop.xlane.xlu0 %6740
    %v6742 = vsel %vm100, %v6718, 0.0
    %6743 = vadd.xlane.f32.xlu0 %v6742
    %v6744 = vpop.xlane.xlu0 %6743
    %v6745 = vmul.f32 %v6723, %v186
    %v6746 = vmul.f32 %v6726, %v186
    %v6747 = vmul.f32 %v6729, %v186
    %v6748 = vmul.f32 %v6732, %v186
    %v6749 = vmul.f32 %v6735, %v186
    %v6750 = vmul.f32 %v6738, %v186
    %v6751 = vmul.f32 %v6741, %v186
    %v6752 = vmul.f32 %v6744, %v186
    %v6753 = vsub.f32 %v6711, %v6745
    %v6754 = vsub.f32 %v6712, %v6746
    %v6755 = vsub.f32 %v6713, %v6747
    %v6756 = vsub.f32 %v6714, %v6748
    %v6757 = vsub.f32 %v6715, %v6749
    %v6758 = vsub.f32 %v6716, %v6750
    %v6759 = vsub.f32 %v6717, %v6751
    %v6760 = vsub.f32 %v6718, %v6752
    %v6761 = vmul.f32 %v6753, %v6753
    %v6762 = vmul.f32 %v6754, %v6754
    %v6763 = vmul.f32 %v6755, %v6755
    %v6764 = vmul.f32 %v6756, %v6756
    %v6765 = vmul.f32 %v6757, %v6757
    %v6766 = vmul.f32 %v6758, %v6758
    %v6767 = vmul.f32 %v6759, %v6759
    %v6768 = vmul.f32 %v6760, %v6760
    %v6769 = vsel %vm100, %v6761, 0.0
    %6770 = vadd.xlane.f32.xlu0 %v6769
    %v6771 = vpop.xlane.xlu0 %6770
    %v6772 = vsel %vm100, %v6762, 0.0
    %6773 = vadd.xlane.f32.xlu0 %v6772
    %v6774 = vpop.xlane.xlu0 %6773
    %v6775 = vsel %vm100, %v6763, 0.0
    %6776 = vadd.xlane.f32.xlu0 %v6775
    %v6777 = vpop.xlane.xlu0 %6776
    %v6778 = vsel %vm100, %v6764, 0.0
    %6779 = vadd.xlane.f32.xlu0 %v6778
    %v6780 = vpop.xlane.xlu0 %6779
    %v6781 = vsel %vm100, %v6765, 0.0
    %6782 = vadd.xlane.f32.xlu0 %v6781
    %v6783 = vpop.xlane.xlu0 %6782
    %v6784 = vsel %vm100, %v6766, 0.0
    %6785 = vadd.xlane.f32.xlu0 %v6784
    %v6786 = vpop.xlane.xlu0 %6785
    %v6787 = vsel %vm100, %v6767, 0.0
    %6788 = vadd.xlane.f32.xlu0 %v6787
    %v6789 = vpop.xlane.xlu0 %6788
    %v6790 = vsel %vm100, %v6768, 0.0
    %6791 = vadd.xlane.f32.xlu0 %v6790
    %v6792 = vpop.xlane.xlu0 %6791
    %v6793 = vmul.f32 %v6771, %v186
    %v6794 = vmul.f32 %v6774, %v186
    %v6795 = vmul.f32 %v6777, %v186
    %v6796 = vmul.f32 %v6780, %v186
    %v6797 = vmul.f32 %v6783, %v186
    %v6798 = vmul.f32 %v6786, %v186
    %v6799 = vmul.f32 %v6789, %v186
    %v6800 = vmul.f32 %v6792, %v186
    %v6801 = vadd.f32 %v6793, 1e-05
    %v6802 = vadd.f32 %v6794, 1e-05
    %v6803 = vadd.f32 %v6795, 1e-05
    %v6804 = vadd.f32 %v6796, 1e-05
    %v6805 = vadd.f32 %v6797, 1e-05
    %v6806 = vadd.f32 %v6798, 1e-05
    %v6807 = vadd.f32 %v6799, 1e-05
    %v6808 = vadd.f32 %v6800, 1e-05
    %v6809 = vrsqrt.pop %v6801
    %v6810 = vrsqrt.pop %v6802
    %v6811 = vrsqrt.pop %v6803
    %v6812 = vrsqrt.pop %v6804
    %v6813 = vrsqrt.pop %v6805
    %v6814 = vrsqrt.pop %v6806
    %v6815 = vrsqrt.pop %v6807
    %v6816 = vrsqrt.pop %v6808
    %v6817 = vmul.f32 %v6753, %v6809
    %v6818 = vmul.f32 %v6754, %v6810
    %v6819 = vmul.f32 %v6755, %v6811
    %v6820 = vmul.f32 %v6756, %v6812
    %v6821 = vmul.f32 %v6757, %v6813
    %v6822 = vmul.f32 %v6758, %v6814
    %v6823 = vmul.f32 %v6759, %v6815
    %v6824 = vmul.f32 %v6760, %v6816
    %v6825 = vlaneseq
    %v6826 = vshrl.u32 %v6825, 7
    %v6827 = vsub.s32 0, %v6826
    %v6828 = vrot.slane %v6719, %v6827
    %v6829 = vmul.f32 %v6817, %v6828
    %v6830 = vmul.f32 %v6818, %v6828
    %v6831 = vmul.f32 %v6819, %v6828
    %v6832 = vmul.f32 %v6820, %v6828
    %v6833 = vmul.f32 %v6821, %v6828
    %v6834 = vmul.f32 %v6822, %v6828
    %v6835 = vmul.f32 %v6823, %v6828
    %v6836 = vmul.f32 %v6824, %v6828
    %v6837 = vlaneseq
    %v6838 = vshrl.u32 %v6837, 7
    %v6839 = vsub.s32 0, %v6838
    %v6840 = vrot.slane %v6720, %v6839
    %v6841 = vadd.f32 %v6829, %v6840
    %v6842 = vadd.f32 %v6830, %v6840
    %v6843 = vadd.f32 %v6831, %v6840
    %v6844 = vadd.f32 %v6832, %v6840
    %v6845 = vadd.f32 %v6833, %v6840
    %v6846 = vadd.f32 %v6834, %v6840
    %v6847 = vadd.f32 %v6835, %v6840
    %v6848 = vadd.f32 %v6836, %v6840
    %v6849 = vld [vmem:[%s5] sm:$0xf]
    %v6850 = vld [vmem:[%s5 + $0x8] sm:$0xf]
    %v6851 = vld [vmem:[%s5 + $0x10] sm:$0xf]
    %v6852 = vld [vmem:[%s5 + $0x18] sm:$0xf]
    %v6853 = vpack.c.bf16 %v6842, %v6841
    %v6854 = vpack.c.bf16 %v6844, %v6843
    %v6855 = vpack.c.bf16 %v6846, %v6845
    %v6856 = vpack.c.bf16 %v6848, %v6847
    %v6857 = vld [vmem:[%s1 + $0x4] sm:$0x1]
    %v6858 = vlaneseq
    %v6859 = vshrl.u32 %v6858, 7
    %v6860 = vsub.s32 0, %v6859
    %v6861 = vrot.slane %v6857, %v6860
    %v6866 = vunpack.c.l.b16 %v6849
    %v6867 = vunpack.c.l.b16 %v6850
    %v6868 = vunpack.c.l.b16 %v6851
    %v6869 = vunpack.c.l.b16 %v6852
    %v6870 = vpack.c.b16 %v6867, %v6866
    %v6871 = vpack.c.b16 %v6869, %v6868
    %v6875 = vsel %vm100, %v6853, 0
    %v6878 = vsel %vm100, %v6854, 0
    %v6881 = vsel %vm100, %v6855, 0
    %v6884 = vsel %vm100, %v6856, 0
    %6886 = vmatprep.subr.bf16.mxu0 0
    %6887 = vmatpush1.bf16.msra.mxu0 0
    %6888 = vmatprep.subr.bf16.mxu0 0
    %6889 = vmatpush1.bf16.msra.mxu0 0
    %6890 = vmatprep.subr.bf16.mxu0 0
    %6891 = vmatpush1.bf16.msra.mxu0 0
    %6892 = vmatprep.subr.bf16.mxu0 0
    %6893 = vmatpush1.bf16.msra.mxu0 0
    %6894 = vmatprep.subr.bf16.mxu0 0
    %6895 = vmatpush1.bf16.msra.mxu0 0
    %6896 = vmatprep.subr.bf16.mxu0 0
    %6897 = vmatpush1.bf16.msra.mxu0 0
    %6898 = vmatprep.subr.bf16.mxu0 0
    %6899 = vmatpush1.bf16.msra.mxu0 %v6871
    %6900 = vmatprep.subr.bf16.mxu0 0
    %6901 = vmatpush1.bf16.msra.mxu0 %v6870
    %6902 = vmatprep.subr.bf16.mxu0 0
    %6903 = vmatpush2.bf16.msra.mxu0 0
    %6904 = vmatprep.subr.bf16.mxu0 0
    %6905 = vmatpush2.bf16.msra.mxu0 0
    %6906 = vmatprep.subr.bf16.mxu0 0
    %6907 = vmatpush2.bf16.msra.mxu0 0
    %6908 = vmatprep.subr.bf16.mxu0 0
    %6909 = vmatpush2.bf16.msra.mxu0 0
    %6910 = vmatprep.subr.bf16.mxu0 0
    %6911 = vmatpush2.bf16.msra.mxu0 0
    %6912 = vmatprep.subr.bf16.mxu0 0
    %6913 = vmatpush2.bf16.msra.mxu0 0
    %6914 = vmatprep.subr.bf16.mxu0 0
    %6915 = vmatpush2.bf16.msra.mxu0 0
    %6916 = vmatprep.subr.bf16.mxu0 0
    %6917 = vmatpush2.bf16.msra.mxu0 0
    %6918 = vmatprep.mubr.bf16.mxu0 0
    %6919 = vmatmul.mubr.bf16.gmra.mxu0 %v6875
    %v6920 = vpop.f32.mrf.mxu0
    %v6921 = vadd.f32 %v6861, %v6920
    %v6922 = vpop.f32.mrf.mxu0
    %v6923 = vpop.f32.mrf.mxu0
    %v6924 = vadd.f32 %v6861, %v6923
    %v6925 = vpop.f32.mrf.mxu0
    %6926 = vmatprep.mubr.bf16.mxu0 0
    %6927 = vmatmul.mubr.bf16.gmra.mxu0 %v6878
    %v6928 = vpop.f32.mrf.mxu0
    %v6929 = vadd.f32 %v6861, %v6928
    %v6930 = vpop.f32.mrf.mxu0
    %v6931 = vpop.f32.mrf.mxu0
    %v6932 = vadd.f32 %v6861, %v6931
    %v6933 = vpop.f32.mrf.mxu0
    %6934 = vmatprep.mubr.bf16.mxu0 0
    %6935 = vmatmul.mubr.bf16.gmra.mxu0 %v6881
    %v6936 = vpop.f32.mrf.mxu0
    %v6937 = vadd.f32 %v6861, %v6936
    %v6938 = vpop.f32.mrf.mxu0
    %v6939 = vpop.f32.mrf.mxu0
    %v6940 = vadd.f32 %v6861, %v6939
    %v6941 = vpop.f32.mrf.mxu0
    %6942 = vmatprep.mubr.bf16.mxu0 0
    %6943 = vmatmul.mubr.bf16.gmra.mxu0 %v6884
    %v6944 = vpop.f32.mrf.mxu0
    %v6945 = vadd.f32 %v6861, %v6944
    %v6946 = vpop.f32.mrf.mxu0
    %v6947 = vpop.f32.mrf.mxu0
    %v6948 = vadd.f32 %v6861, %v6947
    %v6949 = vpop.f32.mrf.mxu0
    %6950 = vdwg.mxu0
    %6951 = vst [vmem:[#allocation2] sm:$0xff] %v6921
    %6952 = vst [vmem:[#allocation2 + $0x8] sm:$0xff] %v6924
    %6953 = vst [vmem:[#allocation2 + $0x10] sm:$0xff] %v6929
    %6954 = vst [vmem:[#allocation2 + $0x18] sm:$0xff] %v6932
    %6955 = vst [vmem:[#allocation2 + $0x20] sm:$0xff] %v6937
    %6956 = vst [vmem:[#allocation2 + $0x28] sm:$0xff] %v6940
    %6957 = vst [vmem:[#allocation2 + $0x30] sm:$0xff] %v6945
    %6958 = vst [vmem:[#allocation2 + $0x38] sm:$0xff] %v6948
    // Predicated region
    $region26: #{tpu_custom_call.1} parent=1 // pred_check
      _
    $region27: #{tpu_custom_call.1} parent=1 // pred_check_branch
      %6960 = sbr.rel (0) target = $region29
    $region28: #{tpu_custom_call.1} parent=1 // pred_region
      %s6962 = ssub.s32 1024, 1024
      %6963 = vsyncadd [#allocation3], %s6962
      %s6964 = sshll.u32 [#allocation2], 4
      %s6965 = int_to_ptr.vmem [resolvable:$true] %s6964
      %6970 = dma.vmem_to_hbm [thread:$0]  %s6965, 1024, %s6, [#allocation3], 128, 128, 8
    $region29: #{tpu_custom_call.1} parent=1 // pred_fallthru
      _
    // Predicated region
    $region30: #{tpu_custom_call.1} parent=1 // pred_check
      _
    $region31: #{tpu_custom_call.1} parent=1 // pred_check_branch
      %6972 = sbr.rel (0) target = $region33
    $region32: #{tpu_custom_call.1} parent=1 // pred_region
      %6973 = dma.done [#allocation3], 1024
    $region33: #{tpu_custom_call.1} parent=1 // pred_fallthru
      _
    %6974 = vsyncpa [#allocation3], 1

</llo_original>
